<compile_context>
chip_gen: v6e
topology: v6e:2x2x1
jax: 0.10.0
libtpu: 0.0.40
codegen_flags: <defaults>
</compile_context>

<pallas_src>
import functools

import jax
import jax.numpy as jnp
from jax import lax
from jax.experimental import pallas as pl
from jax.experimental.pallas import tpu as pltpu

EPS = 1e-5
LANE = 128
_VMEM_LIMIT = 32 * 1024 * 1024   # safe on v5e/v6e (128 MiB) and v7x (64 MiB)


# ----------------------------------------------------------------------------
# small static helpers (run at trace time only)
# ----------------------------------------------------------------------------
def _ceil_to(x, m):
    return ((x + m - 1) // m) * m


def _pick_conv_tile(lout, s, cin_p, target_bytes=2 << 20):
    """Output rows per grid step: divides lout, multiple of 8 (sublane tiling)
    and >= 2*s + 2 so the 3x3 halo fits in the current + next input block."""
    halo = 2 * s + 2
    max_rows = max(halo, target_bytes // (cin_p * 4))
    best = None
    for d in range(8, lout + 1, 8):
        if lout % d == 0 and halo <= d <= max_rows:
            best = d                       # ends at the largest fitting tile
    if best is None:
        for d in range(8, lout + 1, 8):
            if lout % d == 0 and d >= halo:
                best = d
                break
    if best is None:
        # TODO(synk): pathological spatial sizes would need a 3-block halo.
        raise NotImplementedError("unsupported spatial size for conv tiling")
    return best


def _pick_flat_tile(total_rows, c_p, target_bytes=2 << 20):
    max_rows = max(8, target_bytes // (c_p * 4))
    best = total_rows                      # full array is always a legal block
    for d in range(8, total_rows + 1, 8):
        if total_rows % d == 0 and d <= max_rows:
            best = d
    return best


def _pick_pool_tile(h2, w2, c_p, target_bytes=2 << 20):
    best = 1
    for d in range(1, h2 + 1):
        if h2 % d == 0 and d * 2 * w2 * 2 * c_p * 4 <= target_bytes:
            best = d
    return best


# ----------------------------------------------------------------------------
# Pallas kernels
# ----------------------------------------------------------------------------
def _conv_relu_stats_kernel(xa_ref, xb_ref, w_ref, b_ref, z_ref, st_ref,
                            *, S, W, TQ):
    """One row-tile of z = relu(conv3x3(x) + b) plus BatchNorm batch-stat
    accumulation (per-channel sum / sum-of-squares of the valid columns)."""
    n = pl.program_id(0)
    t = pl.program_id(1)

    # current block + next block of the flat zero-bordered input (halo).
    xx = jnp.concatenate([xa_ref[...], xb_ref[...]], axis=0)      # (2*TQ, Ci)

    acc = jnp.zeros((TQ, w_ref.shape[-1]), jnp.float32)
    for dh in range(3):
        for dw in range(3):
            off = dh * S + dw              # constant row offset of this tap
            lhs = xx[off:off + TQ, :].astype(jnp.bfloat16)
            acc = acc + jnp.dot(lhs, w_ref[dh * 3 + dw],
                                preferred_element_type=jnp.float32)

    z = jnp.maximum(acc + b_ref[...], 0.0)
    z_ref[...] = z

    # valid columns are 1..W of each (W+2)-wide flat row (0 and W+1 = border).
    q = t * TQ + lax.broadcasted_iota(jnp.int32, (TQ, 1), 0)
    col = q % S
    valid = jnp.logical_and(col >= 1, col <= W).astype(jnp.float32)
    zm = z * valid

    @pl.when(jnp.logical_and(n == 0, t == 0))
    def _init():
        st_ref[...] = jnp.zeros_like(st_ref)

    st_ref[...] += jnp.concatenate(
        [jnp.sum(zm, axis=0, keepdims=True),
         jnp.sum(zm * zm, axis=0, keepdims=True)], axis=0)


def _bn_affine_kernel(z_ref, sc_ref, sh_ref, o_ref, *, S, W, TQ):
    """out = (z * scale + shift), border columns forced to zero."""
    t = pl.program_id(0)
    q = t * TQ + lax.broadcasted_iota(jnp.int32, (TQ, 1), 0)
    col = q % S
    valid = jnp.logical_and(col >= 1, col <= W).astype(jnp.float32)
    o_ref[...] = (z_ref[...] * sc_ref[...] + sh_ref[...]) * valid


def _maxpool_kernel(x_ref, o_ref, *, C):
    x = x_ref[...]                               # (bh, 2, W//2, 2*C)
    m = jnp.maximum(x[:, 0], x[:, 1])            # rows of each 2x2 window
    o_ref[...] = jnp.maximum(m[..., :C], m[..., C:])   # cols of each window


# ----------------------------------------------------------------------------
# fused Conv3x3 -> ReLU -> BatchNorm (training-mode batch statistics)
# ----------------------------------------------------------------------------
def _conv3x3_relu_bn(x_flat, H, W, w, b, gamma, beta):
    """x_flat: (N, (H+2)*(W+2), Cin_p) f32, zero-bordered flat layout.
    Returns (N, H*(W+2), Cout_p) f32: data in cols 1..W of every (W+2)-wide
    row, zeros in cols 0 and W+1 (ready to be re-used as the next conv's
    side borders)."""
    N, _, Cin_p = x_flat.shape
    cin, cout = w.shape[2], w.shape[3]
    Cout_p = _ceil_to(cout, LANE)
    S = W + 2
    Lout = H * S

    # parameters: zero-pad channels, flatten taps, bf16 weights for the MXU.
    w_p = jnp.zeros((3, 3, Cin_p, Cout_p), jnp.float32)
    w_p = w_p.at[:, :, :cin, :cout].set(w).reshape(9, Cin_p, Cout_p)
    w_p = w_p.astype(jnp.bfloat16)

    def _padvec(v):
        return jnp.zeros((1, Cout_p), jnp.float32).at[0, :cout].set(v)

    b_p, g_p, beta_p = _padvec(b), _padvec(gamma), _padvec(beta)

    # ---- pass 1: conv + bias + ReLU + BN statistics, tiled over output rows.
    TQ = _pick_conv_tile(Lout, S, Cin_p)
    num_t = Lout // TQ
    rows_needed = (num_t + 1) * TQ             # the halo spec reads block t+1
    x_sh = jnp.pad(x_flat,
                   ((0, 0),
                    (1, rows_needed - x_flat.shape[1] - 1),   # +1 row shift
                    (0, 0)))                                  # keeps taps >= 0

    kern1 = functools.partial(_conv_relu_stats_kernel, S=S, W=W, TQ=TQ)
    z, stats = pl.pallas_call(
        kern1,
        out_shape=(jax.ShapeDtypeStruct((N, Lout, Cout_p), jnp.float32),
                   jax.ShapeDtypeStruct((2, Cout_p), jnp.float32)),
        grid=(N, num_t),
        in_specs=[
            pl.BlockSpec((None, TQ, Cin_p), lambda n, t: (n, t, 0)),
            pl.BlockSpec((None, TQ, Cin_p), lambda n, t: (n, t + 1, 0)),
            pl.BlockSpec((9, Cin_p, Cout_p), lambda n, t: (0, 0, 0)),
            pl.BlockSpec((1, Cout_p), lambda n, t: (0, 0)),
        ],
        out_specs=(
            pl.BlockSpec((None, TQ, Cout_p), lambda n, t: (n, t, 0)),
            pl.BlockSpec((2, Cout_p), lambda n, t: (0, 0)),
        ),
        compiler_params=pltpu.CompilerParams(
            dimension_semantics=("arbitrary", "arbitrary"),
            vmem_limit_bytes=_VMEM_LIMIT),
    )(x_sh, x_sh, w_p, b_p)

    # ---- batch statistics -> affine scale/shift (tiny, plain XLA).
    count = float(N * H * W)
    mean = stats[0] / count
    var = jnp.maximum(stats[1] / count - mean * mean, 0.0)   # biased variance
    scale = g_p[0] * lax.rsqrt(var + EPS)
    shift = beta_p[0] - mean * scale

    # ---- pass 2: normalize + affine + zero border columns ("parallel" grid).
    zf = z.reshape(N * Lout, Cout_p)
    TQ2 = _pick_flat_tile(N * Lout, Cout_p)
    kern2 = functools.partial(_bn_affine_kernel, S=S, W=W, TQ=TQ2)
    a = pl.pallas_call(
        kern2,
        out_shape=jax.ShapeDtypeStruct((N * Lout, Cout_p), jnp.float32),
        grid=(N * Lout // TQ2,),
        in_specs=[
            pl.BlockSpec((TQ2, Cout_p), lambda i: (i, 0)),
            pl.BlockSpec((1, Cout_p), lambda i: (0, 0)),
            pl.BlockSpec((1, Cout_p), lambda i: (0, 0)),
        ],
        out_specs=pl.BlockSpec((TQ2, Cout_p), lambda i: (i, 0)),
        compiler_params=pltpu.CompilerParams(
            dimension_semantics=("parallel",),
            vmem_limit_bytes=_VMEM_LIMIT),
    )(zf, scale.reshape(1, Cout_p), shift.reshape(1, Cout_p))
    return a.reshape(N, Lout, Cout_p)


# ----------------------------------------------------------------------------
# MaxPool2d(2, 2)
# ----------------------------------------------------------------------------
def maxpool2x2(x):
    """x: (N, H, W, C_p) channel-padded NHWC."""
    N, H, W, C = x.shape
    H2, W2 = H // 2, W // 2
    x = x[:, :2 * H2, :2 * W2, :]              # floor odd sizes like PyTorch
    xr = x.reshape(N, H2, 2, W2, 2 * C)        # free, layout-compatible
    bh = _pick_pool_tile(H2, W2, C)
    return pl.pallas_call(
        functools.partial(_maxpool_kernel, C=C),
        out_shape=jax.ShapeDtypeStruct((N, H2, W2, C), jnp.float32),
        grid=(N, H2 // bh),
        in_specs=[pl.BlockSpec((None, bh, 2, W2, 2 * C),
                               lambda n, i: (n, i, 0, 0, 0))],
        out_specs=pl.BlockSpec((None, bh, W2, C),
                               lambda n, i: (n, i, 0, 0)),
        compiler_params=pltpu.CompilerParams(
            dimension_semantics=("parallel", "parallel"),
            vmem_limit_bytes=_VMEM_LIMIT),
    )(xr)


# ----------------------------------------------------------------------------
# blocks / encoder
# ----------------------------------------------------------------------------
def conv_block(x_nhwc, p):
    """UNetConvblock: (conv3x3 -> ReLU -> BN) x 2 on channel-padded NHWC."""
    N, H, W, _ = x_nhwc.shape
    S = W + 2
    # conv 1: plain NHWC -> zero-bordered flat layout (single cheap pad).
    xf = jnp.pad(x_nhwc, ((0, 0), (1, 1), (1, 1), (0, 0)))
    xf = xf.reshape(N, (H + 2) * S, x_nhwc.shape[-1])
    a1 = _conv3x3_relu_bn(xf, H, W, p["w1"], p["b1"], p["g1"], p["beta1"])
    # conv 2: side borders are already zero, only add top/bottom border rows.
    a1p = jnp.pad(a1, ((0, 0), (S, S), (0, 0)))
    a2 = _conv3x3_relu_bn(a1p, H, W, p["w2"], p["b2"], p["g2"], p["beta2"])
    # strip the border columns -> plain NHWC (still channel-padded).
    return a2.reshape(N, H, S, -1)[:, :, 1:W + 1, :]


@jax.jit
def unet_encoder_forward(x_nchw, layer_params):
    """Matches UnetEncoder.forward: returns (x, outs), both NCHW."""
    N, C0, H, W = x_nchw.shape
    x = jnp.transpose(x_nchw, (0, 2, 3, 1))                      # -> NHWC
    x = jnp.pad(x, ((0, 0), (0, 0), (0, 0), (0, _ceil_to(C0, LANE) - C0)))
    skips, couts = [], []
    for p in layer_params:
        x = conv_block(x, p)
        skips.append(x)                        # NHWC, channel-padded
        couts.append(p["w2"].shape[-1])
        x = maxpool2x2(x)
    # NCHW + true channel counts only at the API boundary.
    outs = [jnp.transpose(s[..., :c], (0, 3, 1, 2))
            for s, c in zip(skips, couts)]
    return jnp.transpose(x[..., :couts[-1]], (0, 3, 1, 2)), outs


# ----------------------------------------------------------------------------
# deterministic synthetic parameters + pure-JAX reference
# ----------------------------------------------------------------------------
def init_params(key, in_channels, channels):
    layer_params = []
    cin = in_channels
    for cout in channels:
        key, k1, k2, k3, k4 = jax.random.split(key, 5)
        layer_params.append({
            "w1": 0.1 * jax.random.normal(k1, (3, 3, cin, cout), jnp.float32),
            "b1": 0.1 * jax.random.normal(k2, (cout,), jnp.float32),
            "g1": jnp.ones((cout,), jnp.float32),
            "beta1": jnp.zeros((cout,), jnp.float32),
            "w2": 0.1 * jax.random.normal(k3, (3, 3, cout, cout), jnp.float32),
            "b2": 0.1 * jax.random.normal(k4, (cout,), jnp.float32),
            "g2": jnp.ones((cout,), jnp.float32),
            "beta2": jnp.zeros((cout,), jnp.float32),
        })
        cin = cout
    return layer_params


def _reference_forward(x_nchw, layer_params):
    """Pure-JAX f32 reference: (Conv -> ReLU -> BN(train)) x2 + maxpool."""
    def crb(x, w, b, g, beta):
        y = lax.conv_general_dilated(
            x, w, (1, 1), "SAME",
            dimension_numbers=("NHWC", "HWIO", "NHWC"),
            precision=lax.Precision.HIGHEST) + b
        y = jnp.maximum(y, 0.0)
        m = jnp.mean(y, axis=(0, 1, 2))
        v = jnp.mean((y - m) ** 2, axis=(0, 1, 2))
        return g * (y - m) * lax.rsqrt(v + EPS) + beta

    x = jnp.transpose(x_nchw, (0, 2, 3, 1))
    outs = []
    for p in layer_params:
        x = crb(x, p["w1"], p["b1"], p["g1"], p["beta1"])
        x = crb(x, p["w2"], p["b2"], p["g2"], p["beta2"])
        outs.append(jnp.transpose(x, (0, 3, 1, 2)))
        N, H, W, C = x.shape
        x = x.reshape(N, H // 2, 2, W // 2, 2, C).max(axis=(2, 4))
    return jnp.transpose(x, (0, 3, 1, 2)), outs


if __name__ == "__main__":
    key = jax.random.PRNGKey(0)
    k_x, k_p = jax.random.split(key)

    in_channels = 4
    channels = [8, 16]
    x = jax.random.normal(k_x, (2, in_channels, 16, 16), jnp.float32)  # NCHW
    params = init_params(k_p, in_channels, channels)

    final_x, outs = unet_encoder_forward(x, params)
    final_x = jax.block_until_ready(final_x)
    outs = [jax.block_until_ready(o) for o in outs]

    assert final_x.shape == (2, channels[-1], 4, 4), final_x.shape
    assert outs[0].shape == (2, channels[0], 16, 16), outs[0].shape
    assert outs[1].shape == (2, channels[1], 8, 8), outs[1].shape

    # loose sanity check vs a pure-JAX f32 reference (kernel uses bf16 MXU
    # inputs with f32 accumulation, so allow small numeric drift).
    ref_x, ref_outs = _reference_forward(x, params)
    err = float(jnp.max(jnp.abs(final_x - ref_x)))
    for a, b in zip(outs, ref_outs):
        err = max(err, float(jnp.max(jnp.abs(a - b))))
    assert err < 0.3, f"max abs diff vs reference = {err}"

    print("KERNEL_OK")
</pallas_src>

<mosaic_0001>
module attributes {stable_mosaic.version = 11 : i64} {
  func.func @_bn_affine_kernel(%arg0: i32, %arg1: memref<576x128xf32, #tpu.memory_space<vmem>>, %arg2: memref<1x128xf32, #tpu.memory_space<vmem>>, %arg3: memref<1x128xf32, #tpu.memory_space<vmem>>, %arg4: memref<576x128xf32, #tpu.memory_space<vmem>>) attributes {dimension_semantics = [#tpu.dimension_semantics<parallel>], iteration_bounds = array<i64: 1>, scalar_prefetch = 0 : i64, scratch_operands = 0 : i64, tpu.core_type = #tpu.core_type<tc>, window_params = [{transform_indices = @transform_0, window_bounds = array<i64: 576, 128>}, {pipeline_mode = #tpu.pipeline_mode<synchronous>, transform_indices = @transform_1, window_bounds = array<i64: 1, 128>}, {pipeline_mode = #tpu.pipeline_mode<synchronous>, transform_indices = @transform_2, window_bounds = array<i64: 1, 128>}, {transform_indices = @transform_3, window_bounds = array<i64: 576, 128>}]} {
    %c576_i32 = arith.constant 576 : i32
    %0 = arith.muli %arg0, %c576_i32 : i32
    %1 = tpu.iota {dimensions = array<i32: 0>} : vector<576x1xi32>
    %2 = vector.broadcast %0 : i32 to vector<576x1xi32>
    %3 = arith.addi %2, %1 : vector<576x1xi32>
    %c18_i32 = arith.constant 18 : i32
    %c0_i32 = arith.constant 0 : i32
    %4 = arith.cmpi eq, %c18_i32, %c0_i32 : i32
    %c1_i32 = arith.constant 1 : i32
    %5 = arith.select %4, %c1_i32, %c18_i32 : i32
    %6 = vector.broadcast %5 : i32 to vector<576x1xi32>
    %7 = arith.remsi %3, %6 : vector<576x1xi32>
    %c0_i32_0 = arith.constant 0 : i32
    %8 = vector.broadcast %c0_i32_0 : i32 to vector<576x1xi32>
    %9 = arith.cmpi ne, %7, %8 : vector<576x1xi32>
    %c0_i32_1 = arith.constant 0 : i32
    %10 = vector.broadcast %c0_i32_1 : i32 to vector<576x1xi32>
    %11 = arith.cmpi slt, %7, %10 : vector<576x1xi32>
    %c0_i32_2 = arith.constant 0 : i32
    %12 = arith.cmpi slt, %5, %c0_i32_2 : i32
    %13 = vector.broadcast %12 : i1 to vector<576x1xi1>
    %14 = vector.broadcast %13 : vector<576x1xi1> to vector<576x1xi1>
    %15 = arith.xori %11, %14 : vector<576x1xi1>
    %16 = arith.andi %15, %9 : vector<576x1xi1>
    %17 = vector.broadcast %5 : i32 to vector<576x1xi32>
    %18 = arith.addi %7, %17 : vector<576x1xi32>
    %19 = arith.select %16, %18, %7 : vector<576x1xi1>, vector<576x1xi32>
    %c1_i32_3 = arith.constant 1 : i32
    %20 = vector.broadcast %c1_i32_3 : i32 to vector<576x1xi32>
    %21 = arith.cmpi sge, %19, %20 : vector<576x1xi32>
    %c16_i32 = arith.constant 16 : i32
    %22 = vector.broadcast %c16_i32 : i32 to vector<576x1xi32>
    %23 = arith.cmpi sle, %19, %22 : vector<576x1xi32>
    %24 = arith.andi %21, %23 : vector<576x1xi1>
    %25 = arith.extui %24 : vector<576x1xi1> to vector<576x1xi32>
    %26 = arith.sitofp %25 : vector<576x1xi32> to vector<576x1xf32>
    %c0 = arith.constant 0 : index
    %c0_4 = arith.constant 0 : index
    %27 = vector.load %arg1[%c0, %c0_4] : memref<576x128xf32, #tpu.memory_space<vmem>>, vector<576x128xf32>
    %c0_5 = arith.constant 0 : index
    %c0_6 = arith.constant 0 : index
    %28 = vector.load %arg2[%c0_5, %c0_6] : memref<1x128xf32, #tpu.memory_space<vmem>>, vector<1x128xf32>
    %29 = vector.broadcast %28 : vector<1x128xf32> to vector<576x128xf32>
    %30 = arith.mulf %27, %29 : vector<576x128xf32>
    %c0_7 = arith.constant 0 : index
    %c0_8 = arith.constant 0 : index
    %31 = vector.load %arg3[%c0_7, %c0_8] : memref<1x128xf32, #tpu.memory_space<vmem>>, vector<1x128xf32>
    %32 = vector.broadcast %31 : vector<1x128xf32> to vector<576x128xf32>
    %33 = arith.addf %30, %32 : vector<576x128xf32>
    %34 = vector.broadcast %26 : vector<576x1xf32> to vector<576x128xf32>
    %35 = arith.mulf %33, %34 : vector<576x128xf32>
    %c0_9 = arith.constant 0 : index
    %c0_10 = arith.constant 0 : index
    %36 = vector.load %arg4[%c0_9, %c0_10] : memref<576x128xf32, #tpu.memory_space<vmem>>, vector<576x128xf32>
    tpu.vector_store %arg4[%c0_9, %c0_10], %35 {strides = array<i32>} : memref<576x128xf32, #tpu.memory_space<vmem>>, vector<576x128xf32>,
    return
  }
  func.func @transform_0(%arg0: i32) -> (i32, i32) {
    %c0_i32 = arith.constant 0 : i32
    %c0_i32_0 = arith.constant 0 : i32
    return %arg0, %c0_i32 : i32, i32
  }
  func.func @transform_1(%arg0: i32) -> (i32, i32) {
    %c0_i32 = arith.constant 0 : i32
    %c0_i32_0 = arith.constant 0 : i32
    %c0_i32_1 = arith.constant 0 : i32
    return %c0_i32, %c0_i32_0 : i32, i32
  }
  func.func @transform_2(%arg0: i32) -> (i32, i32) {
    %c0_i32 = arith.constant 0 : i32
    %c0_i32_0 = arith.constant 0 : i32
    %c0_i32_1 = arith.constant 0 : i32
    return %c0_i32, %c0_i32_0 : i32, i32
  }
  func.func @transform_3(%arg0: i32) -> (i32, i32) {
    %c0_i32 = arith.constant 0 : i32
    %c0_i32_0 = arith.constant 0 : i32
    return %arg0, %c0_i32 : i32, i32
  }
}

module attributes {stable_mosaic.version = 11 : i64} {
  func.func @_conv_relu_stats_kernel(%arg0: i32, %arg1: i32, %arg2: memref<1x288x128xf32, #tpu.memory_space<vmem>>, %arg3: memref<1x288x128xf32, #tpu.memory_space<vmem>>, %arg4: memref<9x128x128xbf16, #tpu.memory_space<vmem>>, %arg5: memref<1x128xf32, #tpu.memory_space<vmem>>, %arg6: memref<1x288x128xf32, #tpu.memory_space<vmem>>, %arg7: memref<2x128xf32, #tpu.memory_space<vmem>>) attributes {dimension_semantics = [#tpu.dimension_semantics<arbitrary>, #tpu.dimension_semantics<arbitrary>], iteration_bounds = array<i64: 2, 1>, scalar_prefetch = 0 : i64, scratch_operands = 0 : i64, tpu.core_type = #tpu.core_type<tc>, window_params = [{transform_indices = @transform_0, window_bounds = array<i64: 1, 288, 128>}, {transform_indices = @transform_1, window_bounds = array<i64: 1, 288, 128>}, {pipeline_mode = #tpu.pipeline_mode<synchronous>, transform_indices = @transform_2, window_bounds = array<i64: 9, 128, 128>}, {pipeline_mode = #tpu.pipeline_mode<synchronous>, transform_indices = @transform_3, window_bounds = array<i64: 1, 128>}, {transform_indices = @transform_4, window_bounds = array<i64: 1, 288, 128>}, {pipeline_mode = #tpu.pipeline_mode<synchronous>, transform_indices = @transform_5, window_bounds = array<i64: 2, 128>}]} {
    %c0 = arith.constant 0 : index
    %c0_0 = arith.constant 0 : index
    %c0_1 = arith.constant 0 : index
    %0 = vector.load %arg2[%c0, %c0_0, %c0_1] : memref<1x288x128xf32, #tpu.memory_space<vmem>>, vector<1x288x128xf32>
    %1 = vector.shape_cast %0 : vector<1x288x128xf32> to vector<288x128xf32>
    %c0_2 = arith.constant 0 : index
    %c0_3 = arith.constant 0 : index
    %c0_4 = arith.constant 0 : index
    %2 = vector.load %arg3[%c0_2, %c0_3, %c0_4] : memref<1x288x128xf32, #tpu.memory_space<vmem>>, vector<1x288x128xf32>
    %3 = vector.shape_cast %2 : vector<1x288x128xf32> to vector<288x128xf32>
    %4 = tpu.concatenate %1, %3 in 0 : vector<288x128xf32>, vector<288x128xf32> -> vector<576x128xf32>
    %cst = arith.constant 0.000000e+00 : f32
    %5 = vector.broadcast %cst : f32 to vector<288x128xf32>
    %6 = vector.extract_strided_slice %4 {offsets = [0, 0], sizes = [288, 128], strides = [1, 1]} : vector<576x128xf32> to vector<288x128xf32>
    %7 = arith.truncf %6 : vector<288x128xf32> to vector<288x128xbf16>
    %c0_5 = arith.constant 0 : index
    %c0_6 = arith.constant 0 : index
    %c0_7 = arith.constant 0 : index
    %8 = vector.load %arg4[%c0_5, %c0_6, %c0_7] : memref<9x128x128xbf16, #tpu.memory_space<vmem>>, vector<1x128x128xbf16>
    %9 = vector.shape_cast %8 : vector<1x128x128xbf16> to vector<128x128xbf16>
    %cst_8 = arith.constant dense<0.000000e+00> : vector<288x128xf32>
    %10 = tpu.matmul %7, %9, %cst_8 {dimension_numbers = #tpu.dot_dimension_numbers<[1], [0], [0], [1], [0, 0, 1, 1], [], []>} : vector<288x128xbf16>, vector<128x128xbf16>, vector<288x128xf32> -> vector<288x128xf32>
    %11 = arith.addf %5, %10 : vector<288x128xf32>
    %12 = vector.extract_strided_slice %4 {offsets = [1, 0], sizes = [288, 128], strides = [1, 1]} : vector<576x128xf32> to vector<288x128xf32>
    %13 = arith.truncf %12 : vector<288x128xf32> to vector<288x128xbf16>
    %c1 = arith.constant 1 : index
    %c0_9 = arith.constant 0 : index
    %c0_10 = arith.constant 0 : index
    %14 = vector.load %arg4[%c1, %c0_9, %c0_10] : memref<9x128x128xbf16, #tpu.memory_space<vmem>>, vector<1x128x128xbf16>
    %15 = vector.shape_cast %14 : vector<1x128x128xbf16> to vector<128x128xbf16>
    %cst_11 = arith.constant dense<0.000000e+00> : vector<288x128xf32>
    %16 = tpu.matmul %13, %15, %cst_11 {dimension_numbers = #tpu.dot_dimension_numbers<[1], [0], [0], [1], [0, 0, 1, 1], [], []>} : vector<288x128xbf16>, vector<128x128xbf16>, vector<288x128xf32> -> vector<288x128xf32>
    %17 = arith.addf %11, %16 : vector<288x128xf32>
    %18 = vector.extract_strided_slice %4 {offsets = [2, 0], sizes = [288, 128], strides = [1, 1]} : vector<576x128xf32> to vector<288x128xf32>
    %19 = arith.truncf %18 : vector<288x128xf32> to vector<288x128xbf16>
    %c2 = arith.constant 2 : index
    %c0_12 = arith.constant 0 : index
    %c0_13 = arith.constant 0 : index
    %20 = vector.load %arg4[%c2, %c0_12, %c0_13] : memref<9x128x128xbf16, #tpu.memory_space<vmem>>, vector<1x128x128xbf16>
    %21 = vector.shape_cast %20 : vector<1x128x128xbf16> to vector<128x128xbf16>
    %cst_14 = arith.constant dense<0.000000e+00> : vector<288x128xf32>
    %22 = tpu.matmul %19, %21, %cst_14 {dimension_numbers = #tpu.dot_dimension_numbers<[1], [0], [0], [1], [0, 0, 1, 1], [], []>} : vector<288x128xbf16>, vector<128x128xbf16>, vector<288x128xf32> -> vector<288x128xf32>
    %23 = arith.addf %17, %22 : vector<288x128xf32>
    %24 = vector.extract_strided_slice %4 {offsets = [18, 0], sizes = [288, 128], strides = [1, 1]} : vector<576x128xf32> to vector<288x128xf32>
    %25 = arith.truncf %24 : vector<288x128xf32> to vector<288x128xbf16>
    %c3 = arith.constant 3 : index
    %c0_15 = arith.constant 0 : index
    %c0_16 = arith.constant 0 : index
    %26 = vector.load %arg4[%c3, %c0_15, %c0_16] : memref<9x128x128xbf16, #tpu.memory_space<vmem>>, vector<1x128x128xbf16>
    %27 = vector.shape_cast %26 : vector<1x128x128xbf16> to vector<128x128xbf16>
    %cst_17 = arith.constant dense<0.000000e+00> : vector<288x128xf32>
    %28 = tpu.matmul %25, %27, %cst_17 {dimension_numbers = #tpu.dot_dimension_numbers<[1], [0], [0], [1], [0, 0, 1, 1], [], []>} : vector<288x128xbf16>, vector<128x128xbf16>, vector<288x128xf32> -> vector<288x128xf32>
    %29 = arith.addf %23, %28 : vector<288x128xf32>
    %30 = vector.extract_strided_slice %4 {offsets = [19, 0], sizes = [288, 128], strides = [1, 1]} : vector<576x128xf32> to vector<288x128xf32>
    %31 = arith.truncf %30 : vector<288x128xf32> to vector<288x128xbf16>
    %c4 = arith.constant 4 : index
    %c0_18 = arith.constant 0 : index
    %c0_19 = arith.constant 0 : index
    %32 = vector.load %arg4[%c4, %c0_18, %c0_19] : memref<9x128x128xbf16, #tpu.memory_space<vmem>>, vector<1x128x128xbf16>
    %33 = vector.shape_cast %32 : vector<1x128x128xbf16> to vector<128x128xbf16>
    %cst_20 = arith.constant dense<0.000000e+00> : vector<288x128xf32>
    %34 = tpu.matmul %31, %33, %cst_20 {dimension_numbers = #tpu.dot_dimension_numbers<[1], [0], [0], [1], [0, 0, 1, 1], [], []>} : vector<288x128xbf16>, vector<128x128xbf16>, vector<288x128xf32> -> vector<288x128xf32>
    %35 = arith.addf %29, %34 : vector<288x128xf32>
    %36 = vector.extract_strided_slice %4 {offsets = [20, 0], sizes = [288, 128], strides = [1, 1]} : vector<576x128xf32> to vector<288x128xf32>
    %37 = arith.truncf %36 : vector<288x128xf32> to vector<288x128xbf16>
    %c5 = arith.constant 5 : index
    %c0_21 = arith.constant 0 : index
    %c0_22 = arith.constant 0 : index
    %38 = vector.load %arg4[%c5, %c0_21, %c0_22] : memref<9x128x128xbf16, #tpu.memory_space<vmem>>, vector<1x128x128xbf16>
    %39 = vector.shape_cast %38 : vector<1x128x128xbf16> to vector<128x128xbf16>
    %cst_23 = arith.constant dense<0.000000e+00> : vector<288x128xf32>
    %40 = tpu.matmul %37, %39, %cst_23 {dimension_numbers = #tpu.dot_dimension_numbers<[1], [0], [0], [1], [0, 0, 1, 1], [], []>} : vector<288x128xbf16>, vector<128x128xbf16>, vector<288x128xf32> -> vector<288x128xf32>
    %41 = arith.addf %35, %40 : vector<288x128xf32>
    %42 = vector.extract_strided_slice %4 {offsets = [36, 0], sizes = [288, 128], strides = [1, 1]} : vector<576x128xf32> to vector<288x128xf32>
    %43 = arith.truncf %42 : vector<288x128xf32> to vector<288x128xbf16>
    %c6 = arith.constant 6 : index
    %c0_24 = arith.constant 0 : index
    %c0_25 = arith.constant 0 : index
    %44 = vector.load %arg4[%c6, %c0_24, %c0_25] : memref<9x128x128xbf16, #tpu.memory_space<vmem>>, vector<1x128x128xbf16>
    %45 = vector.shape_cast %44 : vector<1x128x128xbf16> to vector<128x128xbf16>
    %cst_26 = arith.constant dense<0.000000e+00> : vector<288x128xf32>
    %46 = tpu.matmul %43, %45, %cst_26 {dimension_numbers = #tpu.dot_dimension_numbers<[1], [0], [0], [1], [0, 0, 1, 1], [], []>} : vector<288x128xbf16>, vector<128x128xbf16>, vector<288x128xf32> -> vector<288x128xf32>
    %47 = arith.addf %41, %46 : vector<288x128xf32>
    %48 = vector.extract_strided_slice %4 {offsets = [37, 0], sizes = [288, 128], strides = [1, 1]} : vector<576x128xf32> to vector<288x128xf32>
    %49 = arith.truncf %48 : vector<288x128xf32> to vector<288x128xbf16>
    %c7 = arith.constant 7 : index
    %c0_27 = arith.constant 0 : index
    %c0_28 = arith.constant 0 : index
    %50 = vector.load %arg4[%c7, %c0_27, %c0_28] : memref<9x128x128xbf16, #tpu.memory_space<vmem>>, vector<1x128x128xbf16>
    %51 = vector.shape_cast %50 : vector<1x128x128xbf16> to vector<128x128xbf16>
    %cst_29 = arith.constant dense<0.000000e+00> : vector<288x128xf32>
    %52 = tpu.matmul %49, %51, %cst_29 {dimension_numbers = #tpu.dot_dimension_numbers<[1], [0], [0], [1], [0, 0, 1, 1], [], []>} : vector<288x128xbf16>, vector<128x128xbf16>, vector<288x128xf32> -> vector<288x128xf32>
    %53 = arith.addf %47, %52 : vector<288x128xf32>
    %54 = vector.extract_strided_slice %4 {offsets = [38, 0], sizes = [288, 128], strides = [1, 1]} : vector<576x128xf32> to vector<288x128xf32>
    %55 = arith.truncf %54 : vector<288x128xf32> to vector<288x128xbf16>
    %c8 = arith.constant 8 : index
    %c0_30 = arith.constant 0 : index
    %c0_31 = arith.constant 0 : index
    %56 = vector.load %arg4[%c8, %c0_30, %c0_31] : memref<9x128x128xbf16, #tpu.memory_space<vmem>>, vector<1x128x128xbf16>
    %57 = vector.shape_cast %56 : vector<1x128x128xbf16> to vector<128x128xbf16>
    %cst_32 = arith.constant dense<0.000000e+00> : vector<288x128xf32>
    %58 = tpu.matmul %55, %57, %cst_32 {dimension_numbers = #tpu.dot_dimension_numbers<[1], [0], [0], [1], [0, 0, 1, 1], [], []>} : vector<288x128xbf16>, vector<128x128xbf16>, vector<288x128xf32> -> vector<288x128xf32>
    %59 = arith.addf %53, %58 : vector<288x128xf32>
    %c0_33 = arith.constant 0 : index
    %c0_34 = arith.constant 0 : index
    %60 = vector.load %arg5[%c0_33, %c0_34] : memref<1x128xf32, #tpu.memory_space<vmem>>, vector<1x128xf32>
    %61 = vector.broadcast %60 : vector<1x128xf32> to vector<288x128xf32>
    %62 = arith.addf %59, %61 : vector<288x128xf32>
    %cst_35 = arith.constant 0.000000e+00 : f32
    %63 = vector.broadcast %cst_35 : f32 to vector<288x128xf32>
    %64 = arith.maximumf %62, %63 : vector<288x128xf32>
    %c0_36 = arith.constant 0 : index
    %c0_37 = arith.constant 0 : index
    %c0_38 = arith.constant 0 : index
    %65 = vector.load %arg6[%c0_36, %c0_37, %c0_38] : memref<1x288x128xf32, #tpu.memory_space<vmem>>, vector<1x288x128xf32>
    %66 = vector.shape_cast %65 : vector<1x288x128xf32> to vector<288x128xf32>
    %67 = vector.shape_cast %64 : vector<288x128xf32> to vector<1x288x128xf32>
    tpu.vector_store %arg6[%c0_36, %c0_37, %c0_38], %67 {strides = array<i32>} : memref<1x288x128xf32, #tpu.memory_space<vmem>>, vector<1x288x128xf32>,
    %c288_i32 = arith.constant 288 : i32
    %68 = arith.muli %arg1, %c288_i32 : i32
    %69 = tpu.iota {dimensions = array<i32: 0>} : vector<288x1xi32>
    %70 = vector.broadcast %68 : i32 to vector<288x1xi32>
    %71 = arith.addi %70, %69 : vector<288x1xi32>
    %c18_i32 = arith.constant 18 : i32
    %c0_i32 = arith.constant 0 : i32
    %72 = arith.cmpi eq, %c18_i32, %c0_i32 : i32
    %c1_i32 = arith.constant 1 : i32
    %73 = arith.select %72, %c1_i32, %c18_i32 : i32
    %74 = vector.broadcast %73 : i32 to vector<288x1xi32>
    %75 = arith.remsi %71, %74 : vector<288x1xi32>
    %c0_i32_39 = arith.constant 0 : i32
    %76 = vector.broadcast %c0_i32_39 : i32 to vector<288x1xi32>
    %77 = arith.cmpi ne, %75, %76 : vector<288x1xi32>
    %c0_i32_40 = arith.constant 0 : i32
    %78 = vector.broadcast %c0_i32_40 : i32 to vector<288x1xi32>
    %79 = arith.cmpi slt, %75, %78 : vector<288x1xi32>
    %c0_i32_41 = arith.constant 0 : i32
    %80 = arith.cmpi slt, %73, %c0_i32_41 : i32
    %81 = vector.broadcast %80 : i1 to vector<288x1xi1>
    %82 = vector.broadcast %81 : vector<288x1xi1> to vector<288x1xi1>
    %83 = arith.xori %79, %82 : vector<288x1xi1>
    %84 = arith.andi %83, %77 : vector<288x1xi1>
    %85 = vector.broadcast %73 : i32 to vector<288x1xi32>
    %86 = arith.addi %75, %85 : vector<288x1xi32>
    %87 = arith.select %84, %86, %75 : vector<288x1xi1>, vector<288x1xi32>
    %c1_i32_42 = arith.constant 1 : i32
    %88 = vector.broadcast %c1_i32_42 : i32 to vector<288x1xi32>
    %89 = arith.cmpi sge, %87, %88 : vector<288x1xi32>
    %c16_i32 = arith.constant 16 : i32
    %90 = vector.broadcast %c16_i32 : i32 to vector<288x1xi32>
    %91 = arith.cmpi sle, %87, %90 : vector<288x1xi32>
    %92 = arith.andi %89, %91 : vector<288x1xi1>
    %93 = arith.extui %92 : vector<288x1xi1> to vector<288x1xi32>
    %94 = arith.sitofp %93 : vector<288x1xi32> to vector<288x1xf32>
    %95 = vector.broadcast %94 : vector<288x1xf32> to vector<288x128xf32>
    %96 = arith.mulf %64, %95 : vector<288x128xf32>
    %c0_i32_43 = arith.constant 0 : i32
    %97 = arith.cmpi eq, %arg0, %c0_i32_43 : i32
    %c0_i32_44 = arith.constant 0 : i32
    %98 = arith.cmpi eq, %arg1, %c0_i32_44 : i32
    %99 = arith.andi %97, %98 : i1
    %100 = arith.extui %99 : i1 to i32
    %c0_i32_45 = arith.constant 0 : i32
    %101 = arith.cmpi ne, %100, %c0_i32_45 : i32
    scf.if %101 {
      %cst_52 = arith.constant 0.000000e+00 : f32
      %111 = vector.broadcast %cst_52 : f32 to vector<2x128xf32>
      %c0_53 = arith.constant 0 : index
      %c0_54 = arith.constant 0 : index
      %112 = vector.load %arg7[%c0_53, %c0_54] : memref<2x128xf32, #tpu.memory_space<vmem>>, vector<2x128xf32>
      tpu.vector_store %arg7[%c0_53, %c0_54], %111 {strides = array<i32>} : memref<2x128xf32, #tpu.memory_space<vmem>>, vector<2x128xf32>,
    } else {
    }
    %c0_46 = arith.constant 0 : index
    %c0_47 = arith.constant 0 : index
    %102 = vector.load %arg7[%c0_46, %c0_47] : memref<2x128xf32, #tpu.memory_space<vmem>>, vector<2x128xf32>
    %cst_48 = arith.constant dense<0.000000e+00> : vector<128xf32>
    %103 = vector.multi_reduction <add>, %96, %cst_48 [0] : vector<288x128xf32> to vector<128xf32>
    %104 = vector.shape_cast %103 : vector<128xf32> to vector<1x128xf32>
    %105 = arith.mulf %96, %96 : vector<288x128xf32>
    %cst_49 = arith.constant dense<0.000000e+00> : vector<128xf32>
    %106 = vector.multi_reduction <add>, %105, %cst_49 [0] : vector<288x128xf32> to vector<128xf32>
    %107 = vector.shape_cast %106 : vector<128xf32> to vector<1x128xf32>
    %108 = tpu.concatenate %104, %107 in 0 : vector<1x128xf32>, vector<1x128xf32> -> vector<2x128xf32>
    %109 = arith.addf %102, %108 : vector<2x128xf32>
    %c0_50 = arith.constant 0 : index
    %c0_51 = arith.constant 0 : index
    %110 = vector.load %arg7[%c0_50, %c0_51] : memref<2x128xf32, #tpu.memory_space<vmem>>, vector<2x128xf32>
    tpu.vector_store %arg7[%c0_50, %c0_51], %109 {strides = array<i32>} : memref<2x128xf32, #tpu.memory_space<vmem>>, vector<2x128xf32>,
    return
  }
  func.func @transform_0(%arg0: i32, %arg1: i32) -> (i32, i32, i32) {
    %c0_i32 = arith.constant 0 : i32
    %c0_i32_0 = arith.constant 0 : i32
    return %arg0, %arg1, %c0_i32 : i32, i32, i32
  }
  func.func @transform_1(%arg0: i32, %arg1: i32) -> (i32, i32, i32) {
    %c1_i32 = arith.constant 1 : i32
    %0 = arith.addi %arg1, %c1_i32 : i32
    %c0_i32 = arith.constant 0 : i32
    %c0_i32_0 = arith.constant 0 : i32
    return %arg0, %0, %c0_i32 : i32, i32, i32
  }
  func.func @transform_2(%arg0: i32, %arg1: i32) -> (i32, i32, i32) {
    %c0_i32 = arith.constant 0 : i32
    %c0_i32_0 = arith.constant 0 : i32
    %c0_i32_1 = arith.constant 0 : i32
    %c0_i32_2 = arith.constant 0 : i32
    return %c0_i32, %c0_i32_0, %c0_i32_1 : i32, i32, i32
  }
  func.func @transform_3(%arg0: i32, %arg1: i32) -> (i32, i32) {
    %c0_i32 = arith.constant 0 : i32
    %c0_i32_0 = arith.constant 0 : i32
    %c0_i32_1 = arith.constant 0 : i32
    return %c0_i32, %c0_i32_0 : i32, i32
  }
  func.func @transform_4(%arg0: i32, %arg1: i32) -> (i32, i32, i32) {
    %c0_i32 = arith.constant 0 : i32
    %c0_i32_0 = arith.constant 0 : i32
    return %arg0, %arg1, %c0_i32 : i32, i32, i32
  }
  func.func @transform_5(%arg0: i32, %arg1: i32) -> (i32, i32) {
    %c0_i32 = arith.constant 0 : i32
    %c0_i32_0 = arith.constant 0 : i32
    %c0_i32_1 = arith.constant 0 : i32
    return %c0_i32, %c0_i32_0 : i32, i32
  }
}

module attributes {stable_mosaic.version = 11 : i64} {
  func.func @_maxpool_kernel(%arg0: i32, %arg1: i32, %arg2: memref<1x8x2x8x256xf32, #tpu.memory_space<vmem>>, %arg3: memref<1x8x8x128xf32, #tpu.memory_space<vmem>>) attributes {dimension_semantics = [#tpu.dimension_semantics<parallel>, #tpu.dimension_semantics<parallel>], iteration_bounds = array<i64: 2, 1>, scalar_prefetch = 0 : i64, scratch_operands = 0 : i64, tpu.core_type = #tpu.core_type<tc>, window_params = [{transform_indices = @transform_0, window_bounds = array<i64: 1, 8, 2, 8, 256>}, {transform_indices = @transform_1, window_bounds = array<i64: 1, 8, 8, 128>}]} {
    %c0 = arith.constant 0 : index
    %c0_0 = arith.constant 0 : index
    %c0_1 = arith.constant 0 : index
    %c0_2 = arith.constant 0 : index
    %c0_3 = arith.constant 0 : index
    %0 = vector.load %arg2[%c0, %c0_0, %c0_1, %c0_2, %c0_3] : memref<1x8x2x8x256xf32, #tpu.memory_space<vmem>>, vector<1x8x2x8x256xf32>
    %1 = vector.shape_cast %0 : vector<1x8x2x8x256xf32> to vector<8x2x8x256xf32>
    %2 = vector.extract_strided_slice %1 {offsets = [0, 0, 0, 0], sizes = [8, 1, 8, 256], strides = [1, 1, 1, 1]} : vector<8x2x8x256xf32> to vector<8x1x8x256xf32>
    %3 = vector.shape_cast %2 : vector<8x1x8x256xf32> to vector<8x8x256xf32>
    %4 = vector.extract_strided_slice %1 {offsets = [0, 1, 0, 0], sizes = [8, 1, 8, 256], strides = [1, 1, 1, 1]} : vector<8x2x8x256xf32> to vector<8x1x8x256xf32>
    %5 = vector.shape_cast %4 : vector<8x1x8x256xf32> to vector<8x8x256xf32>
    %6 = arith.maximumf %3, %5 : vector<8x8x256xf32>
    %7 = vector.extract_strided_slice %6 {offsets = [0, 0, 0], sizes = [8, 8, 128], strides = [1, 1, 1]} : vector<8x8x256xf32> to vector<8x8x128xf32>
    %8 = vector.extract_strided_slice %6 {offsets = [0, 0, 128], sizes = [8, 8, 128], strides = [1, 1, 1]} : vector<8x8x256xf32> to vector<8x8x128xf32>
    %9 = arith.maximumf %7, %8 : vector<8x8x128xf32>
    %c0_4 = arith.constant 0 : index
    %c0_5 = arith.constant 0 : index
    %c0_6 = arith.constant 0 : index
    %c0_7 = arith.constant 0 : index
    %10 = vector.load %arg3[%c0_4, %c0_5, %c0_6, %c0_7] : memref<1x8x8x128xf32, #tpu.memory_space<vmem>>, vector<1x8x8x128xf32>
    %11 = vector.shape_cast %10 : vector<1x8x8x128xf32> to vector<8x8x128xf32>
    %12 = vector.shape_cast %9 : vector<8x8x128xf32> to vector<1x8x8x128xf32>
    tpu.vector_store %arg3[%c0_4, %c0_5, %c0_6, %c0_7], %12 {strides = array<i32>} : memref<1x8x8x128xf32, #tpu.memory_space<vmem>>, vector<1x8x8x128xf32>,
    return
  }
  func.func @transform_0(%arg0: i32, %arg1: i32) -> (i32, i32, i32, i32, i32) {
    %c0_i32 = arith.constant 0 : i32
    %c0_i32_0 = arith.constant 0 : i32
    %c0_i32_1 = arith.constant 0 : i32
    %c0_i32_2 = arith.constant 0 : i32
    return %arg0, %arg1, %c0_i32, %c0_i32_0, %c0_i32_1 : i32, i32, i32, i32, i32
  }
  func.func @transform_1(%arg0: i32, %arg1: i32) -> (i32, i32, i32, i32) {
    %c0_i32 = arith.constant 0 : i32
    %c0_i32_0 = arith.constant 0 : i32
    %c0_i32_1 = arith.constant 0 : i32
    return %arg0, %arg1, %c0_i32, %c0_i32_0 : i32, i32, i32, i32
  }
}

module attributes {stable_mosaic.version = 11 : i64} {
  func.func @_conv_relu_stats_kernel(%arg0: i32, %arg1: i32, %arg2: memref<1x80x128xf32, #tpu.memory_space<vmem>>, %arg3: memref<1x80x128xf32, #tpu.memory_space<vmem>>, %arg4: memref<9x128x128xbf16, #tpu.memory_space<vmem>>, %arg5: memref<1x128xf32, #tpu.memory_space<vmem>>, %arg6: memref<1x80x128xf32, #tpu.memory_space<vmem>>, %arg7: memref<2x128xf32, #tpu.memory_space<vmem>>) attributes {dimension_semantics = [#tpu.dimension_semantics<arbitrary>, #tpu.dimension_semantics<arbitrary>], iteration_bounds = array<i64: 2, 1>, scalar_prefetch = 0 : i64, scratch_operands = 0 : i64, tpu.core_type = #tpu.core_type<tc>, window_params = [{transform_indices = @transform_0, window_bounds = array<i64: 1, 80, 128>}, {transform_indices = @transform_1, window_bounds = array<i64: 1, 80, 128>}, {pipeline_mode = #tpu.pipeline_mode<synchronous>, transform_indices = @transform_2, window_bounds = array<i64: 9, 128, 128>}, {pipeline_mode = #tpu.pipeline_mode<synchronous>, transform_indices = @transform_3, window_bounds = array<i64: 1, 128>}, {transform_indices = @transform_4, window_bounds = array<i64: 1, 80, 128>}, {pipeline_mode = #tpu.pipeline_mode<synchronous>, transform_indices = @transform_5, window_bounds = array<i64: 2, 128>}]} {
    %c0 = arith.constant 0 : index
    %c0_0 = arith.constant 0 : index
    %c0_1 = arith.constant 0 : index
    %0 = vector.load %arg2[%c0, %c0_0, %c0_1] : memref<1x80x128xf32, #tpu.memory_space<vmem>>, vector<1x80x128xf32>
    %1 = vector.shape_cast %0 : vector<1x80x128xf32> to vector<80x128xf32>
    %c0_2 = arith.constant 0 : index
    %c0_3 = arith.constant 0 : index
    %c0_4 = arith.constant 0 : index
    %2 = vector.load %arg3[%c0_2, %c0_3, %c0_4] : memref<1x80x128xf32, #tpu.memory_space<vmem>>, vector<1x80x128xf32>
    %3 = vector.shape_cast %2 : vector<1x80x128xf32> to vector<80x128xf32>
    %4 = tpu.concatenate %1, %3 in 0 : vector<80x128xf32>, vector<80x128xf32> -> vector<160x128xf32>
    %cst = arith.constant 0.000000e+00 : f32
    %5 = vector.broadcast %cst : f32 to vector<80x128xf32>
    %6 = vector.extract_strided_slice %4 {offsets = [0, 0], sizes = [80, 128], strides = [1, 1]} : vector<160x128xf32> to vector<80x128xf32>
    %7 = arith.truncf %6 : vector<80x128xf32> to vector<80x128xbf16>
    %c0_5 = arith.constant 0 : index
    %c0_6 = arith.constant 0 : index
    %c0_7 = arith.constant 0 : index
    %8 = vector.load %arg4[%c0_5, %c0_6, %c0_7] : memref<9x128x128xbf16, #tpu.memory_space<vmem>>, vector<1x128x128xbf16>
    %9 = vector.shape_cast %8 : vector<1x128x128xbf16> to vector<128x128xbf16>
    %cst_8 = arith.constant dense<0.000000e+00> : vector<80x128xf32>
    %10 = tpu.matmul %7, %9, %cst_8 {dimension_numbers = #tpu.dot_dimension_numbers<[1], [0], [0], [1], [0, 0, 1, 1], [], []>} : vector<80x128xbf16>, vector<128x128xbf16>, vector<80x128xf32> -> vector<80x128xf32>
    %11 = arith.addf %5, %10 : vector<80x128xf32>
    %12 = vector.extract_strided_slice %4 {offsets = [1, 0], sizes = [80, 128], strides = [1, 1]} : vector<160x128xf32> to vector<80x128xf32>
    %13 = arith.truncf %12 : vector<80x128xf32> to vector<80x128xbf16>
    %c1 = arith.constant 1 : index
    %c0_9 = arith.constant 0 : index
    %c0_10 = arith.constant 0 : index
    %14 = vector.load %arg4[%c1, %c0_9, %c0_10] : memref<9x128x128xbf16, #tpu.memory_space<vmem>>, vector<1x128x128xbf16>
    %15 = vector.shape_cast %14 : vector<1x128x128xbf16> to vector<128x128xbf16>
    %cst_11 = arith.constant dense<0.000000e+00> : vector<80x128xf32>
    %16 = tpu.matmul %13, %15, %cst_11 {dimension_numbers = #tpu.dot_dimension_numbers<[1], [0], [0], [1], [0, 0, 1, 1], [], []>} : vector<80x128xbf16>, vector<128x128xbf16>, vector<80x128xf32> -> vector<80x128xf32>
    %17 = arith.addf %11, %16 : vector<80x128xf32>
    %18 = vector.extract_strided_slice %4 {offsets = [2, 0], sizes = [80, 128], strides = [1, 1]} : vector<160x128xf32> to vector<80x128xf32>
    %19 = arith.truncf %18 : vector<80x128xf32> to vector<80x128xbf16>
    %c2 = arith.constant 2 : index
    %c0_12 = arith.constant 0 : index
    %c0_13 = arith.constant 0 : index
    %20 = vector.load %arg4[%c2, %c0_12, %c0_13] : memref<9x128x128xbf16, #tpu.memory_space<vmem>>, vector<1x128x128xbf16>
    %21 = vector.shape_cast %20 : vector<1x128x128xbf16> to vector<128x128xbf16>
    %cst_14 = arith.constant dense<0.000000e+00> : vector<80x128xf32>
    %22 = tpu.matmul %19, %21, %cst_14 {dimension_numbers = #tpu.dot_dimension_numbers<[1], [0], [0], [1], [0, 0, 1, 1], [], []>} : vector<80x128xbf16>, vector<128x128xbf16>, vector<80x128xf32> -> vector<80x128xf32>
    %23 = arith.addf %17, %22 : vector<80x128xf32>
    %24 = vector.extract_strided_slice %4 {offsets = [10, 0], sizes = [80, 128], strides = [1, 1]} : vector<160x128xf32> to vector<80x128xf32>
    %25 = arith.truncf %24 : vector<80x128xf32> to vector<80x128xbf16>
    %c3 = arith.constant 3 : index
    %c0_15 = arith.constant 0 : index
    %c0_16 = arith.constant 0 : index
    %26 = vector.load %arg4[%c3, %c0_15, %c0_16] : memref<9x128x128xbf16, #tpu.memory_space<vmem>>, vector<1x128x128xbf16>
    %27 = vector.shape_cast %26 : vector<1x128x128xbf16> to vector<128x128xbf16>
    %cst_17 = arith.constant dense<0.000000e+00> : vector<80x128xf32>
    %28 = tpu.matmul %25, %27, %cst_17 {dimension_numbers = #tpu.dot_dimension_numbers<[1], [0], [0], [1], [0, 0, 1, 1], [], []>} : vector<80x128xbf16>, vector<128x128xbf16>, vector<80x128xf32> -> vector<80x128xf32>
    %29 = arith.addf %23, %28 : vector<80x128xf32>
    %30 = vector.extract_strided_slice %4 {offsets = [11, 0], sizes = [80, 128], strides = [1, 1]} : vector<160x128xf32> to vector<80x128xf32>
    %31 = arith.truncf %30 : vector<80x128xf32> to vector<80x128xbf16>
    %c4 = arith.constant 4 : index
    %c0_18 = arith.constant 0 : index
    %c0_19 = arith.constant 0 : index
    %32 = vector.load %arg4[%c4, %c0_18, %c0_19] : memref<9x128x128xbf16, #tpu.memory_space<vmem>>, vector<1x128x128xbf16>
    %33 = vector.shape_cast %32 : vector<1x128x128xbf16> to vector<128x128xbf16>
    %cst_20 = arith.constant dense<0.000000e+00> : vector<80x128xf32>
    %34 = tpu.matmul %31, %33, %cst_20 {dimension_numbers = #tpu.dot_dimension_numbers<[1], [0], [0], [1], [0, 0, 1, 1], [], []>} : vector<80x128xbf16>, vector<128x128xbf16>, vector<80x128xf32> -> vector<80x128xf32>
    %35 = arith.addf %29, %34 : vector<80x128xf32>
    %36 = vector.extract_strided_slice %4 {offsets = [12, 0], sizes = [80, 128], strides = [1, 1]} : vector<160x128xf32> to vector<80x128xf32>
    %37 = arith.truncf %36 : vector<80x128xf32> to vector<80x128xbf16>
    %c5 = arith.constant 5 : index
    %c0_21 = arith.constant 0 : index
    %c0_22 = arith.constant 0 : index
    %38 = vector.load %arg4[%c5, %c0_21, %c0_22] : memref<9x128x128xbf16, #tpu.memory_space<vmem>>, vector<1x128x128xbf16>
    %39 = vector.shape_cast %38 : vector<1x128x128xbf16> to vector<128x128xbf16>
    %cst_23 = arith.constant dense<0.000000e+00> : vector<80x128xf32>
    %40 = tpu.matmul %37, %39, %cst_23 {dimension_numbers = #tpu.dot_dimension_numbers<[1], [0], [0], [1], [0, 0, 1, 1], [], []>} : vector<80x128xbf16>, vector<128x128xbf16>, vector<80x128xf32> -> vector<80x128xf32>
    %41 = arith.addf %35, %40 : vector<80x128xf32>
    %42 = vector.extract_strided_slice %4 {offsets = [20, 0], sizes = [80, 128], strides = [1, 1]} : vector<160x128xf32> to vector<80x128xf32>
    %43 = arith.truncf %42 : vector<80x128xf32> to vector<80x128xbf16>
    %c6 = arith.constant 6 : index
    %c0_24 = arith.constant 0 : index
    %c0_25 = arith.constant 0 : index
    %44 = vector.load %arg4[%c6, %c0_24, %c0_25] : memref<9x128x128xbf16, #tpu.memory_space<vmem>>, vector<1x128x128xbf16>
    %45 = vector.shape_cast %44 : vector<1x128x128xbf16> to vector<128x128xbf16>
    %cst_26 = arith.constant dense<0.000000e+00> : vector<80x128xf32>
    %46 = tpu.matmul %43, %45, %cst_26 {dimension_numbers = #tpu.dot_dimension_numbers<[1], [0], [0], [1], [0, 0, 1, 1], [], []>} : vector<80x128xbf16>, vector<128x128xbf16>, vector<80x128xf32> -> vector<80x128xf32>
    %47 = arith.addf %41, %46 : vector<80x128xf32>
    %48 = vector.extract_strided_slice %4 {offsets = [21, 0], sizes = [80, 128], strides = [1, 1]} : vector<160x128xf32> to vector<80x128xf32>
    %49 = arith.truncf %48 : vector<80x128xf32> to vector<80x128xbf16>
    %c7 = arith.constant 7 : index
    %c0_27 = arith.constant 0 : index
    %c0_28 = arith.constant 0 : index
    %50 = vector.load %arg4[%c7, %c0_27, %c0_28] : memref<9x128x128xbf16, #tpu.memory_space<vmem>>, vector<1x128x128xbf16>
    %51 = vector.shape_cast %50 : vector<1x128x128xbf16> to vector<128x128xbf16>
    %cst_29 = arith.constant dense<0.000000e+00> : vector<80x128xf32>
    %52 = tpu.matmul %49, %51, %cst_29 {dimension_numbers = #tpu.dot_dimension_numbers<[1], [0], [0], [1], [0, 0, 1, 1], [], []>} : vector<80x128xbf16>, vector<128x128xbf16>, vector<80x128xf32> -> vector<80x128xf32>
    %53 = arith.addf %47, %52 : vector<80x128xf32>
    %54 = vector.extract_strided_slice %4 {offsets = [22, 0], sizes = [80, 128], strides = [1, 1]} : vector<160x128xf32> to vector<80x128xf32>
    %55 = arith.truncf %54 : vector<80x128xf32> to vector<80x128xbf16>
    %c8 = arith.constant 8 : index
    %c0_30 = arith.constant 0 : index
    %c0_31 = arith.constant 0 : index
    %56 = vector.load %arg4[%c8, %c0_30, %c0_31] : memref<9x128x128xbf16, #tpu.memory_space<vmem>>, vector<1x128x128xbf16>
    %57 = vector.shape_cast %56 : vector<1x128x128xbf16> to vector<128x128xbf16>
    %cst_32 = arith.constant dense<0.000000e+00> : vector<80x128xf32>
    %58 = tpu.matmul %55, %57, %cst_32 {dimension_numbers = #tpu.dot_dimension_numbers<[1], [0], [0], [1], [0, 0, 1, 1], [], []>} : vector<80x128xbf16>, vector<128x128xbf16>, vector<80x128xf32> -> vector<80x128xf32>
    %59 = arith.addf %53, %58 : vector<80x128xf32>
    %c0_33 = arith.constant 0 : index
    %c0_34 = arith.constant 0 : index
    %60 = vector.load %arg5[%c0_33, %c0_34] : memref<1x128xf32, #tpu.memory_space<vmem>>, vector<1x128xf32>
    %61 = vector.broadcast %60 : vector<1x128xf32> to vector<80x128xf32>
    %62 = arith.addf %59, %61 : vector<80x128xf32>
    %cst_35 = arith.constant 0.000000e+00 : f32
    %63 = vector.broadcast %cst_35 : f32 to vector<80x128xf32>
    %64 = arith.maximumf %62, %63 : vector<80x128xf32>
    %c0_36 = arith.constant 0 : index
    %c0_37 = arith.constant 0 : index
    %c0_38 = arith.constant 0 : index
    %65 = vector.load %arg6[%c0_36, %c0_37, %c0_38] : memref<1x80x128xf32, #tpu.memory_space<vmem>>, vector<1x80x128xf32>
    %66 = vector.shape_cast %65 : vector<1x80x128xf32> to vector<80x128xf32>
    %67 = vector.shape_cast %64 : vector<80x128xf32> to vector<1x80x128xf32>
    tpu.vector_store %arg6[%c0_36, %c0_37, %c0_38], %67 {strides = array<i32>} : memref<1x80x128xf32, #tpu.memory_space<vmem>>, vector<1x80x128xf32>,
    %c80_i32 = arith.constant 80 : i32
    %68 = arith.muli %arg1, %c80_i32 : i32
    %69 = tpu.iota {dimensions = array<i32: 0>} : vector<80x1xi32>
    %70 = vector.broadcast %68 : i32 to vector<80x1xi32>
    %71 = arith.addi %70, %69 : vector<80x1xi32>
    %c10_i32 = arith.constant 10 : i32
    %c0_i32 = arith.constant 0 : i32
    %72 = arith.cmpi eq, %c10_i32, %c0_i32 : i32
    %c1_i32 = arith.constant 1 : i32
    %73 = arith.select %72, %c1_i32, %c10_i32 : i32
    %74 = vector.broadcast %73 : i32 to vector<80x1xi32>
    %75 = arith.remsi %71, %74 : vector<80x1xi32>
    %c0_i32_39 = arith.constant 0 : i32
    %76 = vector.broadcast %c0_i32_39 : i32 to vector<80x1xi32>
    %77 = arith.cmpi ne, %75, %76 : vector<80x1xi32>
    %c0_i32_40 = arith.constant 0 : i32
    %78 = vector.broadcast %c0_i32_40 : i32 to vector<80x1xi32>
    %79 = arith.cmpi slt, %75, %78 : vector<80x1xi32>
    %c0_i32_41 = arith.constant 0 : i32
    %80 = arith.cmpi slt, %73, %c0_i32_41 : i32
    %81 = vector.broadcast %80 : i1 to vector<80x1xi1>
    %82 = vector.broadcast %81 : vector<80x1xi1> to vector<80x1xi1>
    %83 = arith.xori %79, %82 : vector<80x1xi1>
    %84 = arith.andi %83, %77 : vector<80x1xi1>
    %85 = vector.broadcast %73 : i32 to vector<80x1xi32>
    %86 = arith.addi %75, %85 : vector<80x1xi32>
    %87 = arith.select %84, %86, %75 : vector<80x1xi1>, vector<80x1xi32>
    %c1_i32_42 = arith.constant 1 : i32
    %88 = vector.broadcast %c1_i32_42 : i32 to vector<80x1xi32>
    %89 = arith.cmpi sge, %87, %88 : vector<80x1xi32>
    %c8_i32 = arith.constant 8 : i32
    %90 = vector.broadcast %c8_i32 : i32 to vector<80x1xi32>
    %91 = arith.cmpi sle, %87, %90 : vector<80x1xi32>
    %92 = arith.andi %89, %91 : vector<80x1xi1>
    %93 = arith.extui %92 : vector<80x1xi1> to vector<80x1xi32>
    %94 = arith.sitofp %93 : vector<80x1xi32> to vector<80x1xf32>
    %95 = vector.broadcast %94 : vector<80x1xf32> to vector<80x128xf32>
    %96 = arith.mulf %64, %95 : vector<80x128xf32>
    %c0_i32_43 = arith.constant 0 : i32
    %97 = arith.cmpi eq, %arg0, %c0_i32_43 : i32
    %c0_i32_44 = arith.constant 0 : i32
    %98 = arith.cmpi eq, %arg1, %c0_i32_44 : i32
    %99 = arith.andi %97, %98 : i1
    %100 = arith.extui %99 : i1 to i32
    %c0_i32_45 = arith.constant 0 : i32
    %101 = arith.cmpi ne, %100, %c0_i32_45 : i32
    scf.if %101 {
      %cst_52 = arith.constant 0.000000e+00 : f32
      %111 = vector.broadcast %cst_52 : f32 to vector<2x128xf32>
      %c0_53 = arith.constant 0 : index
      %c0_54 = arith.constant 0 : index
      %112 = vector.load %arg7[%c0_53, %c0_54] : memref<2x128xf32, #tpu.memory_space<vmem>>, vector<2x128xf32>
      tpu.vector_store %arg7[%c0_53, %c0_54], %111 {strides = array<i32>} : memref<2x128xf32, #tpu.memory_space<vmem>>, vector<2x128xf32>,
    } else {
    }
    %c0_46 = arith.constant 0 : index
    %c0_47 = arith.constant 0 : index
    %102 = vector.load %arg7[%c0_46, %c0_47] : memref<2x128xf32, #tpu.memory_space<vmem>>, vector<2x128xf32>
    %cst_48 = arith.constant dense<0.000000e+00> : vector<128xf32>
    %103 = vector.multi_reduction <add>, %96, %cst_48 [0] : vector<80x128xf32> to vector<128xf32>
    %104 = vector.shape_cast %103 : vector<128xf32> to vector<1x128xf32>
    %105 = arith.mulf %96, %96 : vector<80x128xf32>
    %cst_49 = arith.constant dense<0.000000e+00> : vector<128xf32>
    %106 = vector.multi_reduction <add>, %105, %cst_49 [0] : vector<80x128xf32> to vector<128xf32>
    %107 = vector.shape_cast %106 : vector<128xf32> to vector<1x128xf32>
    %108 = tpu.concatenate %104, %107 in 0 : vector<1x128xf32>, vector<1x128xf32> -> vector<2x128xf32>
    %109 = arith.addf %102, %108 : vector<2x128xf32>
    %c0_50 = arith.constant 0 : index
    %c0_51 = arith.constant 0 : index
    %110 = vector.load %arg7[%c0_50, %c0_51] : memref<2x128xf32, #tpu.memory_space<vmem>>, vector<2x128xf32>
    tpu.vector_store %arg7[%c0_50, %c0_51], %109 {strides = array<i32>} : memref<2x128xf32, #tpu.memory_space<vmem>>, vector<2x128xf32>,
    return
  }
  func.func @transform_0(%arg0: i32, %arg1: i32) -> (i32, i32, i32) {
    %c0_i32 = arith.constant 0 : i32
    %c0_i32_0 = arith.constant 0 : i32
    return %arg0, %arg1, %c0_i32 : i32, i32, i32
  }
  func.func @transform_1(%arg0: i32, %arg1: i32) -> (i32, i32, i32) {
    %c1_i32 = arith.constant 1 : i32
    %0 = arith.addi %arg1, %c1_i32 : i32
    %c0_i32 = arith.constant 0 : i32
    %c0_i32_0 = arith.constant 0 : i32
    return %arg0, %0, %c0_i32 : i32, i32, i32
  }
  func.func @transform_2(%arg0: i32, %arg1: i32) -> (i32, i32, i32) {
    %c0_i32 = arith.constant 0 : i32
    %c0_i32_0 = arith.constant 0 : i32
    %c0_i32_1 = arith.constant 0 : i32
    %c0_i32_2 = arith.constant 0 : i32
    return %c0_i32, %c0_i32_0, %c0_i32_1 : i32, i32, i32
  }
  func.func @transform_3(%arg0: i32, %arg1: i32) -> (i32, i32) {
    %c0_i32 = arith.constant 0 : i32
    %c0_i32_0 = arith.constant 0 : i32
    %c0_i32_1 = arith.constant 0 : i32
    return %c0_i32, %c0_i32_0 : i32, i32
  }
  func.func @transform_4(%arg0: i32, %arg1: i32) -> (i32, i32, i32) {
    %c0_i32 = arith.constant 0 : i32
    %c0_i32_0 = arith.constant 0 : i32
    return %arg0, %arg1, %c0_i32 : i32, i32, i32
  }
  func.func @transform_5(%arg0: i32, %arg1: i32) -> (i32, i32) {
    %c0_i32 = arith.constant 0 : i32
    %c0_i32_0 = arith.constant 0 : i32
    %c0_i32_1 = arith.constant 0 : i32
    return %c0_i32, %c0_i32_0 : i32, i32
  }
}

module attributes {stable_mosaic.version = 11 : i64} {
  func.func @_bn_affine_kernel(%arg0: i32, %arg1: memref<160x128xf32, #tpu.memory_space<vmem>>, %arg2: memref<1x128xf32, #tpu.memory_space<vmem>>, %arg3: memref<1x128xf32, #tpu.memory_space<vmem>>, %arg4: memref<160x128xf32, #tpu.memory_space<vmem>>) attributes {dimension_semantics = [#tpu.dimension_semantics<parallel>], iteration_bounds = array<i64: 1>, scalar_prefetch = 0 : i64, scratch_operands = 0 : i64, tpu.core_type = #tpu.core_type<tc>, window_params = [{transform_indices = @transform_0, window_bounds = array<i64: 160, 128>}, {pipeline_mode = #tpu.pipeline_mode<synchronous>, transform_indices = @transform_1, window_bounds = array<i64: 1, 128>}, {pipeline_mode = #tpu.pipeline_mode<synchronous>, transform_indices = @transform_2, window_bounds = array<i64: 1, 128>}, {transform_indices = @transform_3, window_bounds = array<i64: 160, 128>}]} {
    %c160_i32 = arith.constant 160 : i32
    %0 = arith.muli %arg0, %c160_i32 : i32
    %1 = tpu.iota {dimensions = array<i32: 0>} : vector<160x1xi32>
    %2 = vector.broadcast %0 : i32 to vector<160x1xi32>
    %3 = arith.addi %2, %1 : vector<160x1xi32>
    %c10_i32 = arith.constant 10 : i32
    %c0_i32 = arith.constant 0 : i32
    %4 = arith.cmpi eq, %c10_i32, %c0_i32 : i32
    %c1_i32 = arith.constant 1 : i32
    %5 = arith.select %4, %c1_i32, %c10_i32 : i32
    %6 = vector.broadcast %5 : i32 to vector<160x1xi32>
    %7 = arith.remsi %3, %6 : vector<160x1xi32>
    %c0_i32_0 = arith.constant 0 : i32
    %8 = vector.broadcast %c0_i32_0 : i32 to vector<160x1xi32>
    %9 = arith.cmpi ne, %7, %8 : vector<160x1xi32>
    %c0_i32_1 = arith.constant 0 : i32
    %10 = vector.broadcast %c0_i32_1 : i32 to vector<160x1xi32>
    %11 = arith.cmpi slt, %7, %10 : vector<160x1xi32>
    %c0_i32_2 = arith.constant 0 : i32
    %12 = arith.cmpi slt, %5, %c0_i32_2 : i32
    %13 = vector.broadcast %12 : i1 to vector<160x1xi1>
    %14 = vector.broadcast %13 : vector<160x1xi1> to vector<160x1xi1>
    %15 = arith.xori %11, %14 : vector<160x1xi1>
    %16 = arith.andi %15, %9 : vector<160x1xi1>
    %17 = vector.broadcast %5 : i32 to vector<160x1xi32>
    %18 = arith.addi %7, %17 : vector<160x1xi32>
    %19 = arith.select %16, %18, %7 : vector<160x1xi1>, vector<160x1xi32>
    %c1_i32_3 = arith.constant 1 : i32
    %20 = vector.broadcast %c1_i32_3 : i32 to vector<160x1xi32>
    %21 = arith.cmpi sge, %19, %20 : vector<160x1xi32>
    %c8_i32 = arith.constant 8 : i32
    %22 = vector.broadcast %c8_i32 : i32 to vector<160x1xi32>
    %23 = arith.cmpi sle, %19, %22 : vector<160x1xi32>
    %24 = arith.andi %21, %23 : vector<160x1xi1>
    %25 = arith.extui %24 : vector<160x1xi1> to vector<160x1xi32>
    %26 = arith.sitofp %25 : vector<160x1xi32> to vector<160x1xf32>
    %c0 = arith.constant 0 : index
    %c0_4 = arith.constant 0 : index
    %27 = vector.load %arg1[%c0, %c0_4] : memref<160x128xf32, #tpu.memory_space<vmem>>, vector<160x128xf32>
    %c0_5 = arith.constant 0 : index
    %c0_6 = arith.constant 0 : index
    %28 = vector.load %arg2[%c0_5, %c0_6] : memref<1x128xf32, #tpu.memory_space<vmem>>, vector<1x128xf32>
    %29 = vector.broadcast %28 : vector<1x128xf32> to vector<160x128xf32>
    %30 = arith.mulf %27, %29 : vector<160x128xf32>
    %c0_7 = arith.constant 0 : index
    %c0_8 = arith.constant 0 : index
    %31 = vector.load %arg3[%c0_7, %c0_8] : memref<1x128xf32, #tpu.memory_space<vmem>>, vector<1x128xf32>
    %32 = vector.broadcast %31 : vector<1x128xf32> to vector<160x128xf32>
    %33 = arith.addf %30, %32 : vector<160x128xf32>
    %34 = vector.broadcast %26 : vector<160x1xf32> to vector<160x128xf32>
    %35 = arith.mulf %33, %34 : vector<160x128xf32>
    %c0_9 = arith.constant 0 : index
    %c0_10 = arith.constant 0 : index
    %36 = vector.load %arg4[%c0_9, %c0_10] : memref<160x128xf32, #tpu.memory_space<vmem>>, vector<160x128xf32>
    tpu.vector_store %arg4[%c0_9, %c0_10], %35 {strides = array<i32>} : memref<160x128xf32, #tpu.memory_space<vmem>>, vector<160x128xf32>,
    return
  }
  func.func @transform_0(%arg0: i32) -> (i32, i32) {
    %c0_i32 = arith.constant 0 : i32
    %c0_i32_0 = arith.constant 0 : i32
    return %arg0, %c0_i32 : i32, i32
  }
  func.func @transform_1(%arg0: i32) -> (i32, i32) {
    %c0_i32 = arith.constant 0 : i32
    %c0_i32_0 = arith.constant 0 : i32
    %c0_i32_1 = arith.constant 0 : i32
    return %c0_i32, %c0_i32_0 : i32, i32
  }
  func.func @transform_2(%arg0: i32) -> (i32, i32) {
    %c0_i32 = arith.constant 0 : i32
    %c0_i32_0 = arith.constant 0 : i32
    %c0_i32_1 = arith.constant 0 : i32
    return %c0_i32, %c0_i32_0 : i32, i32
  }
  func.func @transform_3(%arg0: i32) -> (i32, i32) {
    %c0_i32 = arith.constant 0 : i32
    %c0_i32_0 = arith.constant 0 : i32
    return %arg0, %c0_i32 : i32, i32
  }
}

module attributes {stable_mosaic.version = 11 : i64} {
  func.func @_maxpool_kernel(%arg0: i32, %arg1: i32, %arg2: memref<1x4x2x4x256xf32, #tpu.memory_space<vmem>>, %arg3: memref<1x4x4x128xf32, #tpu.memory_space<vmem>>) attributes {dimension_semantics = [#tpu.dimension_semantics<parallel>, #tpu.dimension_semantics<parallel>], iteration_bounds = array<i64: 2, 1>, scalar_prefetch = 0 : i64, scratch_operands = 0 : i64, tpu.core_type = #tpu.core_type<tc>, window_params = [{transform_indices = @transform_0, window_bounds = array<i64: 1, 4, 2, 4, 256>}, {transform_indices = @transform_1, window_bounds = array<i64: 1, 4, 4, 128>}]} {
    %c0 = arith.constant 0 : index
    %c0_0 = arith.constant 0 : index
    %c0_1 = arith.constant 0 : index
    %c0_2 = arith.constant 0 : index
    %c0_3 = arith.constant 0 : index
    %0 = vector.load %arg2[%c0, %c0_0, %c0_1, %c0_2, %c0_3] : memref<1x4x2x4x256xf32, #tpu.memory_space<vmem>>, vector<1x4x2x4x256xf32>
    %1 = vector.shape_cast %0 : vector<1x4x2x4x256xf32> to vector<4x2x4x256xf32>
    %2 = vector.extract_strided_slice %1 {offsets = [0, 0, 0, 0], sizes = [4, 1, 4, 256], strides = [1, 1, 1, 1]} : vector<4x2x4x256xf32> to vector<4x1x4x256xf32>
    %3 = vector.shape_cast %2 : vector<4x1x4x256xf32> to vector<4x4x256xf32>
    %4 = vector.extract_strided_slice %1 {offsets = [0, 1, 0, 0], sizes = [4, 1, 4, 256], strides = [1, 1, 1, 1]} : vector<4x2x4x256xf32> to vector<4x1x4x256xf32>
    %5 = vector.shape_cast %4 : vector<4x1x4x256xf32> to vector<4x4x256xf32>
    %6 = arith.maximumf %3, %5 : vector<4x4x256xf32>
    %7 = vector.extract_strided_slice %6 {offsets = [0, 0, 0], sizes = [4, 4, 128], strides = [1, 1, 1]} : vector<4x4x256xf32> to vector<4x4x128xf32>
    %8 = vector.extract_strided_slice %6 {offsets = [0, 0, 128], sizes = [4, 4, 128], strides = [1, 1, 1]} : vector<4x4x256xf32> to vector<4x4x128xf32>
    %9 = arith.maximumf %7, %8 : vector<4x4x128xf32>
    %c0_4 = arith.constant 0 : index
    %c0_5 = arith.constant 0 : index
    %c0_6 = arith.constant 0 : index
    %c0_7 = arith.constant 0 : index
    %10 = vector.load %arg3[%c0_4, %c0_5, %c0_6, %c0_7] : memref<1x4x4x128xf32, #tpu.memory_space<vmem>>, vector<1x4x4x128xf32>
    %11 = vector.shape_cast %10 : vector<1x4x4x128xf32> to vector<4x4x128xf32>
    %12 = vector.shape_cast %9 : vector<4x4x128xf32> to vector<1x4x4x128xf32>
    tpu.vector_store %arg3[%c0_4, %c0_5, %c0_6, %c0_7], %12 {strides = array<i32>} : memref<1x4x4x128xf32, #tpu.memory_space<vmem>>, vector<1x4x4x128xf32>,
    return
  }
  func.func @transform_0(%arg0: i32, %arg1: i32) -> (i32, i32, i32, i32, i32) {
    %c0_i32 = arith.constant 0 : i32
    %c0_i32_0 = arith.constant 0 : i32
    %c0_i32_1 = arith.constant 0 : i32
    %c0_i32_2 = arith.constant 0 : i32
    return %arg0, %arg1, %c0_i32, %c0_i32_0, %c0_i32_1 : i32, i32, i32, i32, i32
  }
  func.func @transform_1(%arg0: i32, %arg1: i32) -> (i32, i32, i32, i32) {
    %c0_i32 = arith.constant 0 : i32
    %c0_i32_0 = arith.constant 0 : i32
    %c0_i32_1 = arith.constant 0 : i32
    return %arg0, %arg1, %c0_i32, %c0_i32_0 : i32, i32, i32, i32
  }
}

</mosaic_0001>

<llo_original>
// kernel: unet_encoder_forward.14
$region0: #{unet_encoder_forward.14}
  #allocation0 [shape = 'u32[]', space=smem, size = 0x4, offset = 0x4, fixed_abs, tag = 'smem constant byte address 0x4 - core index']
  #allocation1 [shape = 'u32[144,128]{1,0:T(1,128)}', space=vmem, size = 0x12000, scoped, tag = 'internal scratch']
  %s0 = inlined_call_operand.vmem [shape: f32[2,8,2,8,256], index: 0, kind: input, shape index: {}]
  %s1 = inlined_call_operand.vmem [shape: f32[2,8,8,128], index: 1, kind: output, shape index: {}]
  %s2 = sld [smem:[#allocation0]]
  $region37: #{unet_encoder_forward.14} parent=0
    _
  %s4 = ssub.s32 1, %s2
  %s5 = scalar_select 0, %s4, %s2
  loop: start=0, step=1, limit=4
  $region2: #{unet_encoder_forward.14} parent=0 // loop_pre_header
    _
  $region3: #{unet_encoder_forward.14} parent=0 // loop_header
    %s7 = sphi 0, %s11
    %p8 = scmp.ge.s32.totalorder %s7, 4
    %s14 = sphi 0, %s26
    %s15 = sphi 0, %s22
    %s16 = sphi 0, %s14
    %s17 = sphi 0, %s15
    %s18 = sphi 0, %s16
    %s19 = sphi 0, %s17
    %s31 = sphi 0, %s33
    %s34 = sphi 0, %s31
    %s35 = sphi 0, %s34
    %s51 = sphi 0, %s35
    %s59 = sphi 0, %s61
    %s62 = sphi 0, %s59
    %s63 = sphi 0, %s62
    %s79 = sphi 0, %s63
  $region4: #{unet_encoder_forward.14} parent=0 // loop_header_branch
    %10 = sbr.rel (%p8) target = $region8
  $region5: #{unet_encoder_forward.14} parent=0 // loop_body
    %s12 = ssub.s32 %s7, 1
    %s13 = ssub.s32 %s7, 2
    %s20 = sadd.s32 1, %s15
    %p21 = scmp.ge.s32.totalorder %s20, 1
    %s22 = scalar_select %p21, 0, %s20
    %s23 = sadd.s32 1, %s14
    %s24 = scalar_select %p21, %s23, %s14
    %p25 = scmp.ge.s32.totalorder %s24, 2
    %s26 = scalar_select %p25, 0, %s24
    %s27 = ssub.s32 %s14, %s26
    %s28 = ssub.s32 %s15, %s22
    %s29 = sor.u32 %s27, %s28
    %p30 = scmp.eq.s32.totalorder %s29, 0
    %s32 = sadd.s32 %s31, 1
    %s33 = scalar_select %p30, %s31, %s32
    %p36 = pneg %p30
    %p37 = scmp.eq.s32.totalorder %s7, 1
    %p38 = por %p36, %p37
    %p39 = scmp.ne.s32.totalorder %s31, %s34
    %p40 = scmp.eq.s32.totalorder %s7, 0
    %p41 = por %p39, %p40
    %p42 = scmp.ne.s32.totalorder %s31, %s34
    %p43 = scmp.eq.s32.totalorder %s12, 1
    %p44 = por %p42, %p43
    %p45 = scmp.ne.s32.totalorder %s34, %s35
    %p46 = scmp.eq.s32.totalorder %s12, 0
    %p47 = por %p45, %p46
    %p48 = scmp.ne.s32.totalorder %s34, %s35
    %p49 = scmp.eq.s32.totalorder %s13, 1
    %p50 = por %p48, %p49
    %p52 = scmp.ne.s32.totalorder %s35, %s51
    %p53 = scmp.eq.s32.totalorder %s13, 0
    %p54 = por %p52, %p53
    %s55 = ssub.s32 %s14, %s26
    %s56 = ssub.s32 %s15, %s22
    %s57 = sor.u32 %s55, %s56
    %p58 = scmp.eq.s32.totalorder %s57, 0
    %s60 = sadd.s32 %s59, 1
    %s61 = scalar_select %p58, %s59, %s60
    %p64 = pneg %p58
    %p65 = scmp.eq.s32.totalorder %s7, 1
    %p66 = por %p64, %p65
    %p67 = scmp.ne.s32.totalorder %s59, %s62
    %p68 = scmp.eq.s32.totalorder %s7, 0
    %p69 = por %p67, %p68
    %p70 = scmp.ne.s32.totalorder %s59, %s62
    %p71 = scmp.eq.s32.totalorder %s12, 1
    %p72 = por %p70, %p71
    %p73 = scmp.ne.s32.totalorder %s62, %s63
    %p74 = scmp.eq.s32.totalorder %s12, 0
    %p75 = por %p73, %p74
    %p76 = scmp.ne.s32.totalorder %s62, %s63
    %p77 = scmp.eq.s32.totalorder %s13, 1
    %p78 = por %p76, %p77
    %p80 = scmp.ne.s32.totalorder %s63, %s79
    %p81 = scmp.eq.s32.totalorder %s13, 0
    %p82 = por %p80, %p81
    %p83 = scmp.le.s32.totalorder 1, %s7
    %p84 = scmp.lt.s32.totalorder %s7, 3
    %p85 = pnand %p83, %p84
    %p86 = pneg %p85
    // Predicated region
    $region9: #{unet_encoder_forward.14} parent=5 // pred_check
      _
    $region10: #{unet_encoder_forward.14} parent=5 // pred_check_branch
      %88 = sbr.rel (%p85) target = $region12
    $region11: #{unet_encoder_forward.14} parent=5 // pred_region
      %s89 = ssub.s32 %s7, 1
    $region12: #{unet_encoder_forward.14} parent=5 // pred_fallthru
      _
    %p90 = scmp.lt.s32.totalorder %s7, 2
    // Predicated region
    $region13: #{unet_encoder_forward.14} parent=5 // pred_check
      %p91 = pneg %p90
    $region14: #{unet_encoder_forward.14} parent=5 // pred_check_branch
      %93 = sbr.rel (%p91) target = $region16
    $region15: #{unet_encoder_forward.14} parent=5 // pred_region
      // Predicated region
      $region17: #{unet_encoder_forward.14} parent=15 // pred_check
        %p94 = pneg %p41
      $region18: #{unet_encoder_forward.14} parent=15 // pred_check_branch
        %96 = sbr.rel (%p94) target = $region20
      $region19: #{unet_encoder_forward.14} parent=15 // pred_region
        %s97 = smul.u32 8, %s15
        %p98 = scmp.lt.s32.totalorder %s14, 1
        %s99 = scalar_select %p98, %s14, 1
        %p100 = scmp.lt.s32.totalorder %s97, 7
        %s101 = scalar_select %p100, %s97, 7
        %s102 = smul.addr %s101, 4
        %s103 = smul.addr %s99, 32
        %s104 = sadd.s32 %s102, %s103
        %s105 = smul.addr %s104, 8
        %s106 = scalar_lea.vmem %s0, %s105
        %s107 = smul.u32 8, %s15
      $region20: #{unet_encoder_forward.14} parent=15 // pred_fallthru
        _
    $region16: #{unet_encoder_forward.14} parent=5 // pred_fallthru
      _
    %p108 = scmp.le.s32.totalorder 1, %s7
    %p109 = scmp.lt.s32.totalorder %s7, 3
    %p110 = pnand %p108, %p109
    %p111 = pneg %p110
    // Predicated region
    $region21: #{unet_encoder_forward.14} parent=5 // pred_check
      _
    $region22: #{unet_encoder_forward.14} parent=5 // pred_check_branch
      %113 = sbr.rel (%p110) target = $region24
    $region23: #{unet_encoder_forward.14} parent=5 // pred_region
      %s114 = ssub.s32 %s7, 1
      %s115 = smul.u32 8, %s17
      %p116 = scmp.lt.s32.totalorder %s16, 1
      %s117 = scalar_select %p116, %s16, 1
      %p118 = scmp.lt.s32.totalorder %s115, 7
      %s119 = scalar_select %p118, %s115, 7
      %s120 = smul.addr %s119, 4
      %s121 = smul.addr %s117, 32
      %s122 = sadd.s32 %s120, %s121
      %s123 = smul.addr %s122, 8
      %s124 = scalar_lea.vmem %s0, %s123
      %p125 = pneg %p47
      %p126 = pneg %p44
      %p127 = pneg %p75
      %p128 = pneg %p72
      %s129 = smul.u32 8, %s17
      %p130 = scmp.lt.s32.totalorder %s16, 1
      %s131 = scalar_select %p130, %s16, 1
      %p132 = scmp.lt.s32.totalorder %s129, 7
      %s133 = scalar_select %p132, %s129, 7
      %s134 = smul.addr %s131, 8
      %s135 = sadd.s32 %s133, %s134
      %s136 = smul.addr %s135, 8
      %s137 = scalar_lea.vmem %s1, %s136
      %s138 = smul.u32 8, %s17
      %p139 = scmp.lt.s32.totalorder %s16, 1
      %s140 = scalar_select %p139, %s16, 1
      %p141 = scmp.lt.s32.totalorder %s138, 7
      %s142 = scalar_select %p141, %s138, 7
      %s143 = smul.addr %s142, 4
      %s144 = smul.addr %s140, 32
      %s145 = sadd.s32 %s143, %s144
      %s146 = smul.addr %s145, 8
      %s147 = scalar_lea.vmem %s0, %s146
      %s148 = smul.u32 8, %s17
      %s149 = smul.u32 8, %s17
      %p150 = scmp.lt.s32.totalorder %s16, 1
      %s151 = scalar_select %p150, %s16, 1
      %p152 = scmp.lt.s32.totalorder %s149, 7
      %s153 = scalar_select %p152, %s149, 7
      %s154 = smul.addr %s151, 8
      %s155 = sadd.s32 %s153, %s154
      %s156 = smul.addr %s155, 8
      %s157 = scalar_lea.vmem %s1, %s156
      %s158 = smul.u32 8, %s17
      %v159 = vld [vmem:[%s147] sm:$0xff]
      %v160 = vld [vmem:[%s147 + $0x8] sm:$0xff]
      %v161 = vld [vmem:[%s147 + $0x10] sm:$0xff]
      %v162 = vld [vmem:[%s147 + $0x18] sm:$0xff]
      %v163 = vld [vmem:[%s147 + $0x20] sm:$0xff]
      %v164 = vld [vmem:[%s147 + $0x28] sm:$0xff]
      %v165 = vld [vmem:[%s147 + $0x30] sm:$0xff]
      %v166 = vld [vmem:[%s147 + $0x38] sm:$0xff]
      %v167 = vld [vmem:[%s147 + $0x40] sm:$0xff]
      %v168 = vld [vmem:[%s147 + $0x48] sm:$0xff]
      %v169 = vld [vmem:[%s147 + $0x50] sm:$0xff]
      %v170 = vld [vmem:[%s147 + $0x58] sm:$0xff]
      %v171 = vld [vmem:[%s147 + $0x60] sm:$0xff]
      %v172 = vld [vmem:[%s147 + $0x68] sm:$0xff]
      %v173 = vld [vmem:[%s147 + $0x70] sm:$0xff]
      %v174 = vld [vmem:[%s147 + $0x78] sm:$0xff]
      %v175 = vld [vmem:[%s147 + $0x80] sm:$0xff]
      %v176 = vld [vmem:[%s147 + $0x88] sm:$0xff]
      %v177 = vld [vmem:[%s147 + $0x90] sm:$0xff]
      %v178 = vld [vmem:[%s147 + $0x98] sm:$0xff]
      %v179 = vld [vmem:[%s147 + $0xa0] sm:$0xff]
      %v180 = vld [vmem:[%s147 + $0xa8] sm:$0xff]
      %v181 = vld [vmem:[%s147 + $0xb0] sm:$0xff]
      %v182 = vld [vmem:[%s147 + $0xb8] sm:$0xff]
      %v183 = vld [vmem:[%s147 + $0xc0] sm:$0xff]
      %v184 = vld [vmem:[%s147 + $0xc8] sm:$0xff]
      %v185 = vld [vmem:[%s147 + $0xd0] sm:$0xff]
      %v186 = vld [vmem:[%s147 + $0xd8] sm:$0xff]
      %v187 = vld [vmem:[%s147 + $0xe0] sm:$0xff]
      %v188 = vld [vmem:[%s147 + $0xe8] sm:$0xff]
      %v189 = vld [vmem:[%s147 + $0xf0] sm:$0xff]
      %v190 = vld [vmem:[%s147 + $0xf8] sm:$0xff]
      %v191 = vmax.f32 %v159, %v161
      %v192 = vmax.f32 %v160, %v162
      %v193 = vmax.f32 %v163, %v165
      %v194 = vmax.f32 %v164, %v166
      %v195 = vmax.f32 %v167, %v169
      %v196 = vmax.f32 %v168, %v170
      %v197 = vmax.f32 %v171, %v173
      %v198 = vmax.f32 %v172, %v174
      %v199 = vmax.f32 %v175, %v177
      %v200 = vmax.f32 %v176, %v178
      %v201 = vmax.f32 %v179, %v181
      %v202 = vmax.f32 %v180, %v182
      %v203 = vmax.f32 %v183, %v185
      %v204 = vmax.f32 %v184, %v186
      %v205 = vmax.f32 %v187, %v189
      %v206 = vmax.f32 %v188, %v190
      %v207 = vmax.f32 %v191, %v192
      %v208 = vmax.f32 %v193, %v194
      %v209 = vmax.f32 %v195, %v196
      %v210 = vmax.f32 %v197, %v198
      %v211 = vmax.f32 %v199, %v200
      %v212 = vmax.f32 %v201, %v202
      %v213 = vmax.f32 %v203, %v204
      %v214 = vmax.f32 %v205, %v206
      %215 = vst [vmem:[%s157] sm:$0xff] %v207
      %216 = vst [vmem:[%s157 + $0x8] sm:$0xff] %v208
      %217 = vst [vmem:[%s157 + $0x10] sm:$0xff] %v209
      %218 = vst [vmem:[%s157 + $0x18] sm:$0xff] %v210
      %219 = vst [vmem:[%s157 + $0x20] sm:$0xff] %v211
      %220 = vst [vmem:[%s157 + $0x28] sm:$0xff] %v212
      %221 = vst [vmem:[%s157 + $0x30] sm:$0xff] %v213
      %222 = vst [vmem:[%s157 + $0x38] sm:$0xff] %v214
      %s223 = smul.u32 8, %s17
      %p224 = scmp.lt.s32.totalorder %s16, 1
      %s225 = scalar_select %p224, %s16, 1
      %p226 = scmp.lt.s32.totalorder %s223, 7
      %s227 = scalar_select %p226, %s223, 7
      %s228 = smul.addr %s225, 8
      %s229 = sadd.s32 %s227, %s228
      %s230 = smul.addr %s229, 8
      %s231 = scalar_lea.vmem %s1, %s230
      // Predicated region
      $region25: #{unet_encoder_forward.14} parent=23 // pred_check
        %p232 = pneg %p72
      $region26: #{unet_encoder_forward.14} parent=23 // pred_check_branch
        %234 = sbr.rel (%p232) target = $region28
      $region27: #{unet_encoder_forward.14} parent=23 // pred_region
        %s235 = smul.u32 8, %s17
      $region28: #{unet_encoder_forward.14} parent=23 // pred_fallthru
        _
    $region24: #{unet_encoder_forward.14} parent=5 // pred_fallthru
      _
    %p236 = scmp.le.s32.totalorder 2, %s7
    // Predicated region
    $region29: #{unet_encoder_forward.14} parent=5 // pred_check
      %p237 = pneg %p236
    $region30: #{unet_encoder_forward.14} parent=5 // pred_check_branch
      %239 = sbr.rel (%p237) target = $region32
    $region31: #{unet_encoder_forward.14} parent=5 // pred_region
      %s240 = ssub.s32 %s7, 2
      // Predicated region
      $region33: #{unet_encoder_forward.14} parent=31 // pred_check
        %p241 = pneg %p78
      $region34: #{unet_encoder_forward.14} parent=31 // pred_check_branch
        %243 = sbr.rel (%p241) target = $region36
      $region35: #{unet_encoder_forward.14} parent=31 // pred_region
        %s244 = smul.u32 8, %s19
        %p245 = scmp.lt.s32.totalorder %s18, 1
        %s246 = scalar_select %p245, %s18, 1
        %p247 = scmp.lt.s32.totalorder %s244, 7
        %s248 = scalar_select %p247, %s244, 7
        %s249 = smul.addr %s246, 8
        %s250 = sadd.s32 %s248, %s249
        %s251 = smul.addr %s250, 8
        %s252 = scalar_lea.vmem %s1, %s251
      $region36: #{unet_encoder_forward.14} parent=31 // pred_fallthru
        _
    $region32: #{unet_encoder_forward.14} parent=5 // pred_fallthru
      _
  $region6: #{unet_encoder_forward.14} parent=0 // loop_footer
    %s11 = sadd.s32 1, %s7
  $region7: #{unet_encoder_forward.14} parent=0 // loop_footer_branch
    %6 = sbr.rel target = $region3
  $region8: #{unet_encoder_forward.14} parent=0 // loop_exit
    _

// kernel: unet_encoder_forward.11
$region0: #{unet_encoder_forward.11}
  #allocation0 [shape = 'u32[]', space=smem, size = 0x4, offset = 0x4, fixed_abs, tag = 'smem constant byte address 0x4 - core index']
  #allocation1 [shape = 'u32[144,128]{1,0:T(1,128)}', space=vmem, size = 0x12000, scoped, tag = 'internal scratch']
  %s0 = inlined_call_operand.vmem [shape: f32[576,128], index: 0, kind: input, shape index: {}]
  %s1 = inlined_call_operand.vmem [shape: f32[1,128], index: 1, kind: input, shape index: {}]
  %s2 = inlined_call_operand.vmem [shape: f32[1,128], index: 2, kind: input, shape index: {}]
  %s3 = inlined_call_operand.vmem [shape: f32[576,128], index: 3, kind: output, shape index: {}]
  %s4 = sld [smem:[#allocation0]]
  $region22: #{unet_encoder_forward.11} parent=0
    _
  %s6 = ssub.s32 1, %s4
  %s7 = scalar_select 0, %s6, %s4
  // Predicated region
  $region2: #{unet_encoder_forward.11} parent=0 // pred_check
    _
  $region3: #{unet_encoder_forward.11} parent=0 // pred_check_branch
    %9 = sbr.rel (0) target = $region5
  $region4: #{unet_encoder_forward.11} parent=0 // pred_region
    _
  $region5: #{unet_encoder_forward.11} parent=0 // pred_fallthru
    _
  // Predicated region
  $region6: #{unet_encoder_forward.11} parent=0 // pred_check
    _
  $region7: #{unet_encoder_forward.11} parent=0 // pred_check_branch
    %11 = sbr.rel (0) target = $region9
  $region8: #{unet_encoder_forward.11} parent=0 // pred_region
    _
  $region9: #{unet_encoder_forward.11} parent=0 // pred_fallthru
    _
  // Predicated region
  $region10: #{unet_encoder_forward.11} parent=0 // pred_check
    _
  $region11: #{unet_encoder_forward.11} parent=0 // pred_check_branch
    %13 = sbr.rel (0) target = $region13
  $region12: #{unet_encoder_forward.11} parent=0 // pred_region
    _
  $region13: #{unet_encoder_forward.11} parent=0 // pred_fallthru
    _
  %s14 = smul.u32 0, 576
  %v15 = vlaneseq
  %v16 = vshrl.u32 %v15, 7
  %v17 = vadd.s32 %v16, 8
  %v18 = vadd.s32 %v16, 16
  %v19 = vadd.s32 %v16, 24
  %v20 = vadd.s32 %v16, 32
  %v21 = vadd.s32 %v16, 40
  %v22 = vadd.s32 %v16, 48
  %v23 = vadd.s32 %v16, 56
  %v24 = vadd.s32 %v16, 64
  %v25 = vadd.s32 %v16, 72
  %v26 = vadd.s32 %v16, 80
  %v27 = vadd.s32 %v16, 88
  %v28 = vadd.s32 %v16, 96
  %v29 = vadd.s32 %v16, 104
  %v30 = vadd.s32 %v16, 112
  %v31 = vadd.s32 %v16, 120
  %v32 = vadd.s32 %v16, 128
  %v33 = vadd.s32 %v16, 136
  %v34 = vadd.s32 %v16, 144
  %v35 = vadd.s32 %v16, 152
  %v36 = vadd.s32 %v16, 160
  %v37 = vadd.s32 %v16, 168
  %v38 = vadd.s32 %v16, 176
  %v39 = vadd.s32 %v16, 184
  %v40 = vadd.s32 %v16, 192
  %v41 = vadd.s32 %v16, 200
  %v42 = vadd.s32 %v16, 208
  %v43 = vadd.s32 %v16, 216
  %v44 = vadd.s32 %v16, 224
  %v45 = vadd.s32 %v16, 232
  %v46 = vadd.s32 %v16, 240
  %v47 = vadd.s32 %v16, 248
  %v48 = vadd.s32 %v16, 256
  %v49 = vadd.s32 %v16, 264
  %v50 = vadd.s32 %v16, 272
  %v51 = vadd.s32 %v16, 280
  %v52 = vadd.s32 %v16, 288
  %v53 = vadd.s32 %v16, 296
  %v54 = vadd.s32 %v16, 304
  %v55 = vadd.s32 %v16, 312
  %v56 = vadd.s32 %v16, 320
  %v57 = vadd.s32 %v16, 328
  %v58 = vadd.s32 %v16, 336
  %v59 = vadd.s32 %v16, 344
  %v60 = vadd.s32 %v16, 352
  %v61 = vadd.s32 %v16, 360
  %v62 = vadd.s32 %v16, 368
  %v63 = vadd.s32 %v16, 376
  %v64 = vadd.s32 %v16, 384
  %v65 = vadd.s32 %v16, 392
  %v66 = vadd.s32 %v16, 400
  %v67 = vadd.s32 %v16, 408
  %v68 = vadd.s32 %v16, 416
  %v69 = vadd.s32 %v16, 424
  %v70 = vadd.s32 %v16, 432
  %v71 = vadd.s32 %v16, 440
  %v72 = vadd.s32 %v16, 448
  %v73 = vadd.s32 %v16, 456
  %v74 = vadd.s32 %v16, 464
  %v75 = vadd.s32 %v16, 472
  %v76 = vadd.s32 %v16, 480
  %v77 = vadd.s32 %v16, 488
  %v78 = vadd.s32 %v16, 496
  %v79 = vadd.s32 %v16, 504
  %v80 = vadd.s32 %v16, 512
  %v81 = vadd.s32 %v16, 520
  %v82 = vadd.s32 %v16, 528
  %v83 = vadd.s32 %v16, 536
  %v84 = vadd.s32 %v16, 544
  %v85 = vadd.s32 %v16, 552
  %v86 = vadd.s32 %v16, 560
  %v87 = vadd.s32 %v16, 568
  %v88 = vstv %s14
  %v89 = vadd.s32 %v88, %v16
  %v90 = vadd.s32 %v88, %v17
  %v91 = vadd.s32 %v88, %v18
  %v92 = vadd.s32 %v88, %v19
  %v93 = vadd.s32 %v88, %v20
  %v94 = vadd.s32 %v88, %v21
  %v95 = vadd.s32 %v88, %v22
  %v96 = vadd.s32 %v88, %v23
  %v97 = vadd.s32 %v88, %v24
  %v98 = vadd.s32 %v88, %v25
  %v99 = vadd.s32 %v88, %v26
  %v100 = vadd.s32 %v88, %v27
  %v101 = vadd.s32 %v88, %v28
  %v102 = vadd.s32 %v88, %v29
  %v103 = vadd.s32 %v88, %v30
  %v104 = vadd.s32 %v88, %v31
  %v105 = vadd.s32 %v88, %v32
  %v106 = vadd.s32 %v88, %v33
  %v107 = vadd.s32 %v88, %v34
  %v108 = vadd.s32 %v88, %v35
  %v109 = vadd.s32 %v88, %v36
  %v110 = vadd.s32 %v88, %v37
  %v111 = vadd.s32 %v88, %v38
  %v112 = vadd.s32 %v88, %v39
  %v113 = vadd.s32 %v88, %v40
  %v114 = vadd.s32 %v88, %v41
  %v115 = vadd.s32 %v88, %v42
  %v116 = vadd.s32 %v88, %v43
  %v117 = vadd.s32 %v88, %v44
  %v118 = vadd.s32 %v88, %v45
  %v119 = vadd.s32 %v88, %v46
  %v120 = vadd.s32 %v88, %v47
  %v121 = vadd.s32 %v88, %v48
  %v122 = vadd.s32 %v88, %v49
  %v123 = vadd.s32 %v88, %v50
  %v124 = vadd.s32 %v88, %v51
  %v125 = vadd.s32 %v88, %v52
  %v126 = vadd.s32 %v88, %v53
  %v127 = vadd.s32 %v88, %v54
  %v128 = vadd.s32 %v88, %v55
  %v129 = vadd.s32 %v88, %v56
  %v130 = vadd.s32 %v88, %v57
  %v131 = vadd.s32 %v88, %v58
  %v132 = vadd.s32 %v88, %v59
  %v133 = vadd.s32 %v88, %v60
  %v134 = vadd.s32 %v88, %v61
  %v135 = vadd.s32 %v88, %v62
  %v136 = vadd.s32 %v88, %v63
  %v137 = vadd.s32 %v88, %v64
  %v138 = vadd.s32 %v88, %v65
  %v139 = vadd.s32 %v88, %v66
  %v140 = vadd.s32 %v88, %v67
  %v141 = vadd.s32 %v88, %v68
  %v142 = vadd.s32 %v88, %v69
  %v143 = vadd.s32 %v88, %v70
  %v144 = vadd.s32 %v88, %v71
  %v145 = vadd.s32 %v88, %v72
  %v146 = vadd.s32 %v88, %v73
  %v147 = vadd.s32 %v88, %v74
  %v148 = vadd.s32 %v88, %v75
  %v149 = vadd.s32 %v88, %v76
  %v150 = vadd.s32 %v88, %v77
  %v151 = vadd.s32 %v88, %v78
  %v152 = vadd.s32 %v88, %v79
  %v153 = vadd.s32 %v88, %v80
  %v154 = vadd.s32 %v88, %v81
  %v155 = vadd.s32 %v88, %v82
  %v156 = vadd.s32 %v88, %v83
  %v157 = vadd.s32 %v88, %v84
  %v158 = vadd.s32 %v88, %v85
  %v159 = vadd.s32 %v88, %v86
  %v160 = vadd.s32 %v88, %v87
  %vm161 = vcmp.lt.s32.totalorder %v89, 0
  %v162 = vsub.s32 0, %v89
  %v163 = vsel %vm161, %v162, %v89
  %v164 = vmul.u32.u64.compose %v163, 3817748708
  %v165 = vextract.low.u32 %v164
  %v166 = vextract.high.u32 %v164
  %v167 = vshrl.u32 %v166, 4
  %v168 = vmul.u32 %v167, 18
  %v169 = vsub.s32 %v163, %v168
  %v170 = vsub.s32 0, %v169
  %v171 = vsel %vm161, %v170, %v169
  %vm172 = vcmp.lt.s32.totalorder %v90, 0
  %v173 = vsub.s32 0, %v90
  %v174 = vsel %vm172, %v173, %v90
  %v175 = vmul.u32.u64.compose %v174, 3817748708
  %v176 = vextract.low.u32 %v175
  %v177 = vextract.high.u32 %v175
  %v178 = vshrl.u32 %v177, 4
  %v179 = vmul.u32 %v178, 18
  %v180 = vsub.s32 %v174, %v179
  %v181 = vsub.s32 0, %v180
  %v182 = vsel %vm172, %v181, %v180
  %vm183 = vcmp.lt.s32.totalorder %v91, 0
  %v184 = vsub.s32 0, %v91
  %v185 = vsel %vm183, %v184, %v91
  %v186 = vmul.u32.u64.compose %v185, 3817748708
  %v187 = vextract.low.u32 %v186
  %v188 = vextract.high.u32 %v186
  %v189 = vshrl.u32 %v188, 4
  %v190 = vmul.u32 %v189, 18
  %v191 = vsub.s32 %v185, %v190
  %v192 = vsub.s32 0, %v191
  %v193 = vsel %vm183, %v192, %v191
  %vm194 = vcmp.lt.s32.totalorder %v92, 0
  %v195 = vsub.s32 0, %v92
  %v196 = vsel %vm194, %v195, %v92
  %v197 = vmul.u32.u64.compose %v196, 3817748708
  %v198 = vextract.low.u32 %v197
  %v199 = vextract.high.u32 %v197
  %v200 = vshrl.u32 %v199, 4
  %v201 = vmul.u32 %v200, 18
  %v202 = vsub.s32 %v196, %v201
  %v203 = vsub.s32 0, %v202
  %v204 = vsel %vm194, %v203, %v202
  %vm205 = vcmp.lt.s32.totalorder %v93, 0
  %v206 = vsub.s32 0, %v93
  %v207 = vsel %vm205, %v206, %v93
  %v208 = vmul.u32.u64.compose %v207, 3817748708
  %v209 = vextract.low.u32 %v208
  %v210 = vextract.high.u32 %v208
  %v211 = vshrl.u32 %v210, 4
  %v212 = vmul.u32 %v211, 18
  %v213 = vsub.s32 %v207, %v212
  %v214 = vsub.s32 0, %v213
  %v215 = vsel %vm205, %v214, %v213
  %vm216 = vcmp.lt.s32.totalorder %v94, 0
  %v217 = vsub.s32 0, %v94
  %v218 = vsel %vm216, %v217, %v94
  %v219 = vmul.u32.u64.compose %v218, 3817748708
  %v220 = vextract.low.u32 %v219
  %v221 = vextract.high.u32 %v219
  %v222 = vshrl.u32 %v221, 4
  %v223 = vmul.u32 %v222, 18
  %v224 = vsub.s32 %v218, %v223
  %v225 = vsub.s32 0, %v224
  %v226 = vsel %vm216, %v225, %v224
  %vm227 = vcmp.lt.s32.totalorder %v95, 0
  %v228 = vsub.s32 0, %v95
  %v229 = vsel %vm227, %v228, %v95
  %v230 = vmul.u32.u64.compose %v229, 3817748708
  %v231 = vextract.low.u32 %v230
  %v232 = vextract.high.u32 %v230
  %v233 = vshrl.u32 %v232, 4
  %v234 = vmul.u32 %v233, 18
  %v235 = vsub.s32 %v229, %v234
  %v236 = vsub.s32 0, %v235
  %v237 = vsel %vm227, %v236, %v235
  %vm238 = vcmp.lt.s32.totalorder %v96, 0
  %v239 = vsub.s32 0, %v96
  %v240 = vsel %vm238, %v239, %v96
  %v241 = vmul.u32.u64.compose %v240, 3817748708
  %v242 = vextract.low.u32 %v241
  %v243 = vextract.high.u32 %v241
  %v244 = vshrl.u32 %v243, 4
  %v245 = vmul.u32 %v244, 18
  %v246 = vsub.s32 %v240, %v245
  %v247 = vsub.s32 0, %v246
  %v248 = vsel %vm238, %v247, %v246
  %vm249 = vcmp.lt.s32.totalorder %v97, 0
  %v250 = vsub.s32 0, %v97
  %v251 = vsel %vm249, %v250, %v97
  %v252 = vmul.u32.u64.compose %v251, 3817748708
  %v253 = vextract.low.u32 %v252
  %v254 = vextract.high.u32 %v252
  %v255 = vshrl.u32 %v254, 4
  %v256 = vmul.u32 %v255, 18
  %v257 = vsub.s32 %v251, %v256
  %v258 = vsub.s32 0, %v257
  %v259 = vsel %vm249, %v258, %v257
  %vm260 = vcmp.lt.s32.totalorder %v98, 0
  %v261 = vsub.s32 0, %v98
  %v262 = vsel %vm260, %v261, %v98
  %v263 = vmul.u32.u64.compose %v262, 3817748708
  %v264 = vextract.low.u32 %v263
  %v265 = vextract.high.u32 %v263
  %v266 = vshrl.u32 %v265, 4
  %v267 = vmul.u32 %v266, 18
  %v268 = vsub.s32 %v262, %v267
  %v269 = vsub.s32 0, %v268
  %v270 = vsel %vm260, %v269, %v268
  %vm271 = vcmp.lt.s32.totalorder %v99, 0
  %v272 = vsub.s32 0, %v99
  %v273 = vsel %vm271, %v272, %v99
  %v274 = vmul.u32.u64.compose %v273, 3817748708
  %v275 = vextract.low.u32 %v274
  %v276 = vextract.high.u32 %v274
  %v277 = vshrl.u32 %v276, 4
  %v278 = vmul.u32 %v277, 18
  %v279 = vsub.s32 %v273, %v278
  %v280 = vsub.s32 0, %v279
  %v281 = vsel %vm271, %v280, %v279
  %vm282 = vcmp.lt.s32.totalorder %v100, 0
  %v283 = vsub.s32 0, %v100
  %v284 = vsel %vm282, %v283, %v100
  %v285 = vmul.u32.u64.compose %v284, 3817748708
  %v286 = vextract.low.u32 %v285
  %v287 = vextract.high.u32 %v285
  %v288 = vshrl.u32 %v287, 4
  %v289 = vmul.u32 %v288, 18
  %v290 = vsub.s32 %v284, %v289
  %v291 = vsub.s32 0, %v290
  %v292 = vsel %vm282, %v291, %v290
  %vm293 = vcmp.lt.s32.totalorder %v101, 0
  %v294 = vsub.s32 0, %v101
  %v295 = vsel %vm293, %v294, %v101
  %v296 = vmul.u32.u64.compose %v295, 3817748708
  %v297 = vextract.low.u32 %v296
  %v298 = vextract.high.u32 %v296
  %v299 = vshrl.u32 %v298, 4
  %v300 = vmul.u32 %v299, 18
  %v301 = vsub.s32 %v295, %v300
  %v302 = vsub.s32 0, %v301
  %v303 = vsel %vm293, %v302, %v301
  %vm304 = vcmp.lt.s32.totalorder %v102, 0
  %v305 = vsub.s32 0, %v102
  %v306 = vsel %vm304, %v305, %v102
  %v307 = vmul.u32.u64.compose %v306, 3817748708
  %v308 = vextract.low.u32 %v307
  %v309 = vextract.high.u32 %v307
  %v310 = vshrl.u32 %v309, 4
  %v311 = vmul.u32 %v310, 18
  %v312 = vsub.s32 %v306, %v311
  %v313 = vsub.s32 0, %v312
  %v314 = vsel %vm304, %v313, %v312
  %vm315 = vcmp.lt.s32.totalorder %v103, 0
  %v316 = vsub.s32 0, %v103
  %v317 = vsel %vm315, %v316, %v103
  %v318 = vmul.u32.u64.compose %v317, 3817748708
  %v319 = vextract.low.u32 %v318
  %v320 = vextract.high.u32 %v318
  %v321 = vshrl.u32 %v320, 4
  %v322 = vmul.u32 %v321, 18
  %v323 = vsub.s32 %v317, %v322
  %v324 = vsub.s32 0, %v323
  %v325 = vsel %vm315, %v324, %v323
  %vm326 = vcmp.lt.s32.totalorder %v104, 0
  %v327 = vsub.s32 0, %v104
  %v328 = vsel %vm326, %v327, %v104
  %v329 = vmul.u32.u64.compose %v328, 3817748708
  %v330 = vextract.low.u32 %v329
  %v331 = vextract.high.u32 %v329
  %v332 = vshrl.u32 %v331, 4
  %v333 = vmul.u32 %v332, 18
  %v334 = vsub.s32 %v328, %v333
  %v335 = vsub.s32 0, %v334
  %v336 = vsel %vm326, %v335, %v334
  %vm337 = vcmp.lt.s32.totalorder %v105, 0
  %v338 = vsub.s32 0, %v105
  %v339 = vsel %vm337, %v338, %v105
  %v340 = vmul.u32.u64.compose %v339, 3817748708
  %v341 = vextract.low.u32 %v340
  %v342 = vextract.high.u32 %v340
  %v343 = vshrl.u32 %v342, 4
  %v344 = vmul.u32 %v343, 18
  %v345 = vsub.s32 %v339, %v344
  %v346 = vsub.s32 0, %v345
  %v347 = vsel %vm337, %v346, %v345
  %vm348 = vcmp.lt.s32.totalorder %v106, 0
  %v349 = vsub.s32 0, %v106
  %v350 = vsel %vm348, %v349, %v106
  %v351 = vmul.u32.u64.compose %v350, 3817748708
  %v352 = vextract.low.u32 %v351
  %v353 = vextract.high.u32 %v351
  %v354 = vshrl.u32 %v353, 4
  %v355 = vmul.u32 %v354, 18
  %v356 = vsub.s32 %v350, %v355
  %v357 = vsub.s32 0, %v356
  %v358 = vsel %vm348, %v357, %v356
  %vm359 = vcmp.lt.s32.totalorder %v107, 0
  %v360 = vsub.s32 0, %v107
  %v361 = vsel %vm359, %v360, %v107
  %v362 = vmul.u32.u64.compose %v361, 3817748708
  %v363 = vextract.low.u32 %v362
  %v364 = vextract.high.u32 %v362
  %v365 = vshrl.u32 %v364, 4
  %v366 = vmul.u32 %v365, 18
  %v367 = vsub.s32 %v361, %v366
  %v368 = vsub.s32 0, %v367
  %v369 = vsel %vm359, %v368, %v367
  %vm370 = vcmp.lt.s32.totalorder %v108, 0
  %v371 = vsub.s32 0, %v108
  %v372 = vsel %vm370, %v371, %v108
  %v373 = vmul.u32.u64.compose %v372, 3817748708
  %v374 = vextract.low.u32 %v373
  %v375 = vextract.high.u32 %v373
  %v376 = vshrl.u32 %v375, 4
  %v377 = vmul.u32 %v376, 18
  %v378 = vsub.s32 %v372, %v377
  %v379 = vsub.s32 0, %v378
  %v380 = vsel %vm370, %v379, %v378
  %vm381 = vcmp.lt.s32.totalorder %v109, 0
  %v382 = vsub.s32 0, %v109
  %v383 = vsel %vm381, %v382, %v109
  %v384 = vmul.u32.u64.compose %v383, 3817748708
  %v385 = vextract.low.u32 %v384
  %v386 = vextract.high.u32 %v384
  %v387 = vshrl.u32 %v386, 4
  %v388 = vmul.u32 %v387, 18
  %v389 = vsub.s32 %v383, %v388
  %v390 = vsub.s32 0, %v389
  %v391 = vsel %vm381, %v390, %v389
  %vm392 = vcmp.lt.s32.totalorder %v110, 0
  %v393 = vsub.s32 0, %v110
  %v394 = vsel %vm392, %v393, %v110
  %v395 = vmul.u32.u64.compose %v394, 3817748708
  %v396 = vextract.low.u32 %v395
  %v397 = vextract.high.u32 %v395
  %v398 = vshrl.u32 %v397, 4
  %v399 = vmul.u32 %v398, 18
  %v400 = vsub.s32 %v394, %v399
  %v401 = vsub.s32 0, %v400
  %v402 = vsel %vm392, %v401, %v400
  %vm403 = vcmp.lt.s32.totalorder %v111, 0
  %v404 = vsub.s32 0, %v111
  %v405 = vsel %vm403, %v404, %v111
  %v406 = vmul.u32.u64.compose %v405, 3817748708
  %v407 = vextract.low.u32 %v406
  %v408 = vextract.high.u32 %v406
  %v409 = vshrl.u32 %v408, 4
  %v410 = vmul.u32 %v409, 18
  %v411 = vsub.s32 %v405, %v410
  %v412 = vsub.s32 0, %v411
  %v413 = vsel %vm403, %v412, %v411
  %vm414 = vcmp.lt.s32.totalorder %v112, 0
  %v415 = vsub.s32 0, %v112
  %v416 = vsel %vm414, %v415, %v112
  %v417 = vmul.u32.u64.compose %v416, 3817748708
  %v418 = vextract.low.u32 %v417
  %v419 = vextract.high.u32 %v417
  %v420 = vshrl.u32 %v419, 4
  %v421 = vmul.u32 %v420, 18
  %v422 = vsub.s32 %v416, %v421
  %v423 = vsub.s32 0, %v422
  %v424 = vsel %vm414, %v423, %v422
  %vm425 = vcmp.lt.s32.totalorder %v113, 0
  %v426 = vsub.s32 0, %v113
  %v427 = vsel %vm425, %v426, %v113
  %v428 = vmul.u32.u64.compose %v427, 3817748708
  %v429 = vextract.low.u32 %v428
  %v430 = vextract.high.u32 %v428
  %v431 = vshrl.u32 %v430, 4
  %v432 = vmul.u32 %v431, 18
  %v433 = vsub.s32 %v427, %v432
  %v434 = vsub.s32 0, %v433
  %v435 = vsel %vm425, %v434, %v433
  %vm436 = vcmp.lt.s32.totalorder %v114, 0
  %v437 = vsub.s32 0, %v114
  %v438 = vsel %vm436, %v437, %v114
  %v439 = vmul.u32.u64.compose %v438, 3817748708
  %v440 = vextract.low.u32 %v439
  %v441 = vextract.high.u32 %v439
  %v442 = vshrl.u32 %v441, 4
  %v443 = vmul.u32 %v442, 18
  %v444 = vsub.s32 %v438, %v443
  %v445 = vsub.s32 0, %v444
  %v446 = vsel %vm436, %v445, %v444
  %vm447 = vcmp.lt.s32.totalorder %v115, 0
  %v448 = vsub.s32 0, %v115
  %v449 = vsel %vm447, %v448, %v115
  %v450 = vmul.u32.u64.compose %v449, 3817748708
  %v451 = vextract.low.u32 %v450
  %v452 = vextract.high.u32 %v450
  %v453 = vshrl.u32 %v452, 4
  %v454 = vmul.u32 %v453, 18
  %v455 = vsub.s32 %v449, %v454
  %v456 = vsub.s32 0, %v455
  %v457 = vsel %vm447, %v456, %v455
  %vm458 = vcmp.lt.s32.totalorder %v116, 0
  %v459 = vsub.s32 0, %v116
  %v460 = vsel %vm458, %v459, %v116
  %v461 = vmul.u32.u64.compose %v460, 3817748708
  %v462 = vextract.low.u32 %v461
  %v463 = vextract.high.u32 %v461
  %v464 = vshrl.u32 %v463, 4
  %v465 = vmul.u32 %v464, 18
  %v466 = vsub.s32 %v460, %v465
  %v467 = vsub.s32 0, %v466
  %v468 = vsel %vm458, %v467, %v466
  %vm469 = vcmp.lt.s32.totalorder %v117, 0
  %v470 = vsub.s32 0, %v117
  %v471 = vsel %vm469, %v470, %v117
  %v472 = vmul.u32.u64.compose %v471, 3817748708
  %v473 = vextract.low.u32 %v472
  %v474 = vextract.high.u32 %v472
  %v475 = vshrl.u32 %v474, 4
  %v476 = vmul.u32 %v475, 18
  %v477 = vsub.s32 %v471, %v476
  %v478 = vsub.s32 0, %v477
  %v479 = vsel %vm469, %v478, %v477
  %vm480 = vcmp.lt.s32.totalorder %v118, 0
  %v481 = vsub.s32 0, %v118
  %v482 = vsel %vm480, %v481, %v118
  %v483 = vmul.u32.u64.compose %v482, 3817748708
  %v484 = vextract.low.u32 %v483
  %v485 = vextract.high.u32 %v483
  %v486 = vshrl.u32 %v485, 4
  %v487 = vmul.u32 %v486, 18
  %v488 = vsub.s32 %v482, %v487
  %v489 = vsub.s32 0, %v488
  %v490 = vsel %vm480, %v489, %v488
  %vm491 = vcmp.lt.s32.totalorder %v119, 0
  %v492 = vsub.s32 0, %v119
  %v493 = vsel %vm491, %v492, %v119
  %v494 = vmul.u32.u64.compose %v493, 3817748708
  %v495 = vextract.low.u32 %v494
  %v496 = vextract.high.u32 %v494
  %v497 = vshrl.u32 %v496, 4
  %v498 = vmul.u32 %v497, 18
  %v499 = vsub.s32 %v493, %v498
  %v500 = vsub.s32 0, %v499
  %v501 = vsel %vm491, %v500, %v499
  %vm502 = vcmp.lt.s32.totalorder %v120, 0
  %v503 = vsub.s32 0, %v120
  %v504 = vsel %vm502, %v503, %v120
  %v505 = vmul.u32.u64.compose %v504, 3817748708
  %v506 = vextract.low.u32 %v505
  %v507 = vextract.high.u32 %v505
  %v508 = vshrl.u32 %v507, 4
  %v509 = vmul.u32 %v508, 18
  %v510 = vsub.s32 %v504, %v509
  %v511 = vsub.s32 0, %v510
  %v512 = vsel %vm502, %v511, %v510
  %vm513 = vcmp.lt.s32.totalorder %v121, 0
  %v514 = vsub.s32 0, %v121
  %v515 = vsel %vm513, %v514, %v121
  %v516 = vmul.u32.u64.compose %v515, 3817748708
  %v517 = vextract.low.u32 %v516
  %v518 = vextract.high.u32 %v516
  %v519 = vshrl.u32 %v518, 4
  %v520 = vmul.u32 %v519, 18
  %v521 = vsub.s32 %v515, %v520
  %v522 = vsub.s32 0, %v521
  %v523 = vsel %vm513, %v522, %v521
  %vm524 = vcmp.lt.s32.totalorder %v122, 0
  %v525 = vsub.s32 0, %v122
  %v526 = vsel %vm524, %v525, %v122
  %v527 = vmul.u32.u64.compose %v526, 3817748708
  %v528 = vextract.low.u32 %v527
  %v529 = vextract.high.u32 %v527
  %v530 = vshrl.u32 %v529, 4
  %v531 = vmul.u32 %v530, 18
  %v532 = vsub.s32 %v526, %v531
  %v533 = vsub.s32 0, %v532
  %v534 = vsel %vm524, %v533, %v532
  %vm535 = vcmp.lt.s32.totalorder %v123, 0
  %v536 = vsub.s32 0, %v123
  %v537 = vsel %vm535, %v536, %v123
  %v538 = vmul.u32.u64.compose %v537, 3817748708
  %v539 = vextract.low.u32 %v538
  %v540 = vextract.high.u32 %v538
  %v541 = vshrl.u32 %v540, 4
  %v542 = vmul.u32 %v541, 18
  %v543 = vsub.s32 %v537, %v542
  %v544 = vsub.s32 0, %v543
  %v545 = vsel %vm535, %v544, %v543
  %vm546 = vcmp.lt.s32.totalorder %v124, 0
  %v547 = vsub.s32 0, %v124
  %v548 = vsel %vm546, %v547, %v124
  %v549 = vmul.u32.u64.compose %v548, 3817748708
  %v550 = vextract.low.u32 %v549
  %v551 = vextract.high.u32 %v549
  %v552 = vshrl.u32 %v551, 4
  %v553 = vmul.u32 %v552, 18
  %v554 = vsub.s32 %v548, %v553
  %v555 = vsub.s32 0, %v554
  %v556 = vsel %vm546, %v555, %v554
  %vm557 = vcmp.lt.s32.totalorder %v125, 0
  %v558 = vsub.s32 0, %v125
  %v559 = vsel %vm557, %v558, %v125
  %v560 = vmul.u32.u64.compose %v559, 3817748708
  %v561 = vextract.low.u32 %v560
  %v562 = vextract.high.u32 %v560
  %v563 = vshrl.u32 %v562, 4
  %v564 = vmul.u32 %v563, 18
  %v565 = vsub.s32 %v559, %v564
  %v566 = vsub.s32 0, %v565
  %v567 = vsel %vm557, %v566, %v565
  %vm568 = vcmp.lt.s32.totalorder %v126, 0
  %v569 = vsub.s32 0, %v126
  %v570 = vsel %vm568, %v569, %v126
  %v571 = vmul.u32.u64.compose %v570, 3817748708
  %v572 = vextract.low.u32 %v571
  %v573 = vextract.high.u32 %v571
  %v574 = vshrl.u32 %v573, 4
  %v575 = vmul.u32 %v574, 18
  %v576 = vsub.s32 %v570, %v575
  %v577 = vsub.s32 0, %v576
  %v578 = vsel %vm568, %v577, %v576
  %vm579 = vcmp.lt.s32.totalorder %v127, 0
  %v580 = vsub.s32 0, %v127
  %v581 = vsel %vm579, %v580, %v127
  %v582 = vmul.u32.u64.compose %v581, 3817748708
  %v583 = vextract.low.u32 %v582
  %v584 = vextract.high.u32 %v582
  %v585 = vshrl.u32 %v584, 4
  %v586 = vmul.u32 %v585, 18
  %v587 = vsub.s32 %v581, %v586
  %v588 = vsub.s32 0, %v587
  %v589 = vsel %vm579, %v588, %v587
  %vm590 = vcmp.lt.s32.totalorder %v128, 0
  %v591 = vsub.s32 0, %v128
  %v592 = vsel %vm590, %v591, %v128
  %v593 = vmul.u32.u64.compose %v592, 3817748708
  %v594 = vextract.low.u32 %v593
  %v595 = vextract.high.u32 %v593
  %v596 = vshrl.u32 %v595, 4
  %v597 = vmul.u32 %v596, 18
  %v598 = vsub.s32 %v592, %v597
  %v599 = vsub.s32 0, %v598
  %v600 = vsel %vm590, %v599, %v598
  %vm601 = vcmp.lt.s32.totalorder %v129, 0
  %v602 = vsub.s32 0, %v129
  %v603 = vsel %vm601, %v602, %v129
  %v604 = vmul.u32.u64.compose %v603, 3817748708
  %v605 = vextract.low.u32 %v604
  %v606 = vextract.high.u32 %v604
  %v607 = vshrl.u32 %v606, 4
  %v608 = vmul.u32 %v607, 18
  %v609 = vsub.s32 %v603, %v608
  %v610 = vsub.s32 0, %v609
  %v611 = vsel %vm601, %v610, %v609
  %vm612 = vcmp.lt.s32.totalorder %v130, 0
  %v613 = vsub.s32 0, %v130
  %v614 = vsel %vm612, %v613, %v130
  %v615 = vmul.u32.u64.compose %v614, 3817748708
  %v616 = vextract.low.u32 %v615
  %v617 = vextract.high.u32 %v615
  %v618 = vshrl.u32 %v617, 4
  %v619 = vmul.u32 %v618, 18
  %v620 = vsub.s32 %v614, %v619
  %v621 = vsub.s32 0, %v620
  %v622 = vsel %vm612, %v621, %v620
  %vm623 = vcmp.lt.s32.totalorder %v131, 0
  %v624 = vsub.s32 0, %v131
  %v625 = vsel %vm623, %v624, %v131
  %v626 = vmul.u32.u64.compose %v625, 3817748708
  %v627 = vextract.low.u32 %v626
  %v628 = vextract.high.u32 %v626
  %v629 = vshrl.u32 %v628, 4
  %v630 = vmul.u32 %v629, 18
  %v631 = vsub.s32 %v625, %v630
  %v632 = vsub.s32 0, %v631
  %v633 = vsel %vm623, %v632, %v631
  %vm634 = vcmp.lt.s32.totalorder %v132, 0
  %v635 = vsub.s32 0, %v132
  %v636 = vsel %vm634, %v635, %v132
  %v637 = vmul.u32.u64.compose %v636, 3817748708
  %v638 = vextract.low.u32 %v637
  %v639 = vextract.high.u32 %v637
  %v640 = vshrl.u32 %v639, 4
  %v641 = vmul.u32 %v640, 18
  %v642 = vsub.s32 %v636, %v641
  %v643 = vsub.s32 0, %v642
  %v644 = vsel %vm634, %v643, %v642
  %vm645 = vcmp.lt.s32.totalorder %v133, 0
  %v646 = vsub.s32 0, %v133
  %v647 = vsel %vm645, %v646, %v133
  %v648 = vmul.u32.u64.compose %v647, 3817748708
  %v649 = vextract.low.u32 %v648
  %v650 = vextract.high.u32 %v648
  %v651 = vshrl.u32 %v650, 4
  %v652 = vmul.u32 %v651, 18
  %v653 = vsub.s32 %v647, %v652
  %v654 = vsub.s32 0, %v653
  %v655 = vsel %vm645, %v654, %v653
  %vm656 = vcmp.lt.s32.totalorder %v134, 0
  %v657 = vsub.s32 0, %v134
  %v658 = vsel %vm656, %v657, %v134
  %v659 = vmul.u32.u64.compose %v658, 3817748708
  %v660 = vextract.low.u32 %v659
  %v661 = vextract.high.u32 %v659
  %v662 = vshrl.u32 %v661, 4
  %v663 = vmul.u32 %v662, 18
  %v664 = vsub.s32 %v658, %v663
  %v665 = vsub.s32 0, %v664
  %v666 = vsel %vm656, %v665, %v664
  %vm667 = vcmp.lt.s32.totalorder %v135, 0
  %v668 = vsub.s32 0, %v135
  %v669 = vsel %vm667, %v668, %v135
  %v670 = vmul.u32.u64.compose %v669, 3817748708
  %v671 = vextract.low.u32 %v670
  %v672 = vextract.high.u32 %v670
  %v673 = vshrl.u32 %v672, 4
  %v674 = vmul.u32 %v673, 18
  %v675 = vsub.s32 %v669, %v674
  %v676 = vsub.s32 0, %v675
  %v677 = vsel %vm667, %v676, %v675
  %vm678 = vcmp.lt.s32.totalorder %v136, 0
  %v679 = vsub.s32 0, %v136
  %v680 = vsel %vm678, %v679, %v136
  %v681 = vmul.u32.u64.compose %v680, 3817748708
  %v682 = vextract.low.u32 %v681
  %v683 = vextract.high.u32 %v681
  %v684 = vshrl.u32 %v683, 4
  %v685 = vmul.u32 %v684, 18
  %v686 = vsub.s32 %v680, %v685
  %v687 = vsub.s32 0, %v686
  %v688 = vsel %vm678, %v687, %v686
  %vm689 = vcmp.lt.s32.totalorder %v137, 0
  %v690 = vsub.s32 0, %v137
  %v691 = vsel %vm689, %v690, %v137
  %v692 = vmul.u32.u64.compose %v691, 3817748708
  %v693 = vextract.low.u32 %v692
  %v694 = vextract.high.u32 %v692
  %v695 = vshrl.u32 %v694, 4
  %v696 = vmul.u32 %v695, 18
  %v697 = vsub.s32 %v691, %v696
  %v698 = vsub.s32 0, %v697
  %v699 = vsel %vm689, %v698, %v697
  %vm700 = vcmp.lt.s32.totalorder %v138, 0
  %v701 = vsub.s32 0, %v138
  %v702 = vsel %vm700, %v701, %v138
  %v703 = vmul.u32.u64.compose %v702, 3817748708
  %v704 = vextract.low.u32 %v703
  %v705 = vextract.high.u32 %v703
  %v706 = vshrl.u32 %v705, 4
  %v707 = vmul.u32 %v706, 18
  %v708 = vsub.s32 %v702, %v707
  %v709 = vsub.s32 0, %v708
  %v710 = vsel %vm700, %v709, %v708
  %vm711 = vcmp.lt.s32.totalorder %v139, 0
  %v712 = vsub.s32 0, %v139
  %v713 = vsel %vm711, %v712, %v139
  %v714 = vmul.u32.u64.compose %v713, 3817748708
  %v715 = vextract.low.u32 %v714
  %v716 = vextract.high.u32 %v714
  %v717 = vshrl.u32 %v716, 4
  %v718 = vmul.u32 %v717, 18
  %v719 = vsub.s32 %v713, %v718
  %v720 = vsub.s32 0, %v719
  %v721 = vsel %vm711, %v720, %v719
  %vm722 = vcmp.lt.s32.totalorder %v140, 0
  %v723 = vsub.s32 0, %v140
  %v724 = vsel %vm722, %v723, %v140
  %v725 = vmul.u32.u64.compose %v724, 3817748708
  %v726 = vextract.low.u32 %v725
  %v727 = vextract.high.u32 %v725
  %v728 = vshrl.u32 %v727, 4
  %v729 = vmul.u32 %v728, 18
  %v730 = vsub.s32 %v724, %v729
  %v731 = vsub.s32 0, %v730
  %v732 = vsel %vm722, %v731, %v730
  %vm733 = vcmp.lt.s32.totalorder %v141, 0
  %v734 = vsub.s32 0, %v141
  %v735 = vsel %vm733, %v734, %v141
  %v736 = vmul.u32.u64.compose %v735, 3817748708
  %v737 = vextract.low.u32 %v736
  %v738 = vextract.high.u32 %v736
  %v739 = vshrl.u32 %v738, 4
  %v740 = vmul.u32 %v739, 18
  %v741 = vsub.s32 %v735, %v740
  %v742 = vsub.s32 0, %v741
  %v743 = vsel %vm733, %v742, %v741
  %vm744 = vcmp.lt.s32.totalorder %v142, 0
  %v745 = vsub.s32 0, %v142
  %v746 = vsel %vm744, %v745, %v142
  %v747 = vmul.u32.u64.compose %v746, 3817748708
  %v748 = vextract.low.u32 %v747
  %v749 = vextract.high.u32 %v747
  %v750 = vshrl.u32 %v749, 4
  %v751 = vmul.u32 %v750, 18
  %v752 = vsub.s32 %v746, %v751
  %v753 = vsub.s32 0, %v752
  %v754 = vsel %vm744, %v753, %v752
  %vm755 = vcmp.lt.s32.totalorder %v143, 0
  %v756 = vsub.s32 0, %v143
  %v757 = vsel %vm755, %v756, %v143
  %v758 = vmul.u32.u64.compose %v757, 3817748708
  %v759 = vextract.low.u32 %v758
  %v760 = vextract.high.u32 %v758
  %v761 = vshrl.u32 %v760, 4
  %v762 = vmul.u32 %v761, 18
  %v763 = vsub.s32 %v757, %v762
  %v764 = vsub.s32 0, %v763
  %v765 = vsel %vm755, %v764, %v763
  %vm766 = vcmp.lt.s32.totalorder %v144, 0
  %v767 = vsub.s32 0, %v144
  %v768 = vsel %vm766, %v767, %v144
  %v769 = vmul.u32.u64.compose %v768, 3817748708
  %v770 = vextract.low.u32 %v769
  %v771 = vextract.high.u32 %v769
  %v772 = vshrl.u32 %v771, 4
  %v773 = vmul.u32 %v772, 18
  %v774 = vsub.s32 %v768, %v773
  %v775 = vsub.s32 0, %v774
  %v776 = vsel %vm766, %v775, %v774
  %vm777 = vcmp.lt.s32.totalorder %v145, 0
  %v778 = vsub.s32 0, %v145
  %v779 = vsel %vm777, %v778, %v145
  %v780 = vmul.u32.u64.compose %v779, 3817748708
  %v781 = vextract.low.u32 %v780
  %v782 = vextract.high.u32 %v780
  %v783 = vshrl.u32 %v782, 4
  %v784 = vmul.u32 %v783, 18
  %v785 = vsub.s32 %v779, %v784
  %v786 = vsub.s32 0, %v785
  %v787 = vsel %vm777, %v786, %v785
  %vm788 = vcmp.lt.s32.totalorder %v146, 0
  %v789 = vsub.s32 0, %v146
  %v790 = vsel %vm788, %v789, %v146
  %v791 = vmul.u32.u64.compose %v790, 3817748708
  %v792 = vextract.low.u32 %v791
  %v793 = vextract.high.u32 %v791
  %v794 = vshrl.u32 %v793, 4
  %v795 = vmul.u32 %v794, 18
  %v796 = vsub.s32 %v790, %v795
  %v797 = vsub.s32 0, %v796
  %v798 = vsel %vm788, %v797, %v796
  %vm799 = vcmp.lt.s32.totalorder %v147, 0
  %v800 = vsub.s32 0, %v147
  %v801 = vsel %vm799, %v800, %v147
  %v802 = vmul.u32.u64.compose %v801, 3817748708
  %v803 = vextract.low.u32 %v802
  %v804 = vextract.high.u32 %v802
  %v805 = vshrl.u32 %v804, 4
  %v806 = vmul.u32 %v805, 18
  %v807 = vsub.s32 %v801, %v806
  %v808 = vsub.s32 0, %v807
  %v809 = vsel %vm799, %v808, %v807
  %vm810 = vcmp.lt.s32.totalorder %v148, 0
  %v811 = vsub.s32 0, %v148
  %v812 = vsel %vm810, %v811, %v148
  %v813 = vmul.u32.u64.compose %v812, 3817748708
  %v814 = vextract.low.u32 %v813
  %v815 = vextract.high.u32 %v813
  %v816 = vshrl.u32 %v815, 4
  %v817 = vmul.u32 %v816, 18
  %v818 = vsub.s32 %v812, %v817
  %v819 = vsub.s32 0, %v818
  %v820 = vsel %vm810, %v819, %v818
  %vm821 = vcmp.lt.s32.totalorder %v149, 0
  %v822 = vsub.s32 0, %v149
  %v823 = vsel %vm821, %v822, %v149
  %v824 = vmul.u32.u64.compose %v823, 3817748708
  %v825 = vextract.low.u32 %v824
  %v826 = vextract.high.u32 %v824
  %v827 = vshrl.u32 %v826, 4
  %v828 = vmul.u32 %v827, 18
  %v829 = vsub.s32 %v823, %v828
  %v830 = vsub.s32 0, %v829
  %v831 = vsel %vm821, %v830, %v829
  %vm832 = vcmp.lt.s32.totalorder %v150, 0
  %v833 = vsub.s32 0, %v150
  %v834 = vsel %vm832, %v833, %v150
  %v835 = vmul.u32.u64.compose %v834, 3817748708
  %v836 = vextract.low.u32 %v835
  %v837 = vextract.high.u32 %v835
  %v838 = vshrl.u32 %v837, 4
  %v839 = vmul.u32 %v838, 18
  %v840 = vsub.s32 %v834, %v839
  %v841 = vsub.s32 0, %v840
  %v842 = vsel %vm832, %v841, %v840
  %vm843 = vcmp.lt.s32.totalorder %v151, 0
  %v844 = vsub.s32 0, %v151
  %v845 = vsel %vm843, %v844, %v151
  %v846 = vmul.u32.u64.compose %v845, 3817748708
  %v847 = vextract.low.u32 %v846
  %v848 = vextract.high.u32 %v846
  %v849 = vshrl.u32 %v848, 4
  %v850 = vmul.u32 %v849, 18
  %v851 = vsub.s32 %v845, %v850
  %v852 = vsub.s32 0, %v851
  %v853 = vsel %vm843, %v852, %v851
  %vm854 = vcmp.lt.s32.totalorder %v152, 0
  %v855 = vsub.s32 0, %v152
  %v856 = vsel %vm854, %v855, %v152
  %v857 = vmul.u32.u64.compose %v856, 3817748708
  %v858 = vextract.low.u32 %v857
  %v859 = vextract.high.u32 %v857
  %v860 = vshrl.u32 %v859, 4
  %v861 = vmul.u32 %v860, 18
  %v862 = vsub.s32 %v856, %v861
  %v863 = vsub.s32 0, %v862
  %v864 = vsel %vm854, %v863, %v862
  %vm865 = vcmp.lt.s32.totalorder %v153, 0
  %v866 = vsub.s32 0, %v153
  %v867 = vsel %vm865, %v866, %v153
  %v868 = vmul.u32.u64.compose %v867, 3817748708
  %v869 = vextract.low.u32 %v868
  %v870 = vextract.high.u32 %v868
  %v871 = vshrl.u32 %v870, 4
  %v872 = vmul.u32 %v871, 18
  %v873 = vsub.s32 %v867, %v872
  %v874 = vsub.s32 0, %v873
  %v875 = vsel %vm865, %v874, %v873
  %vm876 = vcmp.lt.s32.totalorder %v154, 0
  %v877 = vsub.s32 0, %v154
  %v878 = vsel %vm876, %v877, %v154
  %v879 = vmul.u32.u64.compose %v878, 3817748708
  %v880 = vextract.low.u32 %v879
  %v881 = vextract.high.u32 %v879
  %v882 = vshrl.u32 %v881, 4
  %v883 = vmul.u32 %v882, 18
  %v884 = vsub.s32 %v878, %v883
  %v885 = vsub.s32 0, %v884
  %v886 = vsel %vm876, %v885, %v884
  %vm887 = vcmp.lt.s32.totalorder %v155, 0
  %v888 = vsub.s32 0, %v155
  %v889 = vsel %vm887, %v888, %v155
  %v890 = vmul.u32.u64.compose %v889, 3817748708
  %v891 = vextract.low.u32 %v890
  %v892 = vextract.high.u32 %v890
  %v893 = vshrl.u32 %v892, 4
  %v894 = vmul.u32 %v893, 18
  %v895 = vsub.s32 %v889, %v894
  %v896 = vsub.s32 0, %v895
  %v897 = vsel %vm887, %v896, %v895
  %vm898 = vcmp.lt.s32.totalorder %v156, 0
  %v899 = vsub.s32 0, %v156
  %v900 = vsel %vm898, %v899, %v156
  %v901 = vmul.u32.u64.compose %v900, 3817748708
  %v902 = vextract.low.u32 %v901
  %v903 = vextract.high.u32 %v901
  %v904 = vshrl.u32 %v903, 4
  %v905 = vmul.u32 %v904, 18
  %v906 = vsub.s32 %v900, %v905
  %v907 = vsub.s32 0, %v906
  %v908 = vsel %vm898, %v907, %v906
  %vm909 = vcmp.lt.s32.totalorder %v157, 0
  %v910 = vsub.s32 0, %v157
  %v911 = vsel %vm909, %v910, %v157
  %v912 = vmul.u32.u64.compose %v911, 3817748708
  %v913 = vextract.low.u32 %v912
  %v914 = vextract.high.u32 %v912
  %v915 = vshrl.u32 %v914, 4
  %v916 = vmul.u32 %v915, 18
  %v917 = vsub.s32 %v911, %v916
  %v918 = vsub.s32 0, %v917
  %v919 = vsel %vm909, %v918, %v917
  %vm920 = vcmp.lt.s32.totalorder %v158, 0
  %v921 = vsub.s32 0, %v158
  %v922 = vsel %vm920, %v921, %v158
  %v923 = vmul.u32.u64.compose %v922, 3817748708
  %v924 = vextract.low.u32 %v923
  %v925 = vextract.high.u32 %v923
  %v926 = vshrl.u32 %v925, 4
  %v927 = vmul.u32 %v926, 18
  %v928 = vsub.s32 %v922, %v927
  %v929 = vsub.s32 0, %v928
  %v930 = vsel %vm920, %v929, %v928
  %vm931 = vcmp.lt.s32.totalorder %v159, 0
  %v932 = vsub.s32 0, %v159
  %v933 = vsel %vm931, %v932, %v159
  %v934 = vmul.u32.u64.compose %v933, 3817748708
  %v935 = vextract.low.u32 %v934
  %v936 = vextract.high.u32 %v934
  %v937 = vshrl.u32 %v936, 4
  %v938 = vmul.u32 %v937, 18
  %v939 = vsub.s32 %v933, %v938
  %v940 = vsub.s32 0, %v939
  %v941 = vsel %vm931, %v940, %v939
  %vm942 = vcmp.lt.s32.totalorder %v160, 0
  %v943 = vsub.s32 0, %v160
  %v944 = vsel %vm942, %v943, %v160
  %v945 = vmul.u32.u64.compose %v944, 3817748708
  %v946 = vextract.low.u32 %v945
  %v947 = vextract.high.u32 %v945
  %v948 = vshrl.u32 %v947, 4
  %v949 = vmul.u32 %v948, 18
  %v950 = vsub.s32 %v944, %v949
  %v951 = vsub.s32 0, %v950
  %v952 = vsel %vm942, %v951, %v950
  %vm953 = vcmp.ne.s32.totalorder %v171, 0
  %vm954 = vcmp.ne.s32.totalorder %v182, 0
  %vm955 = vcmp.ne.s32.totalorder %v193, 0
  %vm956 = vcmp.ne.s32.totalorder %v204, 0
  %vm957 = vcmp.ne.s32.totalorder %v215, 0
  %vm958 = vcmp.ne.s32.totalorder %v226, 0
  %vm959 = vcmp.ne.s32.totalorder %v237, 0
  %vm960 = vcmp.ne.s32.totalorder %v248, 0
  %vm961 = vcmp.ne.s32.totalorder %v259, 0
  %vm962 = vcmp.ne.s32.totalorder %v270, 0
  %vm963 = vcmp.ne.s32.totalorder %v281, 0
  %vm964 = vcmp.ne.s32.totalorder %v292, 0
  %vm965 = vcmp.ne.s32.totalorder %v303, 0
  %vm966 = vcmp.ne.s32.totalorder %v314, 0
  %vm967 = vcmp.ne.s32.totalorder %v325, 0
  %vm968 = vcmp.ne.s32.totalorder %v336, 0
  %vm969 = vcmp.ne.s32.totalorder %v347, 0
  %vm970 = vcmp.ne.s32.totalorder %v358, 0
  %vm971 = vcmp.ne.s32.totalorder %v369, 0
  %vm972 = vcmp.ne.s32.totalorder %v380, 0
  %vm973 = vcmp.ne.s32.totalorder %v391, 0
  %vm974 = vcmp.ne.s32.totalorder %v402, 0
  %vm975 = vcmp.ne.s32.totalorder %v413, 0
  %vm976 = vcmp.ne.s32.totalorder %v424, 0
  %vm977 = vcmp.ne.s32.totalorder %v435, 0
  %vm978 = vcmp.ne.s32.totalorder %v446, 0
  %vm979 = vcmp.ne.s32.totalorder %v457, 0
  %vm980 = vcmp.ne.s32.totalorder %v468, 0
  %vm981 = vcmp.ne.s32.totalorder %v479, 0
  %vm982 = vcmp.ne.s32.totalorder %v490, 0
  %vm983 = vcmp.ne.s32.totalorder %v501, 0
  %vm984 = vcmp.ne.s32.totalorder %v512, 0
  %vm985 = vcmp.ne.s32.totalorder %v523, 0
  %vm986 = vcmp.ne.s32.totalorder %v534, 0
  %vm987 = vcmp.ne.s32.totalorder %v545, 0
  %vm988 = vcmp.ne.s32.totalorder %v556, 0
  %vm989 = vcmp.ne.s32.totalorder %v567, 0
  %vm990 = vcmp.ne.s32.totalorder %v578, 0
  %vm991 = vcmp.ne.s32.totalorder %v589, 0
  %vm992 = vcmp.ne.s32.totalorder %v600, 0
  %vm993 = vcmp.ne.s32.totalorder %v611, 0
  %vm994 = vcmp.ne.s32.totalorder %v622, 0
  %vm995 = vcmp.ne.s32.totalorder %v633, 0
  %vm996 = vcmp.ne.s32.totalorder %v644, 0
  %vm997 = vcmp.ne.s32.totalorder %v655, 0
  %vm998 = vcmp.ne.s32.totalorder %v666, 0
  %vm999 = vcmp.ne.s32.totalorder %v677, 0
  %vm1000 = vcmp.ne.s32.totalorder %v688, 0
  %vm1001 = vcmp.ne.s32.totalorder %v699, 0
  %vm1002 = vcmp.ne.s32.totalorder %v710, 0
  %vm1003 = vcmp.ne.s32.totalorder %v721, 0
  %vm1004 = vcmp.ne.s32.totalorder %v732, 0
  %vm1005 = vcmp.ne.s32.totalorder %v743, 0
  %vm1006 = vcmp.ne.s32.totalorder %v754, 0
  %vm1007 = vcmp.ne.s32.totalorder %v765, 0
  %vm1008 = vcmp.ne.s32.totalorder %v776, 0
  %vm1009 = vcmp.ne.s32.totalorder %v787, 0
  %vm1010 = vcmp.ne.s32.totalorder %v798, 0
  %vm1011 = vcmp.ne.s32.totalorder %v809, 0
  %vm1012 = vcmp.ne.s32.totalorder %v820, 0
  %vm1013 = vcmp.ne.s32.totalorder %v831, 0
  %vm1014 = vcmp.ne.s32.totalorder %v842, 0
  %vm1015 = vcmp.ne.s32.totalorder %v853, 0
  %vm1016 = vcmp.ne.s32.totalorder %v864, 0
  %vm1017 = vcmp.ne.s32.totalorder %v875, 0
  %vm1018 = vcmp.ne.s32.totalorder %v886, 0
  %vm1019 = vcmp.ne.s32.totalorder %v897, 0
  %vm1020 = vcmp.ne.s32.totalorder %v908, 0
  %vm1021 = vcmp.ne.s32.totalorder %v919, 0
  %vm1022 = vcmp.ne.s32.totalorder %v930, 0
  %vm1023 = vcmp.ne.s32.totalorder %v941, 0
  %vm1024 = vcmp.ne.s32.totalorder %v952, 0
  %vm1025 = vcmp.lt.s32.totalorder %v171, 0
  %vm1026 = vcmp.lt.s32.totalorder %v182, 0
  %vm1027 = vcmp.lt.s32.totalorder %v193, 0
  %vm1028 = vcmp.lt.s32.totalorder %v204, 0
  %vm1029 = vcmp.lt.s32.totalorder %v215, 0
  %vm1030 = vcmp.lt.s32.totalorder %v226, 0
  %vm1031 = vcmp.lt.s32.totalorder %v237, 0
  %vm1032 = vcmp.lt.s32.totalorder %v248, 0
  %vm1033 = vcmp.lt.s32.totalorder %v259, 0
  %vm1034 = vcmp.lt.s32.totalorder %v270, 0
  %vm1035 = vcmp.lt.s32.totalorder %v281, 0
  %vm1036 = vcmp.lt.s32.totalorder %v292, 0
  %vm1037 = vcmp.lt.s32.totalorder %v303, 0
  %vm1038 = vcmp.lt.s32.totalorder %v314, 0
  %vm1039 = vcmp.lt.s32.totalorder %v325, 0
  %vm1040 = vcmp.lt.s32.totalorder %v336, 0
  %vm1041 = vcmp.lt.s32.totalorder %v347, 0
  %vm1042 = vcmp.lt.s32.totalorder %v358, 0
  %vm1043 = vcmp.lt.s32.totalorder %v369, 0
  %vm1044 = vcmp.lt.s32.totalorder %v380, 0
  %vm1045 = vcmp.lt.s32.totalorder %v391, 0
  %vm1046 = vcmp.lt.s32.totalorder %v402, 0
  %vm1047 = vcmp.lt.s32.totalorder %v413, 0
  %vm1048 = vcmp.lt.s32.totalorder %v424, 0
  %vm1049 = vcmp.lt.s32.totalorder %v435, 0
  %vm1050 = vcmp.lt.s32.totalorder %v446, 0
  %vm1051 = vcmp.lt.s32.totalorder %v457, 0
  %vm1052 = vcmp.lt.s32.totalorder %v468, 0
  %vm1053 = vcmp.lt.s32.totalorder %v479, 0
  %vm1054 = vcmp.lt.s32.totalorder %v490, 0
  %vm1055 = vcmp.lt.s32.totalorder %v501, 0
  %vm1056 = vcmp.lt.s32.totalorder %v512, 0
  %vm1057 = vcmp.lt.s32.totalorder %v523, 0
  %vm1058 = vcmp.lt.s32.totalorder %v534, 0
  %vm1059 = vcmp.lt.s32.totalorder %v545, 0
  %vm1060 = vcmp.lt.s32.totalorder %v556, 0
  %vm1061 = vcmp.lt.s32.totalorder %v567, 0
  %vm1062 = vcmp.lt.s32.totalorder %v578, 0
  %vm1063 = vcmp.lt.s32.totalorder %v589, 0
  %vm1064 = vcmp.lt.s32.totalorder %v600, 0
  %vm1065 = vcmp.lt.s32.totalorder %v611, 0
  %vm1066 = vcmp.lt.s32.totalorder %v622, 0
  %vm1067 = vcmp.lt.s32.totalorder %v633, 0
  %vm1068 = vcmp.lt.s32.totalorder %v644, 0
  %vm1069 = vcmp.lt.s32.totalorder %v655, 0
  %vm1070 = vcmp.lt.s32.totalorder %v666, 0
  %vm1071 = vcmp.lt.s32.totalorder %v677, 0
  %vm1072 = vcmp.lt.s32.totalorder %v688, 0
  %vm1073 = vcmp.lt.s32.totalorder %v699, 0
  %vm1074 = vcmp.lt.s32.totalorder %v710, 0
  %vm1075 = vcmp.lt.s32.totalorder %v721, 0
  %vm1076 = vcmp.lt.s32.totalorder %v732, 0
  %vm1077 = vcmp.lt.s32.totalorder %v743, 0
  %vm1078 = vcmp.lt.s32.totalorder %v754, 0
  %vm1079 = vcmp.lt.s32.totalorder %v765, 0
  %vm1080 = vcmp.lt.s32.totalorder %v776, 0
  %vm1081 = vcmp.lt.s32.totalorder %v787, 0
  %vm1082 = vcmp.lt.s32.totalorder %v798, 0
  %vm1083 = vcmp.lt.s32.totalorder %v809, 0
  %vm1084 = vcmp.lt.s32.totalorder %v820, 0
  %vm1085 = vcmp.lt.s32.totalorder %v831, 0
  %vm1086 = vcmp.lt.s32.totalorder %v842, 0
  %vm1087 = vcmp.lt.s32.totalorder %v853, 0
  %vm1088 = vcmp.lt.s32.totalorder %v864, 0
  %vm1089 = vcmp.lt.s32.totalorder %v875, 0
  %vm1090 = vcmp.lt.s32.totalorder %v886, 0
  %vm1091 = vcmp.lt.s32.totalorder %v897, 0
  %vm1092 = vcmp.lt.s32.totalorder %v908, 0
  %vm1093 = vcmp.lt.s32.totalorder %v919, 0
  %vm1094 = vcmp.lt.s32.totalorder %v930, 0
  %vm1095 = vcmp.lt.s32.totalorder %v941, 0
  %vm1096 = vcmp.lt.s32.totalorder %v952, 0
  %vm1097 = vmand %vm1025, %vm953
  %vm1098 = vmand %vm1026, %vm954
  %vm1099 = vmand %vm1027, %vm955
  %vm1100 = vmand %vm1028, %vm956
  %vm1101 = vmand %vm1029, %vm957
  %vm1102 = vmand %vm1030, %vm958
  %vm1103 = vmand %vm1031, %vm959
  %vm1104 = vmand %vm1032, %vm960
  %vm1105 = vmand %vm1033, %vm961
  %vm1106 = vmand %vm1034, %vm962
  %vm1107 = vmand %vm1035, %vm963
  %vm1108 = vmand %vm1036, %vm964
  %vm1109 = vmand %vm1037, %vm965
  %vm1110 = vmand %vm1038, %vm966
  %vm1111 = vmand %vm1039, %vm967
  %vm1112 = vmand %vm1040, %vm968
  %vm1113 = vmand %vm1041, %vm969
  %vm1114 = vmand %vm1042, %vm970
  %vm1115 = vmand %vm1043, %vm971
  %vm1116 = vmand %vm1044, %vm972
  %vm1117 = vmand %vm1045, %vm973
  %vm1118 = vmand %vm1046, %vm974
  %vm1119 = vmand %vm1047, %vm975
  %vm1120 = vmand %vm1048, %vm976
  %vm1121 = vmand %vm1049, %vm977
  %vm1122 = vmand %vm1050, %vm978
  %vm1123 = vmand %vm1051, %vm979
  %vm1124 = vmand %vm1052, %vm980
  %vm1125 = vmand %vm1053, %vm981
  %vm1126 = vmand %vm1054, %vm982
  %vm1127 = vmand %vm1055, %vm983
  %vm1128 = vmand %vm1056, %vm984
  %vm1129 = vmand %vm1057, %vm985
  %vm1130 = vmand %vm1058, %vm986
  %vm1131 = vmand %vm1059, %vm987
  %vm1132 = vmand %vm1060, %vm988
  %vm1133 = vmand %vm1061, %vm989
  %vm1134 = vmand %vm1062, %vm990
  %vm1135 = vmand %vm1063, %vm991
  %vm1136 = vmand %vm1064, %vm992
  %vm1137 = vmand %vm1065, %vm993
  %vm1138 = vmand %vm1066, %vm994
  %vm1139 = vmand %vm1067, %vm995
  %vm1140 = vmand %vm1068, %vm996
  %vm1141 = vmand %vm1069, %vm997
  %vm1142 = vmand %vm1070, %vm998
  %vm1143 = vmand %vm1071, %vm999
  %vm1144 = vmand %vm1072, %vm1000
  %vm1145 = vmand %vm1073, %vm1001
  %vm1146 = vmand %vm1074, %vm1002
  %vm1147 = vmand %vm1075, %vm1003
  %vm1148 = vmand %vm1076, %vm1004
  %vm1149 = vmand %vm1077, %vm1005
  %vm1150 = vmand %vm1078, %vm1006
  %vm1151 = vmand %vm1079, %vm1007
  %vm1152 = vmand %vm1080, %vm1008
  %vm1153 = vmand %vm1081, %vm1009
  %vm1154 = vmand %vm1082, %vm1010
  %vm1155 = vmand %vm1083, %vm1011
  %vm1156 = vmand %vm1084, %vm1012
  %vm1157 = vmand %vm1085, %vm1013
  %vm1158 = vmand %vm1086, %vm1014
  %vm1159 = vmand %vm1087, %vm1015
  %vm1160 = vmand %vm1088, %vm1016
  %vm1161 = vmand %vm1089, %vm1017
  %vm1162 = vmand %vm1090, %vm1018
  %vm1163 = vmand %vm1091, %vm1019
  %vm1164 = vmand %vm1092, %vm1020
  %vm1165 = vmand %vm1093, %vm1021
  %vm1166 = vmand %vm1094, %vm1022
  %vm1167 = vmand %vm1095, %vm1023
  %vm1168 = vmand %vm1096, %vm1024
  %v1169 = vadd.s32 %v171, 18
  %v1170 = vadd.s32 %v182, 18
  %v1171 = vadd.s32 %v193, 18
  %v1172 = vadd.s32 %v204, 18
  %v1173 = vadd.s32 %v215, 18
  %v1174 = vadd.s32 %v226, 18
  %v1175 = vadd.s32 %v237, 18
  %v1176 = vadd.s32 %v248, 18
  %v1177 = vadd.s32 %v259, 18
  %v1178 = vadd.s32 %v270, 18
  %v1179 = vadd.s32 %v281, 18
  %v1180 = vadd.s32 %v292, 18
  %v1181 = vadd.s32 %v303, 18
  %v1182 = vadd.s32 %v314, 18
  %v1183 = vadd.s32 %v325, 18
  %v1184 = vadd.s32 %v336, 18
  %v1185 = vadd.s32 %v347, 18
  %v1186 = vadd.s32 %v358, 18
  %v1187 = vadd.s32 %v369, 18
  %v1188 = vadd.s32 %v380, 18
  %v1189 = vadd.s32 %v391, 18
  %v1190 = vadd.s32 %v402, 18
  %v1191 = vadd.s32 %v413, 18
  %v1192 = vadd.s32 %v424, 18
  %v1193 = vadd.s32 %v435, 18
  %v1194 = vadd.s32 %v446, 18
  %v1195 = vadd.s32 %v457, 18
  %v1196 = vadd.s32 %v468, 18
  %v1197 = vadd.s32 %v479, 18
  %v1198 = vadd.s32 %v490, 18
  %v1199 = vadd.s32 %v501, 18
  %v1200 = vadd.s32 %v512, 18
  %v1201 = vadd.s32 %v523, 18
  %v1202 = vadd.s32 %v534, 18
  %v1203 = vadd.s32 %v545, 18
  %v1204 = vadd.s32 %v556, 18
  %v1205 = vadd.s32 %v567, 18
  %v1206 = vadd.s32 %v578, 18
  %v1207 = vadd.s32 %v589, 18
  %v1208 = vadd.s32 %v600, 18
  %v1209 = vadd.s32 %v611, 18
  %v1210 = vadd.s32 %v622, 18
  %v1211 = vadd.s32 %v633, 18
  %v1212 = vadd.s32 %v644, 18
  %v1213 = vadd.s32 %v655, 18
  %v1214 = vadd.s32 %v666, 18
  %v1215 = vadd.s32 %v677, 18
  %v1216 = vadd.s32 %v688, 18
  %v1217 = vadd.s32 %v699, 18
  %v1218 = vadd.s32 %v710, 18
  %v1219 = vadd.s32 %v721, 18
  %v1220 = vadd.s32 %v732, 18
  %v1221 = vadd.s32 %v743, 18
  %v1222 = vadd.s32 %v754, 18
  %v1223 = vadd.s32 %v765, 18
  %v1224 = vadd.s32 %v776, 18
  %v1225 = vadd.s32 %v787, 18
  %v1226 = vadd.s32 %v798, 18
  %v1227 = vadd.s32 %v809, 18
  %v1228 = vadd.s32 %v820, 18
  %v1229 = vadd.s32 %v831, 18
  %v1230 = vadd.s32 %v842, 18
  %v1231 = vadd.s32 %v853, 18
  %v1232 = vadd.s32 %v864, 18
  %v1233 = vadd.s32 %v875, 18
  %v1234 = vadd.s32 %v886, 18
  %v1235 = vadd.s32 %v897, 18
  %v1236 = vadd.s32 %v908, 18
  %v1237 = vadd.s32 %v919, 18
  %v1238 = vadd.s32 %v930, 18
  %v1239 = vadd.s32 %v941, 18
  %v1240 = vadd.s32 %v952, 18
  %v1241 = vsel %vm1097, %v1169, %v171
  %v1242 = vsel %vm1098, %v1170, %v182
  %v1243 = vsel %vm1099, %v1171, %v193
  %v1244 = vsel %vm1100, %v1172, %v204
  %v1245 = vsel %vm1101, %v1173, %v215
  %v1246 = vsel %vm1102, %v1174, %v226
  %v1247 = vsel %vm1103, %v1175, %v237
  %v1248 = vsel %vm1104, %v1176, %v248
  %v1249 = vsel %vm1105, %v1177, %v259
  %v1250 = vsel %vm1106, %v1178, %v270
  %v1251 = vsel %vm1107, %v1179, %v281
  %v1252 = vsel %vm1108, %v1180, %v292
  %v1253 = vsel %vm1109, %v1181, %v303
  %v1254 = vsel %vm1110, %v1182, %v314
  %v1255 = vsel %vm1111, %v1183, %v325
  %v1256 = vsel %vm1112, %v1184, %v336
  %v1257 = vsel %vm1113, %v1185, %v347
  %v1258 = vsel %vm1114, %v1186, %v358
  %v1259 = vsel %vm1115, %v1187, %v369
  %v1260 = vsel %vm1116, %v1188, %v380
  %v1261 = vsel %vm1117, %v1189, %v391
  %v1262 = vsel %vm1118, %v1190, %v402
  %v1263 = vsel %vm1119, %v1191, %v413
  %v1264 = vsel %vm1120, %v1192, %v424
  %v1265 = vsel %vm1121, %v1193, %v435
  %v1266 = vsel %vm1122, %v1194, %v446
  %v1267 = vsel %vm1123, %v1195, %v457
  %v1268 = vsel %vm1124, %v1196, %v468
  %v1269 = vsel %vm1125, %v1197, %v479
  %v1270 = vsel %vm1126, %v1198, %v490
  %v1271 = vsel %vm1127, %v1199, %v501
  %v1272 = vsel %vm1128, %v1200, %v512
  %v1273 = vsel %vm1129, %v1201, %v523
  %v1274 = vsel %vm1130, %v1202, %v534
  %v1275 = vsel %vm1131, %v1203, %v545
  %v1276 = vsel %vm1132, %v1204, %v556
  %v1277 = vsel %vm1133, %v1205, %v567
  %v1278 = vsel %vm1134, %v1206, %v578
  %v1279 = vsel %vm1135, %v1207, %v589
  %v1280 = vsel %vm1136, %v1208, %v600
  %v1281 = vsel %vm1137, %v1209, %v611
  %v1282 = vsel %vm1138, %v1210, %v622
  %v1283 = vsel %vm1139, %v1211, %v633
  %v1284 = vsel %vm1140, %v1212, %v644
  %v1285 = vsel %vm1141, %v1213, %v655
  %v1286 = vsel %vm1142, %v1214, %v666
  %v1287 = vsel %vm1143, %v1215, %v677
  %v1288 = vsel %vm1144, %v1216, %v688
  %v1289 = vsel %vm1145, %v1217, %v699
  %v1290 = vsel %vm1146, %v1218, %v710
  %v1291 = vsel %vm1147, %v1219, %v721
  %v1292 = vsel %vm1148, %v1220, %v732
  %v1293 = vsel %vm1149, %v1221, %v743
  %v1294 = vsel %vm1150, %v1222, %v754
  %v1295 = vsel %vm1151, %v1223, %v765
  %v1296 = vsel %vm1152, %v1224, %v776
  %v1297 = vsel %vm1153, %v1225, %v787
  %v1298 = vsel %vm1154, %v1226, %v798
  %v1299 = vsel %vm1155, %v1227, %v809
  %v1300 = vsel %vm1156, %v1228, %v820
  %v1301 = vsel %vm1157, %v1229, %v831
  %v1302 = vsel %vm1158, %v1230, %v842
  %v1303 = vsel %vm1159, %v1231, %v853
  %v1304 = vsel %vm1160, %v1232, %v864
  %v1305 = vsel %vm1161, %v1233, %v875
  %v1306 = vsel %vm1162, %v1234, %v886
  %v1307 = vsel %vm1163, %v1235, %v897
  %v1308 = vsel %vm1164, %v1236, %v908
  %v1309 = vsel %vm1165, %v1237, %v919
  %v1310 = vsel %vm1166, %v1238, %v930
  %v1311 = vsel %vm1167, %v1239, %v941
  %v1312 = vsel %vm1168, %v1240, %v952
  %vm1313 = vcmp.ge.s32.totalorder %v1241, 1
  %vm1314 = vcmp.ge.s32.totalorder %v1242, 1
  %vm1315 = vcmp.ge.s32.totalorder %v1243, 1
  %vm1316 = vcmp.ge.s32.totalorder %v1244, 1
  %vm1317 = vcmp.ge.s32.totalorder %v1245, 1
  %vm1318 = vcmp.ge.s32.totalorder %v1246, 1
  %vm1319 = vcmp.ge.s32.totalorder %v1247, 1
  %vm1320 = vcmp.ge.s32.totalorder %v1248, 1
  %vm1321 = vcmp.ge.s32.totalorder %v1249, 1
  %vm1322 = vcmp.ge.s32.totalorder %v1250, 1
  %vm1323 = vcmp.ge.s32.totalorder %v1251, 1
  %vm1324 = vcmp.ge.s32.totalorder %v1252, 1
  %vm1325 = vcmp.ge.s32.totalorder %v1253, 1
  %vm1326 = vcmp.ge.s32.totalorder %v1254, 1
  %vm1327 = vcmp.ge.s32.totalorder %v1255, 1
  %vm1328 = vcmp.ge.s32.totalorder %v1256, 1
  %vm1329 = vcmp.ge.s32.totalorder %v1257, 1
  %vm1330 = vcmp.ge.s32.totalorder %v1258, 1
  %vm1331 = vcmp.ge.s32.totalorder %v1259, 1
  %vm1332 = vcmp.ge.s32.totalorder %v1260, 1
  %vm1333 = vcmp.ge.s32.totalorder %v1261, 1
  %vm1334 = vcmp.ge.s32.totalorder %v1262, 1
  %vm1335 = vcmp.ge.s32.totalorder %v1263, 1
  %vm1336 = vcmp.ge.s32.totalorder %v1264, 1
  %vm1337 = vcmp.ge.s32.totalorder %v1265, 1
  %vm1338 = vcmp.ge.s32.totalorder %v1266, 1
  %vm1339 = vcmp.ge.s32.totalorder %v1267, 1
  %vm1340 = vcmp.ge.s32.totalorder %v1268, 1
  %vm1341 = vcmp.ge.s32.totalorder %v1269, 1
  %vm1342 = vcmp.ge.s32.totalorder %v1270, 1
  %vm1343 = vcmp.ge.s32.totalorder %v1271, 1
  %vm1344 = vcmp.ge.s32.totalorder %v1272, 1
  %vm1345 = vcmp.ge.s32.totalorder %v1273, 1
  %vm1346 = vcmp.ge.s32.totalorder %v1274, 1
  %vm1347 = vcmp.ge.s32.totalorder %v1275, 1
  %vm1348 = vcmp.ge.s32.totalorder %v1276, 1
  %vm1349 = vcmp.ge.s32.totalorder %v1277, 1
  %vm1350 = vcmp.ge.s32.totalorder %v1278, 1
  %vm1351 = vcmp.ge.s32.totalorder %v1279, 1
  %vm1352 = vcmp.ge.s32.totalorder %v1280, 1
  %vm1353 = vcmp.ge.s32.totalorder %v1281, 1
  %vm1354 = vcmp.ge.s32.totalorder %v1282, 1
  %vm1355 = vcmp.ge.s32.totalorder %v1283, 1
  %vm1356 = vcmp.ge.s32.totalorder %v1284, 1
  %vm1357 = vcmp.ge.s32.totalorder %v1285, 1
  %vm1358 = vcmp.ge.s32.totalorder %v1286, 1
  %vm1359 = vcmp.ge.s32.totalorder %v1287, 1
  %vm1360 = vcmp.ge.s32.totalorder %v1288, 1
  %vm1361 = vcmp.ge.s32.totalorder %v1289, 1
  %vm1362 = vcmp.ge.s32.totalorder %v1290, 1
  %vm1363 = vcmp.ge.s32.totalorder %v1291, 1
  %vm1364 = vcmp.ge.s32.totalorder %v1292, 1
  %vm1365 = vcmp.ge.s32.totalorder %v1293, 1
  %vm1366 = vcmp.ge.s32.totalorder %v1294, 1
  %vm1367 = vcmp.ge.s32.totalorder %v1295, 1
  %vm1368 = vcmp.ge.s32.totalorder %v1296, 1
  %vm1369 = vcmp.ge.s32.totalorder %v1297, 1
  %vm1370 = vcmp.ge.s32.totalorder %v1298, 1
  %vm1371 = vcmp.ge.s32.totalorder %v1299, 1
  %vm1372 = vcmp.ge.s32.totalorder %v1300, 1
  %vm1373 = vcmp.ge.s32.totalorder %v1301, 1
  %vm1374 = vcmp.ge.s32.totalorder %v1302, 1
  %vm1375 = vcmp.ge.s32.totalorder %v1303, 1
  %vm1376 = vcmp.ge.s32.totalorder %v1304, 1
  %vm1377 = vcmp.ge.s32.totalorder %v1305, 1
  %vm1378 = vcmp.ge.s32.totalorder %v1306, 1
  %vm1379 = vcmp.ge.s32.totalorder %v1307, 1
  %vm1380 = vcmp.ge.s32.totalorder %v1308, 1
  %vm1381 = vcmp.ge.s32.totalorder %v1309, 1
  %vm1382 = vcmp.ge.s32.totalorder %v1310, 1
  %vm1383 = vcmp.ge.s32.totalorder %v1311, 1
  %vm1384 = vcmp.ge.s32.totalorder %v1312, 1
  %vm1385 = vcmp.le.s32.totalorder %v1241, 16
  %vm1386 = vcmp.le.s32.totalorder %v1242, 16
  %vm1387 = vcmp.le.s32.totalorder %v1243, 16
  %vm1388 = vcmp.le.s32.totalorder %v1244, 16
  %vm1389 = vcmp.le.s32.totalorder %v1245, 16
  %vm1390 = vcmp.le.s32.totalorder %v1246, 16
  %vm1391 = vcmp.le.s32.totalorder %v1247, 16
  %vm1392 = vcmp.le.s32.totalorder %v1248, 16
  %vm1393 = vcmp.le.s32.totalorder %v1249, 16
  %vm1394 = vcmp.le.s32.totalorder %v1250, 16
  %vm1395 = vcmp.le.s32.totalorder %v1251, 16
  %vm1396 = vcmp.le.s32.totalorder %v1252, 16
  %vm1397 = vcmp.le.s32.totalorder %v1253, 16
  %vm1398 = vcmp.le.s32.totalorder %v1254, 16
  %vm1399 = vcmp.le.s32.totalorder %v1255, 16
  %vm1400 = vcmp.le.s32.totalorder %v1256, 16
  %vm1401 = vcmp.le.s32.totalorder %v1257, 16
  %vm1402 = vcmp.le.s32.totalorder %v1258, 16
  %vm1403 = vcmp.le.s32.totalorder %v1259, 16
  %vm1404 = vcmp.le.s32.totalorder %v1260, 16
  %vm1405 = vcmp.le.s32.totalorder %v1261, 16
  %vm1406 = vcmp.le.s32.totalorder %v1262, 16
  %vm1407 = vcmp.le.s32.totalorder %v1263, 16
  %vm1408 = vcmp.le.s32.totalorder %v1264, 16
  %vm1409 = vcmp.le.s32.totalorder %v1265, 16
  %vm1410 = vcmp.le.s32.totalorder %v1266, 16
  %vm1411 = vcmp.le.s32.totalorder %v1267, 16
  %vm1412 = vcmp.le.s32.totalorder %v1268, 16
  %vm1413 = vcmp.le.s32.totalorder %v1269, 16
  %vm1414 = vcmp.le.s32.totalorder %v1270, 16
  %vm1415 = vcmp.le.s32.totalorder %v1271, 16
  %vm1416 = vcmp.le.s32.totalorder %v1272, 16
  %vm1417 = vcmp.le.s32.totalorder %v1273, 16
  %vm1418 = vcmp.le.s32.totalorder %v1274, 16
  %vm1419 = vcmp.le.s32.totalorder %v1275, 16
  %vm1420 = vcmp.le.s32.totalorder %v1276, 16
  %vm1421 = vcmp.le.s32.totalorder %v1277, 16
  %vm1422 = vcmp.le.s32.totalorder %v1278, 16
  %vm1423 = vcmp.le.s32.totalorder %v1279, 16
  %vm1424 = vcmp.le.s32.totalorder %v1280, 16
  %vm1425 = vcmp.le.s32.totalorder %v1281, 16
  %vm1426 = vcmp.le.s32.totalorder %v1282, 16
  %vm1427 = vcmp.le.s32.totalorder %v1283, 16
  %vm1428 = vcmp.le.s32.totalorder %v1284, 16
  %vm1429 = vcmp.le.s32.totalorder %v1285, 16
  %vm1430 = vcmp.le.s32.totalorder %v1286, 16
  %vm1431 = vcmp.le.s32.totalorder %v1287, 16
  %vm1432 = vcmp.le.s32.totalorder %v1288, 16
  %vm1433 = vcmp.le.s32.totalorder %v1289, 16
  %vm1434 = vcmp.le.s32.totalorder %v1290, 16
  %vm1435 = vcmp.le.s32.totalorder %v1291, 16
  %vm1436 = vcmp.le.s32.totalorder %v1292, 16
  %vm1437 = vcmp.le.s32.totalorder %v1293, 16
  %vm1438 = vcmp.le.s32.totalorder %v1294, 16
  %vm1439 = vcmp.le.s32.totalorder %v1295, 16
  %vm1440 = vcmp.le.s32.totalorder %v1296, 16
  %vm1441 = vcmp.le.s32.totalorder %v1297, 16
  %vm1442 = vcmp.le.s32.totalorder %v1298, 16
  %vm1443 = vcmp.le.s32.totalorder %v1299, 16
  %vm1444 = vcmp.le.s32.totalorder %v1300, 16
  %vm1445 = vcmp.le.s32.totalorder %v1301, 16
  %vm1446 = vcmp.le.s32.totalorder %v1302, 16
  %vm1447 = vcmp.le.s32.totalorder %v1303, 16
  %vm1448 = vcmp.le.s32.totalorder %v1304, 16
  %vm1449 = vcmp.le.s32.totalorder %v1305, 16
  %vm1450 = vcmp.le.s32.totalorder %v1306, 16
  %vm1451 = vcmp.le.s32.totalorder %v1307, 16
  %vm1452 = vcmp.le.s32.totalorder %v1308, 16
  %vm1453 = vcmp.le.s32.totalorder %v1309, 16
  %vm1454 = vcmp.le.s32.totalorder %v1310, 16
  %vm1455 = vcmp.le.s32.totalorder %v1311, 16
  %vm1456 = vcmp.le.s32.totalorder %v1312, 16
  %vm1457 = vmand %vm1313, %vm1385
  %vm1458 = vmand %vm1314, %vm1386
  %vm1459 = vmand %vm1315, %vm1387
  %vm1460 = vmand %vm1316, %vm1388
  %vm1461 = vmand %vm1317, %vm1389
  %vm1462 = vmand %vm1318, %vm1390
  %vm1463 = vmand %vm1319, %vm1391
  %vm1464 = vmand %vm1320, %vm1392
  %vm1465 = vmand %vm1321, %vm1393
  %vm1466 = vmand %vm1322, %vm1394
  %vm1467 = vmand %vm1323, %vm1395
  %vm1468 = vmand %vm1324, %vm1396
  %vm1469 = vmand %vm1325, %vm1397
  %vm1470 = vmand %vm1326, %vm1398
  %vm1471 = vmand %vm1327, %vm1399
  %vm1472 = vmand %vm1328, %vm1400
  %vm1473 = vmand %vm1329, %vm1401
  %vm1474 = vmand %vm1330, %vm1402
  %vm1475 = vmand %vm1331, %vm1403
  %vm1476 = vmand %vm1332, %vm1404
  %vm1477 = vmand %vm1333, %vm1405
  %vm1478 = vmand %vm1334, %vm1406
  %vm1479 = vmand %vm1335, %vm1407
  %vm1480 = vmand %vm1336, %vm1408
  %vm1481 = vmand %vm1337, %vm1409
  %vm1482 = vmand %vm1338, %vm1410
  %vm1483 = vmand %vm1339, %vm1411
  %vm1484 = vmand %vm1340, %vm1412
  %vm1485 = vmand %vm1341, %vm1413
  %vm1486 = vmand %vm1342, %vm1414
  %vm1487 = vmand %vm1343, %vm1415
  %vm1488 = vmand %vm1344, %vm1416
  %vm1489 = vmand %vm1345, %vm1417
  %vm1490 = vmand %vm1346, %vm1418
  %vm1491 = vmand %vm1347, %vm1419
  %vm1492 = vmand %vm1348, %vm1420
  %vm1493 = vmand %vm1349, %vm1421
  %vm1494 = vmand %vm1350, %vm1422
  %vm1495 = vmand %vm1351, %vm1423
  %vm1496 = vmand %vm1352, %vm1424
  %vm1497 = vmand %vm1353, %vm1425
  %vm1498 = vmand %vm1354, %vm1426
  %vm1499 = vmand %vm1355, %vm1427
  %vm1500 = vmand %vm1356, %vm1428
  %vm1501 = vmand %vm1357, %vm1429
  %vm1502 = vmand %vm1358, %vm1430
  %vm1503 = vmand %vm1359, %vm1431
  %vm1504 = vmand %vm1360, %vm1432
  %vm1505 = vmand %vm1361, %vm1433
  %vm1506 = vmand %vm1362, %vm1434
  %vm1507 = vmand %vm1363, %vm1435
  %vm1508 = vmand %vm1364, %vm1436
  %vm1509 = vmand %vm1365, %vm1437
  %vm1510 = vmand %vm1366, %vm1438
  %vm1511 = vmand %vm1367, %vm1439
  %vm1512 = vmand %vm1368, %vm1440
  %vm1513 = vmand %vm1369, %vm1441
  %vm1514 = vmand %vm1370, %vm1442
  %vm1515 = vmand %vm1371, %vm1443
  %vm1516 = vmand %vm1372, %vm1444
  %vm1517 = vmand %vm1373, %vm1445
  %vm1518 = vmand %vm1374, %vm1446
  %vm1519 = vmand %vm1375, %vm1447
  %vm1520 = vmand %vm1376, %vm1448
  %vm1521 = vmand %vm1377, %vm1449
  %vm1522 = vmand %vm1378, %vm1450
  %vm1523 = vmand %vm1379, %vm1451
  %vm1524 = vmand %vm1380, %vm1452
  %vm1525 = vmand %vm1381, %vm1453
  %vm1526 = vmand %vm1382, %vm1454
  %vm1527 = vmand %vm1383, %vm1455
  %vm1528 = vmand %vm1384, %vm1456
  %v1529 = vsel %vm1457, 1, 0
  %v1530 = vsel %vm1458, 1, 0
  %v1531 = vsel %vm1459, 1, 0
  %v1532 = vsel %vm1460, 1, 0
  %v1533 = vsel %vm1461, 1, 0
  %v1534 = vsel %vm1462, 1, 0
  %v1535 = vsel %vm1463, 1, 0
  %v1536 = vsel %vm1464, 1, 0
  %v1537 = vsel %vm1465, 1, 0
  %v1538 = vsel %vm1466, 1, 0
  %v1539 = vsel %vm1467, 1, 0
  %v1540 = vsel %vm1468, 1, 0
  %v1541 = vsel %vm1469, 1, 0
  %v1542 = vsel %vm1470, 1, 0
  %v1543 = vsel %vm1471, 1, 0
  %v1544 = vsel %vm1472, 1, 0
  %v1545 = vsel %vm1473, 1, 0
  %v1546 = vsel %vm1474, 1, 0
  %v1547 = vsel %vm1475, 1, 0
  %v1548 = vsel %vm1476, 1, 0
  %v1549 = vsel %vm1477, 1, 0
  %v1550 = vsel %vm1478, 1, 0
  %v1551 = vsel %vm1479, 1, 0
  %v1552 = vsel %vm1480, 1, 0
  %v1553 = vsel %vm1481, 1, 0
  %v1554 = vsel %vm1482, 1, 0
  %v1555 = vsel %vm1483, 1, 0
  %v1556 = vsel %vm1484, 1, 0
  %v1557 = vsel %vm1485, 1, 0
  %v1558 = vsel %vm1486, 1, 0
  %v1559 = vsel %vm1487, 1, 0
  %v1560 = vsel %vm1488, 1, 0
  %v1561 = vsel %vm1489, 1, 0
  %v1562 = vsel %vm1490, 1, 0
  %v1563 = vsel %vm1491, 1, 0
  %v1564 = vsel %vm1492, 1, 0
  %v1565 = vsel %vm1493, 1, 0
  %v1566 = vsel %vm1494, 1, 0
  %v1567 = vsel %vm1495, 1, 0
  %v1568 = vsel %vm1496, 1, 0
  %v1569 = vsel %vm1497, 1, 0
  %v1570 = vsel %vm1498, 1, 0
  %v1571 = vsel %vm1499, 1, 0
  %v1572 = vsel %vm1500, 1, 0
  %v1573 = vsel %vm1501, 1, 0
  %v1574 = vsel %vm1502, 1, 0
  %v1575 = vsel %vm1503, 1, 0
  %v1576 = vsel %vm1504, 1, 0
  %v1577 = vsel %vm1505, 1, 0
  %v1578 = vsel %vm1506, 1, 0
  %v1579 = vsel %vm1507, 1, 0
  %v1580 = vsel %vm1508, 1, 0
  %v1581 = vsel %vm1509, 1, 0
  %v1582 = vsel %vm1510, 1, 0
  %v1583 = vsel %vm1511, 1, 0
  %v1584 = vsel %vm1512, 1, 0
  %v1585 = vsel %vm1513, 1, 0
  %v1586 = vsel %vm1514, 1, 0
  %v1587 = vsel %vm1515, 1, 0
  %v1588 = vsel %vm1516, 1, 0
  %v1589 = vsel %vm1517, 1, 0
  %v1590 = vsel %vm1518, 1, 0
  %v1591 = vsel %vm1519, 1, 0
  %v1592 = vsel %vm1520, 1, 0
  %v1593 = vsel %vm1521, 1, 0
  %v1594 = vsel %vm1522, 1, 0
  %v1595 = vsel %vm1523, 1, 0
  %v1596 = vsel %vm1524, 1, 0
  %v1597 = vsel %vm1525, 1, 0
  %v1598 = vsel %vm1526, 1, 0
  %v1599 = vsel %vm1527, 1, 0
  %v1600 = vsel %vm1528, 1, 0
  %v1601 = vcvt.s32.f32 %v1529
  %v1602 = vcvt.s32.f32 %v1530
  %v1603 = vcvt.s32.f32 %v1531
  %v1604 = vcvt.s32.f32 %v1532
  %v1605 = vcvt.s32.f32 %v1533
  %v1606 = vcvt.s32.f32 %v1534
  %v1607 = vcvt.s32.f32 %v1535
  %v1608 = vcvt.s32.f32 %v1536
  %v1609 = vcvt.s32.f32 %v1537
  %v1610 = vcvt.s32.f32 %v1538
  %v1611 = vcvt.s32.f32 %v1539
  %v1612 = vcvt.s32.f32 %v1540
  %v1613 = vcvt.s32.f32 %v1541
  %v1614 = vcvt.s32.f32 %v1542
  %v1615 = vcvt.s32.f32 %v1543
  %v1616 = vcvt.s32.f32 %v1544
  %v1617 = vcvt.s32.f32 %v1545
  %v1618 = vcvt.s32.f32 %v1546
  %v1619 = vcvt.s32.f32 %v1547
  %v1620 = vcvt.s32.f32 %v1548
  %v1621 = vcvt.s32.f32 %v1549
  %v1622 = vcvt.s32.f32 %v1550
  %v1623 = vcvt.s32.f32 %v1551
  %v1624 = vcvt.s32.f32 %v1552
  %v1625 = vcvt.s32.f32 %v1553
  %v1626 = vcvt.s32.f32 %v1554
  %v1627 = vcvt.s32.f32 %v1555
  %v1628 = vcvt.s32.f32 %v1556
  %v1629 = vcvt.s32.f32 %v1557
  %v1630 = vcvt.s32.f32 %v1558
  %v1631 = vcvt.s32.f32 %v1559
  %v1632 = vcvt.s32.f32 %v1560
  %v1633 = vcvt.s32.f32 %v1561
  %v1634 = vcvt.s32.f32 %v1562
  %v1635 = vcvt.s32.f32 %v1563
  %v1636 = vcvt.s32.f32 %v1564
  %v1637 = vcvt.s32.f32 %v1565
  %v1638 = vcvt.s32.f32 %v1566
  %v1639 = vcvt.s32.f32 %v1567
  %v1640 = vcvt.s32.f32 %v1568
  %v1641 = vcvt.s32.f32 %v1569
  %v1642 = vcvt.s32.f32 %v1570
  %v1643 = vcvt.s32.f32 %v1571
  %v1644 = vcvt.s32.f32 %v1572
  %v1645 = vcvt.s32.f32 %v1573
  %v1646 = vcvt.s32.f32 %v1574
  %v1647 = vcvt.s32.f32 %v1575
  %v1648 = vcvt.s32.f32 %v1576
  %v1649 = vcvt.s32.f32 %v1577
  %v1650 = vcvt.s32.f32 %v1578
  %v1651 = vcvt.s32.f32 %v1579
  %v1652 = vcvt.s32.f32 %v1580
  %v1653 = vcvt.s32.f32 %v1581
  %v1654 = vcvt.s32.f32 %v1582
  %v1655 = vcvt.s32.f32 %v1583
  %v1656 = vcvt.s32.f32 %v1584
  %v1657 = vcvt.s32.f32 %v1585
  %v1658 = vcvt.s32.f32 %v1586
  %v1659 = vcvt.s32.f32 %v1587
  %v1660 = vcvt.s32.f32 %v1588
  %v1661 = vcvt.s32.f32 %v1589
  %v1662 = vcvt.s32.f32 %v1590
  %v1663 = vcvt.s32.f32 %v1591
  %v1664 = vcvt.s32.f32 %v1592
  %v1665 = vcvt.s32.f32 %v1593
  %v1666 = vcvt.s32.f32 %v1594
  %v1667 = vcvt.s32.f32 %v1595
  %v1668 = vcvt.s32.f32 %v1596
  %v1669 = vcvt.s32.f32 %v1597
  %v1670 = vcvt.s32.f32 %v1598
  %v1671 = vcvt.s32.f32 %v1599
  %v1672 = vcvt.s32.f32 %v1600
  %v1673 = vld [vmem:[%s0] sm:$0xff]
  %v1674 = vld [vmem:[%s0 + $0x8] sm:$0xff]
  %v1675 = vld [vmem:[%s0 + $0x10] sm:$0xff]
  %v1676 = vld [vmem:[%s0 + $0x18] sm:$0xff]
  %v1677 = vld [vmem:[%s0 + $0x20] sm:$0xff]
  %v1678 = vld [vmem:[%s0 + $0x28] sm:$0xff]
  %v1679 = vld [vmem:[%s0 + $0x30] sm:$0xff]
  %v1680 = vld [vmem:[%s0 + $0x38] sm:$0xff]
  %v1681 = vld [vmem:[%s0 + $0x40] sm:$0xff]
  %v1682 = vld [vmem:[%s0 + $0x48] sm:$0xff]
  %v1683 = vld [vmem:[%s0 + $0x50] sm:$0xff]
  %v1684 = vld [vmem:[%s0 + $0x58] sm:$0xff]
  %v1685 = vld [vmem:[%s0 + $0x60] sm:$0xff]
  %v1686 = vld [vmem:[%s0 + $0x68] sm:$0xff]
  %v1687 = vld [vmem:[%s0 + $0x70] sm:$0xff]
  %v1688 = vld [vmem:[%s0 + $0x78] sm:$0xff]
  %v1689 = vld [vmem:[%s0 + $0x80] sm:$0xff]
  %v1690 = vld [vmem:[%s0 + $0x88] sm:$0xff]
  %v1691 = vld [vmem:[%s0 + $0x90] sm:$0xff]
  %v1692 = vld [vmem:[%s0 + $0x98] sm:$0xff]
  %v1693 = vld [vmem:[%s0 + $0xa0] sm:$0xff]
  %v1694 = vld [vmem:[%s0 + $0xa8] sm:$0xff]
  %v1695 = vld [vmem:[%s0 + $0xb0] sm:$0xff]
  %v1696 = vld [vmem:[%s0 + $0xb8] sm:$0xff]
  %v1697 = vld [vmem:[%s0 + $0xc0] sm:$0xff]
  %v1698 = vld [vmem:[%s0 + $0xc8] sm:$0xff]
  %v1699 = vld [vmem:[%s0 + $0xd0] sm:$0xff]
  %v1700 = vld [vmem:[%s0 + $0xd8] sm:$0xff]
  %v1701 = vld [vmem:[%s0 + $0xe0] sm:$0xff]
  %v1702 = vld [vmem:[%s0 + $0xe8] sm:$0xff]
  %v1703 = vld [vmem:[%s0 + $0xf0] sm:$0xff]
  %v1704 = vld [vmem:[%s0 + $0xf8] sm:$0xff]
  %v1705 = vld [vmem:[%s0 + $0x100] sm:$0xff]
  %v1706 = vld [vmem:[%s0 + $0x108] sm:$0xff]
  %v1707 = vld [vmem:[%s0 + $0x110] sm:$0xff]
  %v1708 = vld [vmem:[%s0 + $0x118] sm:$0xff]
  %v1709 = vld [vmem:[%s0 + $0x120] sm:$0xff]
  %v1710 = vld [vmem:[%s0 + $0x128] sm:$0xff]
  %v1711 = vld [vmem:[%s0 + $0x130] sm:$0xff]
  %v1712 = vld [vmem:[%s0 + $0x138] sm:$0xff]
  %v1713 = vld [vmem:[%s0 + $0x140] sm:$0xff]
  %v1714 = vld [vmem:[%s0 + $0x148] sm:$0xff]
  %v1715 = vld [vmem:[%s0 + $0x150] sm:$0xff]
  %v1716 = vld [vmem:[%s0 + $0x158] sm:$0xff]
  %v1717 = vld [vmem:[%s0 + $0x160] sm:$0xff]
  %v1718 = vld [vmem:[%s0 + $0x168] sm:$0xff]
  %v1719 = vld [vmem:[%s0 + $0x170] sm:$0xff]
  %v1720 = vld [vmem:[%s0 + $0x178] sm:$0xff]
  %v1721 = vld [vmem:[%s0 + $0x180] sm:$0xff]
  %v1722 = vld [vmem:[%s0 + $0x188] sm:$0xff]
  %v1723 = vld [vmem:[%s0 + $0x190] sm:$0xff]
  %v1724 = vld [vmem:[%s0 + $0x198] sm:$0xff]
  %v1725 = vld [vmem:[%s0 + $0x1a0] sm:$0xff]
  %v1726 = vld [vmem:[%s0 + $0x1a8] sm:$0xff]
  %v1727 = vld [vmem:[%s0 + $0x1b0] sm:$0xff]
  %v1728 = vld [vmem:[%s0 + $0x1b8] sm:$0xff]
  %v1729 = vld [vmem:[%s0 + $0x1c0] sm:$0xff]
  %v1730 = vld [vmem:[%s0 + $0x1c8] sm:$0xff]
  %v1731 = vld [vmem:[%s0 + $0x1d0] sm:$0xff]
  %v1732 = vld [vmem:[%s0 + $0x1d8] sm:$0xff]
  %v1733 = vld [vmem:[%s0 + $0x1e0] sm:$0xff]
  %v1734 = vld [vmem:[%s0 + $0x1e8] sm:$0xff]
  %v1735 = vld [vmem:[%s0 + $0x1f0] sm:$0xff]
  %v1736 = vld [vmem:[%s0 + $0x1f8] sm:$0xff]
  %v1737 = vld [vmem:[%s0 + $0x200] sm:$0xff]
  %v1738 = vld [vmem:[%s0 + $0x208] sm:$0xff]
  %v1739 = vld [vmem:[%s0 + $0x210] sm:$0xff]
  %v1740 = vld [vmem:[%s0 + $0x218] sm:$0xff]
  %v1741 = vld [vmem:[%s0 + $0x220] sm:$0xff]
  %v1742 = vld [vmem:[%s0 + $0x228] sm:$0xff]
  %v1743 = vld [vmem:[%s0 + $0x230] sm:$0xff]
  %v1744 = vld [vmem:[%s0 + $0x238] sm:$0xff]
  %v1745 = vld [vmem:[%s1] sm:$0x1]
  %v1747 = vlaneseq
  %v1748 = vshrl.u32 %v1747, 7
  %v1749 = vsub.s32 0, %v1748
  %v1750 = vrot.slane %v1745, %v1749
  %v1752 = vmul.f32 %v1673, %v1750
  %v1753 = vmul.f32 %v1674, %v1750
  %v1754 = vmul.f32 %v1675, %v1750
  %v1755 = vmul.f32 %v1676, %v1750
  %v1756 = vmul.f32 %v1677, %v1750
  %v1757 = vmul.f32 %v1678, %v1750
  %v1758 = vmul.f32 %v1679, %v1750
  %v1759 = vmul.f32 %v1680, %v1750
  %v1760 = vmul.f32 %v1681, %v1750
  %v1761 = vmul.f32 %v1682, %v1750
  %v1762 = vmul.f32 %v1683, %v1750
  %v1763 = vmul.f32 %v1684, %v1750
  %v1764 = vmul.f32 %v1685, %v1750
  %v1765 = vmul.f32 %v1686, %v1750
  %v1766 = vmul.f32 %v1687, %v1750
  %v1767 = vmul.f32 %v1688, %v1750
  %v1768 = vmul.f32 %v1689, %v1750
  %v1769 = vmul.f32 %v1690, %v1750
  %v1770 = vmul.f32 %v1691, %v1750
  %v1771 = vmul.f32 %v1692, %v1750
  %v1772 = vmul.f32 %v1693, %v1750
  %v1773 = vmul.f32 %v1694, %v1750
  %v1774 = vmul.f32 %v1695, %v1750
  %v1775 = vmul.f32 %v1696, %v1750
  %v1776 = vmul.f32 %v1697, %v1750
  %v1777 = vmul.f32 %v1698, %v1750
  %v1778 = vmul.f32 %v1699, %v1750
  %v1779 = vmul.f32 %v1700, %v1750
  %v1780 = vmul.f32 %v1701, %v1750
  %v1781 = vmul.f32 %v1702, %v1750
  %v1782 = vmul.f32 %v1703, %v1750
  %v1783 = vmul.f32 %v1704, %v1750
  %v1784 = vmul.f32 %v1705, %v1750
  %v1785 = vmul.f32 %v1706, %v1750
  %v1786 = vmul.f32 %v1707, %v1750
  %v1787 = vmul.f32 %v1708, %v1750
  %v1788 = vmul.f32 %v1709, %v1750
  %v1789 = vmul.f32 %v1710, %v1750
  %v1790 = vmul.f32 %v1711, %v1750
  %v1791 = vmul.f32 %v1712, %v1750
  %v1792 = vmul.f32 %v1713, %v1750
  %v1793 = vmul.f32 %v1714, %v1750
  %v1794 = vmul.f32 %v1715, %v1750
  %v1795 = vmul.f32 %v1716, %v1750
  %v1796 = vmul.f32 %v1717, %v1750
  %v1797 = vmul.f32 %v1718, %v1750
  %v1798 = vmul.f32 %v1719, %v1750
  %v1799 = vmul.f32 %v1720, %v1750
  %v1800 = vmul.f32 %v1721, %v1750
  %v1801 = vmul.f32 %v1722, %v1750
  %v1802 = vmul.f32 %v1723, %v1750
  %v1803 = vmul.f32 %v1724, %v1750
  %v1804 = vmul.f32 %v1725, %v1750
  %v1805 = vmul.f32 %v1726, %v1750
  %v1806 = vmul.f32 %v1727, %v1750
  %v1807 = vmul.f32 %v1728, %v1750
  %v1808 = vmul.f32 %v1729, %v1750
  %v1809 = vmul.f32 %v1730, %v1750
  %v1810 = vmul.f32 %v1731, %v1750
  %v1811 = vmul.f32 %v1732, %v1750
  %v1812 = vmul.f32 %v1733, %v1750
  %v1813 = vmul.f32 %v1734, %v1750
  %v1814 = vmul.f32 %v1735, %v1750
  %v1815 = vmul.f32 %v1736, %v1750
  %v1816 = vmul.f32 %v1737, %v1750
  %v1817 = vmul.f32 %v1738, %v1750
  %v1818 = vmul.f32 %v1739, %v1750
  %v1819 = vmul.f32 %v1740, %v1750
  %v1820 = vmul.f32 %v1741, %v1750
  %v1821 = vmul.f32 %v1742, %v1750
  %v1822 = vmul.f32 %v1743, %v1750
  %v1823 = vmul.f32 %v1744, %v1750
  %v1824 = vld [vmem:[%s2] sm:$0x1]
  %v1826 = vlaneseq
  %v1827 = vshrl.u32 %v1826, 7
  %v1828 = vsub.s32 0, %v1827
  %v1829 = vrot.slane %v1824, %v1828
  %v1831 = vadd.f32 %v1752, %v1829
  %v1832 = vadd.f32 %v1753, %v1829
  %v1833 = vadd.f32 %v1754, %v1829
  %v1834 = vadd.f32 %v1755, %v1829
  %v1835 = vadd.f32 %v1756, %v1829
  %v1836 = vadd.f32 %v1757, %v1829
  %v1837 = vadd.f32 %v1758, %v1829
  %v1838 = vadd.f32 %v1759, %v1829
  %v1839 = vadd.f32 %v1760, %v1829
  %v1840 = vadd.f32 %v1761, %v1829
  %v1841 = vadd.f32 %v1762, %v1829
  %v1842 = vadd.f32 %v1763, %v1829
  %v1843 = vadd.f32 %v1764, %v1829
  %v1844 = vadd.f32 %v1765, %v1829
  %v1845 = vadd.f32 %v1766, %v1829
  %v1846 = vadd.f32 %v1767, %v1829
  %v1847 = vadd.f32 %v1768, %v1829
  %v1848 = vadd.f32 %v1769, %v1829
  %v1849 = vadd.f32 %v1770, %v1829
  %v1850 = vadd.f32 %v1771, %v1829
  %v1851 = vadd.f32 %v1772, %v1829
  %v1852 = vadd.f32 %v1773, %v1829
  %v1853 = vadd.f32 %v1774, %v1829
  %v1854 = vadd.f32 %v1775, %v1829
  %v1855 = vadd.f32 %v1776, %v1829
  %v1856 = vadd.f32 %v1777, %v1829
  %v1857 = vadd.f32 %v1778, %v1829
  %v1858 = vadd.f32 %v1779, %v1829
  %v1859 = vadd.f32 %v1780, %v1829
  %v1860 = vadd.f32 %v1781, %v1829
  %v1861 = vadd.f32 %v1782, %v1829
  %v1862 = vadd.f32 %v1783, %v1829
  %v1863 = vadd.f32 %v1784, %v1829
  %v1864 = vadd.f32 %v1785, %v1829
  %v1865 = vadd.f32 %v1786, %v1829
  %v1866 = vadd.f32 %v1787, %v1829
  %v1867 = vadd.f32 %v1788, %v1829
  %v1868 = vadd.f32 %v1789, %v1829
  %v1869 = vadd.f32 %v1790, %v1829
  %v1870 = vadd.f32 %v1791, %v1829
  %v1871 = vadd.f32 %v1792, %v1829
  %v1872 = vadd.f32 %v1793, %v1829
  %v1873 = vadd.f32 %v1794, %v1829
  %v1874 = vadd.f32 %v1795, %v1829
  %v1875 = vadd.f32 %v1796, %v1829
  %v1876 = vadd.f32 %v1797, %v1829
  %v1877 = vadd.f32 %v1798, %v1829
  %v1878 = vadd.f32 %v1799, %v1829
  %v1879 = vadd.f32 %v1800, %v1829
  %v1880 = vadd.f32 %v1801, %v1829
  %v1881 = vadd.f32 %v1802, %v1829
  %v1882 = vadd.f32 %v1803, %v1829
  %v1883 = vadd.f32 %v1804, %v1829
  %v1884 = vadd.f32 %v1805, %v1829
  %v1885 = vadd.f32 %v1806, %v1829
  %v1886 = vadd.f32 %v1807, %v1829
  %v1887 = vadd.f32 %v1808, %v1829
  %v1888 = vadd.f32 %v1809, %v1829
  %v1889 = vadd.f32 %v1810, %v1829
  %v1890 = vadd.f32 %v1811, %v1829
  %v1891 = vadd.f32 %v1812, %v1829
  %v1892 = vadd.f32 %v1813, %v1829
  %v1893 = vadd.f32 %v1814, %v1829
  %v1894 = vadd.f32 %v1815, %v1829
  %v1895 = vadd.f32 %v1816, %v1829
  %v1896 = vadd.f32 %v1817, %v1829
  %v1897 = vadd.f32 %v1818, %v1829
  %v1898 = vadd.f32 %v1819, %v1829
  %v1899 = vadd.f32 %v1820, %v1829
  %v1900 = vadd.f32 %v1821, %v1829
  %v1901 = vadd.f32 %v1822, %v1829
  %v1902 = vadd.f32 %v1823, %v1829
  %v1903 = vmul.f32 %v1831, %v1601
  %v1904 = vmul.f32 %v1832, %v1602
  %v1905 = vmul.f32 %v1833, %v1603
  %v1906 = vmul.f32 %v1834, %v1604
  %v1907 = vmul.f32 %v1835, %v1605
  %v1908 = vmul.f32 %v1836, %v1606
  %v1909 = vmul.f32 %v1837, %v1607
  %v1910 = vmul.f32 %v1838, %v1608
  %v1911 = vmul.f32 %v1839, %v1609
  %v1912 = vmul.f32 %v1840, %v1610
  %v1913 = vmul.f32 %v1841, %v1611
  %v1914 = vmul.f32 %v1842, %v1612
  %v1915 = vmul.f32 %v1843, %v1613
  %v1916 = vmul.f32 %v1844, %v1614
  %v1917 = vmul.f32 %v1845, %v1615
  %v1918 = vmul.f32 %v1846, %v1616
  %v1919 = vmul.f32 %v1847, %v1617
  %v1920 = vmul.f32 %v1848, %v1618
  %v1921 = vmul.f32 %v1849, %v1619
  %v1922 = vmul.f32 %v1850, %v1620
  %v1923 = vmul.f32 %v1851, %v1621
  %v1924 = vmul.f32 %v1852, %v1622
  %v1925 = vmul.f32 %v1853, %v1623
  %v1926 = vmul.f32 %v1854, %v1624
  %v1927 = vmul.f32 %v1855, %v1625
  %v1928 = vmul.f32 %v1856, %v1626
  %v1929 = vmul.f32 %v1857, %v1627
  %v1930 = vmul.f32 %v1858, %v1628
  %v1931 = vmul.f32 %v1859, %v1629
  %v1932 = vmul.f32 %v1860, %v1630
  %v1933 = vmul.f32 %v1861, %v1631
  %v1934 = vmul.f32 %v1862, %v1632
  %v1935 = vmul.f32 %v1863, %v1633
  %v1936 = vmul.f32 %v1864, %v1634
  %v1937 = vmul.f32 %v1865, %v1635
  %v1938 = vmul.f32 %v1866, %v1636
  %v1939 = vmul.f32 %v1867, %v1637
  %v1940 = vmul.f32 %v1868, %v1638
  %v1941 = vmul.f32 %v1869, %v1639
  %v1942 = vmul.f32 %v1870, %v1640
  %v1943 = vmul.f32 %v1871, %v1641
  %v1944 = vmul.f32 %v1872, %v1642
  %v1945 = vmul.f32 %v1873, %v1643
  %v1946 = vmul.f32 %v1874, %v1644
  %v1947 = vmul.f32 %v1875, %v1645
  %v1948 = vmul.f32 %v1876, %v1646
  %v1949 = vmul.f32 %v1877, %v1647
  %v1950 = vmul.f32 %v1878, %v1648
  %v1951 = vmul.f32 %v1879, %v1649
  %v1952 = vmul.f32 %v1880, %v1650
  %v1953 = vmul.f32 %v1881, %v1651
  %v1954 = vmul.f32 %v1882, %v1652
  %v1955 = vmul.f32 %v1883, %v1653
  %v1956 = vmul.f32 %v1884, %v1654
  %v1957 = vmul.f32 %v1885, %v1655
  %v1958 = vmul.f32 %v1886, %v1656
  %v1959 = vmul.f32 %v1887, %v1657
  %v1960 = vmul.f32 %v1888, %v1658
  %v1961 = vmul.f32 %v1889, %v1659
  %v1962 = vmul.f32 %v1890, %v1660
  %v1963 = vmul.f32 %v1891, %v1661
  %v1964 = vmul.f32 %v1892, %v1662
  %v1965 = vmul.f32 %v1893, %v1663
  %v1966 = vmul.f32 %v1894, %v1664
  %v1967 = vmul.f32 %v1895, %v1665
  %v1968 = vmul.f32 %v1896, %v1666
  %v1969 = vmul.f32 %v1897, %v1667
  %v1970 = vmul.f32 %v1898, %v1668
  %v1971 = vmul.f32 %v1899, %v1669
  %v1972 = vmul.f32 %v1900, %v1670
  %v1973 = vmul.f32 %v1901, %v1671
  %v1974 = vmul.f32 %v1902, %v1672
  %1975 = vst [vmem:[%s3] sm:$0xff] %v1903
  %1976 = vst [vmem:[%s3 + $0x8] sm:$0xff] %v1904
  %1977 = vst [vmem:[%s3 + $0x10] sm:$0xff] %v1905
  %1978 = vst [vmem:[%s3 + $0x18] sm:$0xff] %v1906
  %1979 = vst [vmem:[%s3 + $0x20] sm:$0xff] %v1907
  %1980 = vst [vmem:[%s3 + $0x28] sm:$0xff] %v1908
  %1981 = vst [vmem:[%s3 + $0x30] sm:$0xff] %v1909
  %1982 = vst [vmem:[%s3 + $0x38] sm:$0xff] %v1910
  %1983 = vst [vmem:[%s3 + $0x40] sm:$0xff] %v1911
  %1984 = vst [vmem:[%s3 + $0x48] sm:$0xff] %v1912
  %1985 = vst [vmem:[%s3 + $0x50] sm:$0xff] %v1913
  %1986 = vst [vmem:[%s3 + $0x58] sm:$0xff] %v1914
  %1987 = vst [vmem:[%s3 + $0x60] sm:$0xff] %v1915
  %1988 = vst [vmem:[%s3 + $0x68] sm:$0xff] %v1916
  %1989 = vst [vmem:[%s3 + $0x70] sm:$0xff] %v1917
  %1990 = vst [vmem:[%s3 + $0x78] sm:$0xff] %v1918
  %1991 = vst [vmem:[%s3 + $0x80] sm:$0xff] %v1919
  %1992 = vst [vmem:[%s3 + $0x88] sm:$0xff] %v1920
  %1993 = vst [vmem:[%s3 + $0x90] sm:$0xff] %v1921
  %1994 = vst [vmem:[%s3 + $0x98] sm:$0xff] %v1922
  %1995 = vst [vmem:[%s3 + $0xa0] sm:$0xff] %v1923
  %1996 = vst [vmem:[%s3 + $0xa8] sm:$0xff] %v1924
  %1997 = vst [vmem:[%s3 + $0xb0] sm:$0xff] %v1925
  %1998 = vst [vmem:[%s3 + $0xb8] sm:$0xff] %v1926
  %1999 = vst [vmem:[%s3 + $0xc0] sm:$0xff] %v1927
  %2000 = vst [vmem:[%s3 + $0xc8] sm:$0xff] %v1928
  %2001 = vst [vmem:[%s3 + $0xd0] sm:$0xff] %v1929
  %2002 = vst [vmem:[%s3 + $0xd8] sm:$0xff] %v1930
  %2003 = vst [vmem:[%s3 + $0xe0] sm:$0xff] %v1931
  %2004 = vst [vmem:[%s3 + $0xe8] sm:$0xff] %v1932
  %2005 = vst [vmem:[%s3 + $0xf0] sm:$0xff] %v1933
  %2006 = vst [vmem:[%s3 + $0xf8] sm:$0xff] %v1934
  %2007 = vst [vmem:[%s3 + $0x100] sm:$0xff] %v1935
  %2008 = vst [vmem:[%s3 + $0x108] sm:$0xff] %v1936
  %2009 = vst [vmem:[%s3 + $0x110] sm:$0xff] %v1937
  %2010 = vst [vmem:[%s3 + $0x118] sm:$0xff] %v1938
  %2011 = vst [vmem:[%s3 + $0x120] sm:$0xff] %v1939
  %2012 = vst [vmem:[%s3 + $0x128] sm:$0xff] %v1940
  %2013 = vst [vmem:[%s3 + $0x130] sm:$0xff] %v1941
  %2014 = vst [vmem:[%s3 + $0x138] sm:$0xff] %v1942
  %2015 = vst [vmem:[%s3 + $0x140] sm:$0xff] %v1943
  %2016 = vst [vmem:[%s3 + $0x148] sm:$0xff] %v1944
  %2017 = vst [vmem:[%s3 + $0x150] sm:$0xff] %v1945
  %2018 = vst [vmem:[%s3 + $0x158] sm:$0xff] %v1946
  %2019 = vst [vmem:[%s3 + $0x160] sm:$0xff] %v1947
  %2020 = vst [vmem:[%s3 + $0x168] sm:$0xff] %v1948
  %2021 = vst [vmem:[%s3 + $0x170] sm:$0xff] %v1949
  %2022 = vst [vmem:[%s3 + $0x178] sm:$0xff] %v1950
  %2023 = vst [vmem:[%s3 + $0x180] sm:$0xff] %v1951
  %2024 = vst [vmem:[%s3 + $0x188] sm:$0xff] %v1952
  %2025 = vst [vmem:[%s3 + $0x190] sm:$0xff] %v1953
  %2026 = vst [vmem:[%s3 + $0x198] sm:$0xff] %v1954
  %2027 = vst [vmem:[%s3 + $0x1a0] sm:$0xff] %v1955
  %2028 = vst [vmem:[%s3 + $0x1a8] sm:$0xff] %v1956
  %2029 = vst [vmem:[%s3 + $0x1b0] sm:$0xff] %v1957
  %2030 = vst [vmem:[%s3 + $0x1b8] sm:$0xff] %v1958
  %2031 = vst [vmem:[%s3 + $0x1c0] sm:$0xff] %v1959
  %2032 = vst [vmem:[%s3 + $0x1c8] sm:$0xff] %v1960
  %2033 = vst [vmem:[%s3 + $0x1d0] sm:$0xff] %v1961
  %2034 = vst [vmem:[%s3 + $0x1d8] sm:$0xff] %v1962
  %2035 = vst [vmem:[%s3 + $0x1e0] sm:$0xff] %v1963
  %2036 = vst [vmem:[%s3 + $0x1e8] sm:$0xff] %v1964
  %2037 = vst [vmem:[%s3 + $0x1f0] sm:$0xff] %v1965
  %2038 = vst [vmem:[%s3 + $0x1f8] sm:$0xff] %v1966
  %2039 = vst [vmem:[%s3 + $0x200] sm:$0xff] %v1967
  %2040 = vst [vmem:[%s3 + $0x208] sm:$0xff] %v1968
  %2041 = vst [vmem:[%s3 + $0x210] sm:$0xff] %v1969
  %2042 = vst [vmem:[%s3 + $0x218] sm:$0xff] %v1970
  %2043 = vst [vmem:[%s3 + $0x220] sm:$0xff] %v1971
  %2044 = vst [vmem:[%s3 + $0x228] sm:$0xff] %v1972
  %2045 = vst [vmem:[%s3 + $0x230] sm:$0xff] %v1973
  %2046 = vst [vmem:[%s3 + $0x238] sm:$0xff] %v1974
  // Predicated region
  $region14: #{unet_encoder_forward.11} parent=0 // pred_check
    _
  $region15: #{unet_encoder_forward.11} parent=0 // pred_check_branch
    %2048 = sbr.rel (0) target = $region17
  $region16: #{unet_encoder_forward.11} parent=0 // pred_region
    _
  $region17: #{unet_encoder_forward.11} parent=0 // pred_fallthru
    _
  // Predicated region
  $region18: #{unet_encoder_forward.11} parent=0 // pred_check
    _
  $region19: #{unet_encoder_forward.11} parent=0 // pred_check_branch
    %2050 = sbr.rel (0) target = $region21
  $region20: #{unet_encoder_forward.11} parent=0 // pred_region
    _
  $region21: #{unet_encoder_forward.11} parent=0 // pred_fallthru
    _

// kernel: unet_encoder_forward.10
$region0: #{unet_encoder_forward.10}
  #allocation0 [shape = 'u32[]', space=smem, size = 0x4, offset = 0x4, fixed_abs, tag = 'smem constant byte address 0x4 - core index']
  #allocation1 [shape = 'u32[144,128]{1,0:T(1,128)}', space=vmem, size = 0x12000, scoped, tag = 'internal scratch']
  %s0 = inlined_call_operand.vmem [shape: f32[2,576,128], index: 0, kind: input, shape index: {}, may-alias: {0,1}]
  %s1 = inlined_call_operand.vmem [shape: f32[2,576,128], index: 1, kind: input, shape index: {}, may-alias: {0,1}]
  %s2 = inlined_call_operand.vmem [shape: bf16[9,128,128], index: 2, kind: input, shape index: {}]
  %s3 = inlined_call_operand.vmem [shape: f32[1,128], index: 3, kind: input, shape index: {}]
  %s4 = inlined_call_operand.vmem [shape: f32[2,288,128], index: 4, kind: output, shape index: {0}]
  %s5 = inlined_call_operand.vmem [shape: f32[2,128], index: 5, kind: output, shape index: {1}]
  %6 = xla_tuple %s4, %s5
  %s7 = sld [smem:[#allocation0]]
  $region61: #{unet_encoder_forward.10} parent=0
    _
  %s9 = ssub.s32 1, %s7
  %s10 = scalar_select 0, %s9, %s7
  loop: start=0, step=1, limit=4
  $region2: #{unet_encoder_forward.10} parent=0 // loop_pre_header
    _
  $region3: #{unet_encoder_forward.10} parent=0 // loop_header
    %s12 = sphi 0, %s16
    %p13 = scmp.ge.s32.totalorder %s12, 4
    %s19 = sphi 0, %s31
    %s20 = sphi 0, %s27
    %s21 = sphi 0, %s19
    %s22 = sphi 0, %s20
    %s23 = sphi 0, %s21
    %s24 = sphi 0, %s22
    %s36 = sphi 0, %s38
    %s39 = sphi 0, %s36
    %s40 = sphi 0, %s39
    %s56 = sphi 0, %s40
    %s66 = sphi 0, %s68
    %s69 = sphi 0, %s66
    %s70 = sphi 0, %s69
    %s86 = sphi 0, %s70
    %s90 = sphi 0, %s90
    %s92 = sphi 0, %s90
    %s93 = sphi 0, %s92
    %s107 = sphi 0, %s93
    %s111 = sphi 0, %s111
    %s113 = sphi 0, %s111
    %s114 = sphi 0, %s113
    %s128 = sphi 0, %s114
    %s136 = sphi 0, %s138
    %s139 = sphi 0, %s136
    %s140 = sphi 0, %s139
    %s156 = sphi 0, %s140
    %s160 = sphi 0, %s160
    %s162 = sphi 0, %s160
    %s163 = sphi 0, %s162
    %s177 = sphi 0, %s163
  $region4: #{unet_encoder_forward.10} parent=0 // loop_header_branch
    %15 = sbr.rel (%p13) target = $region8
  $region5: #{unet_encoder_forward.10} parent=0 // loop_body
    %s17 = ssub.s32 %s12, 1
    %s18 = ssub.s32 %s12, 2
    %s25 = sadd.s32 1, %s20
    %p26 = scmp.ge.s32.totalorder %s25, 1
    %s27 = scalar_select %p26, 0, %s25
    %s28 = sadd.s32 1, %s19
    %s29 = scalar_select %p26, %s28, %s19
    %p30 = scmp.ge.s32.totalorder %s29, 2
    %s31 = scalar_select %p30, 0, %s29
    %s32 = ssub.s32 %s19, %s31
    %s33 = ssub.s32 %s20, %s27
    %s34 = sor.u32 %s32, %s33
    %p35 = scmp.eq.s32.totalorder %s34, 0
    %s37 = sadd.s32 %s36, 1
    %s38 = scalar_select %p35, %s36, %s37
    %p41 = pneg %p35
    %p42 = scmp.eq.s32.totalorder %s12, 1
    %p43 = por %p41, %p42
    %p44 = scmp.ne.s32.totalorder %s36, %s39
    %p45 = scmp.eq.s32.totalorder %s12, 0
    %p46 = por %p44, %p45
    %p47 = scmp.ne.s32.totalorder %s36, %s39
    %p48 = scmp.eq.s32.totalorder %s17, 1
    %p49 = por %p47, %p48
    %p50 = scmp.ne.s32.totalorder %s39, %s40
    %p51 = scmp.eq.s32.totalorder %s17, 0
    %p52 = por %p50, %p51
    %p53 = scmp.ne.s32.totalorder %s39, %s40
    %p54 = scmp.eq.s32.totalorder %s18, 1
    %p55 = por %p53, %p54
    %p57 = scmp.ne.s32.totalorder %s40, %s56
    %p58 = scmp.eq.s32.totalorder %s18, 0
    %p59 = por %p57, %p58
    %s60 = sadd.s32 %s20, 1
    %s61 = sadd.s32 %s27, 1
    %s62 = ssub.s32 %s19, %s31
    %s63 = ssub.s32 %s60, %s61
    %s64 = sor.u32 %s62, %s63
    %p65 = scmp.eq.s32.totalorder %s64, 0
    %s67 = sadd.s32 %s66, 1
    %s68 = scalar_select %p65, %s66, %s67
    %p71 = pneg %p65
    %p72 = scmp.eq.s32.totalorder %s12, 1
    %p73 = por %p71, %p72
    %p74 = scmp.ne.s32.totalorder %s66, %s69
    %p75 = scmp.eq.s32.totalorder %s12, 0
    %p76 = por %p74, %p75
    %p77 = scmp.ne.s32.totalorder %s66, %s69
    %p78 = scmp.eq.s32.totalorder %s17, 1
    %p79 = por %p77, %p78
    %p80 = scmp.ne.s32.totalorder %s69, %s70
    %p81 = scmp.eq.s32.totalorder %s17, 0
    %p82 = por %p80, %p81
    %p83 = scmp.ne.s32.totalorder %s69, %s70
    %p84 = scmp.eq.s32.totalorder %s18, 1
    %p85 = por %p83, %p84
    %p87 = scmp.ne.s32.totalorder %s70, %s86
    %p88 = scmp.eq.s32.totalorder %s18, 0
    %p89 = por %p87, %p88
    %s91 = sadd.s32 %s90, 1
    %p94 = scmp.eq.s32.totalorder %s12, 1
    %p95 = scmp.ne.s32.totalorder %s90, %s92
    %p96 = scmp.eq.s32.totalorder %s12, 0
    %p97 = por %p95, %p96
    %p98 = scmp.ne.s32.totalorder %s90, %s92
    %p99 = scmp.eq.s32.totalorder %s17, 1
    %p100 = por %p98, %p99
    %p101 = scmp.ne.s32.totalorder %s92, %s93
    %p102 = scmp.eq.s32.totalorder %s17, 0
    %p103 = por %p101, %p102
    %p104 = scmp.ne.s32.totalorder %s92, %s93
    %p105 = scmp.eq.s32.totalorder %s18, 1
    %p106 = por %p104, %p105
    %p108 = scmp.ne.s32.totalorder %s93, %s107
    %p109 = scmp.eq.s32.totalorder %s18, 0
    %p110 = por %p108, %p109
    %s112 = sadd.s32 %s111, 1
    %p115 = scmp.eq.s32.totalorder %s12, 1
    %p116 = scmp.ne.s32.totalorder %s111, %s113
    %p117 = scmp.eq.s32.totalorder %s12, 0
    %p118 = por %p116, %p117
    %p119 = scmp.ne.s32.totalorder %s111, %s113
    %p120 = scmp.eq.s32.totalorder %s17, 1
    %p121 = por %p119, %p120
    %p122 = scmp.ne.s32.totalorder %s113, %s114
    %p123 = scmp.eq.s32.totalorder %s17, 0
    %p124 = por %p122, %p123
    %p125 = scmp.ne.s32.totalorder %s113, %s114
    %p126 = scmp.eq.s32.totalorder %s18, 1
    %p127 = por %p125, %p126
    %p129 = scmp.ne.s32.totalorder %s114, %s128
    %p130 = scmp.eq.s32.totalorder %s18, 0
    %p131 = por %p129, %p130
    %s132 = ssub.s32 %s19, %s31
    %s133 = ssub.s32 %s20, %s27
    %s134 = sor.u32 %s132, %s133
    %p135 = scmp.eq.s32.totalorder %s134, 0
    %s137 = sadd.s32 %s136, 1
    %s138 = scalar_select %p135, %s136, %s137
    %p141 = pneg %p135
    %p142 = scmp.eq.s32.totalorder %s12, 1
    %p143 = por %p141, %p142
    %p144 = scmp.ne.s32.totalorder %s136, %s139
    %p145 = scmp.eq.s32.totalorder %s12, 0
    %p146 = por %p144, %p145
    %p147 = scmp.ne.s32.totalorder %s136, %s139
    %p148 = scmp.eq.s32.totalorder %s17, 1
    %p149 = por %p147, %p148
    %p150 = scmp.ne.s32.totalorder %s139, %s140
    %p151 = scmp.eq.s32.totalorder %s17, 0
    %p152 = por %p150, %p151
    %p153 = scmp.ne.s32.totalorder %s139, %s140
    %p154 = scmp.eq.s32.totalorder %s18, 1
    %p155 = por %p153, %p154
    %p157 = scmp.ne.s32.totalorder %s140, %s156
    %p158 = scmp.eq.s32.totalorder %s18, 0
    %p159 = por %p157, %p158
    %s161 = sadd.s32 %s160, 1
    %p164 = scmp.eq.s32.totalorder %s12, 1
    %p165 = scmp.ne.s32.totalorder %s160, %s162
    %p166 = scmp.eq.s32.totalorder %s12, 0
    %p167 = por %p165, %p166
    %p168 = scmp.ne.s32.totalorder %s160, %s162
    %p169 = scmp.eq.s32.totalorder %s17, 1
    %p170 = por %p168, %p169
    %p171 = scmp.ne.s32.totalorder %s162, %s163
    %p172 = scmp.eq.s32.totalorder %s17, 0
    %p173 = por %p171, %p172
    %p174 = scmp.ne.s32.totalorder %s162, %s163
    %p175 = scmp.eq.s32.totalorder %s18, 1
    %p176 = por %p174, %p175
    %p178 = scmp.ne.s32.totalorder %s163, %s177
    %p179 = scmp.eq.s32.totalorder %s18, 0
    %p180 = por %p178, %p179
    %p181 = scmp.le.s32.totalorder 1, %s12
    %p182 = scmp.lt.s32.totalorder %s12, 3
    %p183 = pnand %p181, %p182
    %p184 = pneg %p183
    // Predicated region
    $region9: #{unet_encoder_forward.10} parent=5 // pred_check
      _
    $region10: #{unet_encoder_forward.10} parent=5 // pred_check_branch
      %186 = sbr.rel (%p183) target = $region12
    $region11: #{unet_encoder_forward.10} parent=5 // pred_region
      %s187 = ssub.s32 %s12, 1
      // Predicated region
      $region13: #{unet_encoder_forward.10} parent=11 // pred_check
        %p188 = pneg %p103
      $region14: #{unet_encoder_forward.10} parent=11 // pred_check_branch
        %190 = sbr.rel (%p188) target = $region16
      $region15: #{unet_encoder_forward.10} parent=11 // pred_region
        _
      $region16: #{unet_encoder_forward.10} parent=11 // pred_fallthru
        _
      // Predicated region
      $region17: #{unet_encoder_forward.10} parent=11 // pred_check
        %p191 = pneg %p124
      $region18: #{unet_encoder_forward.10} parent=11 // pred_check_branch
        %193 = sbr.rel (%p191) target = $region20
      $region19: #{unet_encoder_forward.10} parent=11 // pred_region
        _
      $region20: #{unet_encoder_forward.10} parent=11 // pred_fallthru
        _
    $region12: #{unet_encoder_forward.10} parent=5 // pred_fallthru
      _
    %p194 = scmp.lt.s32.totalorder %s12, 2
    // Predicated region
    $region21: #{unet_encoder_forward.10} parent=5 // pred_check
      %p195 = pneg %p194
    $region22: #{unet_encoder_forward.10} parent=5 // pred_check_branch
      %197 = sbr.rel (%p195) target = $region24
    $region23: #{unet_encoder_forward.10} parent=5 // pred_region
      // Predicated region
      $region25: #{unet_encoder_forward.10} parent=23 // pred_check
        %p198 = pneg %p46
      $region26: #{unet_encoder_forward.10} parent=23 // pred_check_branch
        %200 = sbr.rel (%p198) target = $region28
      $region27: #{unet_encoder_forward.10} parent=23 // pred_region
        %s201 = smul.u32 36, %s20
        %p202 = scmp.lt.s32.totalorder %s19, 1
        %s203 = scalar_select %p202, %s19, 1
        %p204 = scmp.lt.s32.totalorder %s201, 71
        %s205 = scalar_select %p204, %s201, 71
        %s206 = smul.addr %s203, 72
        %s207 = sadd.s32 %s205, %s206
        %s208 = smul.addr %s207, 8
        %s209 = scalar_lea.vmem %s0, %s208
        %s210 = smul.u32 36, %s20
      $region28: #{unet_encoder_forward.10} parent=23 // pred_fallthru
        _
      // Predicated region
      $region29: #{unet_encoder_forward.10} parent=23 // pred_check
        %p211 = pneg %p76
      $region30: #{unet_encoder_forward.10} parent=23 // pred_check_branch
        %213 = sbr.rel (%p211) target = $region32
      $region31: #{unet_encoder_forward.10} parent=23 // pred_region
        %s214 = sadd.s32 %s20, 1
        %s215 = smul.u32 36, %s214
        %p216 = scmp.lt.s32.totalorder %s19, 1
        %s217 = scalar_select %p216, %s19, 1
        %p218 = scmp.lt.s32.totalorder %s215, 71
        %s219 = scalar_select %p218, %s215, 71
        %s220 = smul.addr %s217, 72
        %s221 = sadd.s32 %s219, %s220
        %s222 = smul.addr %s221, 8
        %s223 = scalar_lea.vmem %s1, %s222
        %s224 = sadd.s32 %s20, 1
        %s225 = smul.u32 36, %s224
      $region32: #{unet_encoder_forward.10} parent=23 // pred_fallthru
        _
    $region24: #{unet_encoder_forward.10} parent=5 // pred_fallthru
      _
    %p226 = scmp.le.s32.totalorder 1, %s12
    %p227 = scmp.lt.s32.totalorder %s12, 3
    %p228 = pnand %p226, %p227
    %p229 = pneg %p228
    // Predicated region
    $region33: #{unet_encoder_forward.10} parent=5 // pred_check
      _
    $region34: #{unet_encoder_forward.10} parent=5 // pred_check_branch
      %231 = sbr.rel (%p228) target = $region36
    $region35: #{unet_encoder_forward.10} parent=5 // pred_region
      %s232 = ssub.s32 %s12, 1
      %s233 = smul.u32 36, %s22
      %p234 = scmp.lt.s32.totalorder %s21, 1
      %s235 = scalar_select %p234, %s21, 1
      %p236 = scmp.lt.s32.totalorder %s233, 71
      %s237 = scalar_select %p236, %s233, 71
      %s238 = smul.addr %s235, 72
      %s239 = sadd.s32 %s237, %s238
      %s240 = smul.addr %s239, 8
      %s241 = scalar_lea.vmem %s0, %s240
      %p242 = pneg %p52
      %p243 = pneg %p49
      %s244 = sadd.s32 %s22, 1
      %s245 = smul.u32 36, %s244
      %p246 = scmp.lt.s32.totalorder %s21, 1
      %s247 = scalar_select %p246, %s21, 1
      %p248 = scmp.lt.s32.totalorder %s245, 71
      %s249 = scalar_select %p248, %s245, 71
      %s250 = smul.addr %s247, 72
      %s251 = sadd.s32 %s249, %s250
      %s252 = smul.addr %s251, 8
      %s253 = scalar_lea.vmem %s1, %s252
      %p254 = pneg %p82
      %p255 = pneg %p79
      %p256 = pneg %p103
      %p257 = pneg %p100
      %p258 = pneg %p124
      %p259 = pneg %p121
      %p260 = pneg %p152
      %p261 = pneg %p149
      %s262 = smul.u32 36, %s22
      %p263 = scmp.lt.s32.totalorder %s21, 1
      %s264 = scalar_select %p263, %s21, 1
      %p265 = scmp.lt.s32.totalorder %s262, 35
      %s266 = scalar_select %p265, %s262, 35
      %s267 = smul.addr %s264, 36
      %s268 = sadd.s32 %s266, %s267
      %s269 = smul.addr %s268, 8
      %s270 = scalar_lea.vmem %s4, %s269
      %p271 = pneg %p173
      %p272 = pneg %p170
      %s273 = smul.u32 36, %s22
      %p274 = scmp.lt.s32.totalorder %s21, 1
      %s275 = scalar_select %p274, %s21, 1
      %p276 = scmp.lt.s32.totalorder %s273, 71
      %s277 = scalar_select %p276, %s273, 71
      %s278 = smul.addr %s275, 72
      %s279 = sadd.s32 %s277, %s278
      %s280 = smul.addr %s279, 8
      %s281 = scalar_lea.vmem %s0, %s280
      %s282 = smul.u32 36, %s22
      %s283 = sadd.s32 %s22, 1
      %s284 = smul.u32 36, %s283
      %p285 = scmp.lt.s32.totalorder %s21, 1
      %s286 = scalar_select %p285, %s21, 1
      %p287 = scmp.lt.s32.totalorder %s284, 71
      %s288 = scalar_select %p287, %s284, 71
      %s289 = smul.addr %s286, 72
      %s290 = sadd.s32 %s288, %s289
      %s291 = smul.addr %s290, 8
      %s292 = scalar_lea.vmem %s1, %s291
      %s293 = sadd.s32 %s22, 1
      %s294 = smul.u32 36, %s293
      %s295 = smul.u32 36, %s22
      %p296 = scmp.lt.s32.totalorder %s21, 1
      %s297 = scalar_select %p296, %s21, 1
      %p298 = scmp.lt.s32.totalorder %s295, 35
      %s299 = scalar_select %p298, %s295, 35
      %s300 = smul.addr %s297, 36
      %s301 = sadd.s32 %s299, %s300
      %s302 = smul.addr %s301, 8
      %s303 = scalar_lea.vmem %s4, %s302
      %s304 = smul.u32 36, %s22
      %v306 = vld [vmem:[%s281] sm:$0xff]
      %v307 = vld [vmem:[%s281 + $0x8] sm:$0xff]
      %v308 = vld [vmem:[%s281 + $0x10] sm:$0xff]
      %v309 = vld [vmem:[%s281 + $0x18] sm:$0xff]
      %v310 = vld [vmem:[%s281 + $0x20] sm:$0xff]
      %v311 = vld [vmem:[%s281 + $0x28] sm:$0xff]
      %v312 = vld [vmem:[%s281 + $0x30] sm:$0xff]
      %v313 = vld [vmem:[%s281 + $0x38] sm:$0xff]
      %v314 = vld [vmem:[%s281 + $0x40] sm:$0xff]
      %v315 = vld [vmem:[%s281 + $0x48] sm:$0xff]
      %v316 = vld [vmem:[%s281 + $0x50] sm:$0xff]
      %v317 = vld [vmem:[%s281 + $0x58] sm:$0xff]
      %v318 = vld [vmem:[%s281 + $0x60] sm:$0xff]
      %v319 = vld [vmem:[%s281 + $0x68] sm:$0xff]
      %v320 = vld [vmem:[%s281 + $0x70] sm:$0xff]
      %v321 = vld [vmem:[%s281 + $0x78] sm:$0xff]
      %v322 = vld [vmem:[%s281 + $0x80] sm:$0xff]
      %v323 = vld [vmem:[%s281 + $0x88] sm:$0xff]
      %v324 = vld [vmem:[%s281 + $0x90] sm:$0xff]
      %v325 = vld [vmem:[%s281 + $0x98] sm:$0xff]
      %v326 = vld [vmem:[%s281 + $0xa0] sm:$0xff]
      %v327 = vld [vmem:[%s281 + $0xa8] sm:$0xff]
      %v328 = vld [vmem:[%s281 + $0xb0] sm:$0xff]
      %v329 = vld [vmem:[%s281 + $0xb8] sm:$0xff]
      %v330 = vld [vmem:[%s281 + $0xc0] sm:$0xff]
      %v331 = vld [vmem:[%s281 + $0xc8] sm:$0xff]
      %v332 = vld [vmem:[%s281 + $0xd0] sm:$0xff]
      %v333 = vld [vmem:[%s281 + $0xd8] sm:$0xff]
      %v334 = vld [vmem:[%s281 + $0xe0] sm:$0xff]
      %v335 = vld [vmem:[%s281 + $0xe8] sm:$0xff]
      %v336 = vld [vmem:[%s281 + $0xf0] sm:$0xff]
      %v337 = vld [vmem:[%s281 + $0xf8] sm:$0xff]
      %v338 = vld [vmem:[%s281 + $0x100] sm:$0xff]
      %v339 = vld [vmem:[%s281 + $0x108] sm:$0xff]
      %v340 = vld [vmem:[%s281 + $0x110] sm:$0xff]
      %v341 = vld [vmem:[%s281 + $0x118] sm:$0xff]
      %v342 = vld [vmem:[%s292] sm:$0xff]
      %v343 = vld [vmem:[%s292 + $0x8] sm:$0xff]
      %v344 = vld [vmem:[%s292 + $0x10] sm:$0xff]
      %v345 = vld [vmem:[%s292 + $0x18] sm:$0xff]
      %v346 = vld [vmem:[%s292 + $0x20] sm:$0xff]
      %v347 = vpack.c.bf16 %v307, %v306
      %v348 = vpack.c.bf16 %v309, %v308
      %v349 = vpack.c.bf16 %v311, %v310
      %v350 = vpack.c.bf16 %v313, %v312
      %v351 = vpack.c.bf16 %v315, %v314
      %v352 = vpack.c.bf16 %v317, %v316
      %v353 = vpack.c.bf16 %v319, %v318
      %v354 = vpack.c.bf16 %v321, %v320
      %v355 = vpack.c.bf16 %v323, %v322
      %v356 = vpack.c.bf16 %v325, %v324
      %v357 = vpack.c.bf16 %v327, %v326
      %v358 = vpack.c.bf16 %v329, %v328
      %v359 = vpack.c.bf16 %v331, %v330
      %v360 = vpack.c.bf16 %v333, %v332
      %v361 = vpack.c.bf16 %v335, %v334
      %v362 = vpack.c.bf16 %v337, %v336
      %v363 = vpack.c.bf16 %v339, %v338
      %v364 = vpack.c.bf16 %v341, %v340
      %v365 = vld [vmem:[%s2] sm:$0xf]
      %v366 = vld [vmem:[%s2 + $0x4] sm:$0xf]
      %v367 = vld [vmem:[%s2 + $0x8] sm:$0xf]
      %v368 = vld [vmem:[%s2 + $0xc] sm:$0xf]
      %v369 = vld [vmem:[%s2 + $0x10] sm:$0xf]
      %v370 = vld [vmem:[%s2 + $0x14] sm:$0xf]
      %v371 = vld [vmem:[%s2 + $0x18] sm:$0xf]
      %v372 = vld [vmem:[%s2 + $0x1c] sm:$0xf]
      %v373 = vld [vmem:[%s2 + $0x20] sm:$0xf]
      %v374 = vld [vmem:[%s2 + $0x24] sm:$0xf]
      %v375 = vld [vmem:[%s2 + $0x28] sm:$0xf]
      %v376 = vld [vmem:[%s2 + $0x2c] sm:$0xf]
      %v377 = vld [vmem:[%s2 + $0x30] sm:$0xf]
      %v378 = vld [vmem:[%s2 + $0x34] sm:$0xf]
      %v379 = vld [vmem:[%s2 + $0x38] sm:$0xf]
      %v380 = vld [vmem:[%s2 + $0x3c] sm:$0xf]
      %v381 = vpack.c.bf16 %v342, %v342
      %s382 = scalar_lea.vmem %s2, 64
      %v383 = vld [vmem:[%s382] sm:$0xf]
      %v384 = vld [vmem:[%s382 + $0x4] sm:$0xf]
      %v385 = vld [vmem:[%s382 + $0x8] sm:$0xf]
      %v386 = vld [vmem:[%s382 + $0xc] sm:$0xf]
      %v387 = vld [vmem:[%s382 + $0x10] sm:$0xf]
      %v388 = vld [vmem:[%s382 + $0x14] sm:$0xf]
      %v389 = vld [vmem:[%s382 + $0x18] sm:$0xf]
      %v390 = vld [vmem:[%s382 + $0x1c] sm:$0xf]
      %v391 = vld [vmem:[%s382 + $0x20] sm:$0xf]
      %v392 = vld [vmem:[%s382 + $0x24] sm:$0xf]
      %v393 = vld [vmem:[%s382 + $0x28] sm:$0xf]
      %v394 = vld [vmem:[%s382 + $0x2c] sm:$0xf]
      %v395 = vld [vmem:[%s382 + $0x30] sm:$0xf]
      %v396 = vld [vmem:[%s382 + $0x34] sm:$0xf]
      %v397 = vld [vmem:[%s382 + $0x38] sm:$0xf]
      %v398 = vld [vmem:[%s382 + $0x3c] sm:$0xf]
      %vm399 = vsmask.f32 7424
      %v401 = vshrl.u32 %v347, 16
      %v403 = vshll.u32 %v347, 16
      %v405 = vrot.slane %v403, 1
      %v406 = vor.u32 %v401, %v405
      %v408 = vshll.u32 %v348, 16
      %v410 = vrot.slane %v408, 1
      %v411 = vsel %vm399, %v406, %v410
      %v412 = vshrl.u32 %v348, 16
      %v414 = vor.u32 %v412, %v410
      %v416 = vshll.u32 %v349, 16
      %v418 = vrot.slane %v416, 1
      %v419 = vsel %vm399, %v414, %v418
      %v420 = vshrl.u32 %v349, 16
      %v422 = vor.u32 %v420, %v418
      %v424 = vshll.u32 %v350, 16
      %v426 = vrot.slane %v424, 1
      %v427 = vsel %vm399, %v422, %v426
      %v428 = vshrl.u32 %v350, 16
      %v430 = vor.u32 %v428, %v426
      %v432 = vshll.u32 %v351, 16
      %v434 = vrot.slane %v432, 1
      %v435 = vsel %vm399, %v430, %v434
      %v436 = vshrl.u32 %v351, 16
      %v438 = vor.u32 %v436, %v434
      %v440 = vshll.u32 %v352, 16
      %v442 = vrot.slane %v440, 1
      %v443 = vsel %vm399, %v438, %v442
      %v444 = vshrl.u32 %v352, 16
      %v446 = vor.u32 %v444, %v442
      %v448 = vshll.u32 %v353, 16
      %v450 = vrot.slane %v448, 1
      %v451 = vsel %vm399, %v446, %v450
      %v452 = vshrl.u32 %v353, 16
      %v454 = vor.u32 %v452, %v450
      %v456 = vshll.u32 %v354, 16
      %v458 = vrot.slane %v456, 1
      %v459 = vsel %vm399, %v454, %v458
      %v460 = vshrl.u32 %v354, 16
      %v462 = vor.u32 %v460, %v458
      %v464 = vshll.u32 %v355, 16
      %v466 = vrot.slane %v464, 1
      %v467 = vsel %vm399, %v462, %v466
      %v468 = vshrl.u32 %v355, 16
      %v470 = vor.u32 %v468, %v466
      %v472 = vshll.u32 %v356, 16
      %v474 = vrot.slane %v472, 1
      %v475 = vsel %vm399, %v470, %v474
      %v476 = vshrl.u32 %v356, 16
      %v478 = vor.u32 %v476, %v474
      %v480 = vshll.u32 %v357, 16
      %v482 = vrot.slane %v480, 1
      %v483 = vsel %vm399, %v478, %v482
      %v484 = vshrl.u32 %v357, 16
      %v486 = vor.u32 %v484, %v482
      %v488 = vshll.u32 %v358, 16
      %v490 = vrot.slane %v488, 1
      %v491 = vsel %vm399, %v486, %v490
      %v492 = vshrl.u32 %v358, 16
      %v494 = vor.u32 %v492, %v490
      %v496 = vshll.u32 %v359, 16
      %v498 = vrot.slane %v496, 1
      %v499 = vsel %vm399, %v494, %v498
      %v500 = vshrl.u32 %v359, 16
      %v502 = vor.u32 %v500, %v498
      %v504 = vshll.u32 %v360, 16
      %v506 = vrot.slane %v504, 1
      %v507 = vsel %vm399, %v502, %v506
      %v508 = vshrl.u32 %v360, 16
      %v510 = vor.u32 %v508, %v506
      %v512 = vshll.u32 %v361, 16
      %v514 = vrot.slane %v512, 1
      %v515 = vsel %vm399, %v510, %v514
      %v516 = vshrl.u32 %v361, 16
      %v518 = vor.u32 %v516, %v514
      %v520 = vshll.u32 %v362, 16
      %v522 = vrot.slane %v520, 1
      %v523 = vsel %vm399, %v518, %v522
      %v524 = vshrl.u32 %v362, 16
      %v526 = vor.u32 %v524, %v522
      %v528 = vshll.u32 %v363, 16
      %v530 = vrot.slane %v528, 1
      %v531 = vsel %vm399, %v526, %v530
      %v532 = vshrl.u32 %v363, 16
      %v534 = vor.u32 %v532, %v530
      %v536 = vshll.u32 %v364, 16
      %v538 = vrot.slane %v536, 1
      %v539 = vsel %vm399, %v534, %v538
      %v540 = vshrl.u32 %v364, 16
      %v542 = vor.u32 %v540, %v538
      %v544 = vshll.u32 %v381, 16
      %v546 = vrot.slane %v544, 1
      %v547 = vsel %vm399, %v542, %v546
      %v582 = vunpack.c.l.b16 %v383
      %v583 = vunpack.c.l.b16 %v384
      %v584 = vunpack.c.l.b16 %v385
      %v585 = vunpack.c.l.b16 %v386
      %v586 = vunpack.c.l.b16 %v387
      %v587 = vunpack.c.l.b16 %v388
      %v588 = vunpack.c.l.b16 %v389
      %v589 = vunpack.c.l.b16 %v390
      %v590 = vunpack.c.l.b16 %v391
      %v591 = vunpack.c.l.b16 %v392
      %v592 = vunpack.c.l.b16 %v393
      %v593 = vunpack.c.l.b16 %v394
      %v594 = vunpack.c.l.b16 %v395
      %v595 = vunpack.c.l.b16 %v396
      %v596 = vunpack.c.l.b16 %v397
      %v597 = vunpack.c.l.b16 %v398
      %v598 = vpack.c.b16 %v583, %v582
      %v599 = vpack.c.b16 %v585, %v584
      %v600 = vpack.c.b16 %v587, %v586
      %v601 = vpack.c.b16 %v589, %v588
      %v602 = vpack.c.b16 %v591, %v590
      %v603 = vpack.c.b16 %v593, %v592
      %v604 = vpack.c.b16 %v595, %v594
      %v605 = vpack.c.b16 %v597, %v596
      %614 = vmatprep.subr.bf16.mxu0 0
      %615 = vmatpush1.bf16.msra.mxu0 %v605
      %616 = vmatprep.subr.bf16.mxu0 0
      %617 = vmatpush1.bf16.msra.mxu0 %v604
      %618 = vmatprep.subr.bf16.mxu0 0
      %619 = vmatpush1.bf16.msra.mxu0 %v603
      %620 = vmatprep.subr.bf16.mxu0 0
      %621 = vmatpush1.bf16.msra.mxu0 %v602
      %622 = vmatprep.subr.bf16.mxu0 0
      %623 = vmatpush1.bf16.msra.mxu0 %v601
      %624 = vmatprep.subr.bf16.mxu0 0
      %625 = vmatpush1.bf16.msra.mxu0 %v600
      %626 = vmatprep.subr.bf16.mxu0 0
      %627 = vmatpush1.bf16.msra.mxu0 %v599
      %628 = vmatprep.subr.bf16.mxu0 0
      %629 = vmatpush1.bf16.msra.mxu0 %v598
      %630 = vmatprep.subr.bf16.mxu0 0
      %631 = vmatpush2.bf16.msra.mxu0 0
      %632 = vmatprep.subr.bf16.mxu0 0
      %633 = vmatpush2.bf16.msra.mxu0 0
      %634 = vmatprep.subr.bf16.mxu0 0
      %635 = vmatpush2.bf16.msra.mxu0 0
      %636 = vmatprep.subr.bf16.mxu0 0
      %637 = vmatpush2.bf16.msra.mxu0 0
      %638 = vmatprep.subr.bf16.mxu0 0
      %639 = vmatpush2.bf16.msra.mxu0 0
      %640 = vmatprep.subr.bf16.mxu0 0
      %641 = vmatpush2.bf16.msra.mxu0 0
      %642 = vmatprep.subr.bf16.mxu0 0
      %643 = vmatpush2.bf16.msra.mxu0 0
      %644 = vmatprep.subr.bf16.mxu0 0
      %645 = vmatpush2.bf16.msra.mxu0 0
      %646 = vmatprep.mubr.bf16.mxu0 0
      %647 = vmatmul.mubr.bf16.gmra.mxu0 %v411
      %v648 = vpop.f32.mrf.mxu0
      %v649 = vadd.f32 0.0, %v648
      %v650 = vpop.f32.mrf.mxu0
      %v651 = vpop.f32.mrf.mxu0
      %v652 = vadd.f32 0.0, %v651
      %v653 = vpop.f32.mrf.mxu0
      %654 = vmatprep.mubr.bf16.mxu0 0
      %655 = vmatmul.mubr.bf16.gmra.mxu0 %v419
      %v656 = vpop.f32.mrf.mxu0
      %v657 = vadd.f32 0.0, %v656
      %v658 = vpop.f32.mrf.mxu0
      %v659 = vpop.f32.mrf.mxu0
      %v660 = vadd.f32 0.0, %v659
      %v661 = vpop.f32.mrf.mxu0
      %662 = vmatprep.mubr.bf16.mxu0 0
      %663 = vmatmul.mubr.bf16.gmra.mxu0 %v427
      %v664 = vpop.f32.mrf.mxu0
      %v665 = vadd.f32 0.0, %v664
      %v666 = vpop.f32.mrf.mxu0
      %v667 = vpop.f32.mrf.mxu0
      %v668 = vadd.f32 0.0, %v667
      %v669 = vpop.f32.mrf.mxu0
      %670 = vmatprep.mubr.bf16.mxu0 0
      %671 = vmatmul.mubr.bf16.gmra.mxu0 %v435
      %v672 = vpop.f32.mrf.mxu0
      %v673 = vadd.f32 0.0, %v672
      %v674 = vpop.f32.mrf.mxu0
      %v675 = vpop.f32.mrf.mxu0
      %v676 = vadd.f32 0.0, %v675
      %v677 = vpop.f32.mrf.mxu0
      %678 = vmatprep.mubr.bf16.mxu0 0
      %679 = vmatmul.mubr.bf16.gmra.mxu0 %v443
      %v680 = vpop.f32.mrf.mxu0
      %v681 = vadd.f32 0.0, %v680
      %v682 = vpop.f32.mrf.mxu0
      %v683 = vpop.f32.mrf.mxu0
      %v684 = vadd.f32 0.0, %v683
      %v685 = vpop.f32.mrf.mxu0
      %686 = vmatprep.mubr.bf16.mxu0 0
      %687 = vmatmul.mubr.bf16.gmra.mxu0 %v451
      %v688 = vpop.f32.mrf.mxu0
      %v689 = vadd.f32 0.0, %v688
      %v690 = vpop.f32.mrf.mxu0
      %v691 = vpop.f32.mrf.mxu0
      %v692 = vadd.f32 0.0, %v691
      %v693 = vpop.f32.mrf.mxu0
      %694 = vmatprep.mubr.bf16.mxu0 0
      %695 = vmatmul.mubr.bf16.gmra.mxu0 %v459
      %v696 = vpop.f32.mrf.mxu0
      %v697 = vadd.f32 0.0, %v696
      %v698 = vpop.f32.mrf.mxu0
      %v699 = vpop.f32.mrf.mxu0
      %v700 = vadd.f32 0.0, %v699
      %v701 = vpop.f32.mrf.mxu0
      %702 = vmatprep.mubr.bf16.mxu0 0
      %703 = vmatmul.mubr.bf16.gmra.mxu0 %v467
      %v704 = vpop.f32.mrf.mxu0
      %v705 = vadd.f32 0.0, %v704
      %v706 = vpop.f32.mrf.mxu0
      %v707 = vpop.f32.mrf.mxu0
      %v708 = vadd.f32 0.0, %v707
      %v709 = vpop.f32.mrf.mxu0
      %710 = vmatprep.mubr.bf16.mxu0 0
      %711 = vmatmul.mubr.bf16.gmra.mxu0 %v475
      %v712 = vpop.f32.mrf.mxu0
      %v713 = vadd.f32 0.0, %v712
      %v714 = vpop.f32.mrf.mxu0
      %v715 = vpop.f32.mrf.mxu0
      %v716 = vadd.f32 0.0, %v715
      %v717 = vpop.f32.mrf.mxu0
      %718 = vmatprep.mubr.bf16.mxu0 0
      %719 = vmatmul.mubr.bf16.gmra.mxu0 %v483
      %v720 = vpop.f32.mrf.mxu0
      %v721 = vadd.f32 0.0, %v720
      %v722 = vpop.f32.mrf.mxu0
      %v723 = vpop.f32.mrf.mxu0
      %v724 = vadd.f32 0.0, %v723
      %v725 = vpop.f32.mrf.mxu0
      %726 = vmatprep.mubr.bf16.mxu0 0
      %727 = vmatmul.mubr.bf16.gmra.mxu0 %v491
      %v728 = vpop.f32.mrf.mxu0
      %v729 = vadd.f32 0.0, %v728
      %v730 = vpop.f32.mrf.mxu0
      %v731 = vpop.f32.mrf.mxu0
      %v732 = vadd.f32 0.0, %v731
      %v733 = vpop.f32.mrf.mxu0
      %734 = vmatprep.mubr.bf16.mxu0 0
      %735 = vmatmul.mubr.bf16.gmra.mxu0 %v499
      %v736 = vpop.f32.mrf.mxu0
      %v737 = vadd.f32 0.0, %v736
      %v738 = vpop.f32.mrf.mxu0
      %v739 = vpop.f32.mrf.mxu0
      %v740 = vadd.f32 0.0, %v739
      %v741 = vpop.f32.mrf.mxu0
      %742 = vmatprep.mubr.bf16.mxu0 0
      %743 = vmatmul.mubr.bf16.gmra.mxu0 %v507
      %v744 = vpop.f32.mrf.mxu0
      %v745 = vadd.f32 0.0, %v744
      %v746 = vpop.f32.mrf.mxu0
      %v747 = vpop.f32.mrf.mxu0
      %v748 = vadd.f32 0.0, %v747
      %v749 = vpop.f32.mrf.mxu0
      %750 = vmatprep.mubr.bf16.mxu0 0
      %751 = vmatmul.mubr.bf16.gmra.mxu0 %v515
      %v752 = vpop.f32.mrf.mxu0
      %v753 = vadd.f32 0.0, %v752
      %v754 = vpop.f32.mrf.mxu0
      %v755 = vpop.f32.mrf.mxu0
      %v756 = vadd.f32 0.0, %v755
      %v757 = vpop.f32.mrf.mxu0
      %758 = vmatprep.mubr.bf16.mxu0 0
      %759 = vmatmul.mubr.bf16.gmra.mxu0 %v523
      %v760 = vpop.f32.mrf.mxu0
      %v761 = vadd.f32 0.0, %v760
      %v762 = vpop.f32.mrf.mxu0
      %v763 = vpop.f32.mrf.mxu0
      %v764 = vadd.f32 0.0, %v763
      %v765 = vpop.f32.mrf.mxu0
      %766 = vmatprep.mubr.bf16.mxu0 0
      %767 = vmatmul.mubr.bf16.gmra.mxu0 %v531
      %v768 = vpop.f32.mrf.mxu0
      %v769 = vadd.f32 0.0, %v768
      %v770 = vpop.f32.mrf.mxu0
      %v771 = vpop.f32.mrf.mxu0
      %v772 = vadd.f32 0.0, %v771
      %v773 = vpop.f32.mrf.mxu0
      %774 = vmatprep.mubr.bf16.mxu0 0
      %775 = vmatmul.mubr.bf16.gmra.mxu0 %v539
      %v776 = vpop.f32.mrf.mxu0
      %v777 = vadd.f32 0.0, %v776
      %v778 = vpop.f32.mrf.mxu0
      %v779 = vpop.f32.mrf.mxu0
      %v780 = vadd.f32 0.0, %v779
      %v781 = vpop.f32.mrf.mxu0
      %782 = vmatprep.mubr.bf16.mxu0 0
      %783 = vmatmul.mubr.bf16.gmra.mxu0 %v547
      %v784 = vpop.f32.mrf.mxu0
      %v785 = vadd.f32 0.0, %v784
      %v786 = vpop.f32.mrf.mxu0
      %v787 = vpop.f32.mrf.mxu0
      %v788 = vadd.f32 0.0, %v787
      %v789 = vpop.f32.mrf.mxu0
      %790 = vdwg.mxu0
      %v807 = vunpack.c.l.b16 %v365
      %v808 = vunpack.c.l.b16 %v366
      %v809 = vunpack.c.l.b16 %v367
      %v810 = vunpack.c.l.b16 %v368
      %v811 = vunpack.c.l.b16 %v369
      %v812 = vunpack.c.l.b16 %v370
      %v813 = vunpack.c.l.b16 %v371
      %v814 = vunpack.c.l.b16 %v372
      %v815 = vunpack.c.l.b16 %v373
      %v816 = vunpack.c.l.b16 %v374
      %v817 = vunpack.c.l.b16 %v375
      %v818 = vunpack.c.l.b16 %v376
      %v819 = vunpack.c.l.b16 %v377
      %v820 = vunpack.c.l.b16 %v378
      %v821 = vunpack.c.l.b16 %v379
      %v822 = vunpack.c.l.b16 %v380
      %v823 = vpack.c.b16 %v808, %v807
      %v824 = vpack.c.b16 %v810, %v809
      %v825 = vpack.c.b16 %v812, %v811
      %v826 = vpack.c.b16 %v814, %v813
      %v827 = vpack.c.b16 %v816, %v815
      %v828 = vpack.c.b16 %v818, %v817
      %v829 = vpack.c.b16 %v820, %v819
      %v830 = vpack.c.b16 %v822, %v821
      %839 = vmatprep.subr.bf16.mxu0 0
      %840 = vmatpush1.bf16.msra.mxu0 %v830
      %841 = vmatprep.subr.bf16.mxu0 0
      %842 = vmatpush1.bf16.msra.mxu0 %v829
      %843 = vmatprep.subr.bf16.mxu0 0
      %844 = vmatpush1.bf16.msra.mxu0 %v828
      %845 = vmatprep.subr.bf16.mxu0 0
      %846 = vmatpush1.bf16.msra.mxu0 %v827
      %847 = vmatprep.subr.bf16.mxu0 0
      %848 = vmatpush1.bf16.msra.mxu0 %v826
      %849 = vmatprep.subr.bf16.mxu0 0
      %850 = vmatpush1.bf16.msra.mxu0 %v825
      %851 = vmatprep.subr.bf16.mxu0 0
      %852 = vmatpush1.bf16.msra.mxu0 %v824
      %853 = vmatprep.subr.bf16.mxu0 0
      %854 = vmatpush1.bf16.msra.mxu0 %v823
      %855 = vmatprep.subr.bf16.mxu0 0
      %856 = vmatpush2.bf16.msra.mxu0 0
      %857 = vmatprep.subr.bf16.mxu0 0
      %858 = vmatpush2.bf16.msra.mxu0 0
      %859 = vmatprep.subr.bf16.mxu0 0
      %860 = vmatpush2.bf16.msra.mxu0 0
      %861 = vmatprep.subr.bf16.mxu0 0
      %862 = vmatpush2.bf16.msra.mxu0 0
      %863 = vmatprep.subr.bf16.mxu0 0
      %864 = vmatpush2.bf16.msra.mxu0 0
      %865 = vmatprep.subr.bf16.mxu0 0
      %866 = vmatpush2.bf16.msra.mxu0 0
      %867 = vmatprep.subr.bf16.mxu0 0
      %868 = vmatpush2.bf16.msra.mxu0 0
      %869 = vmatprep.subr.bf16.mxu0 0
      %870 = vmatpush2.bf16.msra.mxu0 0
      %871 = vmatprep.mubr.bf16.mxu0 0
      %872 = vmatmul.mubr.bf16.gmra.mxu0 %v347
      %v873 = vpop.f32.mrf.mxu0
      %v874 = vadd.f32 %v649, %v873
      %v875 = vpop.f32.mrf.mxu0
      %v876 = vpop.f32.mrf.mxu0
      %v877 = vadd.f32 %v652, %v876
      %v878 = vpop.f32.mrf.mxu0
      %879 = vmatprep.mubr.bf16.mxu0 0
      %880 = vmatmul.mubr.bf16.gmra.mxu0 %v348
      %v881 = vpop.f32.mrf.mxu0
      %v882 = vadd.f32 %v657, %v881
      %v883 = vpop.f32.mrf.mxu0
      %v884 = vpop.f32.mrf.mxu0
      %v885 = vadd.f32 %v660, %v884
      %v886 = vpop.f32.mrf.mxu0
      %887 = vmatprep.mubr.bf16.mxu0 0
      %888 = vmatmul.mubr.bf16.gmra.mxu0 %v349
      %v889 = vpop.f32.mrf.mxu0
      %v890 = vadd.f32 %v665, %v889
      %v891 = vpop.f32.mrf.mxu0
      %v892 = vpop.f32.mrf.mxu0
      %v893 = vadd.f32 %v668, %v892
      %v894 = vpop.f32.mrf.mxu0
      %895 = vmatprep.mubr.bf16.mxu0 0
      %896 = vmatmul.mubr.bf16.gmra.mxu0 %v350
      %v897 = vpop.f32.mrf.mxu0
      %v898 = vadd.f32 %v673, %v897
      %v899 = vpop.f32.mrf.mxu0
      %v900 = vpop.f32.mrf.mxu0
      %v901 = vadd.f32 %v676, %v900
      %v902 = vpop.f32.mrf.mxu0
      %903 = vmatprep.mubr.bf16.mxu0 0
      %904 = vmatmul.mubr.bf16.gmra.mxu0 %v351
      %v905 = vpop.f32.mrf.mxu0
      %v906 = vadd.f32 %v681, %v905
      %v907 = vpop.f32.mrf.mxu0
      %v908 = vpop.f32.mrf.mxu0
      %v909 = vadd.f32 %v684, %v908
      %v910 = vpop.f32.mrf.mxu0
      %911 = vmatprep.mubr.bf16.mxu0 0
      %912 = vmatmul.mubr.bf16.gmra.mxu0 %v352
      %v913 = vpop.f32.mrf.mxu0
      %v914 = vadd.f32 %v689, %v913
      %v915 = vpop.f32.mrf.mxu0
      %v916 = vpop.f32.mrf.mxu0
      %v917 = vadd.f32 %v692, %v916
      %v918 = vpop.f32.mrf.mxu0
      %919 = vmatprep.mubr.bf16.mxu0 0
      %920 = vmatmul.mubr.bf16.gmra.mxu0 %v353
      %v921 = vpop.f32.mrf.mxu0
      %v922 = vadd.f32 %v697, %v921
      %v923 = vpop.f32.mrf.mxu0
      %v924 = vpop.f32.mrf.mxu0
      %v925 = vadd.f32 %v700, %v924
      %v926 = vpop.f32.mrf.mxu0
      %927 = vmatprep.mubr.bf16.mxu0 0
      %928 = vmatmul.mubr.bf16.gmra.mxu0 %v354
      %v929 = vpop.f32.mrf.mxu0
      %v930 = vadd.f32 %v705, %v929
      %v931 = vpop.f32.mrf.mxu0
      %v932 = vpop.f32.mrf.mxu0
      %v933 = vadd.f32 %v708, %v932
      %v934 = vpop.f32.mrf.mxu0
      %935 = vmatprep.mubr.bf16.mxu0 0
      %936 = vmatmul.mubr.bf16.gmra.mxu0 %v355
      %v937 = vpop.f32.mrf.mxu0
      %v938 = vadd.f32 %v713, %v937
      %v939 = vpop.f32.mrf.mxu0
      %v940 = vpop.f32.mrf.mxu0
      %v941 = vadd.f32 %v716, %v940
      %v942 = vpop.f32.mrf.mxu0
      %943 = vmatprep.mubr.bf16.mxu0 0
      %944 = vmatmul.mubr.bf16.gmra.mxu0 %v356
      %v945 = vpop.f32.mrf.mxu0
      %v946 = vadd.f32 %v721, %v945
      %v947 = vpop.f32.mrf.mxu0
      %v948 = vpop.f32.mrf.mxu0
      %v949 = vadd.f32 %v724, %v948
      %v950 = vpop.f32.mrf.mxu0
      %951 = vmatprep.mubr.bf16.mxu0 0
      %952 = vmatmul.mubr.bf16.gmra.mxu0 %v357
      %v953 = vpop.f32.mrf.mxu0
      %v954 = vadd.f32 %v729, %v953
      %v955 = vpop.f32.mrf.mxu0
      %v956 = vpop.f32.mrf.mxu0
      %v957 = vadd.f32 %v732, %v956
      %v958 = vpop.f32.mrf.mxu0
      %959 = vmatprep.mubr.bf16.mxu0 0
      %960 = vmatmul.mubr.bf16.gmra.mxu0 %v358
      %v961 = vpop.f32.mrf.mxu0
      %v962 = vadd.f32 %v737, %v961
      %v963 = vpop.f32.mrf.mxu0
      %v964 = vpop.f32.mrf.mxu0
      %v965 = vadd.f32 %v740, %v964
      %v966 = vpop.f32.mrf.mxu0
      %967 = vmatprep.mubr.bf16.mxu0 0
      %968 = vmatmul.mubr.bf16.gmra.mxu0 %v359
      %v969 = vpop.f32.mrf.mxu0
      %v970 = vadd.f32 %v745, %v969
      %v971 = vpop.f32.mrf.mxu0
      %v972 = vpop.f32.mrf.mxu0
      %v973 = vadd.f32 %v748, %v972
      %v974 = vpop.f32.mrf.mxu0
      %975 = vmatprep.mubr.bf16.mxu0 0
      %976 = vmatmul.mubr.bf16.gmra.mxu0 %v360
      %v977 = vpop.f32.mrf.mxu0
      %v978 = vadd.f32 %v753, %v977
      %v979 = vpop.f32.mrf.mxu0
      %v980 = vpop.f32.mrf.mxu0
      %v981 = vadd.f32 %v756, %v980
      %v982 = vpop.f32.mrf.mxu0
      %983 = vmatprep.mubr.bf16.mxu0 0
      %984 = vmatmul.mubr.bf16.gmra.mxu0 %v361
      %v985 = vpop.f32.mrf.mxu0
      %v986 = vadd.f32 %v761, %v985
      %v987 = vpop.f32.mrf.mxu0
      %v988 = vpop.f32.mrf.mxu0
      %v989 = vadd.f32 %v764, %v988
      %v990 = vpop.f32.mrf.mxu0
      %991 = vmatprep.mubr.bf16.mxu0 0
      %992 = vmatmul.mubr.bf16.gmra.mxu0 %v362
      %v993 = vpop.f32.mrf.mxu0
      %v994 = vadd.f32 %v769, %v993
      %v995 = vpop.f32.mrf.mxu0
      %v996 = vpop.f32.mrf.mxu0
      %v997 = vadd.f32 %v772, %v996
      %v998 = vpop.f32.mrf.mxu0
      %999 = vmatprep.mubr.bf16.mxu0 0
      %1000 = vmatmul.mubr.bf16.gmra.mxu0 %v363
      %v1001 = vpop.f32.mrf.mxu0
      %v1002 = vadd.f32 %v777, %v1001
      %v1003 = vpop.f32.mrf.mxu0
      %v1004 = vpop.f32.mrf.mxu0
      %v1005 = vadd.f32 %v780, %v1004
      %v1006 = vpop.f32.mrf.mxu0
      %1007 = vmatprep.mubr.bf16.mxu0 0
      %1008 = vmatmul.mubr.bf16.gmra.mxu0 %v364
      %v1009 = vpop.f32.mrf.mxu0
      %v1010 = vadd.f32 %v785, %v1009
      %v1011 = vpop.f32.mrf.mxu0
      %v1012 = vpop.f32.mrf.mxu0
      %v1013 = vadd.f32 %v788, %v1012
      %v1014 = vpop.f32.mrf.mxu0
      %1015 = vdwg.mxu0
      %s1016 = scalar_lea.vmem %s2, 128
      %v1017 = vld [vmem:[%s1016] sm:$0xf]
      %v1018 = vld [vmem:[%s1016 + $0x4] sm:$0xf]
      %v1019 = vld [vmem:[%s1016 + $0x8] sm:$0xf]
      %v1020 = vld [vmem:[%s1016 + $0xc] sm:$0xf]
      %v1021 = vld [vmem:[%s1016 + $0x10] sm:$0xf]
      %v1022 = vld [vmem:[%s1016 + $0x14] sm:$0xf]
      %v1023 = vld [vmem:[%s1016 + $0x18] sm:$0xf]
      %v1024 = vld [vmem:[%s1016 + $0x1c] sm:$0xf]
      %v1025 = vld [vmem:[%s1016 + $0x20] sm:$0xf]
      %v1026 = vld [vmem:[%s1016 + $0x24] sm:$0xf]
      %v1027 = vld [vmem:[%s1016 + $0x28] sm:$0xf]
      %v1028 = vld [vmem:[%s1016 + $0x2c] sm:$0xf]
      %v1029 = vld [vmem:[%s1016 + $0x30] sm:$0xf]
      %v1030 = vld [vmem:[%s1016 + $0x34] sm:$0xf]
      %v1031 = vld [vmem:[%s1016 + $0x38] sm:$0xf]
      %v1032 = vld [vmem:[%s1016 + $0x3c] sm:$0xf]
      %vm1052 = vcmask 1046528
      %v1053 = vrot.slane %v347, 1
      %v1054 = vrot.slane %v348, 1
      %v1055 = vsel %vm1052, %v1053, %v1054
      %v1056 = vrot.slane %v349, 1
      %v1057 = vsel %vm1052, %v1054, %v1056
      %v1058 = vrot.slane %v350, 1
      %v1059 = vsel %vm1052, %v1056, %v1058
      %v1060 = vrot.slane %v351, 1
      %v1061 = vsel %vm1052, %v1058, %v1060
      %v1062 = vrot.slane %v352, 1
      %v1063 = vsel %vm1052, %v1060, %v1062
      %v1064 = vrot.slane %v353, 1
      %v1065 = vsel %vm1052, %v1062, %v1064
      %v1066 = vrot.slane %v354, 1
      %v1067 = vsel %vm1052, %v1064, %v1066
      %v1068 = vrot.slane %v355, 1
      %v1069 = vsel %vm1052, %v1066, %v1068
      %v1070 = vrot.slane %v356, 1
      %v1071 = vsel %vm1052, %v1068, %v1070
      %v1072 = vrot.slane %v357, 1
      %v1073 = vsel %vm1052, %v1070, %v1072
      %v1074 = vrot.slane %v358, 1
      %v1075 = vsel %vm1052, %v1072, %v1074
      %v1076 = vrot.slane %v359, 1
      %v1077 = vsel %vm1052, %v1074, %v1076
      %v1078 = vrot.slane %v360, 1
      %v1079 = vsel %vm1052, %v1076, %v1078
      %v1080 = vrot.slane %v361, 1
      %v1081 = vsel %vm1052, %v1078, %v1080
      %v1082 = vrot.slane %v362, 1
      %v1083 = vsel %vm1052, %v1080, %v1082
      %v1084 = vrot.slane %v363, 1
      %v1085 = vsel %vm1052, %v1082, %v1084
      %v1086 = vrot.slane %v364, 1
      %v1087 = vsel %vm1052, %v1084, %v1086
      %v1088 = vrot.slane %v381, 1
      %v1089 = vsel %vm1052, %v1086, %v1088
      %v1124 = vunpack.c.l.b16 %v1017
      %v1125 = vunpack.c.l.b16 %v1018
      %v1126 = vunpack.c.l.b16 %v1019
      %v1127 = vunpack.c.l.b16 %v1020
      %v1128 = vunpack.c.l.b16 %v1021
      %v1129 = vunpack.c.l.b16 %v1022
      %v1130 = vunpack.c.l.b16 %v1023
      %v1131 = vunpack.c.l.b16 %v1024
      %v1132 = vunpack.c.l.b16 %v1025
      %v1133 = vunpack.c.l.b16 %v1026
      %v1134 = vunpack.c.l.b16 %v1027
      %v1135 = vunpack.c.l.b16 %v1028
      %v1136 = vunpack.c.l.b16 %v1029
      %v1137 = vunpack.c.l.b16 %v1030
      %v1138 = vunpack.c.l.b16 %v1031
      %v1139 = vunpack.c.l.b16 %v1032
      %v1140 = vpack.c.b16 %v1125, %v1124
      %v1141 = vpack.c.b16 %v1127, %v1126
      %v1142 = vpack.c.b16 %v1129, %v1128
      %v1143 = vpack.c.b16 %v1131, %v1130
      %v1144 = vpack.c.b16 %v1133, %v1132
      %v1145 = vpack.c.b16 %v1135, %v1134
      %v1146 = vpack.c.b16 %v1137, %v1136
      %v1147 = vpack.c.b16 %v1139, %v1138
      %1156 = vmatprep.subr.bf16.mxu0 0
      %1157 = vmatpush1.bf16.msra.mxu0 %v1147
      %1158 = vmatprep.subr.bf16.mxu0 0
      %1159 = vmatpush1.bf16.msra.mxu0 %v1146
      %1160 = vmatprep.subr.bf16.mxu0 0
      %1161 = vmatpush1.bf16.msra.mxu0 %v1145
      %1162 = vmatprep.subr.bf16.mxu0 0
      %1163 = vmatpush1.bf16.msra.mxu0 %v1144
      %1164 = vmatprep.subr.bf16.mxu0 0
      %1165 = vmatpush1.bf16.msra.mxu0 %v1143
      %1166 = vmatprep.subr.bf16.mxu0 0
      %1167 = vmatpush1.bf16.msra.mxu0 %v1142
      %1168 = vmatprep.subr.bf16.mxu0 0
      %1169 = vmatpush1.bf16.msra.mxu0 %v1141
      %1170 = vmatprep.subr.bf16.mxu0 0
      %1171 = vmatpush1.bf16.msra.mxu0 %v1140
      %1172 = vmatprep.subr.bf16.mxu0 0
      %1173 = vmatpush2.bf16.msra.mxu0 0
      %1174 = vmatprep.subr.bf16.mxu0 0
      %1175 = vmatpush2.bf16.msra.mxu0 0
      %1176 = vmatprep.subr.bf16.mxu0 0
      %1177 = vmatpush2.bf16.msra.mxu0 0
      %1178 = vmatprep.subr.bf16.mxu0 0
      %1179 = vmatpush2.bf16.msra.mxu0 0
      %1180 = vmatprep.subr.bf16.mxu0 0
      %1181 = vmatpush2.bf16.msra.mxu0 0
      %1182 = vmatprep.subr.bf16.mxu0 0
      %1183 = vmatpush2.bf16.msra.mxu0 0
      %1184 = vmatprep.subr.bf16.mxu0 0
      %1185 = vmatpush2.bf16.msra.mxu0 0
      %1186 = vmatprep.subr.bf16.mxu0 0
      %1187 = vmatpush2.bf16.msra.mxu0 0
      %1188 = vmatprep.mubr.bf16.mxu0 0
      %1189 = vmatmul.mubr.bf16.gmra.mxu0 %v1055
      %v1190 = vpop.f32.mrf.mxu0
      %v1191 = vadd.f32 0.0, %v1190
      %v1192 = vpop.f32.mrf.mxu0
      %v1193 = vpop.f32.mrf.mxu0
      %v1194 = vadd.f32 0.0, %v1193
      %v1195 = vpop.f32.mrf.mxu0
      %1196 = vmatprep.mubr.bf16.mxu0 0
      %1197 = vmatmul.mubr.bf16.gmra.mxu0 %v1057
      %v1198 = vpop.f32.mrf.mxu0
      %v1199 = vadd.f32 0.0, %v1198
      %v1200 = vpop.f32.mrf.mxu0
      %v1201 = vpop.f32.mrf.mxu0
      %v1202 = vadd.f32 0.0, %v1201
      %v1203 = vpop.f32.mrf.mxu0
      %1204 = vmatprep.mubr.bf16.mxu0 0
      %1205 = vmatmul.mubr.bf16.gmra.mxu0 %v1059
      %v1206 = vpop.f32.mrf.mxu0
      %v1207 = vadd.f32 0.0, %v1206
      %v1208 = vpop.f32.mrf.mxu0
      %v1209 = vpop.f32.mrf.mxu0
      %v1210 = vadd.f32 0.0, %v1209
      %v1211 = vpop.f32.mrf.mxu0
      %1212 = vmatprep.mubr.bf16.mxu0 0
      %1213 = vmatmul.mubr.bf16.gmra.mxu0 %v1061
      %v1214 = vpop.f32.mrf.mxu0
      %v1215 = vadd.f32 0.0, %v1214
      %v1216 = vpop.f32.mrf.mxu0
      %v1217 = vpop.f32.mrf.mxu0
      %v1218 = vadd.f32 0.0, %v1217
      %v1219 = vpop.f32.mrf.mxu0
      %1220 = vmatprep.mubr.bf16.mxu0 0
      %1221 = vmatmul.mubr.bf16.gmra.mxu0 %v1063
      %v1222 = vpop.f32.mrf.mxu0
      %v1223 = vadd.f32 0.0, %v1222
      %v1224 = vpop.f32.mrf.mxu0
      %v1225 = vpop.f32.mrf.mxu0
      %v1226 = vadd.f32 0.0, %v1225
      %v1227 = vpop.f32.mrf.mxu0
      %1228 = vmatprep.mubr.bf16.mxu0 0
      %1229 = vmatmul.mubr.bf16.gmra.mxu0 %v1065
      %v1230 = vpop.f32.mrf.mxu0
      %v1231 = vadd.f32 0.0, %v1230
      %v1232 = vpop.f32.mrf.mxu0
      %v1233 = vpop.f32.mrf.mxu0
      %v1234 = vadd.f32 0.0, %v1233
      %v1235 = vpop.f32.mrf.mxu0
      %1236 = vmatprep.mubr.bf16.mxu0 0
      %1237 = vmatmul.mubr.bf16.gmra.mxu0 %v1067
      %v1238 = vpop.f32.mrf.mxu0
      %v1239 = vadd.f32 0.0, %v1238
      %v1240 = vpop.f32.mrf.mxu0
      %v1241 = vpop.f32.mrf.mxu0
      %v1242 = vadd.f32 0.0, %v1241
      %v1243 = vpop.f32.mrf.mxu0
      %1244 = vmatprep.mubr.bf16.mxu0 0
      %1245 = vmatmul.mubr.bf16.gmra.mxu0 %v1069
      %v1246 = vpop.f32.mrf.mxu0
      %v1247 = vadd.f32 0.0, %v1246
      %v1248 = vpop.f32.mrf.mxu0
      %v1249 = vpop.f32.mrf.mxu0
      %v1250 = vadd.f32 0.0, %v1249
      %v1251 = vpop.f32.mrf.mxu0
      %1252 = vmatprep.mubr.bf16.mxu0 0
      %1253 = vmatmul.mubr.bf16.gmra.mxu0 %v1071
      %v1254 = vpop.f32.mrf.mxu0
      %v1255 = vadd.f32 0.0, %v1254
      %v1256 = vpop.f32.mrf.mxu0
      %v1257 = vpop.f32.mrf.mxu0
      %v1258 = vadd.f32 0.0, %v1257
      %v1259 = vpop.f32.mrf.mxu0
      %1260 = vmatprep.mubr.bf16.mxu0 0
      %1261 = vmatmul.mubr.bf16.gmra.mxu0 %v1073
      %v1262 = vpop.f32.mrf.mxu0
      %v1263 = vadd.f32 0.0, %v1262
      %v1264 = vpop.f32.mrf.mxu0
      %v1265 = vpop.f32.mrf.mxu0
      %v1266 = vadd.f32 0.0, %v1265
      %v1267 = vpop.f32.mrf.mxu0
      %1268 = vmatprep.mubr.bf16.mxu0 0
      %1269 = vmatmul.mubr.bf16.gmra.mxu0 %v1075
      %v1270 = vpop.f32.mrf.mxu0
      %v1271 = vadd.f32 0.0, %v1270
      %v1272 = vpop.f32.mrf.mxu0
      %v1273 = vpop.f32.mrf.mxu0
      %v1274 = vadd.f32 0.0, %v1273
      %v1275 = vpop.f32.mrf.mxu0
      %1276 = vmatprep.mubr.bf16.mxu0 0
      %1277 = vmatmul.mubr.bf16.gmra.mxu0 %v1077
      %v1278 = vpop.f32.mrf.mxu0
      %v1279 = vadd.f32 0.0, %v1278
      %v1280 = vpop.f32.mrf.mxu0
      %v1281 = vpop.f32.mrf.mxu0
      %v1282 = vadd.f32 0.0, %v1281
      %v1283 = vpop.f32.mrf.mxu0
      %1284 = vmatprep.mubr.bf16.mxu0 0
      %1285 = vmatmul.mubr.bf16.gmra.mxu0 %v1079
      %v1286 = vpop.f32.mrf.mxu0
      %v1287 = vadd.f32 0.0, %v1286
      %v1288 = vpop.f32.mrf.mxu0
      %v1289 = vpop.f32.mrf.mxu0
      %v1290 = vadd.f32 0.0, %v1289
      %v1291 = vpop.f32.mrf.mxu0
      %1292 = vmatprep.mubr.bf16.mxu0 0
      %1293 = vmatmul.mubr.bf16.gmra.mxu0 %v1081
      %v1294 = vpop.f32.mrf.mxu0
      %v1295 = vadd.f32 0.0, %v1294
      %v1296 = vpop.f32.mrf.mxu0
      %v1297 = vpop.f32.mrf.mxu0
      %v1298 = vadd.f32 0.0, %v1297
      %v1299 = vpop.f32.mrf.mxu0
      %1300 = vmatprep.mubr.bf16.mxu0 0
      %1301 = vmatmul.mubr.bf16.gmra.mxu0 %v1083
      %v1302 = vpop.f32.mrf.mxu0
      %v1303 = vadd.f32 0.0, %v1302
      %v1304 = vpop.f32.mrf.mxu0
      %v1305 = vpop.f32.mrf.mxu0
      %v1306 = vadd.f32 0.0, %v1305
      %v1307 = vpop.f32.mrf.mxu0
      %1308 = vmatprep.mubr.bf16.mxu0 0
      %1309 = vmatmul.mubr.bf16.gmra.mxu0 %v1085
      %v1310 = vpop.f32.mrf.mxu0
      %v1311 = vadd.f32 0.0, %v1310
      %v1312 = vpop.f32.mrf.mxu0
      %v1313 = vpop.f32.mrf.mxu0
      %v1314 = vadd.f32 0.0, %v1313
      %v1315 = vpop.f32.mrf.mxu0
      %1316 = vmatprep.mubr.bf16.mxu0 0
      %1317 = vmatmul.mubr.bf16.gmra.mxu0 %v1087
      %v1318 = vpop.f32.mrf.mxu0
      %v1319 = vadd.f32 0.0, %v1318
      %v1320 = vpop.f32.mrf.mxu0
      %v1321 = vpop.f32.mrf.mxu0
      %v1322 = vadd.f32 0.0, %v1321
      %v1323 = vpop.f32.mrf.mxu0
      %1324 = vmatprep.mubr.bf16.mxu0 0
      %1325 = vmatmul.mubr.bf16.gmra.mxu0 %v1089
      %v1326 = vpop.f32.mrf.mxu0
      %v1327 = vadd.f32 0.0, %v1326
      %v1328 = vpop.f32.mrf.mxu0
      %v1329 = vpop.f32.mrf.mxu0
      %v1330 = vadd.f32 0.0, %v1329
      %v1331 = vpop.f32.mrf.mxu0
      %1332 = vdwg.mxu0
      %v1333 = vadd.f32 %v874, %v1191
      %v1334 = vadd.f32 %v877, %v1194
      %v1335 = vadd.f32 %v882, %v1199
      %v1336 = vadd.f32 %v885, %v1202
      %v1337 = vadd.f32 %v890, %v1207
      %v1338 = vadd.f32 %v893, %v1210
      %v1339 = vadd.f32 %v898, %v1215
      %v1340 = vadd.f32 %v901, %v1218
      %v1341 = vadd.f32 %v906, %v1223
      %v1342 = vadd.f32 %v909, %v1226
      %v1343 = vadd.f32 %v914, %v1231
      %v1344 = vadd.f32 %v917, %v1234
      %v1345 = vadd.f32 %v922, %v1239
      %v1346 = vadd.f32 %v925, %v1242
      %v1347 = vadd.f32 %v930, %v1247
      %v1348 = vadd.f32 %v933, %v1250
      %v1349 = vadd.f32 %v938, %v1255
      %v1350 = vadd.f32 %v941, %v1258
      %v1351 = vadd.f32 %v946, %v1263
      %v1352 = vadd.f32 %v949, %v1266
      %v1353 = vadd.f32 %v954, %v1271
      %v1354 = vadd.f32 %v957, %v1274
      %v1355 = vadd.f32 %v962, %v1279
      %v1356 = vadd.f32 %v965, %v1282
      %v1357 = vadd.f32 %v970, %v1287
      %v1358 = vadd.f32 %v973, %v1290
      %v1359 = vadd.f32 %v978, %v1295
      %v1360 = vadd.f32 %v981, %v1298
      %v1361 = vadd.f32 %v986, %v1303
      %v1362 = vadd.f32 %v989, %v1306
      %v1363 = vadd.f32 %v994, %v1311
      %v1364 = vadd.f32 %v997, %v1314
      %v1365 = vadd.f32 %v1002, %v1319
      %v1366 = vadd.f32 %v1005, %v1322
      %v1367 = vadd.f32 %v1010, %v1327
      %v1368 = vadd.f32 %v1013, %v1330
      %v1369 = vpack.c.bf16 %v343, %v342
      %v1370 = vpack.c.bf16 %v344, %v344
      %s1371 = scalar_lea.vmem %s2, 192
      %v1372 = vld [vmem:[%s1371] sm:$0xf]
      %v1373 = vld [vmem:[%s1371 + $0x4] sm:$0xf]
      %v1374 = vld [vmem:[%s1371 + $0x8] sm:$0xf]
      %v1375 = vld [vmem:[%s1371 + $0xc] sm:$0xf]
      %v1376 = vld [vmem:[%s1371 + $0x10] sm:$0xf]
      %v1377 = vld [vmem:[%s1371 + $0x14] sm:$0xf]
      %v1378 = vld [vmem:[%s1371 + $0x18] sm:$0xf]
      %v1379 = vld [vmem:[%s1371 + $0x1c] sm:$0xf]
      %v1380 = vld [vmem:[%s1371 + $0x20] sm:$0xf]
      %v1381 = vld [vmem:[%s1371 + $0x24] sm:$0xf]
      %v1382 = vld [vmem:[%s1371 + $0x28] sm:$0xf]
      %v1383 = vld [vmem:[%s1371 + $0x2c] sm:$0xf]
      %v1384 = vld [vmem:[%s1371 + $0x30] sm:$0xf]
      %v1385 = vld [vmem:[%s1371 + $0x34] sm:$0xf]
      %v1386 = vld [vmem:[%s1371 + $0x38] sm:$0xf]
      %v1387 = vld [vmem:[%s1371 + $0x3c] sm:$0xf]
      %v1390 = vrot.slane %v1369, 1
      %v1391 = vsel %vm1052, %v1086, %v1390
      %v1392 = vrot.slane %v1370, 1
      %v1393 = vsel %vm1052, %v1390, %v1392
      %v1412 = vunpack.c.l.b16 %v1372
      %v1413 = vunpack.c.l.b16 %v1373
      %v1414 = vunpack.c.l.b16 %v1374
      %v1415 = vunpack.c.l.b16 %v1375
      %v1416 = vunpack.c.l.b16 %v1376
      %v1417 = vunpack.c.l.b16 %v1377
      %v1418 = vunpack.c.l.b16 %v1378
      %v1419 = vunpack.c.l.b16 %v1379
      %v1420 = vunpack.c.l.b16 %v1380
      %v1421 = vunpack.c.l.b16 %v1381
      %v1422 = vunpack.c.l.b16 %v1382
      %v1423 = vunpack.c.l.b16 %v1383
      %v1424 = vunpack.c.l.b16 %v1384
      %v1425 = vunpack.c.l.b16 %v1385
      %v1426 = vunpack.c.l.b16 %v1386
      %v1427 = vunpack.c.l.b16 %v1387
      %v1428 = vpack.c.b16 %v1413, %v1412
      %v1429 = vpack.c.b16 %v1415, %v1414
      %v1430 = vpack.c.b16 %v1417, %v1416
      %v1431 = vpack.c.b16 %v1419, %v1418
      %v1432 = vpack.c.b16 %v1421, %v1420
      %v1433 = vpack.c.b16 %v1423, %v1422
      %v1434 = vpack.c.b16 %v1425, %v1424
      %v1435 = vpack.c.b16 %v1427, %v1426
      %1444 = vmatprep.subr.bf16.mxu0 0
      %1445 = vmatpush1.bf16.msra.mxu0 %v1435
      %1446 = vmatprep.subr.bf16.mxu0 0
      %1447 = vmatpush1.bf16.msra.mxu0 %v1434
      %1448 = vmatprep.subr.bf16.mxu0 0
      %1449 = vmatpush1.bf16.msra.mxu0 %v1433
      %1450 = vmatprep.subr.bf16.mxu0 0
      %1451 = vmatpush1.bf16.msra.mxu0 %v1432
      %1452 = vmatprep.subr.bf16.mxu0 0
      %1453 = vmatpush1.bf16.msra.mxu0 %v1431
      %1454 = vmatprep.subr.bf16.mxu0 0
      %1455 = vmatpush1.bf16.msra.mxu0 %v1430
      %1456 = vmatprep.subr.bf16.mxu0 0
      %1457 = vmatpush1.bf16.msra.mxu0 %v1429
      %1458 = vmatprep.subr.bf16.mxu0 0
      %1459 = vmatpush1.bf16.msra.mxu0 %v1428
      %1460 = vmatprep.subr.bf16.mxu0 0
      %1461 = vmatpush2.bf16.msra.mxu0 0
      %1462 = vmatprep.subr.bf16.mxu0 0
      %1463 = vmatpush2.bf16.msra.mxu0 0
      %1464 = vmatprep.subr.bf16.mxu0 0
      %1465 = vmatpush2.bf16.msra.mxu0 0
      %1466 = vmatprep.subr.bf16.mxu0 0
      %1467 = vmatpush2.bf16.msra.mxu0 0
      %1468 = vmatprep.subr.bf16.mxu0 0
      %1469 = vmatpush2.bf16.msra.mxu0 0
      %1470 = vmatprep.subr.bf16.mxu0 0
      %1471 = vmatpush2.bf16.msra.mxu0 0
      %1472 = vmatprep.subr.bf16.mxu0 0
      %1473 = vmatpush2.bf16.msra.mxu0 0
      %1474 = vmatprep.subr.bf16.mxu0 0
      %1475 = vmatpush2.bf16.msra.mxu0 0
      %1476 = vmatprep.mubr.bf16.mxu0 0
      %1477 = vmatmul.mubr.bf16.gmra.mxu0 %v1057
      %v1478 = vpop.f32.mrf.mxu0
      %v1479 = vadd.f32 0.0, %v1478
      %v1480 = vpop.f32.mrf.mxu0
      %v1481 = vpop.f32.mrf.mxu0
      %v1482 = vadd.f32 0.0, %v1481
      %v1483 = vpop.f32.mrf.mxu0
      %1484 = vmatprep.mubr.bf16.mxu0 0
      %1485 = vmatmul.mubr.bf16.gmra.mxu0 %v1059
      %v1486 = vpop.f32.mrf.mxu0
      %v1487 = vadd.f32 0.0, %v1486
      %v1488 = vpop.f32.mrf.mxu0
      %v1489 = vpop.f32.mrf.mxu0
      %v1490 = vadd.f32 0.0, %v1489
      %v1491 = vpop.f32.mrf.mxu0
      %1492 = vmatprep.mubr.bf16.mxu0 0
      %1493 = vmatmul.mubr.bf16.gmra.mxu0 %v1061
      %v1494 = vpop.f32.mrf.mxu0
      %v1495 = vadd.f32 0.0, %v1494
      %v1496 = vpop.f32.mrf.mxu0
      %v1497 = vpop.f32.mrf.mxu0
      %v1498 = vadd.f32 0.0, %v1497
      %v1499 = vpop.f32.mrf.mxu0
      %1500 = vmatprep.mubr.bf16.mxu0 0
      %1501 = vmatmul.mubr.bf16.gmra.mxu0 %v1063
      %v1502 = vpop.f32.mrf.mxu0
      %v1503 = vadd.f32 0.0, %v1502
      %v1504 = vpop.f32.mrf.mxu0
      %v1505 = vpop.f32.mrf.mxu0
      %v1506 = vadd.f32 0.0, %v1505
      %v1507 = vpop.f32.mrf.mxu0
      %1508 = vmatprep.mubr.bf16.mxu0 0
      %1509 = vmatmul.mubr.bf16.gmra.mxu0 %v1065
      %v1510 = vpop.f32.mrf.mxu0
      %v1511 = vadd.f32 0.0, %v1510
      %v1512 = vpop.f32.mrf.mxu0
      %v1513 = vpop.f32.mrf.mxu0
      %v1514 = vadd.f32 0.0, %v1513
      %v1515 = vpop.f32.mrf.mxu0
      %1516 = vmatprep.mubr.bf16.mxu0 0
      %1517 = vmatmul.mubr.bf16.gmra.mxu0 %v1067
      %v1518 = vpop.f32.mrf.mxu0
      %v1519 = vadd.f32 0.0, %v1518
      %v1520 = vpop.f32.mrf.mxu0
      %v1521 = vpop.f32.mrf.mxu0
      %v1522 = vadd.f32 0.0, %v1521
      %v1523 = vpop.f32.mrf.mxu0
      %1524 = vmatprep.mubr.bf16.mxu0 0
      %1525 = vmatmul.mubr.bf16.gmra.mxu0 %v1069
      %v1526 = vpop.f32.mrf.mxu0
      %v1527 = vadd.f32 0.0, %v1526
      %v1528 = vpop.f32.mrf.mxu0
      %v1529 = vpop.f32.mrf.mxu0
      %v1530 = vadd.f32 0.0, %v1529
      %v1531 = vpop.f32.mrf.mxu0
      %1532 = vmatprep.mubr.bf16.mxu0 0
      %1533 = vmatmul.mubr.bf16.gmra.mxu0 %v1071
      %v1534 = vpop.f32.mrf.mxu0
      %v1535 = vadd.f32 0.0, %v1534
      %v1536 = vpop.f32.mrf.mxu0
      %v1537 = vpop.f32.mrf.mxu0
      %v1538 = vadd.f32 0.0, %v1537
      %v1539 = vpop.f32.mrf.mxu0
      %1540 = vmatprep.mubr.bf16.mxu0 0
      %1541 = vmatmul.mubr.bf16.gmra.mxu0 %v1073
      %v1542 = vpop.f32.mrf.mxu0
      %v1543 = vadd.f32 0.0, %v1542
      %v1544 = vpop.f32.mrf.mxu0
      %v1545 = vpop.f32.mrf.mxu0
      %v1546 = vadd.f32 0.0, %v1545
      %v1547 = vpop.f32.mrf.mxu0
      %1548 = vmatprep.mubr.bf16.mxu0 0
      %1549 = vmatmul.mubr.bf16.gmra.mxu0 %v1075
      %v1550 = vpop.f32.mrf.mxu0
      %v1551 = vadd.f32 0.0, %v1550
      %v1552 = vpop.f32.mrf.mxu0
      %v1553 = vpop.f32.mrf.mxu0
      %v1554 = vadd.f32 0.0, %v1553
      %v1555 = vpop.f32.mrf.mxu0
      %1556 = vmatprep.mubr.bf16.mxu0 0
      %1557 = vmatmul.mubr.bf16.gmra.mxu0 %v1077
      %v1558 = vpop.f32.mrf.mxu0
      %v1559 = vadd.f32 0.0, %v1558
      %v1560 = vpop.f32.mrf.mxu0
      %v1561 = vpop.f32.mrf.mxu0
      %v1562 = vadd.f32 0.0, %v1561
      %v1563 = vpop.f32.mrf.mxu0
      %1564 = vmatprep.mubr.bf16.mxu0 0
      %1565 = vmatmul.mubr.bf16.gmra.mxu0 %v1079
      %v1566 = vpop.f32.mrf.mxu0
      %v1567 = vadd.f32 0.0, %v1566
      %v1568 = vpop.f32.mrf.mxu0
      %v1569 = vpop.f32.mrf.mxu0
      %v1570 = vadd.f32 0.0, %v1569
      %v1571 = vpop.f32.mrf.mxu0
      %1572 = vmatprep.mubr.bf16.mxu0 0
      %1573 = vmatmul.mubr.bf16.gmra.mxu0 %v1081
      %v1574 = vpop.f32.mrf.mxu0
      %v1575 = vadd.f32 0.0, %v1574
      %v1576 = vpop.f32.mrf.mxu0
      %v1577 = vpop.f32.mrf.mxu0
      %v1578 = vadd.f32 0.0, %v1577
      %v1579 = vpop.f32.mrf.mxu0
      %1580 = vmatprep.mubr.bf16.mxu0 0
      %1581 = vmatmul.mubr.bf16.gmra.mxu0 %v1083
      %v1582 = vpop.f32.mrf.mxu0
      %v1583 = vadd.f32 0.0, %v1582
      %v1584 = vpop.f32.mrf.mxu0
      %v1585 = vpop.f32.mrf.mxu0
      %v1586 = vadd.f32 0.0, %v1585
      %v1587 = vpop.f32.mrf.mxu0
      %1588 = vmatprep.mubr.bf16.mxu0 0
      %1589 = vmatmul.mubr.bf16.gmra.mxu0 %v1085
      %v1590 = vpop.f32.mrf.mxu0
      %v1591 = vadd.f32 0.0, %v1590
      %v1592 = vpop.f32.mrf.mxu0
      %v1593 = vpop.f32.mrf.mxu0
      %v1594 = vadd.f32 0.0, %v1593
      %v1595 = vpop.f32.mrf.mxu0
      %1596 = vmatprep.mubr.bf16.mxu0 0
      %1597 = vmatmul.mubr.bf16.gmra.mxu0 %v1087
      %v1598 = vpop.f32.mrf.mxu0
      %v1599 = vadd.f32 0.0, %v1598
      %v1600 = vpop.f32.mrf.mxu0
      %v1601 = vpop.f32.mrf.mxu0
      %v1602 = vadd.f32 0.0, %v1601
      %v1603 = vpop.f32.mrf.mxu0
      %1604 = vmatprep.mubr.bf16.mxu0 0
      %1605 = vmatmul.mubr.bf16.gmra.mxu0 %v1391
      %v1606 = vpop.f32.mrf.mxu0
      %v1607 = vadd.f32 0.0, %v1606
      %v1608 = vpop.f32.mrf.mxu0
      %v1609 = vpop.f32.mrf.mxu0
      %v1610 = vadd.f32 0.0, %v1609
      %v1611 = vpop.f32.mrf.mxu0
      %1612 = vmatprep.mubr.bf16.mxu0 0
      %1613 = vmatmul.mubr.bf16.gmra.mxu0 %v1393
      %v1614 = vpop.f32.mrf.mxu0
      %v1615 = vadd.f32 0.0, %v1614
      %v1616 = vpop.f32.mrf.mxu0
      %v1617 = vpop.f32.mrf.mxu0
      %v1618 = vadd.f32 0.0, %v1617
      %v1619 = vpop.f32.mrf.mxu0
      %1620 = vdwg.mxu0
      %v1621 = vadd.f32 %v1333, %v1479
      %v1622 = vadd.f32 %v1334, %v1482
      %v1623 = vadd.f32 %v1335, %v1487
      %v1624 = vadd.f32 %v1336, %v1490
      %v1625 = vadd.f32 %v1337, %v1495
      %v1626 = vadd.f32 %v1338, %v1498
      %v1627 = vadd.f32 %v1339, %v1503
      %v1628 = vadd.f32 %v1340, %v1506
      %v1629 = vadd.f32 %v1341, %v1511
      %v1630 = vadd.f32 %v1342, %v1514
      %v1631 = vadd.f32 %v1343, %v1519
      %v1632 = vadd.f32 %v1344, %v1522
      %v1633 = vadd.f32 %v1345, %v1527
      %v1634 = vadd.f32 %v1346, %v1530
      %v1635 = vadd.f32 %v1347, %v1535
      %v1636 = vadd.f32 %v1348, %v1538
      %v1637 = vadd.f32 %v1349, %v1543
      %v1638 = vadd.f32 %v1350, %v1546
      %v1639 = vadd.f32 %v1351, %v1551
      %v1640 = vadd.f32 %v1352, %v1554
      %v1641 = vadd.f32 %v1353, %v1559
      %v1642 = vadd.f32 %v1354, %v1562
      %v1643 = vadd.f32 %v1355, %v1567
      %v1644 = vadd.f32 %v1356, %v1570
      %v1645 = vadd.f32 %v1357, %v1575
      %v1646 = vadd.f32 %v1358, %v1578
      %v1647 = vadd.f32 %v1359, %v1583
      %v1648 = vadd.f32 %v1360, %v1586
      %v1649 = vadd.f32 %v1361, %v1591
      %v1650 = vadd.f32 %v1362, %v1594
      %v1651 = vadd.f32 %v1363, %v1599
      %v1652 = vadd.f32 %v1364, %v1602
      %v1653 = vadd.f32 %v1365, %v1607
      %v1654 = vadd.f32 %v1366, %v1610
      %v1655 = vadd.f32 %v1367, %v1615
      %v1656 = vadd.f32 %v1368, %v1618
      %s1657 = scalar_lea.vmem %s2, 256
      %v1658 = vld [vmem:[%s1657] sm:$0xf]
      %v1659 = vld [vmem:[%s1657 + $0x4] sm:$0xf]
      %v1660 = vld [vmem:[%s1657 + $0x8] sm:$0xf]
      %v1661 = vld [vmem:[%s1657 + $0xc] sm:$0xf]
      %v1662 = vld [vmem:[%s1657 + $0x10] sm:$0xf]
      %v1663 = vld [vmem:[%s1657 + $0x14] sm:$0xf]
      %v1664 = vld [vmem:[%s1657 + $0x18] sm:$0xf]
      %v1665 = vld [vmem:[%s1657 + $0x1c] sm:$0xf]
      %v1666 = vld [vmem:[%s1657 + $0x20] sm:$0xf]
      %v1667 = vld [vmem:[%s1657 + $0x24] sm:$0xf]
      %v1668 = vld [vmem:[%s1657 + $0x28] sm:$0xf]
      %v1669 = vld [vmem:[%s1657 + $0x2c] sm:$0xf]
      %v1670 = vld [vmem:[%s1657 + $0x30] sm:$0xf]
      %v1671 = vld [vmem:[%s1657 + $0x34] sm:$0xf]
      %v1672 = vld [vmem:[%s1657 + $0x38] sm:$0xf]
      %v1673 = vld [vmem:[%s1657 + $0x3c] sm:$0xf]
      %vm1674 = vsmask.f32 6400
      %v1675 = vrot.slane %v412, 1
      %v1676 = vrot.slane %v408, 2
      %v1677 = vor.u32 %v1675, %v1676
      %v1678 = vrot.slane %v420, 1
      %v1679 = vrot.slane %v416, 2
      %v1680 = vor.u32 %v1678, %v1679
      %v1681 = vsel %vm1674, %v1677, %v1680
      %v1682 = vrot.slane %v428, 1
      %v1683 = vrot.slane %v424, 2
      %v1684 = vor.u32 %v1682, %v1683
      %v1685 = vsel %vm1674, %v1680, %v1684
      %v1686 = vrot.slane %v436, 1
      %v1687 = vrot.slane %v432, 2
      %v1688 = vor.u32 %v1686, %v1687
      %v1689 = vsel %vm1674, %v1684, %v1688
      %v1690 = vrot.slane %v444, 1
      %v1691 = vrot.slane %v440, 2
      %v1692 = vor.u32 %v1690, %v1691
      %v1693 = vsel %vm1674, %v1688, %v1692
      %v1694 = vrot.slane %v452, 1
      %v1695 = vrot.slane %v448, 2
      %v1696 = vor.u32 %v1694, %v1695
      %v1697 = vsel %vm1674, %v1692, %v1696
      %v1698 = vrot.slane %v460, 1
      %v1699 = vrot.slane %v456, 2
      %v1700 = vor.u32 %v1698, %v1699
      %v1701 = vsel %vm1674, %v1696, %v1700
      %v1702 = vrot.slane %v468, 1
      %v1703 = vrot.slane %v464, 2
      %v1704 = vor.u32 %v1702, %v1703
      %v1705 = vsel %vm1674, %v1700, %v1704
      %v1706 = vrot.slane %v476, 1
      %v1707 = vrot.slane %v472, 2
      %v1708 = vor.u32 %v1706, %v1707
      %v1709 = vsel %vm1674, %v1704, %v1708
      %v1710 = vrot.slane %v484, 1
      %v1711 = vrot.slane %v480, 2
      %v1712 = vor.u32 %v1710, %v1711
      %v1713 = vsel %vm1674, %v1708, %v1712
      %v1714 = vrot.slane %v492, 1
      %v1715 = vrot.slane %v488, 2
      %v1716 = vor.u32 %v1714, %v1715
      %v1717 = vsel %vm1674, %v1712, %v1716
      %v1718 = vrot.slane %v500, 1
      %v1719 = vrot.slane %v496, 2
      %v1720 = vor.u32 %v1718, %v1719
      %v1721 = vsel %vm1674, %v1716, %v1720
      %v1722 = vrot.slane %v508, 1
      %v1723 = vrot.slane %v504, 2
      %v1724 = vor.u32 %v1722, %v1723
      %v1725 = vsel %vm1674, %v1720, %v1724
      %v1726 = vrot.slane %v516, 1
      %v1727 = vrot.slane %v512, 2
      %v1728 = vor.u32 %v1726, %v1727
      %v1729 = vsel %vm1674, %v1724, %v1728
      %v1730 = vrot.slane %v524, 1
      %v1731 = vrot.slane %v520, 2
      %v1732 = vor.u32 %v1730, %v1731
      %v1733 = vsel %vm1674, %v1728, %v1732
      %v1734 = vrot.slane %v532, 1
      %v1735 = vrot.slane %v528, 2
      %v1736 = vor.u32 %v1734, %v1735
      %v1737 = vsel %vm1674, %v1732, %v1736
      %v1738 = vrot.slane %v540, 1
      %v1739 = vrot.slane %v536, 2
      %v1740 = vor.u32 %v1738, %v1739
      %v1741 = vsel %vm1674, %v1736, %v1740
      %v1743 = vshrl.u32 %v1369, 16
      %v1745 = vrot.slane %v1743, 1
      %v1746 = vshll.u32 %v1369, 16
      %v1748 = vrot.slane %v1746, 2
      %v1749 = vor.u32 %v1745, %v1748
      %v1750 = vsel %vm1674, %v1740, %v1749
      %v1752 = vshrl.u32 %v1370, 16
      %v1754 = vrot.slane %v1752, 1
      %v1755 = vshll.u32 %v1370, 16
      %v1757 = vrot.slane %v1755, 2
      %v1758 = vor.u32 %v1754, %v1757
      %v1759 = vsel %vm1674, %v1749, %v1758
      %v1794 = vunpack.c.l.b16 %v1658
      %v1795 = vunpack.c.l.b16 %v1659
      %v1796 = vunpack.c.l.b16 %v1660
      %v1797 = vunpack.c.l.b16 %v1661
      %v1798 = vunpack.c.l.b16 %v1662
      %v1799 = vunpack.c.l.b16 %v1663
      %v1800 = vunpack.c.l.b16 %v1664
      %v1801 = vunpack.c.l.b16 %v1665
      %v1802 = vunpack.c.l.b16 %v1666
      %v1803 = vunpack.c.l.b16 %v1667
      %v1804 = vunpack.c.l.b16 %v1668
      %v1805 = vunpack.c.l.b16 %v1669
      %v1806 = vunpack.c.l.b16 %v1670
      %v1807 = vunpack.c.l.b16 %v1671
      %v1808 = vunpack.c.l.b16 %v1672
      %v1809 = vunpack.c.l.b16 %v1673
      %v1810 = vpack.c.b16 %v1795, %v1794
      %v1811 = vpack.c.b16 %v1797, %v1796
      %v1812 = vpack.c.b16 %v1799, %v1798
      %v1813 = vpack.c.b16 %v1801, %v1800
      %v1814 = vpack.c.b16 %v1803, %v1802
      %v1815 = vpack.c.b16 %v1805, %v1804
      %v1816 = vpack.c.b16 %v1807, %v1806
      %v1817 = vpack.c.b16 %v1809, %v1808
      %1826 = vmatprep.subr.bf16.mxu0 0
      %1827 = vmatpush1.bf16.msra.mxu0 %v1817
      %1828 = vmatprep.subr.bf16.mxu0 0
      %1829 = vmatpush1.bf16.msra.mxu0 %v1816
      %1830 = vmatprep.subr.bf16.mxu0 0
      %1831 = vmatpush1.bf16.msra.mxu0 %v1815
      %1832 = vmatprep.subr.bf16.mxu0 0
      %1833 = vmatpush1.bf16.msra.mxu0 %v1814
      %1834 = vmatprep.subr.bf16.mxu0 0
      %1835 = vmatpush1.bf16.msra.mxu0 %v1813
      %1836 = vmatprep.subr.bf16.mxu0 0
      %1837 = vmatpush1.bf16.msra.mxu0 %v1812
      %1838 = vmatprep.subr.bf16.mxu0 0
      %1839 = vmatpush1.bf16.msra.mxu0 %v1811
      %1840 = vmatprep.subr.bf16.mxu0 0
      %1841 = vmatpush1.bf16.msra.mxu0 %v1810
      %1842 = vmatprep.subr.bf16.mxu0 0
      %1843 = vmatpush2.bf16.msra.mxu0 0
      %1844 = vmatprep.subr.bf16.mxu0 0
      %1845 = vmatpush2.bf16.msra.mxu0 0
      %1846 = vmatprep.subr.bf16.mxu0 0
      %1847 = vmatpush2.bf16.msra.mxu0 0
      %1848 = vmatprep.subr.bf16.mxu0 0
      %1849 = vmatpush2.bf16.msra.mxu0 0
      %1850 = vmatprep.subr.bf16.mxu0 0
      %1851 = vmatpush2.bf16.msra.mxu0 0
      %1852 = vmatprep.subr.bf16.mxu0 0
      %1853 = vmatpush2.bf16.msra.mxu0 0
      %1854 = vmatprep.subr.bf16.mxu0 0
      %1855 = vmatpush2.bf16.msra.mxu0 0
      %1856 = vmatprep.subr.bf16.mxu0 0
      %1857 = vmatpush2.bf16.msra.mxu0 0
      %1858 = vmatprep.mubr.bf16.mxu0 0
      %1859 = vmatmul.mubr.bf16.gmra.mxu0 %v1681
      %v1860 = vpop.f32.mrf.mxu0
      %v1861 = vadd.f32 0.0, %v1860
      %v1862 = vpop.f32.mrf.mxu0
      %v1863 = vpop.f32.mrf.mxu0
      %v1864 = vadd.f32 0.0, %v1863
      %v1865 = vpop.f32.mrf.mxu0
      %1866 = vmatprep.mubr.bf16.mxu0 0
      %1867 = vmatmul.mubr.bf16.gmra.mxu0 %v1685
      %v1868 = vpop.f32.mrf.mxu0
      %v1869 = vadd.f32 0.0, %v1868
      %v1870 = vpop.f32.mrf.mxu0
      %v1871 = vpop.f32.mrf.mxu0
      %v1872 = vadd.f32 0.0, %v1871
      %v1873 = vpop.f32.mrf.mxu0
      %1874 = vmatprep.mubr.bf16.mxu0 0
      %1875 = vmatmul.mubr.bf16.gmra.mxu0 %v1689
      %v1876 = vpop.f32.mrf.mxu0
      %v1877 = vadd.f32 0.0, %v1876
      %v1878 = vpop.f32.mrf.mxu0
      %v1879 = vpop.f32.mrf.mxu0
      %v1880 = vadd.f32 0.0, %v1879
      %v1881 = vpop.f32.mrf.mxu0
      %1882 = vmatprep.mubr.bf16.mxu0 0
      %1883 = vmatmul.mubr.bf16.gmra.mxu0 %v1693
      %v1884 = vpop.f32.mrf.mxu0
      %v1885 = vadd.f32 0.0, %v1884
      %v1886 = vpop.f32.mrf.mxu0
      %v1887 = vpop.f32.mrf.mxu0
      %v1888 = vadd.f32 0.0, %v1887
      %v1889 = vpop.f32.mrf.mxu0
      %1890 = vmatprep.mubr.bf16.mxu0 0
      %1891 = vmatmul.mubr.bf16.gmra.mxu0 %v1697
      %v1892 = vpop.f32.mrf.mxu0
      %v1893 = vadd.f32 0.0, %v1892
      %v1894 = vpop.f32.mrf.mxu0
      %v1895 = vpop.f32.mrf.mxu0
      %v1896 = vadd.f32 0.0, %v1895
      %v1897 = vpop.f32.mrf.mxu0
      %1898 = vmatprep.mubr.bf16.mxu0 0
      %1899 = vmatmul.mubr.bf16.gmra.mxu0 %v1701
      %v1900 = vpop.f32.mrf.mxu0
      %v1901 = vadd.f32 0.0, %v1900
      %v1902 = vpop.f32.mrf.mxu0
      %v1903 = vpop.f32.mrf.mxu0
      %v1904 = vadd.f32 0.0, %v1903
      %v1905 = vpop.f32.mrf.mxu0
      %1906 = vmatprep.mubr.bf16.mxu0 0
      %1907 = vmatmul.mubr.bf16.gmra.mxu0 %v1705
      %v1908 = vpop.f32.mrf.mxu0
      %v1909 = vadd.f32 0.0, %v1908
      %v1910 = vpop.f32.mrf.mxu0
      %v1911 = vpop.f32.mrf.mxu0
      %v1912 = vadd.f32 0.0, %v1911
      %v1913 = vpop.f32.mrf.mxu0
      %1914 = vmatprep.mubr.bf16.mxu0 0
      %1915 = vmatmul.mubr.bf16.gmra.mxu0 %v1709
      %v1916 = vpop.f32.mrf.mxu0
      %v1917 = vadd.f32 0.0, %v1916
      %v1918 = vpop.f32.mrf.mxu0
      %v1919 = vpop.f32.mrf.mxu0
      %v1920 = vadd.f32 0.0, %v1919
      %v1921 = vpop.f32.mrf.mxu0
      %1922 = vmatprep.mubr.bf16.mxu0 0
      %1923 = vmatmul.mubr.bf16.gmra.mxu0 %v1713
      %v1924 = vpop.f32.mrf.mxu0
      %v1925 = vadd.f32 0.0, %v1924
      %v1926 = vpop.f32.mrf.mxu0
      %v1927 = vpop.f32.mrf.mxu0
      %v1928 = vadd.f32 0.0, %v1927
      %v1929 = vpop.f32.mrf.mxu0
      %1930 = vmatprep.mubr.bf16.mxu0 0
      %1931 = vmatmul.mubr.bf16.gmra.mxu0 %v1717
      %v1932 = vpop.f32.mrf.mxu0
      %v1933 = vadd.f32 0.0, %v1932
      %v1934 = vpop.f32.mrf.mxu0
      %v1935 = vpop.f32.mrf.mxu0
      %v1936 = vadd.f32 0.0, %v1935
      %v1937 = vpop.f32.mrf.mxu0
      %1938 = vmatprep.mubr.bf16.mxu0 0
      %1939 = vmatmul.mubr.bf16.gmra.mxu0 %v1721
      %v1940 = vpop.f32.mrf.mxu0
      %v1941 = vadd.f32 0.0, %v1940
      %v1942 = vpop.f32.mrf.mxu0
      %v1943 = vpop.f32.mrf.mxu0
      %v1944 = vadd.f32 0.0, %v1943
      %v1945 = vpop.f32.mrf.mxu0
      %1946 = vmatprep.mubr.bf16.mxu0 0
      %1947 = vmatmul.mubr.bf16.gmra.mxu0 %v1725
      %v1948 = vpop.f32.mrf.mxu0
      %v1949 = vadd.f32 0.0, %v1948
      %v1950 = vpop.f32.mrf.mxu0
      %v1951 = vpop.f32.mrf.mxu0
      %v1952 = vadd.f32 0.0, %v1951
      %v1953 = vpop.f32.mrf.mxu0
      %1954 = vmatprep.mubr.bf16.mxu0 0
      %1955 = vmatmul.mubr.bf16.gmra.mxu0 %v1729
      %v1956 = vpop.f32.mrf.mxu0
      %v1957 = vadd.f32 0.0, %v1956
      %v1958 = vpop.f32.mrf.mxu0
      %v1959 = vpop.f32.mrf.mxu0
      %v1960 = vadd.f32 0.0, %v1959
      %v1961 = vpop.f32.mrf.mxu0
      %1962 = vmatprep.mubr.bf16.mxu0 0
      %1963 = vmatmul.mubr.bf16.gmra.mxu0 %v1733
      %v1964 = vpop.f32.mrf.mxu0
      %v1965 = vadd.f32 0.0, %v1964
      %v1966 = vpop.f32.mrf.mxu0
      %v1967 = vpop.f32.mrf.mxu0
      %v1968 = vadd.f32 0.0, %v1967
      %v1969 = vpop.f32.mrf.mxu0
      %1970 = vmatprep.mubr.bf16.mxu0 0
      %1971 = vmatmul.mubr.bf16.gmra.mxu0 %v1737
      %v1972 = vpop.f32.mrf.mxu0
      %v1973 = vadd.f32 0.0, %v1972
      %v1974 = vpop.f32.mrf.mxu0
      %v1975 = vpop.f32.mrf.mxu0
      %v1976 = vadd.f32 0.0, %v1975
      %v1977 = vpop.f32.mrf.mxu0
      %1978 = vmatprep.mubr.bf16.mxu0 0
      %1979 = vmatmul.mubr.bf16.gmra.mxu0 %v1741
      %v1980 = vpop.f32.mrf.mxu0
      %v1981 = vadd.f32 0.0, %v1980
      %v1982 = vpop.f32.mrf.mxu0
      %v1983 = vpop.f32.mrf.mxu0
      %v1984 = vadd.f32 0.0, %v1983
      %v1985 = vpop.f32.mrf.mxu0
      %1986 = vmatprep.mubr.bf16.mxu0 0
      %1987 = vmatmul.mubr.bf16.gmra.mxu0 %v1750
      %v1988 = vpop.f32.mrf.mxu0
      %v1989 = vadd.f32 0.0, %v1988
      %v1990 = vpop.f32.mrf.mxu0
      %v1991 = vpop.f32.mrf.mxu0
      %v1992 = vadd.f32 0.0, %v1991
      %v1993 = vpop.f32.mrf.mxu0
      %1994 = vmatprep.mubr.bf16.mxu0 0
      %1995 = vmatmul.mubr.bf16.gmra.mxu0 %v1759
      %v1996 = vpop.f32.mrf.mxu0
      %v1997 = vadd.f32 0.0, %v1996
      %v1998 = vpop.f32.mrf.mxu0
      %v1999 = vpop.f32.mrf.mxu0
      %v2000 = vadd.f32 0.0, %v1999
      %v2001 = vpop.f32.mrf.mxu0
      %2002 = vdwg.mxu0
      %v2003 = vadd.f32 %v1621, %v1861
      %v2004 = vadd.f32 %v1622, %v1864
      %v2005 = vadd.f32 %v1623, %v1869
      %v2006 = vadd.f32 %v1624, %v1872
      %v2007 = vadd.f32 %v1625, %v1877
      %v2008 = vadd.f32 %v1626, %v1880
      %v2009 = vadd.f32 %v1627, %v1885
      %v2010 = vadd.f32 %v1628, %v1888
      %v2011 = vadd.f32 %v1629, %v1893
      %v2012 = vadd.f32 %v1630, %v1896
      %v2013 = vadd.f32 %v1631, %v1901
      %v2014 = vadd.f32 %v1632, %v1904
      %v2015 = vadd.f32 %v1633, %v1909
      %v2016 = vadd.f32 %v1634, %v1912
      %v2017 = vadd.f32 %v1635, %v1917
      %v2018 = vadd.f32 %v1636, %v1920
      %v2019 = vadd.f32 %v1637, %v1925
      %v2020 = vadd.f32 %v1638, %v1928
      %v2021 = vadd.f32 %v1639, %v1933
      %v2022 = vadd.f32 %v1640, %v1936
      %v2023 = vadd.f32 %v1641, %v1941
      %v2024 = vadd.f32 %v1642, %v1944
      %v2025 = vadd.f32 %v1643, %v1949
      %v2026 = vadd.f32 %v1644, %v1952
      %v2027 = vadd.f32 %v1645, %v1957
      %v2028 = vadd.f32 %v1646, %v1960
      %v2029 = vadd.f32 %v1647, %v1965
      %v2030 = vadd.f32 %v1648, %v1968
      %v2031 = vadd.f32 %v1649, %v1973
      %v2032 = vadd.f32 %v1650, %v1976
      %v2033 = vadd.f32 %v1651, %v1981
      %v2034 = vadd.f32 %v1652, %v1984
      %v2035 = vadd.f32 %v1653, %v1989
      %v2036 = vadd.f32 %v1654, %v1992
      %v2037 = vadd.f32 %v1655, %v1997
      %v2038 = vadd.f32 %v1656, %v2000
      %s2039 = scalar_lea.vmem %s2, 320
      %v2040 = vld [vmem:[%s2039] sm:$0xf]
      %v2041 = vld [vmem:[%s2039 + $0x4] sm:$0xf]
      %v2042 = vld [vmem:[%s2039 + $0x8] sm:$0xf]
      %v2043 = vld [vmem:[%s2039 + $0xc] sm:$0xf]
      %v2044 = vld [vmem:[%s2039 + $0x10] sm:$0xf]
      %v2045 = vld [vmem:[%s2039 + $0x14] sm:$0xf]
      %v2046 = vld [vmem:[%s2039 + $0x18] sm:$0xf]
      %v2047 = vld [vmem:[%s2039 + $0x1c] sm:$0xf]
      %v2048 = vld [vmem:[%s2039 + $0x20] sm:$0xf]
      %v2049 = vld [vmem:[%s2039 + $0x24] sm:$0xf]
      %v2050 = vld [vmem:[%s2039 + $0x28] sm:$0xf]
      %v2051 = vld [vmem:[%s2039 + $0x2c] sm:$0xf]
      %v2052 = vld [vmem:[%s2039 + $0x30] sm:$0xf]
      %v2053 = vld [vmem:[%s2039 + $0x34] sm:$0xf]
      %v2054 = vld [vmem:[%s2039 + $0x38] sm:$0xf]
      %v2055 = vld [vmem:[%s2039 + $0x3c] sm:$0xf]
      %vm2056 = vcmask 1045504
      %v2057 = vrot.slane %v348, 2
      %v2058 = vrot.slane %v349, 2
      %v2059 = vsel %vm2056, %v2057, %v2058
      %v2060 = vrot.slane %v350, 2
      %v2061 = vsel %vm2056, %v2058, %v2060
      %v2062 = vrot.slane %v351, 2
      %v2063 = vsel %vm2056, %v2060, %v2062
      %v2064 = vrot.slane %v352, 2
      %v2065 = vsel %vm2056, %v2062, %v2064
      %v2066 = vrot.slane %v353, 2
      %v2067 = vsel %vm2056, %v2064, %v2066
      %v2068 = vrot.slane %v354, 2
      %v2069 = vsel %vm2056, %v2066, %v2068
      %v2070 = vrot.slane %v355, 2
      %v2071 = vsel %vm2056, %v2068, %v2070
      %v2072 = vrot.slane %v356, 2
      %v2073 = vsel %vm2056, %v2070, %v2072
      %v2074 = vrot.slane %v357, 2
      %v2075 = vsel %vm2056, %v2072, %v2074
      %v2076 = vrot.slane %v358, 2
      %v2077 = vsel %vm2056, %v2074, %v2076
      %v2078 = vrot.slane %v359, 2
      %v2079 = vsel %vm2056, %v2076, %v2078
      %v2080 = vrot.slane %v360, 2
      %v2081 = vsel %vm2056, %v2078, %v2080
      %v2082 = vrot.slane %v361, 2
      %v2083 = vsel %vm2056, %v2080, %v2082
      %v2084 = vrot.slane %v362, 2
      %v2085 = vsel %vm2056, %v2082, %v2084
      %v2086 = vrot.slane %v363, 2
      %v2087 = vsel %vm2056, %v2084, %v2086
      %v2088 = vrot.slane %v364, 2
      %v2089 = vsel %vm2056, %v2086, %v2088
      %v2090 = vrot.slane %v1369, 2
      %v2091 = vsel %vm2056, %v2088, %v2090
      %v2092 = vrot.slane %v1370, 2
      %v2093 = vsel %vm2056, %v2090, %v2092
      %v2128 = vunpack.c.l.b16 %v2040
      %v2129 = vunpack.c.l.b16 %v2041
      %v2130 = vunpack.c.l.b16 %v2042
      %v2131 = vunpack.c.l.b16 %v2043
      %v2132 = vunpack.c.l.b16 %v2044
      %v2133 = vunpack.c.l.b16 %v2045
      %v2134 = vunpack.c.l.b16 %v2046
      %v2135 = vunpack.c.l.b16 %v2047
      %v2136 = vunpack.c.l.b16 %v2048
      %v2137 = vunpack.c.l.b16 %v2049
      %v2138 = vunpack.c.l.b16 %v2050
      %v2139 = vunpack.c.l.b16 %v2051
      %v2140 = vunpack.c.l.b16 %v2052
      %v2141 = vunpack.c.l.b16 %v2053
      %v2142 = vunpack.c.l.b16 %v2054
      %v2143 = vunpack.c.l.b16 %v2055
      %v2144 = vpack.c.b16 %v2129, %v2128
      %v2145 = vpack.c.b16 %v2131, %v2130
      %v2146 = vpack.c.b16 %v2133, %v2132
      %v2147 = vpack.c.b16 %v2135, %v2134
      %v2148 = vpack.c.b16 %v2137, %v2136
      %v2149 = vpack.c.b16 %v2139, %v2138
      %v2150 = vpack.c.b16 %v2141, %v2140
      %v2151 = vpack.c.b16 %v2143, %v2142
      %2160 = vmatprep.subr.bf16.mxu0 0
      %2161 = vmatpush1.bf16.msra.mxu0 %v2151
      %2162 = vmatprep.subr.bf16.mxu0 0
      %2163 = vmatpush1.bf16.msra.mxu0 %v2150
      %2164 = vmatprep.subr.bf16.mxu0 0
      %2165 = vmatpush1.bf16.msra.mxu0 %v2149
      %2166 = vmatprep.subr.bf16.mxu0 0
      %2167 = vmatpush1.bf16.msra.mxu0 %v2148
      %2168 = vmatprep.subr.bf16.mxu0 0
      %2169 = vmatpush1.bf16.msra.mxu0 %v2147
      %2170 = vmatprep.subr.bf16.mxu0 0
      %2171 = vmatpush1.bf16.msra.mxu0 %v2146
      %2172 = vmatprep.subr.bf16.mxu0 0
      %2173 = vmatpush1.bf16.msra.mxu0 %v2145
      %2174 = vmatprep.subr.bf16.mxu0 0
      %2175 = vmatpush1.bf16.msra.mxu0 %v2144
      %2176 = vmatprep.subr.bf16.mxu0 0
      %2177 = vmatpush2.bf16.msra.mxu0 0
      %2178 = vmatprep.subr.bf16.mxu0 0
      %2179 = vmatpush2.bf16.msra.mxu0 0
      %2180 = vmatprep.subr.bf16.mxu0 0
      %2181 = vmatpush2.bf16.msra.mxu0 0
      %2182 = vmatprep.subr.bf16.mxu0 0
      %2183 = vmatpush2.bf16.msra.mxu0 0
      %2184 = vmatprep.subr.bf16.mxu0 0
      %2185 = vmatpush2.bf16.msra.mxu0 0
      %2186 = vmatprep.subr.bf16.mxu0 0
      %2187 = vmatpush2.bf16.msra.mxu0 0
      %2188 = vmatprep.subr.bf16.mxu0 0
      %2189 = vmatpush2.bf16.msra.mxu0 0
      %2190 = vmatprep.subr.bf16.mxu0 0
      %2191 = vmatpush2.bf16.msra.mxu0 0
      %2192 = vmatprep.mubr.bf16.mxu0 0
      %2193 = vmatmul.mubr.bf16.gmra.mxu0 %v2059
      %v2194 = vpop.f32.mrf.mxu0
      %v2195 = vadd.f32 0.0, %v2194
      %v2196 = vpop.f32.mrf.mxu0
      %v2197 = vpop.f32.mrf.mxu0
      %v2198 = vadd.f32 0.0, %v2197
      %v2199 = vpop.f32.mrf.mxu0
      %2200 = vmatprep.mubr.bf16.mxu0 0
      %2201 = vmatmul.mubr.bf16.gmra.mxu0 %v2061
      %v2202 = vpop.f32.mrf.mxu0
      %v2203 = vadd.f32 0.0, %v2202
      %v2204 = vpop.f32.mrf.mxu0
      %v2205 = vpop.f32.mrf.mxu0
      %v2206 = vadd.f32 0.0, %v2205
      %v2207 = vpop.f32.mrf.mxu0
      %2208 = vmatprep.mubr.bf16.mxu0 0
      %2209 = vmatmul.mubr.bf16.gmra.mxu0 %v2063
      %v2210 = vpop.f32.mrf.mxu0
      %v2211 = vadd.f32 0.0, %v2210
      %v2212 = vpop.f32.mrf.mxu0
      %v2213 = vpop.f32.mrf.mxu0
      %v2214 = vadd.f32 0.0, %v2213
      %v2215 = vpop.f32.mrf.mxu0
      %2216 = vmatprep.mubr.bf16.mxu0 0
      %2217 = vmatmul.mubr.bf16.gmra.mxu0 %v2065
      %v2218 = vpop.f32.mrf.mxu0
      %v2219 = vadd.f32 0.0, %v2218
      %v2220 = vpop.f32.mrf.mxu0
      %v2221 = vpop.f32.mrf.mxu0
      %v2222 = vadd.f32 0.0, %v2221
      %v2223 = vpop.f32.mrf.mxu0
      %2224 = vmatprep.mubr.bf16.mxu0 0
      %2225 = vmatmul.mubr.bf16.gmra.mxu0 %v2067
      %v2226 = vpop.f32.mrf.mxu0
      %v2227 = vadd.f32 0.0, %v2226
      %v2228 = vpop.f32.mrf.mxu0
      %v2229 = vpop.f32.mrf.mxu0
      %v2230 = vadd.f32 0.0, %v2229
      %v2231 = vpop.f32.mrf.mxu0
      %2232 = vmatprep.mubr.bf16.mxu0 0
      %2233 = vmatmul.mubr.bf16.gmra.mxu0 %v2069
      %v2234 = vpop.f32.mrf.mxu0
      %v2235 = vadd.f32 0.0, %v2234
      %v2236 = vpop.f32.mrf.mxu0
      %v2237 = vpop.f32.mrf.mxu0
      %v2238 = vadd.f32 0.0, %v2237
      %v2239 = vpop.f32.mrf.mxu0
      %2240 = vmatprep.mubr.bf16.mxu0 0
      %2241 = vmatmul.mubr.bf16.gmra.mxu0 %v2071
      %v2242 = vpop.f32.mrf.mxu0
      %v2243 = vadd.f32 0.0, %v2242
      %v2244 = vpop.f32.mrf.mxu0
      %v2245 = vpop.f32.mrf.mxu0
      %v2246 = vadd.f32 0.0, %v2245
      %v2247 = vpop.f32.mrf.mxu0
      %2248 = vmatprep.mubr.bf16.mxu0 0
      %2249 = vmatmul.mubr.bf16.gmra.mxu0 %v2073
      %v2250 = vpop.f32.mrf.mxu0
      %v2251 = vadd.f32 0.0, %v2250
      %v2252 = vpop.f32.mrf.mxu0
      %v2253 = vpop.f32.mrf.mxu0
      %v2254 = vadd.f32 0.0, %v2253
      %v2255 = vpop.f32.mrf.mxu0
      %2256 = vmatprep.mubr.bf16.mxu0 0
      %2257 = vmatmul.mubr.bf16.gmra.mxu0 %v2075
      %v2258 = vpop.f32.mrf.mxu0
      %v2259 = vadd.f32 0.0, %v2258
      %v2260 = vpop.f32.mrf.mxu0
      %v2261 = vpop.f32.mrf.mxu0
      %v2262 = vadd.f32 0.0, %v2261
      %v2263 = vpop.f32.mrf.mxu0
      %2264 = vmatprep.mubr.bf16.mxu0 0
      %2265 = vmatmul.mubr.bf16.gmra.mxu0 %v2077
      %v2266 = vpop.f32.mrf.mxu0
      %v2267 = vadd.f32 0.0, %v2266
      %v2268 = vpop.f32.mrf.mxu0
      %v2269 = vpop.f32.mrf.mxu0
      %v2270 = vadd.f32 0.0, %v2269
      %v2271 = vpop.f32.mrf.mxu0
      %2272 = vmatprep.mubr.bf16.mxu0 0
      %2273 = vmatmul.mubr.bf16.gmra.mxu0 %v2079
      %v2274 = vpop.f32.mrf.mxu0
      %v2275 = vadd.f32 0.0, %v2274
      %v2276 = vpop.f32.mrf.mxu0
      %v2277 = vpop.f32.mrf.mxu0
      %v2278 = vadd.f32 0.0, %v2277
      %v2279 = vpop.f32.mrf.mxu0
      %2280 = vmatprep.mubr.bf16.mxu0 0
      %2281 = vmatmul.mubr.bf16.gmra.mxu0 %v2081
      %v2282 = vpop.f32.mrf.mxu0
      %v2283 = vadd.f32 0.0, %v2282
      %v2284 = vpop.f32.mrf.mxu0
      %v2285 = vpop.f32.mrf.mxu0
      %v2286 = vadd.f32 0.0, %v2285
      %v2287 = vpop.f32.mrf.mxu0
      %2288 = vmatprep.mubr.bf16.mxu0 0
      %2289 = vmatmul.mubr.bf16.gmra.mxu0 %v2083
      %v2290 = vpop.f32.mrf.mxu0
      %v2291 = vadd.f32 0.0, %v2290
      %v2292 = vpop.f32.mrf.mxu0
      %v2293 = vpop.f32.mrf.mxu0
      %v2294 = vadd.f32 0.0, %v2293
      %v2295 = vpop.f32.mrf.mxu0
      %2296 = vmatprep.mubr.bf16.mxu0 0
      %2297 = vmatmul.mubr.bf16.gmra.mxu0 %v2085
      %v2298 = vpop.f32.mrf.mxu0
      %v2299 = vadd.f32 0.0, %v2298
      %v2300 = vpop.f32.mrf.mxu0
      %v2301 = vpop.f32.mrf.mxu0
      %v2302 = vadd.f32 0.0, %v2301
      %v2303 = vpop.f32.mrf.mxu0
      %2304 = vmatprep.mubr.bf16.mxu0 0
      %2305 = vmatmul.mubr.bf16.gmra.mxu0 %v2087
      %v2306 = vpop.f32.mrf.mxu0
      %v2307 = vadd.f32 0.0, %v2306
      %v2308 = vpop.f32.mrf.mxu0
      %v2309 = vpop.f32.mrf.mxu0
      %v2310 = vadd.f32 0.0, %v2309
      %v2311 = vpop.f32.mrf.mxu0
      %2312 = vmatprep.mubr.bf16.mxu0 0
      %2313 = vmatmul.mubr.bf16.gmra.mxu0 %v2089
      %v2314 = vpop.f32.mrf.mxu0
      %v2315 = vadd.f32 0.0, %v2314
      %v2316 = vpop.f32.mrf.mxu0
      %v2317 = vpop.f32.mrf.mxu0
      %v2318 = vadd.f32 0.0, %v2317
      %v2319 = vpop.f32.mrf.mxu0
      %2320 = vmatprep.mubr.bf16.mxu0 0
      %2321 = vmatmul.mubr.bf16.gmra.mxu0 %v2091
      %v2322 = vpop.f32.mrf.mxu0
      %v2323 = vadd.f32 0.0, %v2322
      %v2324 = vpop.f32.mrf.mxu0
      %v2325 = vpop.f32.mrf.mxu0
      %v2326 = vadd.f32 0.0, %v2325
      %v2327 = vpop.f32.mrf.mxu0
      %2328 = vmatprep.mubr.bf16.mxu0 0
      %2329 = vmatmul.mubr.bf16.gmra.mxu0 %v2093
      %v2330 = vpop.f32.mrf.mxu0
      %v2331 = vadd.f32 0.0, %v2330
      %v2332 = vpop.f32.mrf.mxu0
      %v2333 = vpop.f32.mrf.mxu0
      %v2334 = vadd.f32 0.0, %v2333
      %v2335 = vpop.f32.mrf.mxu0
      %2336 = vdwg.mxu0
      %v2337 = vadd.f32 %v2003, %v2195
      %v2338 = vadd.f32 %v2004, %v2198
      %v2339 = vadd.f32 %v2005, %v2203
      %v2340 = vadd.f32 %v2006, %v2206
      %v2341 = vadd.f32 %v2007, %v2211
      %v2342 = vadd.f32 %v2008, %v2214
      %v2343 = vadd.f32 %v2009, %v2219
      %v2344 = vadd.f32 %v2010, %v2222
      %v2345 = vadd.f32 %v2011, %v2227
      %v2346 = vadd.f32 %v2012, %v2230
      %v2347 = vadd.f32 %v2013, %v2235
      %v2348 = vadd.f32 %v2014, %v2238
      %v2349 = vadd.f32 %v2015, %v2243
      %v2350 = vadd.f32 %v2016, %v2246
      %v2351 = vadd.f32 %v2017, %v2251
      %v2352 = vadd.f32 %v2018, %v2254
      %v2353 = vadd.f32 %v2019, %v2259
      %v2354 = vadd.f32 %v2020, %v2262
      %v2355 = vadd.f32 %v2021, %v2267
      %v2356 = vadd.f32 %v2022, %v2270
      %v2357 = vadd.f32 %v2023, %v2275
      %v2358 = vadd.f32 %v2024, %v2278
      %v2359 = vadd.f32 %v2025, %v2283
      %v2360 = vadd.f32 %v2026, %v2286
      %v2361 = vadd.f32 %v2027, %v2291
      %v2362 = vadd.f32 %v2028, %v2294
      %v2363 = vadd.f32 %v2029, %v2299
      %v2364 = vadd.f32 %v2030, %v2302
      %v2365 = vadd.f32 %v2031, %v2307
      %v2366 = vadd.f32 %v2032, %v2310
      %v2367 = vadd.f32 %v2033, %v2315
      %v2368 = vadd.f32 %v2034, %v2318
      %v2369 = vadd.f32 %v2035, %v2323
      %v2370 = vadd.f32 %v2036, %v2326
      %v2371 = vadd.f32 %v2037, %v2331
      %v2372 = vadd.f32 %v2038, %v2334
      %v2373 = vpack.c.bf16 %v345, %v344
      %v2374 = vpack.c.bf16 %v346, %v346
      %s2375 = scalar_lea.vmem %s2, 384
      %v2376 = vld [vmem:[%s2375] sm:$0xf]
      %v2377 = vld [vmem:[%s2375 + $0x4] sm:$0xf]
      %v2378 = vld [vmem:[%s2375 + $0x8] sm:$0xf]
      %v2379 = vld [vmem:[%s2375 + $0xc] sm:$0xf]
      %v2380 = vld [vmem:[%s2375 + $0x10] sm:$0xf]
      %v2381 = vld [vmem:[%s2375 + $0x14] sm:$0xf]
      %v2382 = vld [vmem:[%s2375 + $0x18] sm:$0xf]
      %v2383 = vld [vmem:[%s2375 + $0x1c] sm:$0xf]
      %v2384 = vld [vmem:[%s2375 + $0x20] sm:$0xf]
      %v2385 = vld [vmem:[%s2375 + $0x24] sm:$0xf]
      %v2386 = vld [vmem:[%s2375 + $0x28] sm:$0xf]
      %v2387 = vld [vmem:[%s2375 + $0x2c] sm:$0xf]
      %v2388 = vld [vmem:[%s2375 + $0x30] sm:$0xf]
      %v2389 = vld [vmem:[%s2375 + $0x34] sm:$0xf]
      %v2390 = vld [vmem:[%s2375 + $0x38] sm:$0xf]
      %v2391 = vld [vmem:[%s2375 + $0x3c] sm:$0xf]
      %v2394 = vrot.slane %v2373, 2
      %v2395 = vsel %vm2056, %v2090, %v2394
      %v2396 = vrot.slane %v2374, 2
      %v2397 = vsel %vm2056, %v2394, %v2396
      %v2416 = vunpack.c.l.b16 %v2376
      %v2417 = vunpack.c.l.b16 %v2377
      %v2418 = vunpack.c.l.b16 %v2378
      %v2419 = vunpack.c.l.b16 %v2379
      %v2420 = vunpack.c.l.b16 %v2380
      %v2421 = vunpack.c.l.b16 %v2381
      %v2422 = vunpack.c.l.b16 %v2382
      %v2423 = vunpack.c.l.b16 %v2383
      %v2424 = vunpack.c.l.b16 %v2384
      %v2425 = vunpack.c.l.b16 %v2385
      %v2426 = vunpack.c.l.b16 %v2386
      %v2427 = vunpack.c.l.b16 %v2387
      %v2428 = vunpack.c.l.b16 %v2388
      %v2429 = vunpack.c.l.b16 %v2389
      %v2430 = vunpack.c.l.b16 %v2390
      %v2431 = vunpack.c.l.b16 %v2391
      %v2432 = vpack.c.b16 %v2417, %v2416
      %v2433 = vpack.c.b16 %v2419, %v2418
      %v2434 = vpack.c.b16 %v2421, %v2420
      %v2435 = vpack.c.b16 %v2423, %v2422
      %v2436 = vpack.c.b16 %v2425, %v2424
      %v2437 = vpack.c.b16 %v2427, %v2426
      %v2438 = vpack.c.b16 %v2429, %v2428
      %v2439 = vpack.c.b16 %v2431, %v2430
      %2448 = vmatprep.subr.bf16.mxu0 0
      %2449 = vmatpush1.bf16.msra.mxu0 %v2439
      %2450 = vmatprep.subr.bf16.mxu0 0
      %2451 = vmatpush1.bf16.msra.mxu0 %v2438
      %2452 = vmatprep.subr.bf16.mxu0 0
      %2453 = vmatpush1.bf16.msra.mxu0 %v2437
      %2454 = vmatprep.subr.bf16.mxu0 0
      %2455 = vmatpush1.bf16.msra.mxu0 %v2436
      %2456 = vmatprep.subr.bf16.mxu0 0
      %2457 = vmatpush1.bf16.msra.mxu0 %v2435
      %2458 = vmatprep.subr.bf16.mxu0 0
      %2459 = vmatpush1.bf16.msra.mxu0 %v2434
      %2460 = vmatprep.subr.bf16.mxu0 0
      %2461 = vmatpush1.bf16.msra.mxu0 %v2433
      %2462 = vmatprep.subr.bf16.mxu0 0
      %2463 = vmatpush1.bf16.msra.mxu0 %v2432
      %2464 = vmatprep.subr.bf16.mxu0 0
      %2465 = vmatpush2.bf16.msra.mxu0 0
      %2466 = vmatprep.subr.bf16.mxu0 0
      %2467 = vmatpush2.bf16.msra.mxu0 0
      %2468 = vmatprep.subr.bf16.mxu0 0
      %2469 = vmatpush2.bf16.msra.mxu0 0
      %2470 = vmatprep.subr.bf16.mxu0 0
      %2471 = vmatpush2.bf16.msra.mxu0 0
      %2472 = vmatprep.subr.bf16.mxu0 0
      %2473 = vmatpush2.bf16.msra.mxu0 0
      %2474 = vmatprep.subr.bf16.mxu0 0
      %2475 = vmatpush2.bf16.msra.mxu0 0
      %2476 = vmatprep.subr.bf16.mxu0 0
      %2477 = vmatpush2.bf16.msra.mxu0 0
      %2478 = vmatprep.subr.bf16.mxu0 0
      %2479 = vmatpush2.bf16.msra.mxu0 0
      %2480 = vmatprep.mubr.bf16.mxu0 0
      %2481 = vmatmul.mubr.bf16.gmra.mxu0 %v2061
      %v2482 = vpop.f32.mrf.mxu0
      %v2483 = vadd.f32 0.0, %v2482
      %v2484 = vpop.f32.mrf.mxu0
      %v2485 = vpop.f32.mrf.mxu0
      %v2486 = vadd.f32 0.0, %v2485
      %v2487 = vpop.f32.mrf.mxu0
      %2488 = vmatprep.mubr.bf16.mxu0 0
      %2489 = vmatmul.mubr.bf16.gmra.mxu0 %v2063
      %v2490 = vpop.f32.mrf.mxu0
      %v2491 = vadd.f32 0.0, %v2490
      %v2492 = vpop.f32.mrf.mxu0
      %v2493 = vpop.f32.mrf.mxu0
      %v2494 = vadd.f32 0.0, %v2493
      %v2495 = vpop.f32.mrf.mxu0
      %2496 = vmatprep.mubr.bf16.mxu0 0
      %2497 = vmatmul.mubr.bf16.gmra.mxu0 %v2065
      %v2498 = vpop.f32.mrf.mxu0
      %v2499 = vadd.f32 0.0, %v2498
      %v2500 = vpop.f32.mrf.mxu0
      %v2501 = vpop.f32.mrf.mxu0
      %v2502 = vadd.f32 0.0, %v2501
      %v2503 = vpop.f32.mrf.mxu0
      %2504 = vmatprep.mubr.bf16.mxu0 0
      %2505 = vmatmul.mubr.bf16.gmra.mxu0 %v2067
      %v2506 = vpop.f32.mrf.mxu0
      %v2507 = vadd.f32 0.0, %v2506
      %v2508 = vpop.f32.mrf.mxu0
      %v2509 = vpop.f32.mrf.mxu0
      %v2510 = vadd.f32 0.0, %v2509
      %v2511 = vpop.f32.mrf.mxu0
      %2512 = vmatprep.mubr.bf16.mxu0 0
      %2513 = vmatmul.mubr.bf16.gmra.mxu0 %v2069
      %v2514 = vpop.f32.mrf.mxu0
      %v2515 = vadd.f32 0.0, %v2514
      %v2516 = vpop.f32.mrf.mxu0
      %v2517 = vpop.f32.mrf.mxu0
      %v2518 = vadd.f32 0.0, %v2517
      %v2519 = vpop.f32.mrf.mxu0
      %2520 = vmatprep.mubr.bf16.mxu0 0
      %2521 = vmatmul.mubr.bf16.gmra.mxu0 %v2071
      %v2522 = vpop.f32.mrf.mxu0
      %v2523 = vadd.f32 0.0, %v2522
      %v2524 = vpop.f32.mrf.mxu0
      %v2525 = vpop.f32.mrf.mxu0
      %v2526 = vadd.f32 0.0, %v2525
      %v2527 = vpop.f32.mrf.mxu0
      %2528 = vmatprep.mubr.bf16.mxu0 0
      %2529 = vmatmul.mubr.bf16.gmra.mxu0 %v2073
      %v2530 = vpop.f32.mrf.mxu0
      %v2531 = vadd.f32 0.0, %v2530
      %v2532 = vpop.f32.mrf.mxu0
      %v2533 = vpop.f32.mrf.mxu0
      %v2534 = vadd.f32 0.0, %v2533
      %v2535 = vpop.f32.mrf.mxu0
      %2536 = vmatprep.mubr.bf16.mxu0 0
      %2537 = vmatmul.mubr.bf16.gmra.mxu0 %v2075
      %v2538 = vpop.f32.mrf.mxu0
      %v2539 = vadd.f32 0.0, %v2538
      %v2540 = vpop.f32.mrf.mxu0
      %v2541 = vpop.f32.mrf.mxu0
      %v2542 = vadd.f32 0.0, %v2541
      %v2543 = vpop.f32.mrf.mxu0
      %2544 = vmatprep.mubr.bf16.mxu0 0
      %2545 = vmatmul.mubr.bf16.gmra.mxu0 %v2077
      %v2546 = vpop.f32.mrf.mxu0
      %v2547 = vadd.f32 0.0, %v2546
      %v2548 = vpop.f32.mrf.mxu0
      %v2549 = vpop.f32.mrf.mxu0
      %v2550 = vadd.f32 0.0, %v2549
      %v2551 = vpop.f32.mrf.mxu0
      %2552 = vmatprep.mubr.bf16.mxu0 0
      %2553 = vmatmul.mubr.bf16.gmra.mxu0 %v2079
      %v2554 = vpop.f32.mrf.mxu0
      %v2555 = vadd.f32 0.0, %v2554
      %v2556 = vpop.f32.mrf.mxu0
      %v2557 = vpop.f32.mrf.mxu0
      %v2558 = vadd.f32 0.0, %v2557
      %v2559 = vpop.f32.mrf.mxu0
      %2560 = vmatprep.mubr.bf16.mxu0 0
      %2561 = vmatmul.mubr.bf16.gmra.mxu0 %v2081
      %v2562 = vpop.f32.mrf.mxu0
      %v2563 = vadd.f32 0.0, %v2562
      %v2564 = vpop.f32.mrf.mxu0
      %v2565 = vpop.f32.mrf.mxu0
      %v2566 = vadd.f32 0.0, %v2565
      %v2567 = vpop.f32.mrf.mxu0
      %2568 = vmatprep.mubr.bf16.mxu0 0
      %2569 = vmatmul.mubr.bf16.gmra.mxu0 %v2083
      %v2570 = vpop.f32.mrf.mxu0
      %v2571 = vadd.f32 0.0, %v2570
      %v2572 = vpop.f32.mrf.mxu0
      %v2573 = vpop.f32.mrf.mxu0
      %v2574 = vadd.f32 0.0, %v2573
      %v2575 = vpop.f32.mrf.mxu0
      %2576 = vmatprep.mubr.bf16.mxu0 0
      %2577 = vmatmul.mubr.bf16.gmra.mxu0 %v2085
      %v2578 = vpop.f32.mrf.mxu0
      %v2579 = vadd.f32 0.0, %v2578
      %v2580 = vpop.f32.mrf.mxu0
      %v2581 = vpop.f32.mrf.mxu0
      %v2582 = vadd.f32 0.0, %v2581
      %v2583 = vpop.f32.mrf.mxu0
      %2584 = vmatprep.mubr.bf16.mxu0 0
      %2585 = vmatmul.mubr.bf16.gmra.mxu0 %v2087
      %v2586 = vpop.f32.mrf.mxu0
      %v2587 = vadd.f32 0.0, %v2586
      %v2588 = vpop.f32.mrf.mxu0
      %v2589 = vpop.f32.mrf.mxu0
      %v2590 = vadd.f32 0.0, %v2589
      %v2591 = vpop.f32.mrf.mxu0
      %2592 = vmatprep.mubr.bf16.mxu0 0
      %2593 = vmatmul.mubr.bf16.gmra.mxu0 %v2089
      %v2594 = vpop.f32.mrf.mxu0
      %v2595 = vadd.f32 0.0, %v2594
      %v2596 = vpop.f32.mrf.mxu0
      %v2597 = vpop.f32.mrf.mxu0
      %v2598 = vadd.f32 0.0, %v2597
      %v2599 = vpop.f32.mrf.mxu0
      %2600 = vmatprep.mubr.bf16.mxu0 0
      %2601 = vmatmul.mubr.bf16.gmra.mxu0 %v2091
      %v2602 = vpop.f32.mrf.mxu0
      %v2603 = vadd.f32 0.0, %v2602
      %v2604 = vpop.f32.mrf.mxu0
      %v2605 = vpop.f32.mrf.mxu0
      %v2606 = vadd.f32 0.0, %v2605
      %v2607 = vpop.f32.mrf.mxu0
      %2608 = vmatprep.mubr.bf16.mxu0 0
      %2609 = vmatmul.mubr.bf16.gmra.mxu0 %v2395
      %v2610 = vpop.f32.mrf.mxu0
      %v2611 = vadd.f32 0.0, %v2610
      %v2612 = vpop.f32.mrf.mxu0
      %v2613 = vpop.f32.mrf.mxu0
      %v2614 = vadd.f32 0.0, %v2613
      %v2615 = vpop.f32.mrf.mxu0
      %2616 = vmatprep.mubr.bf16.mxu0 0
      %2617 = vmatmul.mubr.bf16.gmra.mxu0 %v2397
      %v2618 = vpop.f32.mrf.mxu0
      %v2619 = vadd.f32 0.0, %v2618
      %v2620 = vpop.f32.mrf.mxu0
      %v2621 = vpop.f32.mrf.mxu0
      %v2622 = vadd.f32 0.0, %v2621
      %v2623 = vpop.f32.mrf.mxu0
      %2624 = vdwg.mxu0
      %v2625 = vadd.f32 %v2337, %v2483
      %v2626 = vadd.f32 %v2338, %v2486
      %v2627 = vadd.f32 %v2339, %v2491
      %v2628 = vadd.f32 %v2340, %v2494
      %v2629 = vadd.f32 %v2341, %v2499
      %v2630 = vadd.f32 %v2342, %v2502
      %v2631 = vadd.f32 %v2343, %v2507
      %v2632 = vadd.f32 %v2344, %v2510
      %v2633 = vadd.f32 %v2345, %v2515
      %v2634 = vadd.f32 %v2346, %v2518
      %v2635 = vadd.f32 %v2347, %v2523
      %v2636 = vadd.f32 %v2348, %v2526
      %v2637 = vadd.f32 %v2349, %v2531
      %v2638 = vadd.f32 %v2350, %v2534
      %v2639 = vadd.f32 %v2351, %v2539
      %v2640 = vadd.f32 %v2352, %v2542
      %v2641 = vadd.f32 %v2353, %v2547
      %v2642 = vadd.f32 %v2354, %v2550
      %v2643 = vadd.f32 %v2355, %v2555
      %v2644 = vadd.f32 %v2356, %v2558
      %v2645 = vadd.f32 %v2357, %v2563
      %v2646 = vadd.f32 %v2358, %v2566
      %v2647 = vadd.f32 %v2359, %v2571
      %v2648 = vadd.f32 %v2360, %v2574
      %v2649 = vadd.f32 %v2361, %v2579
      %v2650 = vadd.f32 %v2362, %v2582
      %v2651 = vadd.f32 %v2363, %v2587
      %v2652 = vadd.f32 %v2364, %v2590
      %v2653 = vadd.f32 %v2365, %v2595
      %v2654 = vadd.f32 %v2366, %v2598
      %v2655 = vadd.f32 %v2367, %v2603
      %v2656 = vadd.f32 %v2368, %v2606
      %v2657 = vadd.f32 %v2369, %v2611
      %v2658 = vadd.f32 %v2370, %v2614
      %v2659 = vadd.f32 %v2371, %v2619
      %v2660 = vadd.f32 %v2372, %v2622
      %s2661 = scalar_lea.vmem %s2, 448
      %v2662 = vld [vmem:[%s2661] sm:$0xf]
      %v2663 = vld [vmem:[%s2661 + $0x4] sm:$0xf]
      %v2664 = vld [vmem:[%s2661 + $0x8] sm:$0xf]
      %v2665 = vld [vmem:[%s2661 + $0xc] sm:$0xf]
      %v2666 = vld [vmem:[%s2661 + $0x10] sm:$0xf]
      %v2667 = vld [vmem:[%s2661 + $0x14] sm:$0xf]
      %v2668 = vld [vmem:[%s2661 + $0x18] sm:$0xf]
      %v2669 = vld [vmem:[%s2661 + $0x1c] sm:$0xf]
      %v2670 = vld [vmem:[%s2661 + $0x20] sm:$0xf]
      %v2671 = vld [vmem:[%s2661 + $0x24] sm:$0xf]
      %v2672 = vld [vmem:[%s2661 + $0x28] sm:$0xf]
      %v2673 = vld [vmem:[%s2661 + $0x2c] sm:$0xf]
      %v2674 = vld [vmem:[%s2661 + $0x30] sm:$0xf]
      %v2675 = vld [vmem:[%s2661 + $0x34] sm:$0xf]
      %v2676 = vld [vmem:[%s2661 + $0x38] sm:$0xf]
      %v2677 = vld [vmem:[%s2661 + $0x3c] sm:$0xf]
      %vm2678 = vsmask.f32 5376
      %v2679 = vrot.slane %v420, 2
      %v2680 = vrot.slane %v416, 3
      %v2681 = vor.u32 %v2679, %v2680
      %v2682 = vrot.slane %v428, 2
      %v2683 = vrot.slane %v424, 3
      %v2684 = vor.u32 %v2682, %v2683
      %v2685 = vsel %vm2678, %v2681, %v2684
      %v2686 = vrot.slane %v436, 2
      %v2687 = vrot.slane %v432, 3
      %v2688 = vor.u32 %v2686, %v2687
      %v2689 = vsel %vm2678, %v2684, %v2688
      %v2690 = vrot.slane %v444, 2
      %v2691 = vrot.slane %v440, 3
      %v2692 = vor.u32 %v2690, %v2691
      %v2693 = vsel %vm2678, %v2688, %v2692
      %v2694 = vrot.slane %v452, 2
      %v2695 = vrot.slane %v448, 3
      %v2696 = vor.u32 %v2694, %v2695
      %v2697 = vsel %vm2678, %v2692, %v2696
      %v2698 = vrot.slane %v460, 2
      %v2699 = vrot.slane %v456, 3
      %v2700 = vor.u32 %v2698, %v2699
      %v2701 = vsel %vm2678, %v2696, %v2700
      %v2702 = vrot.slane %v468, 2
      %v2703 = vrot.slane %v464, 3
      %v2704 = vor.u32 %v2702, %v2703
      %v2705 = vsel %vm2678, %v2700, %v2704
      %v2706 = vrot.slane %v476, 2
      %v2707 = vrot.slane %v472, 3
      %v2708 = vor.u32 %v2706, %v2707
      %v2709 = vsel %vm2678, %v2704, %v2708
      %v2710 = vrot.slane %v484, 2
      %v2711 = vrot.slane %v480, 3
      %v2712 = vor.u32 %v2710, %v2711
      %v2713 = vsel %vm2678, %v2708, %v2712
      %v2714 = vrot.slane %v492, 2
      %v2715 = vrot.slane %v488, 3
      %v2716 = vor.u32 %v2714, %v2715
      %v2717 = vsel %vm2678, %v2712, %v2716
      %v2718 = vrot.slane %v500, 2
      %v2719 = vrot.slane %v496, 3
      %v2720 = vor.u32 %v2718, %v2719
      %v2721 = vsel %vm2678, %v2716, %v2720
      %v2722 = vrot.slane %v508, 2
      %v2723 = vrot.slane %v504, 3
      %v2724 = vor.u32 %v2722, %v2723
      %v2725 = vsel %vm2678, %v2720, %v2724
      %v2726 = vrot.slane %v516, 2
      %v2727 = vrot.slane %v512, 3
      %v2728 = vor.u32 %v2726, %v2727
      %v2729 = vsel %vm2678, %v2724, %v2728
      %v2730 = vrot.slane %v524, 2
      %v2731 = vrot.slane %v520, 3
      %v2732 = vor.u32 %v2730, %v2731
      %v2733 = vsel %vm2678, %v2728, %v2732
      %v2734 = vrot.slane %v532, 2
      %v2735 = vrot.slane %v528, 3
      %v2736 = vor.u32 %v2734, %v2735
      %v2737 = vsel %vm2678, %v2732, %v2736
      %v2738 = vrot.slane %v540, 2
      %v2739 = vrot.slane %v536, 3
      %v2740 = vor.u32 %v2738, %v2739
      %v2741 = vsel %vm2678, %v2736, %v2740
      %v2742 = vrot.slane %v1743, 2
      %v2743 = vrot.slane %v1746, 3
      %v2744 = vor.u32 %v2742, %v2743
      %v2745 = vsel %vm2678, %v2740, %v2744
      %v2747 = vshrl.u32 %v2373, 16
      %v2749 = vrot.slane %v2747, 2
      %v2750 = vshll.u32 %v2373, 16
      %v2752 = vrot.slane %v2750, 3
      %v2753 = vor.u32 %v2749, %v2752
      %v2754 = vsel %vm2678, %v2744, %v2753
      %v2756 = vshrl.u32 %v2374, 16
      %v2758 = vrot.slane %v2756, 2
      %v2759 = vshll.u32 %v2374, 16
      %v2761 = vrot.slane %v2759, 3
      %v2762 = vor.u32 %v2758, %v2761
      %v2763 = vsel %vm2678, %v2753, %v2762
      %v2798 = vunpack.c.l.b16 %v2662
      %v2799 = vunpack.c.l.b16 %v2663
      %v2800 = vunpack.c.l.b16 %v2664
      %v2801 = vunpack.c.l.b16 %v2665
      %v2802 = vunpack.c.l.b16 %v2666
      %v2803 = vunpack.c.l.b16 %v2667
      %v2804 = vunpack.c.l.b16 %v2668
      %v2805 = vunpack.c.l.b16 %v2669
      %v2806 = vunpack.c.l.b16 %v2670
      %v2807 = vunpack.c.l.b16 %v2671
      %v2808 = vunpack.c.l.b16 %v2672
      %v2809 = vunpack.c.l.b16 %v2673
      %v2810 = vunpack.c.l.b16 %v2674
      %v2811 = vunpack.c.l.b16 %v2675
      %v2812 = vunpack.c.l.b16 %v2676
      %v2813 = vunpack.c.l.b16 %v2677
      %v2814 = vpack.c.b16 %v2799, %v2798
      %v2815 = vpack.c.b16 %v2801, %v2800
      %v2816 = vpack.c.b16 %v2803, %v2802
      %v2817 = vpack.c.b16 %v2805, %v2804
      %v2818 = vpack.c.b16 %v2807, %v2806
      %v2819 = vpack.c.b16 %v2809, %v2808
      %v2820 = vpack.c.b16 %v2811, %v2810
      %v2821 = vpack.c.b16 %v2813, %v2812
      %2830 = vmatprep.subr.bf16.mxu0 0
      %2831 = vmatpush1.bf16.msra.mxu0 %v2821
      %2832 = vmatprep.subr.bf16.mxu0 0
      %2833 = vmatpush1.bf16.msra.mxu0 %v2820
      %2834 = vmatprep.subr.bf16.mxu0 0
      %2835 = vmatpush1.bf16.msra.mxu0 %v2819
      %2836 = vmatprep.subr.bf16.mxu0 0
      %2837 = vmatpush1.bf16.msra.mxu0 %v2818
      %2838 = vmatprep.subr.bf16.mxu0 0
      %2839 = vmatpush1.bf16.msra.mxu0 %v2817
      %2840 = vmatprep.subr.bf16.mxu0 0
      %2841 = vmatpush1.bf16.msra.mxu0 %v2816
      %2842 = vmatprep.subr.bf16.mxu0 0
      %2843 = vmatpush1.bf16.msra.mxu0 %v2815
      %2844 = vmatprep.subr.bf16.mxu0 0
      %2845 = vmatpush1.bf16.msra.mxu0 %v2814
      %2846 = vmatprep.subr.bf16.mxu0 0
      %2847 = vmatpush2.bf16.msra.mxu0 0
      %2848 = vmatprep.subr.bf16.mxu0 0
      %2849 = vmatpush2.bf16.msra.mxu0 0
      %2850 = vmatprep.subr.bf16.mxu0 0
      %2851 = vmatpush2.bf16.msra.mxu0 0
      %2852 = vmatprep.subr.bf16.mxu0 0
      %2853 = vmatpush2.bf16.msra.mxu0 0
      %2854 = vmatprep.subr.bf16.mxu0 0
      %2855 = vmatpush2.bf16.msra.mxu0 0
      %2856 = vmatprep.subr.bf16.mxu0 0
      %2857 = vmatpush2.bf16.msra.mxu0 0
      %2858 = vmatprep.subr.bf16.mxu0 0
      %2859 = vmatpush2.bf16.msra.mxu0 0
      %2860 = vmatprep.subr.bf16.mxu0 0
      %2861 = vmatpush2.bf16.msra.mxu0 0
      %2862 = vmatprep.mubr.bf16.mxu0 0
      %2863 = vmatmul.mubr.bf16.gmra.mxu0 %v2685
      %v2864 = vpop.f32.mrf.mxu0
      %v2865 = vadd.f32 0.0, %v2864
      %v2866 = vpop.f32.mrf.mxu0
      %v2867 = vpop.f32.mrf.mxu0
      %v2868 = vadd.f32 0.0, %v2867
      %v2869 = vpop.f32.mrf.mxu0
      %2870 = vmatprep.mubr.bf16.mxu0 0
      %2871 = vmatmul.mubr.bf16.gmra.mxu0 %v2689
      %v2872 = vpop.f32.mrf.mxu0
      %v2873 = vadd.f32 0.0, %v2872
      %v2874 = vpop.f32.mrf.mxu0
      %v2875 = vpop.f32.mrf.mxu0
      %v2876 = vadd.f32 0.0, %v2875
      %v2877 = vpop.f32.mrf.mxu0
      %2878 = vmatprep.mubr.bf16.mxu0 0
      %2879 = vmatmul.mubr.bf16.gmra.mxu0 %v2693
      %v2880 = vpop.f32.mrf.mxu0
      %v2881 = vadd.f32 0.0, %v2880
      %v2882 = vpop.f32.mrf.mxu0
      %v2883 = vpop.f32.mrf.mxu0
      %v2884 = vadd.f32 0.0, %v2883
      %v2885 = vpop.f32.mrf.mxu0
      %2886 = vmatprep.mubr.bf16.mxu0 0
      %2887 = vmatmul.mubr.bf16.gmra.mxu0 %v2697
      %v2888 = vpop.f32.mrf.mxu0
      %v2889 = vadd.f32 0.0, %v2888
      %v2890 = vpop.f32.mrf.mxu0
      %v2891 = vpop.f32.mrf.mxu0
      %v2892 = vadd.f32 0.0, %v2891
      %v2893 = vpop.f32.mrf.mxu0
      %2894 = vmatprep.mubr.bf16.mxu0 0
      %2895 = vmatmul.mubr.bf16.gmra.mxu0 %v2701
      %v2896 = vpop.f32.mrf.mxu0
      %v2897 = vadd.f32 0.0, %v2896
      %v2898 = vpop.f32.mrf.mxu0
      %v2899 = vpop.f32.mrf.mxu0
      %v2900 = vadd.f32 0.0, %v2899
      %v2901 = vpop.f32.mrf.mxu0
      %2902 = vmatprep.mubr.bf16.mxu0 0
      %2903 = vmatmul.mubr.bf16.gmra.mxu0 %v2705
      %v2904 = vpop.f32.mrf.mxu0
      %v2905 = vadd.f32 0.0, %v2904
      %v2906 = vpop.f32.mrf.mxu0
      %v2907 = vpop.f32.mrf.mxu0
      %v2908 = vadd.f32 0.0, %v2907
      %v2909 = vpop.f32.mrf.mxu0
      %2910 = vmatprep.mubr.bf16.mxu0 0
      %2911 = vmatmul.mubr.bf16.gmra.mxu0 %v2709
      %v2912 = vpop.f32.mrf.mxu0
      %v2913 = vadd.f32 0.0, %v2912
      %v2914 = vpop.f32.mrf.mxu0
      %v2915 = vpop.f32.mrf.mxu0
      %v2916 = vadd.f32 0.0, %v2915
      %v2917 = vpop.f32.mrf.mxu0
      %2918 = vmatprep.mubr.bf16.mxu0 0
      %2919 = vmatmul.mubr.bf16.gmra.mxu0 %v2713
      %v2920 = vpop.f32.mrf.mxu0
      %v2921 = vadd.f32 0.0, %v2920
      %v2922 = vpop.f32.mrf.mxu0
      %v2923 = vpop.f32.mrf.mxu0
      %v2924 = vadd.f32 0.0, %v2923
      %v2925 = vpop.f32.mrf.mxu0
      %2926 = vmatprep.mubr.bf16.mxu0 0
      %2927 = vmatmul.mubr.bf16.gmra.mxu0 %v2717
      %v2928 = vpop.f32.mrf.mxu0
      %v2929 = vadd.f32 0.0, %v2928
      %v2930 = vpop.f32.mrf.mxu0
      %v2931 = vpop.f32.mrf.mxu0
      %v2932 = vadd.f32 0.0, %v2931
      %v2933 = vpop.f32.mrf.mxu0
      %2934 = vmatprep.mubr.bf16.mxu0 0
      %2935 = vmatmul.mubr.bf16.gmra.mxu0 %v2721
      %v2936 = vpop.f32.mrf.mxu0
      %v2937 = vadd.f32 0.0, %v2936
      %v2938 = vpop.f32.mrf.mxu0
      %v2939 = vpop.f32.mrf.mxu0
      %v2940 = vadd.f32 0.0, %v2939
      %v2941 = vpop.f32.mrf.mxu0
      %2942 = vmatprep.mubr.bf16.mxu0 0
      %2943 = vmatmul.mubr.bf16.gmra.mxu0 %v2725
      %v2944 = vpop.f32.mrf.mxu0
      %v2945 = vadd.f32 0.0, %v2944
      %v2946 = vpop.f32.mrf.mxu0
      %v2947 = vpop.f32.mrf.mxu0
      %v2948 = vadd.f32 0.0, %v2947
      %v2949 = vpop.f32.mrf.mxu0
      %2950 = vmatprep.mubr.bf16.mxu0 0
      %2951 = vmatmul.mubr.bf16.gmra.mxu0 %v2729
      %v2952 = vpop.f32.mrf.mxu0
      %v2953 = vadd.f32 0.0, %v2952
      %v2954 = vpop.f32.mrf.mxu0
      %v2955 = vpop.f32.mrf.mxu0
      %v2956 = vadd.f32 0.0, %v2955
      %v2957 = vpop.f32.mrf.mxu0
      %2958 = vmatprep.mubr.bf16.mxu0 0
      %2959 = vmatmul.mubr.bf16.gmra.mxu0 %v2733
      %v2960 = vpop.f32.mrf.mxu0
      %v2961 = vadd.f32 0.0, %v2960
      %v2962 = vpop.f32.mrf.mxu0
      %v2963 = vpop.f32.mrf.mxu0
      %v2964 = vadd.f32 0.0, %v2963
      %v2965 = vpop.f32.mrf.mxu0
      %2966 = vmatprep.mubr.bf16.mxu0 0
      %2967 = vmatmul.mubr.bf16.gmra.mxu0 %v2737
      %v2968 = vpop.f32.mrf.mxu0
      %v2969 = vadd.f32 0.0, %v2968
      %v2970 = vpop.f32.mrf.mxu0
      %v2971 = vpop.f32.mrf.mxu0
      %v2972 = vadd.f32 0.0, %v2971
      %v2973 = vpop.f32.mrf.mxu0
      %2974 = vmatprep.mubr.bf16.mxu0 0
      %2975 = vmatmul.mubr.bf16.gmra.mxu0 %v2741
      %v2976 = vpop.f32.mrf.mxu0
      %v2977 = vadd.f32 0.0, %v2976
      %v2978 = vpop.f32.mrf.mxu0
      %v2979 = vpop.f32.mrf.mxu0
      %v2980 = vadd.f32 0.0, %v2979
      %v2981 = vpop.f32.mrf.mxu0
      %2982 = vmatprep.mubr.bf16.mxu0 0
      %2983 = vmatmul.mubr.bf16.gmra.mxu0 %v2745
      %v2984 = vpop.f32.mrf.mxu0
      %v2985 = vadd.f32 0.0, %v2984
      %v2986 = vpop.f32.mrf.mxu0
      %v2987 = vpop.f32.mrf.mxu0
      %v2988 = vadd.f32 0.0, %v2987
      %v2989 = vpop.f32.mrf.mxu0
      %2990 = vmatprep.mubr.bf16.mxu0 0
      %2991 = vmatmul.mubr.bf16.gmra.mxu0 %v2754
      %v2992 = vpop.f32.mrf.mxu0
      %v2993 = vadd.f32 0.0, %v2992
      %v2994 = vpop.f32.mrf.mxu0
      %v2995 = vpop.f32.mrf.mxu0
      %v2996 = vadd.f32 0.0, %v2995
      %v2997 = vpop.f32.mrf.mxu0
      %2998 = vmatprep.mubr.bf16.mxu0 0
      %2999 = vmatmul.mubr.bf16.gmra.mxu0 %v2763
      %v3000 = vpop.f32.mrf.mxu0
      %v3001 = vadd.f32 0.0, %v3000
      %v3002 = vpop.f32.mrf.mxu0
      %v3003 = vpop.f32.mrf.mxu0
      %v3004 = vadd.f32 0.0, %v3003
      %v3005 = vpop.f32.mrf.mxu0
      %3006 = vdwg.mxu0
      %v3007 = vadd.f32 %v2625, %v2865
      %v3008 = vadd.f32 %v2626, %v2868
      %v3009 = vadd.f32 %v2627, %v2873
      %v3010 = vadd.f32 %v2628, %v2876
      %v3011 = vadd.f32 %v2629, %v2881
      %v3012 = vadd.f32 %v2630, %v2884
      %v3013 = vadd.f32 %v2631, %v2889
      %v3014 = vadd.f32 %v2632, %v2892
      %v3015 = vadd.f32 %v2633, %v2897
      %v3016 = vadd.f32 %v2634, %v2900
      %v3017 = vadd.f32 %v2635, %v2905
      %v3018 = vadd.f32 %v2636, %v2908
      %v3019 = vadd.f32 %v2637, %v2913
      %v3020 = vadd.f32 %v2638, %v2916
      %v3021 = vadd.f32 %v2639, %v2921
      %v3022 = vadd.f32 %v2640, %v2924
      %v3023 = vadd.f32 %v2641, %v2929
      %v3024 = vadd.f32 %v2642, %v2932
      %v3025 = vadd.f32 %v2643, %v2937
      %v3026 = vadd.f32 %v2644, %v2940
      %v3027 = vadd.f32 %v2645, %v2945
      %v3028 = vadd.f32 %v2646, %v2948
      %v3029 = vadd.f32 %v2647, %v2953
      %v3030 = vadd.f32 %v2648, %v2956
      %v3031 = vadd.f32 %v2649, %v2961
      %v3032 = vadd.f32 %v2650, %v2964
      %v3033 = vadd.f32 %v2651, %v2969
      %v3034 = vadd.f32 %v2652, %v2972
      %v3035 = vadd.f32 %v2653, %v2977
      %v3036 = vadd.f32 %v2654, %v2980
      %v3037 = vadd.f32 %v2655, %v2985
      %v3038 = vadd.f32 %v2656, %v2988
      %v3039 = vadd.f32 %v2657, %v2993
      %v3040 = vadd.f32 %v2658, %v2996
      %v3041 = vadd.f32 %v2659, %v3001
      %v3042 = vadd.f32 %v2660, %v3004
      %s3043 = scalar_lea.vmem %s2, 512
      %v3044 = vld [vmem:[%s3043] sm:$0xf]
      %v3045 = vld [vmem:[%s3043 + $0x4] sm:$0xf]
      %v3046 = vld [vmem:[%s3043 + $0x8] sm:$0xf]
      %v3047 = vld [vmem:[%s3043 + $0xc] sm:$0xf]
      %v3048 = vld [vmem:[%s3043 + $0x10] sm:$0xf]
      %v3049 = vld [vmem:[%s3043 + $0x14] sm:$0xf]
      %v3050 = vld [vmem:[%s3043 + $0x18] sm:$0xf]
      %v3051 = vld [vmem:[%s3043 + $0x1c] sm:$0xf]
      %v3052 = vld [vmem:[%s3043 + $0x20] sm:$0xf]
      %v3053 = vld [vmem:[%s3043 + $0x24] sm:$0xf]
      %v3054 = vld [vmem:[%s3043 + $0x28] sm:$0xf]
      %v3055 = vld [vmem:[%s3043 + $0x2c] sm:$0xf]
      %v3056 = vld [vmem:[%s3043 + $0x30] sm:$0xf]
      %v3057 = vld [vmem:[%s3043 + $0x34] sm:$0xf]
      %v3058 = vld [vmem:[%s3043 + $0x38] sm:$0xf]
      %v3059 = vld [vmem:[%s3043 + $0x3c] sm:$0xf]
      %vm3060 = vcmask 1044480
      %v3061 = vrot.slane %v349, 3
      %v3062 = vrot.slane %v350, 3
      %v3063 = vsel %vm3060, %v3061, %v3062
      %v3064 = vrot.slane %v351, 3
      %v3065 = vsel %vm3060, %v3062, %v3064
      %v3066 = vrot.slane %v352, 3
      %v3067 = vsel %vm3060, %v3064, %v3066
      %v3068 = vrot.slane %v353, 3
      %v3069 = vsel %vm3060, %v3066, %v3068
      %v3070 = vrot.slane %v354, 3
      %v3071 = vsel %vm3060, %v3068, %v3070
      %v3072 = vrot.slane %v355, 3
      %v3073 = vsel %vm3060, %v3070, %v3072
      %v3074 = vrot.slane %v356, 3
      %v3075 = vsel %vm3060, %v3072, %v3074
      %v3076 = vrot.slane %v357, 3
      %v3077 = vsel %vm3060, %v3074, %v3076
      %v3078 = vrot.slane %v358, 3
      %v3079 = vsel %vm3060, %v3076, %v3078
      %v3080 = vrot.slane %v359, 3
      %v3081 = vsel %vm3060, %v3078, %v3080
      %v3082 = vrot.slane %v360, 3
      %v3083 = vsel %vm3060, %v3080, %v3082
      %v3084 = vrot.slane %v361, 3
      %v3085 = vsel %vm3060, %v3082, %v3084
      %v3086 = vrot.slane %v362, 3
      %v3087 = vsel %vm3060, %v3084, %v3086
      %v3088 = vrot.slane %v363, 3
      %v3089 = vsel %vm3060, %v3086, %v3088
      %v3090 = vrot.slane %v364, 3
      %v3091 = vsel %vm3060, %v3088, %v3090
      %v3092 = vrot.slane %v1369, 3
      %v3093 = vsel %vm3060, %v3090, %v3092
      %v3094 = vrot.slane %v2373, 3
      %v3095 = vsel %vm3060, %v3092, %v3094
      %v3096 = vrot.slane %v2374, 3
      %v3097 = vsel %vm3060, %v3094, %v3096
      %v3132 = vunpack.c.l.b16 %v3044
      %v3133 = vunpack.c.l.b16 %v3045
      %v3134 = vunpack.c.l.b16 %v3046
      %v3135 = vunpack.c.l.b16 %v3047
      %v3136 = vunpack.c.l.b16 %v3048
      %v3137 = vunpack.c.l.b16 %v3049
      %v3138 = vunpack.c.l.b16 %v3050
      %v3139 = vunpack.c.l.b16 %v3051
      %v3140 = vunpack.c.l.b16 %v3052
      %v3141 = vunpack.c.l.b16 %v3053
      %v3142 = vunpack.c.l.b16 %v3054
      %v3143 = vunpack.c.l.b16 %v3055
      %v3144 = vunpack.c.l.b16 %v3056
      %v3145 = vunpack.c.l.b16 %v3057
      %v3146 = vunpack.c.l.b16 %v3058
      %v3147 = vunpack.c.l.b16 %v3059
      %v3148 = vpack.c.b16 %v3133, %v3132
      %v3149 = vpack.c.b16 %v3135, %v3134
      %v3150 = vpack.c.b16 %v3137, %v3136
      %v3151 = vpack.c.b16 %v3139, %v3138
      %v3152 = vpack.c.b16 %v3141, %v3140
      %v3153 = vpack.c.b16 %v3143, %v3142
      %v3154 = vpack.c.b16 %v3145, %v3144
      %v3155 = vpack.c.b16 %v3147, %v3146
      %3164 = vmatprep.subr.bf16.mxu0 0
      %3165 = vmatpush1.bf16.msra.mxu0 %v3155
      %3166 = vmatprep.subr.bf16.mxu0 0
      %3167 = vmatpush1.bf16.msra.mxu0 %v3154
      %3168 = vmatprep.subr.bf16.mxu0 0
      %3169 = vmatpush1.bf16.msra.mxu0 %v3153
      %3170 = vmatprep.subr.bf16.mxu0 0
      %3171 = vmatpush1.bf16.msra.mxu0 %v3152
      %3172 = vmatprep.subr.bf16.mxu0 0
      %3173 = vmatpush1.bf16.msra.mxu0 %v3151
      %3174 = vmatprep.subr.bf16.mxu0 0
      %3175 = vmatpush1.bf16.msra.mxu0 %v3150
      %3176 = vmatprep.subr.bf16.mxu0 0
      %3177 = vmatpush1.bf16.msra.mxu0 %v3149
      %3178 = vmatprep.subr.bf16.mxu0 0
      %3179 = vmatpush1.bf16.msra.mxu0 %v3148
      %3180 = vmatprep.subr.bf16.mxu0 0
      %3181 = vmatpush2.bf16.msra.mxu0 0
      %3182 = vmatprep.subr.bf16.mxu0 0
      %3183 = vmatpush2.bf16.msra.mxu0 0
      %3184 = vmatprep.subr.bf16.mxu0 0
      %3185 = vmatpush2.bf16.msra.mxu0 0
      %3186 = vmatprep.subr.bf16.mxu0 0
      %3187 = vmatpush2.bf16.msra.mxu0 0
      %3188 = vmatprep.subr.bf16.mxu0 0
      %3189 = vmatpush2.bf16.msra.mxu0 0
      %3190 = vmatprep.subr.bf16.mxu0 0
      %3191 = vmatpush2.bf16.msra.mxu0 0
      %3192 = vmatprep.subr.bf16.mxu0 0
      %3193 = vmatpush2.bf16.msra.mxu0 0
      %3194 = vmatprep.subr.bf16.mxu0 0
      %3195 = vmatpush2.bf16.msra.mxu0 0
      %3196 = vmatprep.mubr.bf16.mxu0 0
      %3197 = vmatmul.mubr.bf16.gmra.mxu0 %v3063
      %v3198 = vpop.f32.mrf.mxu0
      %v3199 = vadd.f32 0.0, %v3198
      %v3200 = vpop.f32.mrf.mxu0
      %v3201 = vpop.f32.mrf.mxu0
      %v3202 = vadd.f32 0.0, %v3201
      %v3203 = vpop.f32.mrf.mxu0
      %3204 = vmatprep.mubr.bf16.mxu0 0
      %3205 = vmatmul.mubr.bf16.gmra.mxu0 %v3065
      %v3206 = vpop.f32.mrf.mxu0
      %v3207 = vadd.f32 0.0, %v3206
      %v3208 = vpop.f32.mrf.mxu0
      %v3209 = vpop.f32.mrf.mxu0
      %v3210 = vadd.f32 0.0, %v3209
      %v3211 = vpop.f32.mrf.mxu0
      %3212 = vmatprep.mubr.bf16.mxu0 0
      %3213 = vmatmul.mubr.bf16.gmra.mxu0 %v3067
      %v3214 = vpop.f32.mrf.mxu0
      %v3215 = vadd.f32 0.0, %v3214
      %v3216 = vpop.f32.mrf.mxu0
      %v3217 = vpop.f32.mrf.mxu0
      %v3218 = vadd.f32 0.0, %v3217
      %v3219 = vpop.f32.mrf.mxu0
      %3220 = vmatprep.mubr.bf16.mxu0 0
      %3221 = vmatmul.mubr.bf16.gmra.mxu0 %v3069
      %v3222 = vpop.f32.mrf.mxu0
      %v3223 = vadd.f32 0.0, %v3222
      %v3224 = vpop.f32.mrf.mxu0
      %v3225 = vpop.f32.mrf.mxu0
      %v3226 = vadd.f32 0.0, %v3225
      %v3227 = vpop.f32.mrf.mxu0
      %3228 = vmatprep.mubr.bf16.mxu0 0
      %3229 = vmatmul.mubr.bf16.gmra.mxu0 %v3071
      %v3230 = vpop.f32.mrf.mxu0
      %v3231 = vadd.f32 0.0, %v3230
      %v3232 = vpop.f32.mrf.mxu0
      %v3233 = vpop.f32.mrf.mxu0
      %v3234 = vadd.f32 0.0, %v3233
      %v3235 = vpop.f32.mrf.mxu0
      %3236 = vmatprep.mubr.bf16.mxu0 0
      %3237 = vmatmul.mubr.bf16.gmra.mxu0 %v3073
      %v3238 = vpop.f32.mrf.mxu0
      %v3239 = vadd.f32 0.0, %v3238
      %v3240 = vpop.f32.mrf.mxu0
      %v3241 = vpop.f32.mrf.mxu0
      %v3242 = vadd.f32 0.0, %v3241
      %v3243 = vpop.f32.mrf.mxu0
      %3244 = vmatprep.mubr.bf16.mxu0 0
      %3245 = vmatmul.mubr.bf16.gmra.mxu0 %v3075
      %v3246 = vpop.f32.mrf.mxu0
      %v3247 = vadd.f32 0.0, %v3246
      %v3248 = vpop.f32.mrf.mxu0
      %v3249 = vpop.f32.mrf.mxu0
      %v3250 = vadd.f32 0.0, %v3249
      %v3251 = vpop.f32.mrf.mxu0
      %3252 = vmatprep.mubr.bf16.mxu0 0
      %3253 = vmatmul.mubr.bf16.gmra.mxu0 %v3077
      %v3254 = vpop.f32.mrf.mxu0
      %v3255 = vadd.f32 0.0, %v3254
      %v3256 = vpop.f32.mrf.mxu0
      %v3257 = vpop.f32.mrf.mxu0
      %v3258 = vadd.f32 0.0, %v3257
      %v3259 = vpop.f32.mrf.mxu0
      %3260 = vmatprep.mubr.bf16.mxu0 0
      %3261 = vmatmul.mubr.bf16.gmra.mxu0 %v3079
      %v3262 = vpop.f32.mrf.mxu0
      %v3263 = vadd.f32 0.0, %v3262
      %v3264 = vpop.f32.mrf.mxu0
      %v3265 = vpop.f32.mrf.mxu0
      %v3266 = vadd.f32 0.0, %v3265
      %v3267 = vpop.f32.mrf.mxu0
      %3268 = vmatprep.mubr.bf16.mxu0 0
      %3269 = vmatmul.mubr.bf16.gmra.mxu0 %v3081
      %v3270 = vpop.f32.mrf.mxu0
      %v3271 = vadd.f32 0.0, %v3270
      %v3272 = vpop.f32.mrf.mxu0
      %v3273 = vpop.f32.mrf.mxu0
      %v3274 = vadd.f32 0.0, %v3273
      %v3275 = vpop.f32.mrf.mxu0
      %3276 = vmatprep.mubr.bf16.mxu0 0
      %3277 = vmatmul.mubr.bf16.gmra.mxu0 %v3083
      %v3278 = vpop.f32.mrf.mxu0
      %v3279 = vadd.f32 0.0, %v3278
      %v3280 = vpop.f32.mrf.mxu0
      %v3281 = vpop.f32.mrf.mxu0
      %v3282 = vadd.f32 0.0, %v3281
      %v3283 = vpop.f32.mrf.mxu0
      %3284 = vmatprep.mubr.bf16.mxu0 0
      %3285 = vmatmul.mubr.bf16.gmra.mxu0 %v3085
      %v3286 = vpop.f32.mrf.mxu0
      %v3287 = vadd.f32 0.0, %v3286
      %v3288 = vpop.f32.mrf.mxu0
      %v3289 = vpop.f32.mrf.mxu0
      %v3290 = vadd.f32 0.0, %v3289
      %v3291 = vpop.f32.mrf.mxu0
      %3292 = vmatprep.mubr.bf16.mxu0 0
      %3293 = vmatmul.mubr.bf16.gmra.mxu0 %v3087
      %v3294 = vpop.f32.mrf.mxu0
      %v3295 = vadd.f32 0.0, %v3294
      %v3296 = vpop.f32.mrf.mxu0
      %v3297 = vpop.f32.mrf.mxu0
      %v3298 = vadd.f32 0.0, %v3297
      %v3299 = vpop.f32.mrf.mxu0
      %3300 = vmatprep.mubr.bf16.mxu0 0
      %3301 = vmatmul.mubr.bf16.gmra.mxu0 %v3089
      %v3302 = vpop.f32.mrf.mxu0
      %v3303 = vadd.f32 0.0, %v3302
      %v3304 = vpop.f32.mrf.mxu0
      %v3305 = vpop.f32.mrf.mxu0
      %v3306 = vadd.f32 0.0, %v3305
      %v3307 = vpop.f32.mrf.mxu0
      %3308 = vmatprep.mubr.bf16.mxu0 0
      %3309 = vmatmul.mubr.bf16.gmra.mxu0 %v3091
      %v3310 = vpop.f32.mrf.mxu0
      %v3311 = vadd.f32 0.0, %v3310
      %v3312 = vpop.f32.mrf.mxu0
      %v3313 = vpop.f32.mrf.mxu0
      %v3314 = vadd.f32 0.0, %v3313
      %v3315 = vpop.f32.mrf.mxu0
      %3316 = vmatprep.mubr.bf16.mxu0 0
      %3317 = vmatmul.mubr.bf16.gmra.mxu0 %v3093
      %v3318 = vpop.f32.mrf.mxu0
      %v3319 = vadd.f32 0.0, %v3318
      %v3320 = vpop.f32.mrf.mxu0
      %v3321 = vpop.f32.mrf.mxu0
      %v3322 = vadd.f32 0.0, %v3321
      %v3323 = vpop.f32.mrf.mxu0
      %3324 = vmatprep.mubr.bf16.mxu0 0
      %3325 = vmatmul.mubr.bf16.gmra.mxu0 %v3095
      %v3326 = vpop.f32.mrf.mxu0
      %v3327 = vadd.f32 0.0, %v3326
      %v3328 = vpop.f32.mrf.mxu0
      %v3329 = vpop.f32.mrf.mxu0
      %v3330 = vadd.f32 0.0, %v3329
      %v3331 = vpop.f32.mrf.mxu0
      %3332 = vmatprep.mubr.bf16.mxu0 0
      %3333 = vmatmul.mubr.bf16.gmra.mxu0 %v3097
      %v3334 = vpop.f32.mrf.mxu0
      %v3335 = vadd.f32 0.0, %v3334
      %v3336 = vpop.f32.mrf.mxu0
      %v3337 = vpop.f32.mrf.mxu0
      %v3338 = vadd.f32 0.0, %v3337
      %v3339 = vpop.f32.mrf.mxu0
      %3340 = vdwg.mxu0
      %v3341 = vadd.f32 %v3007, %v3199
      %v3342 = vadd.f32 %v3008, %v3202
      %v3343 = vadd.f32 %v3009, %v3207
      %v3344 = vadd.f32 %v3010, %v3210
      %v3345 = vadd.f32 %v3011, %v3215
      %v3346 = vadd.f32 %v3012, %v3218
      %v3347 = vadd.f32 %v3013, %v3223
      %v3348 = vadd.f32 %v3014, %v3226
      %v3349 = vadd.f32 %v3015, %v3231
      %v3350 = vadd.f32 %v3016, %v3234
      %v3351 = vadd.f32 %v3017, %v3239
      %v3352 = vadd.f32 %v3018, %v3242
      %v3353 = vadd.f32 %v3019, %v3247
      %v3354 = vadd.f32 %v3020, %v3250
      %v3355 = vadd.f32 %v3021, %v3255
      %v3356 = vadd.f32 %v3022, %v3258
      %v3357 = vadd.f32 %v3023, %v3263
      %v3358 = vadd.f32 %v3024, %v3266
      %v3359 = vadd.f32 %v3025, %v3271
      %v3360 = vadd.f32 %v3026, %v3274
      %v3361 = vadd.f32 %v3027, %v3279
      %v3362 = vadd.f32 %v3028, %v3282
      %v3363 = vadd.f32 %v3029, %v3287
      %v3364 = vadd.f32 %v3030, %v3290
      %v3365 = vadd.f32 %v3031, %v3295
      %v3366 = vadd.f32 %v3032, %v3298
      %v3367 = vadd.f32 %v3033, %v3303
      %v3368 = vadd.f32 %v3034, %v3306
      %v3369 = vadd.f32 %v3035, %v3311
      %v3370 = vadd.f32 %v3036, %v3314
      %v3371 = vadd.f32 %v3037, %v3319
      %v3372 = vadd.f32 %v3038, %v3322
      %v3373 = vadd.f32 %v3039, %v3327
      %v3374 = vadd.f32 %v3040, %v3330
      %v3375 = vadd.f32 %v3041, %v3335
      %v3376 = vadd.f32 %v3042, %v3338
      %v3377 = vld [vmem:[%s3] sm:$0x1]
      %v3379 = vlaneseq
      %v3380 = vshrl.u32 %v3379, 7
      %v3381 = vsub.s32 0, %v3380
      %v3382 = vrot.slane %v3377, %v3381
      %v3384 = vadd.f32 %v3341, %v3382
      %v3385 = vadd.f32 %v3342, %v3382
      %v3386 = vadd.f32 %v3343, %v3382
      %v3387 = vadd.f32 %v3344, %v3382
      %v3388 = vadd.f32 %v3345, %v3382
      %v3389 = vadd.f32 %v3346, %v3382
      %v3390 = vadd.f32 %v3347, %v3382
      %v3391 = vadd.f32 %v3348, %v3382
      %v3392 = vadd.f32 %v3349, %v3382
      %v3393 = vadd.f32 %v3350, %v3382
      %v3394 = vadd.f32 %v3351, %v3382
      %v3395 = vadd.f32 %v3352, %v3382
      %v3396 = vadd.f32 %v3353, %v3382
      %v3397 = vadd.f32 %v3354, %v3382
      %v3398 = vadd.f32 %v3355, %v3382
      %v3399 = vadd.f32 %v3356, %v3382
      %v3400 = vadd.f32 %v3357, %v3382
      %v3401 = vadd.f32 %v3358, %v3382
      %v3402 = vadd.f32 %v3359, %v3382
      %v3403 = vadd.f32 %v3360, %v3382
      %v3404 = vadd.f32 %v3361, %v3382
      %v3405 = vadd.f32 %v3362, %v3382
      %v3406 = vadd.f32 %v3363, %v3382
      %v3407 = vadd.f32 %v3364, %v3382
      %v3408 = vadd.f32 %v3365, %v3382
      %v3409 = vadd.f32 %v3366, %v3382
      %v3410 = vadd.f32 %v3367, %v3382
      %v3411 = vadd.f32 %v3368, %v3382
      %v3412 = vadd.f32 %v3369, %v3382
      %v3413 = vadd.f32 %v3370, %v3382
      %v3414 = vadd.f32 %v3371, %v3382
      %v3415 = vadd.f32 %v3372, %v3382
      %v3416 = vadd.f32 %v3373, %v3382
      %v3417 = vadd.f32 %v3374, %v3382
      %v3418 = vadd.f32 %v3375, %v3382
      %v3419 = vadd.f32 %v3376, %v3382
      %v3420 = vmax.f32 %v3384, 0.0
      %v3421 = vmax.f32 %v3385, 0.0
      %v3422 = vmax.f32 %v3386, 0.0
      %v3423 = vmax.f32 %v3387, 0.0
      %v3424 = vmax.f32 %v3388, 0.0
      %v3425 = vmax.f32 %v3389, 0.0
      %v3426 = vmax.f32 %v3390, 0.0
      %v3427 = vmax.f32 %v3391, 0.0
      %v3428 = vmax.f32 %v3392, 0.0
      %v3429 = vmax.f32 %v3393, 0.0
      %v3430 = vmax.f32 %v3394, 0.0
      %v3431 = vmax.f32 %v3395, 0.0
      %v3432 = vmax.f32 %v3396, 0.0
      %v3433 = vmax.f32 %v3397, 0.0
      %v3434 = vmax.f32 %v3398, 0.0
      %v3435 = vmax.f32 %v3399, 0.0
      %v3436 = vmax.f32 %v3400, 0.0
      %v3437 = vmax.f32 %v3401, 0.0
      %v3438 = vmax.f32 %v3402, 0.0
      %v3439 = vmax.f32 %v3403, 0.0
      %v3440 = vmax.f32 %v3404, 0.0
      %v3441 = vmax.f32 %v3405, 0.0
      %v3442 = vmax.f32 %v3406, 0.0
      %v3443 = vmax.f32 %v3407, 0.0
      %v3444 = vmax.f32 %v3408, 0.0
      %v3445 = vmax.f32 %v3409, 0.0
      %v3446 = vmax.f32 %v3410, 0.0
      %v3447 = vmax.f32 %v3411, 0.0
      %v3448 = vmax.f32 %v3412, 0.0
      %v3449 = vmax.f32 %v3413, 0.0
      %v3450 = vmax.f32 %v3414, 0.0
      %v3451 = vmax.f32 %v3415, 0.0
      %v3452 = vmax.f32 %v3416, 0.0
      %v3453 = vmax.f32 %v3417, 0.0
      %v3454 = vmax.f32 %v3418, 0.0
      %v3455 = vmax.f32 %v3419, 0.0
      %3456 = vst [vmem:[%s303] sm:$0xff] %v3420
      %3457 = vst [vmem:[%s303 + $0x8] sm:$0xff] %v3421
      %3458 = vst [vmem:[%s303 + $0x10] sm:$0xff] %v3422
      %3459 = vst [vmem:[%s303 + $0x18] sm:$0xff] %v3423
      %3460 = vst [vmem:[%s303 + $0x20] sm:$0xff] %v3424
      %3461 = vst [vmem:[%s303 + $0x28] sm:$0xff] %v3425
      %3462 = vst [vmem:[%s303 + $0x30] sm:$0xff] %v3426
      %3463 = vst [vmem:[%s303 + $0x38] sm:$0xff] %v3427
      %3464 = vst [vmem:[%s303 + $0x40] sm:$0xff] %v3428
      %3465 = vst [vmem:[%s303 + $0x48] sm:$0xff] %v3429
      %3466 = vst [vmem:[%s303 + $0x50] sm:$0xff] %v3430
      %3467 = vst [vmem:[%s303 + $0x58] sm:$0xff] %v3431
      %3468 = vst [vmem:[%s303 + $0x60] sm:$0xff] %v3432
      %3469 = vst [vmem:[%s303 + $0x68] sm:$0xff] %v3433
      %3470 = vst [vmem:[%s303 + $0x70] sm:$0xff] %v3434
      %3471 = vst [vmem:[%s303 + $0x78] sm:$0xff] %v3435
      %3472 = vst [vmem:[%s303 + $0x80] sm:$0xff] %v3436
      %3473 = vst [vmem:[%s303 + $0x88] sm:$0xff] %v3437
      %3474 = vst [vmem:[%s303 + $0x90] sm:$0xff] %v3438
      %3475 = vst [vmem:[%s303 + $0x98] sm:$0xff] %v3439
      %3476 = vst [vmem:[%s303 + $0xa0] sm:$0xff] %v3440
      %3477 = vst [vmem:[%s303 + $0xa8] sm:$0xff] %v3441
      %3478 = vst [vmem:[%s303 + $0xb0] sm:$0xff] %v3442
      %3479 = vst [vmem:[%s303 + $0xb8] sm:$0xff] %v3443
      %3480 = vst [vmem:[%s303 + $0xc0] sm:$0xff] %v3444
      %3481 = vst [vmem:[%s303 + $0xc8] sm:$0xff] %v3445
      %3482 = vst [vmem:[%s303 + $0xd0] sm:$0xff] %v3446
      %3483 = vst [vmem:[%s303 + $0xd8] sm:$0xff] %v3447
      %3484 = vst [vmem:[%s303 + $0xe0] sm:$0xff] %v3448
      %3485 = vst [vmem:[%s303 + $0xe8] sm:$0xff] %v3449
      %3486 = vst [vmem:[%s303 + $0xf0] sm:$0xff] %v3450
      %3487 = vst [vmem:[%s303 + $0xf8] sm:$0xff] %v3451
      %3488 = vst [vmem:[%s303 + $0x100] sm:$0xff] %v3452
      %3489 = vst [vmem:[%s303 + $0x108] sm:$0xff] %v3453
      %3490 = vst [vmem:[%s303 + $0x110] sm:$0xff] %v3454
      %3491 = vst [vmem:[%s303 + $0x118] sm:$0xff] %v3455
      %s3492 = smul.u32 %s22, 288
      %v3493 = vlaneseq
      %v3494 = vshrl.u32 %v3493, 7
      %v3495 = vadd.s32 %v3494, 8
      %v3496 = vadd.s32 %v3494, 16
      %v3497 = vadd.s32 %v3494, 24
      %v3498 = vadd.s32 %v3494, 32
      %v3499 = vadd.s32 %v3494, 40
      %v3500 = vadd.s32 %v3494, 48
      %v3501 = vadd.s32 %v3494, 56
      %v3502 = vadd.s32 %v3494, 64
      %v3503 = vadd.s32 %v3494, 72
      %v3504 = vadd.s32 %v3494, 80
      %v3505 = vadd.s32 %v3494, 88
      %v3506 = vadd.s32 %v3494, 96
      %v3507 = vadd.s32 %v3494, 104
      %v3508 = vadd.s32 %v3494, 112
      %v3509 = vadd.s32 %v3494, 120
      %v3510 = vadd.s32 %v3494, 128
      %v3511 = vadd.s32 %v3494, 136
      %v3512 = vadd.s32 %v3494, 144
      %v3513 = vadd.s32 %v3494, 152
      %v3514 = vadd.s32 %v3494, 160
      %v3515 = vadd.s32 %v3494, 168
      %v3516 = vadd.s32 %v3494, 176
      %v3517 = vadd.s32 %v3494, 184
      %v3518 = vadd.s32 %v3494, 192
      %v3519 = vadd.s32 %v3494, 200
      %v3520 = vadd.s32 %v3494, 208
      %v3521 = vadd.s32 %v3494, 216
      %v3522 = vadd.s32 %v3494, 224
      %v3523 = vadd.s32 %v3494, 232
      %v3524 = vadd.s32 %v3494, 240
      %v3525 = vadd.s32 %v3494, 248
      %v3526 = vadd.s32 %v3494, 256
      %v3527 = vadd.s32 %v3494, 264
      %v3528 = vadd.s32 %v3494, 272
      %v3529 = vadd.s32 %v3494, 280
      %v3530 = vstv %s3492
      %v3531 = vadd.s32 %v3530, %v3494
      %v3532 = vadd.s32 %v3530, %v3495
      %v3533 = vadd.s32 %v3530, %v3496
      %v3534 = vadd.s32 %v3530, %v3497
      %v3535 = vadd.s32 %v3530, %v3498
      %v3536 = vadd.s32 %v3530, %v3499
      %v3537 = vadd.s32 %v3530, %v3500
      %v3538 = vadd.s32 %v3530, %v3501
      %v3539 = vadd.s32 %v3530, %v3502
      %v3540 = vadd.s32 %v3530, %v3503
      %v3541 = vadd.s32 %v3530, %v3504
      %v3542 = vadd.s32 %v3530, %v3505
      %v3543 = vadd.s32 %v3530, %v3506
      %v3544 = vadd.s32 %v3530, %v3507
      %v3545 = vadd.s32 %v3530, %v3508
      %v3546 = vadd.s32 %v3530, %v3509
      %v3547 = vadd.s32 %v3530, %v3510
      %v3548 = vadd.s32 %v3530, %v3511
      %v3549 = vadd.s32 %v3530, %v3512
      %v3550 = vadd.s32 %v3530, %v3513
      %v3551 = vadd.s32 %v3530, %v3514
      %v3552 = vadd.s32 %v3530, %v3515
      %v3553 = vadd.s32 %v3530, %v3516
      %v3554 = vadd.s32 %v3530, %v3517
      %v3555 = vadd.s32 %v3530, %v3518
      %v3556 = vadd.s32 %v3530, %v3519
      %v3557 = vadd.s32 %v3530, %v3520
      %v3558 = vadd.s32 %v3530, %v3521
      %v3559 = vadd.s32 %v3530, %v3522
      %v3560 = vadd.s32 %v3530, %v3523
      %v3561 = vadd.s32 %v3530, %v3524
      %v3562 = vadd.s32 %v3530, %v3525
      %v3563 = vadd.s32 %v3530, %v3526
      %v3564 = vadd.s32 %v3530, %v3527
      %v3565 = vadd.s32 %v3530, %v3528
      %v3566 = vadd.s32 %v3530, %v3529
      %vm3567 = vcmp.lt.s32.totalorder %v3531, 0
      %v3568 = vsub.s32 0, %v3531
      %v3569 = vsel %vm3567, %v3568, %v3531
      %v3570 = vmul.u32.u64.compose %v3569, 3817748708
      %v3571 = vextract.low.u32 %v3570
      %v3572 = vextract.high.u32 %v3570
      %v3573 = vshrl.u32 %v3572, 4
      %v3574 = vmul.u32 %v3573, 18
      %v3575 = vsub.s32 %v3569, %v3574
      %v3576 = vsub.s32 0, %v3575
      %v3577 = vsel %vm3567, %v3576, %v3575
      %vm3578 = vcmp.lt.s32.totalorder %v3532, 0
      %v3579 = vsub.s32 0, %v3532
      %v3580 = vsel %vm3578, %v3579, %v3532
      %v3581 = vmul.u32.u64.compose %v3580, 3817748708
      %v3582 = vextract.low.u32 %v3581
      %v3583 = vextract.high.u32 %v3581
      %v3584 = vshrl.u32 %v3583, 4
      %v3585 = vmul.u32 %v3584, 18
      %v3586 = vsub.s32 %v3580, %v3585
      %v3587 = vsub.s32 0, %v3586
      %v3588 = vsel %vm3578, %v3587, %v3586
      %vm3589 = vcmp.lt.s32.totalorder %v3533, 0
      %v3590 = vsub.s32 0, %v3533
      %v3591 = vsel %vm3589, %v3590, %v3533
      %v3592 = vmul.u32.u64.compose %v3591, 3817748708
      %v3593 = vextract.low.u32 %v3592
      %v3594 = vextract.high.u32 %v3592
      %v3595 = vshrl.u32 %v3594, 4
      %v3596 = vmul.u32 %v3595, 18
      %v3597 = vsub.s32 %v3591, %v3596
      %v3598 = vsub.s32 0, %v3597
      %v3599 = vsel %vm3589, %v3598, %v3597
      %vm3600 = vcmp.lt.s32.totalorder %v3534, 0
      %v3601 = vsub.s32 0, %v3534
      %v3602 = vsel %vm3600, %v3601, %v3534
      %v3603 = vmul.u32.u64.compose %v3602, 3817748708
      %v3604 = vextract.low.u32 %v3603
      %v3605 = vextract.high.u32 %v3603
      %v3606 = vshrl.u32 %v3605, 4
      %v3607 = vmul.u32 %v3606, 18
      %v3608 = vsub.s32 %v3602, %v3607
      %v3609 = vsub.s32 0, %v3608
      %v3610 = vsel %vm3600, %v3609, %v3608
      %vm3611 = vcmp.lt.s32.totalorder %v3535, 0
      %v3612 = vsub.s32 0, %v3535
      %v3613 = vsel %vm3611, %v3612, %v3535
      %v3614 = vmul.u32.u64.compose %v3613, 3817748708
      %v3615 = vextract.low.u32 %v3614
      %v3616 = vextract.high.u32 %v3614
      %v3617 = vshrl.u32 %v3616, 4
      %v3618 = vmul.u32 %v3617, 18
      %v3619 = vsub.s32 %v3613, %v3618
      %v3620 = vsub.s32 0, %v3619
      %v3621 = vsel %vm3611, %v3620, %v3619
      %vm3622 = vcmp.lt.s32.totalorder %v3536, 0
      %v3623 = vsub.s32 0, %v3536
      %v3624 = vsel %vm3622, %v3623, %v3536
      %v3625 = vmul.u32.u64.compose %v3624, 3817748708
      %v3626 = vextract.low.u32 %v3625
      %v3627 = vextract.high.u32 %v3625
      %v3628 = vshrl.u32 %v3627, 4
      %v3629 = vmul.u32 %v3628, 18
      %v3630 = vsub.s32 %v3624, %v3629
      %v3631 = vsub.s32 0, %v3630
      %v3632 = vsel %vm3622, %v3631, %v3630
      %vm3633 = vcmp.lt.s32.totalorder %v3537, 0
      %v3634 = vsub.s32 0, %v3537
      %v3635 = vsel %vm3633, %v3634, %v3537
      %v3636 = vmul.u32.u64.compose %v3635, 3817748708
      %v3637 = vextract.low.u32 %v3636
      %v3638 = vextract.high.u32 %v3636
      %v3639 = vshrl.u32 %v3638, 4
      %v3640 = vmul.u32 %v3639, 18
      %v3641 = vsub.s32 %v3635, %v3640
      %v3642 = vsub.s32 0, %v3641
      %v3643 = vsel %vm3633, %v3642, %v3641
      %vm3644 = vcmp.lt.s32.totalorder %v3538, 0
      %v3645 = vsub.s32 0, %v3538
      %v3646 = vsel %vm3644, %v3645, %v3538
      %v3647 = vmul.u32.u64.compose %v3646, 3817748708
      %v3648 = vextract.low.u32 %v3647
      %v3649 = vextract.high.u32 %v3647
      %v3650 = vshrl.u32 %v3649, 4
      %v3651 = vmul.u32 %v3650, 18
      %v3652 = vsub.s32 %v3646, %v3651
      %v3653 = vsub.s32 0, %v3652
      %v3654 = vsel %vm3644, %v3653, %v3652
      %vm3655 = vcmp.lt.s32.totalorder %v3539, 0
      %v3656 = vsub.s32 0, %v3539
      %v3657 = vsel %vm3655, %v3656, %v3539
      %v3658 = vmul.u32.u64.compose %v3657, 3817748708
      %v3659 = vextract.low.u32 %v3658
      %v3660 = vextract.high.u32 %v3658
      %v3661 = vshrl.u32 %v3660, 4
      %v3662 = vmul.u32 %v3661, 18
      %v3663 = vsub.s32 %v3657, %v3662
      %v3664 = vsub.s32 0, %v3663
      %v3665 = vsel %vm3655, %v3664, %v3663
      %vm3666 = vcmp.lt.s32.totalorder %v3540, 0
      %v3667 = vsub.s32 0, %v3540
      %v3668 = vsel %vm3666, %v3667, %v3540
      %v3669 = vmul.u32.u64.compose %v3668, 3817748708
      %v3670 = vextract.low.u32 %v3669
      %v3671 = vextract.high.u32 %v3669
      %v3672 = vshrl.u32 %v3671, 4
      %v3673 = vmul.u32 %v3672, 18
      %v3674 = vsub.s32 %v3668, %v3673
      %v3675 = vsub.s32 0, %v3674
      %v3676 = vsel %vm3666, %v3675, %v3674
      %vm3677 = vcmp.lt.s32.totalorder %v3541, 0
      %v3678 = vsub.s32 0, %v3541
      %v3679 = vsel %vm3677, %v3678, %v3541
      %v3680 = vmul.u32.u64.compose %v3679, 3817748708
      %v3681 = vextract.low.u32 %v3680
      %v3682 = vextract.high.u32 %v3680
      %v3683 = vshrl.u32 %v3682, 4
      %v3684 = vmul.u32 %v3683, 18
      %v3685 = vsub.s32 %v3679, %v3684
      %v3686 = vsub.s32 0, %v3685
      %v3687 = vsel %vm3677, %v3686, %v3685
      %vm3688 = vcmp.lt.s32.totalorder %v3542, 0
      %v3689 = vsub.s32 0, %v3542
      %v3690 = vsel %vm3688, %v3689, %v3542
      %v3691 = vmul.u32.u64.compose %v3690, 3817748708
      %v3692 = vextract.low.u32 %v3691
      %v3693 = vextract.high.u32 %v3691
      %v3694 = vshrl.u32 %v3693, 4
      %v3695 = vmul.u32 %v3694, 18
      %v3696 = vsub.s32 %v3690, %v3695
      %v3697 = vsub.s32 0, %v3696
      %v3698 = vsel %vm3688, %v3697, %v3696
      %vm3699 = vcmp.lt.s32.totalorder %v3543, 0
      %v3700 = vsub.s32 0, %v3543
      %v3701 = vsel %vm3699, %v3700, %v3543
      %v3702 = vmul.u32.u64.compose %v3701, 3817748708
      %v3703 = vextract.low.u32 %v3702
      %v3704 = vextract.high.u32 %v3702
      %v3705 = vshrl.u32 %v3704, 4
      %v3706 = vmul.u32 %v3705, 18
      %v3707 = vsub.s32 %v3701, %v3706
      %v3708 = vsub.s32 0, %v3707
      %v3709 = vsel %vm3699, %v3708, %v3707
      %vm3710 = vcmp.lt.s32.totalorder %v3544, 0
      %v3711 = vsub.s32 0, %v3544
      %v3712 = vsel %vm3710, %v3711, %v3544
      %v3713 = vmul.u32.u64.compose %v3712, 3817748708
      %v3714 = vextract.low.u32 %v3713
      %v3715 = vextract.high.u32 %v3713
      %v3716 = vshrl.u32 %v3715, 4
      %v3717 = vmul.u32 %v3716, 18
      %v3718 = vsub.s32 %v3712, %v3717
      %v3719 = vsub.s32 0, %v3718
      %v3720 = vsel %vm3710, %v3719, %v3718
      %vm3721 = vcmp.lt.s32.totalorder %v3545, 0
      %v3722 = vsub.s32 0, %v3545
      %v3723 = vsel %vm3721, %v3722, %v3545
      %v3724 = vmul.u32.u64.compose %v3723, 3817748708
      %v3725 = vextract.low.u32 %v3724
      %v3726 = vextract.high.u32 %v3724
      %v3727 = vshrl.u32 %v3726, 4
      %v3728 = vmul.u32 %v3727, 18
      %v3729 = vsub.s32 %v3723, %v3728
      %v3730 = vsub.s32 0, %v3729
      %v3731 = vsel %vm3721, %v3730, %v3729
      %vm3732 = vcmp.lt.s32.totalorder %v3546, 0
      %v3733 = vsub.s32 0, %v3546
      %v3734 = vsel %vm3732, %v3733, %v3546
      %v3735 = vmul.u32.u64.compose %v3734, 3817748708
      %v3736 = vextract.low.u32 %v3735
      %v3737 = vextract.high.u32 %v3735
      %v3738 = vshrl.u32 %v3737, 4
      %v3739 = vmul.u32 %v3738, 18
      %v3740 = vsub.s32 %v3734, %v3739
      %v3741 = vsub.s32 0, %v3740
      %v3742 = vsel %vm3732, %v3741, %v3740
      %vm3743 = vcmp.lt.s32.totalorder %v3547, 0
      %v3744 = vsub.s32 0, %v3547
      %v3745 = vsel %vm3743, %v3744, %v3547
      %v3746 = vmul.u32.u64.compose %v3745, 3817748708
      %v3747 = vextract.low.u32 %v3746
      %v3748 = vextract.high.u32 %v3746
      %v3749 = vshrl.u32 %v3748, 4
      %v3750 = vmul.u32 %v3749, 18
      %v3751 = vsub.s32 %v3745, %v3750
      %v3752 = vsub.s32 0, %v3751
      %v3753 = vsel %vm3743, %v3752, %v3751
      %vm3754 = vcmp.lt.s32.totalorder %v3548, 0
      %v3755 = vsub.s32 0, %v3548
      %v3756 = vsel %vm3754, %v3755, %v3548
      %v3757 = vmul.u32.u64.compose %v3756, 3817748708
      %v3758 = vextract.low.u32 %v3757
      %v3759 = vextract.high.u32 %v3757
      %v3760 = vshrl.u32 %v3759, 4
      %v3761 = vmul.u32 %v3760, 18
      %v3762 = vsub.s32 %v3756, %v3761
      %v3763 = vsub.s32 0, %v3762
      %v3764 = vsel %vm3754, %v3763, %v3762
      %vm3765 = vcmp.lt.s32.totalorder %v3549, 0
      %v3766 = vsub.s32 0, %v3549
      %v3767 = vsel %vm3765, %v3766, %v3549
      %v3768 = vmul.u32.u64.compose %v3767, 3817748708
      %v3769 = vextract.low.u32 %v3768
      %v3770 = vextract.high.u32 %v3768
      %v3771 = vshrl.u32 %v3770, 4
      %v3772 = vmul.u32 %v3771, 18
      %v3773 = vsub.s32 %v3767, %v3772
      %v3774 = vsub.s32 0, %v3773
      %v3775 = vsel %vm3765, %v3774, %v3773
      %vm3776 = vcmp.lt.s32.totalorder %v3550, 0
      %v3777 = vsub.s32 0, %v3550
      %v3778 = vsel %vm3776, %v3777, %v3550
      %v3779 = vmul.u32.u64.compose %v3778, 3817748708
      %v3780 = vextract.low.u32 %v3779
      %v3781 = vextract.high.u32 %v3779
      %v3782 = vshrl.u32 %v3781, 4
      %v3783 = vmul.u32 %v3782, 18
      %v3784 = vsub.s32 %v3778, %v3783
      %v3785 = vsub.s32 0, %v3784
      %v3786 = vsel %vm3776, %v3785, %v3784
      %vm3787 = vcmp.lt.s32.totalorder %v3551, 0
      %v3788 = vsub.s32 0, %v3551
      %v3789 = vsel %vm3787, %v3788, %v3551
      %v3790 = vmul.u32.u64.compose %v3789, 3817748708
      %v3791 = vextract.low.u32 %v3790
      %v3792 = vextract.high.u32 %v3790
      %v3793 = vshrl.u32 %v3792, 4
      %v3794 = vmul.u32 %v3793, 18
      %v3795 = vsub.s32 %v3789, %v3794
      %v3796 = vsub.s32 0, %v3795
      %v3797 = vsel %vm3787, %v3796, %v3795
      %vm3798 = vcmp.lt.s32.totalorder %v3552, 0
      %v3799 = vsub.s32 0, %v3552
      %v3800 = vsel %vm3798, %v3799, %v3552
      %v3801 = vmul.u32.u64.compose %v3800, 3817748708
      %v3802 = vextract.low.u32 %v3801
      %v3803 = vextract.high.u32 %v3801
      %v3804 = vshrl.u32 %v3803, 4
      %v3805 = vmul.u32 %v3804, 18
      %v3806 = vsub.s32 %v3800, %v3805
      %v3807 = vsub.s32 0, %v3806
      %v3808 = vsel %vm3798, %v3807, %v3806
      %vm3809 = vcmp.lt.s32.totalorder %v3553, 0
      %v3810 = vsub.s32 0, %v3553
      %v3811 = vsel %vm3809, %v3810, %v3553
      %v3812 = vmul.u32.u64.compose %v3811, 3817748708
      %v3813 = vextract.low.u32 %v3812
      %v3814 = vextract.high.u32 %v3812
      %v3815 = vshrl.u32 %v3814, 4
      %v3816 = vmul.u32 %v3815, 18
      %v3817 = vsub.s32 %v3811, %v3816
      %v3818 = vsub.s32 0, %v3817
      %v3819 = vsel %vm3809, %v3818, %v3817
      %vm3820 = vcmp.lt.s32.totalorder %v3554, 0
      %v3821 = vsub.s32 0, %v3554
      %v3822 = vsel %vm3820, %v3821, %v3554
      %v3823 = vmul.u32.u64.compose %v3822, 3817748708
      %v3824 = vextract.low.u32 %v3823
      %v3825 = vextract.high.u32 %v3823
      %v3826 = vshrl.u32 %v3825, 4
      %v3827 = vmul.u32 %v3826, 18
      %v3828 = vsub.s32 %v3822, %v3827
      %v3829 = vsub.s32 0, %v3828
      %v3830 = vsel %vm3820, %v3829, %v3828
      %vm3831 = vcmp.lt.s32.totalorder %v3555, 0
      %v3832 = vsub.s32 0, %v3555
      %v3833 = vsel %vm3831, %v3832, %v3555
      %v3834 = vmul.u32.u64.compose %v3833, 3817748708
      %v3835 = vextract.low.u32 %v3834
      %v3836 = vextract.high.u32 %v3834
      %v3837 = vshrl.u32 %v3836, 4
      %v3838 = vmul.u32 %v3837, 18
      %v3839 = vsub.s32 %v3833, %v3838
      %v3840 = vsub.s32 0, %v3839
      %v3841 = vsel %vm3831, %v3840, %v3839
      %vm3842 = vcmp.lt.s32.totalorder %v3556, 0
      %v3843 = vsub.s32 0, %v3556
      %v3844 = vsel %vm3842, %v3843, %v3556
      %v3845 = vmul.u32.u64.compose %v3844, 3817748708
      %v3846 = vextract.low.u32 %v3845
      %v3847 = vextract.high.u32 %v3845
      %v3848 = vshrl.u32 %v3847, 4
      %v3849 = vmul.u32 %v3848, 18
      %v3850 = vsub.s32 %v3844, %v3849
      %v3851 = vsub.s32 0, %v3850
      %v3852 = vsel %vm3842, %v3851, %v3850
      %vm3853 = vcmp.lt.s32.totalorder %v3557, 0
      %v3854 = vsub.s32 0, %v3557
      %v3855 = vsel %vm3853, %v3854, %v3557
      %v3856 = vmul.u32.u64.compose %v3855, 3817748708
      %v3857 = vextract.low.u32 %v3856
      %v3858 = vextract.high.u32 %v3856
      %v3859 = vshrl.u32 %v3858, 4
      %v3860 = vmul.u32 %v3859, 18
      %v3861 = vsub.s32 %v3855, %v3860
      %v3862 = vsub.s32 0, %v3861
      %v3863 = vsel %vm3853, %v3862, %v3861
      %vm3864 = vcmp.lt.s32.totalorder %v3558, 0
      %v3865 = vsub.s32 0, %v3558
      %v3866 = vsel %vm3864, %v3865, %v3558
      %v3867 = vmul.u32.u64.compose %v3866, 3817748708
      %v3868 = vextract.low.u32 %v3867
      %v3869 = vextract.high.u32 %v3867
      %v3870 = vshrl.u32 %v3869, 4
      %v3871 = vmul.u32 %v3870, 18
      %v3872 = vsub.s32 %v3866, %v3871
      %v3873 = vsub.s32 0, %v3872
      %v3874 = vsel %vm3864, %v3873, %v3872
      %vm3875 = vcmp.lt.s32.totalorder %v3559, 0
      %v3876 = vsub.s32 0, %v3559
      %v3877 = vsel %vm3875, %v3876, %v3559
      %v3878 = vmul.u32.u64.compose %v3877, 3817748708
      %v3879 = vextract.low.u32 %v3878
      %v3880 = vextract.high.u32 %v3878
      %v3881 = vshrl.u32 %v3880, 4
      %v3882 = vmul.u32 %v3881, 18
      %v3883 = vsub.s32 %v3877, %v3882
      %v3884 = vsub.s32 0, %v3883
      %v3885 = vsel %vm3875, %v3884, %v3883
      %vm3886 = vcmp.lt.s32.totalorder %v3560, 0
      %v3887 = vsub.s32 0, %v3560
      %v3888 = vsel %vm3886, %v3887, %v3560
      %v3889 = vmul.u32.u64.compose %v3888, 3817748708
      %v3890 = vextract.low.u32 %v3889
      %v3891 = vextract.high.u32 %v3889
      %v3892 = vshrl.u32 %v3891, 4
      %v3893 = vmul.u32 %v3892, 18
      %v3894 = vsub.s32 %v3888, %v3893
      %v3895 = vsub.s32 0, %v3894
      %v3896 = vsel %vm3886, %v3895, %v3894
      %vm3897 = vcmp.lt.s32.totalorder %v3561, 0
      %v3898 = vsub.s32 0, %v3561
      %v3899 = vsel %vm3897, %v3898, %v3561
      %v3900 = vmul.u32.u64.compose %v3899, 3817748708
      %v3901 = vextract.low.u32 %v3900
      %v3902 = vextract.high.u32 %v3900
      %v3903 = vshrl.u32 %v3902, 4
      %v3904 = vmul.u32 %v3903, 18
      %v3905 = vsub.s32 %v3899, %v3904
      %v3906 = vsub.s32 0, %v3905
      %v3907 = vsel %vm3897, %v3906, %v3905
      %vm3908 = vcmp.lt.s32.totalorder %v3562, 0
      %v3909 = vsub.s32 0, %v3562
      %v3910 = vsel %vm3908, %v3909, %v3562
      %v3911 = vmul.u32.u64.compose %v3910, 3817748708
      %v3912 = vextract.low.u32 %v3911
      %v3913 = vextract.high.u32 %v3911
      %v3914 = vshrl.u32 %v3913, 4
      %v3915 = vmul.u32 %v3914, 18
      %v3916 = vsub.s32 %v3910, %v3915
      %v3917 = vsub.s32 0, %v3916
      %v3918 = vsel %vm3908, %v3917, %v3916
      %vm3919 = vcmp.lt.s32.totalorder %v3563, 0
      %v3920 = vsub.s32 0, %v3563
      %v3921 = vsel %vm3919, %v3920, %v3563
      %v3922 = vmul.u32.u64.compose %v3921, 3817748708
      %v3923 = vextract.low.u32 %v3922
      %v3924 = vextract.high.u32 %v3922
      %v3925 = vshrl.u32 %v3924, 4
      %v3926 = vmul.u32 %v3925, 18
      %v3927 = vsub.s32 %v3921, %v3926
      %v3928 = vsub.s32 0, %v3927
      %v3929 = vsel %vm3919, %v3928, %v3927
      %vm3930 = vcmp.lt.s32.totalorder %v3564, 0
      %v3931 = vsub.s32 0, %v3564
      %v3932 = vsel %vm3930, %v3931, %v3564
      %v3933 = vmul.u32.u64.compose %v3932, 3817748708
      %v3934 = vextract.low.u32 %v3933
      %v3935 = vextract.high.u32 %v3933
      %v3936 = vshrl.u32 %v3935, 4
      %v3937 = vmul.u32 %v3936, 18
      %v3938 = vsub.s32 %v3932, %v3937
      %v3939 = vsub.s32 0, %v3938
      %v3940 = vsel %vm3930, %v3939, %v3938
      %vm3941 = vcmp.lt.s32.totalorder %v3565, 0
      %v3942 = vsub.s32 0, %v3565
      %v3943 = vsel %vm3941, %v3942, %v3565
      %v3944 = vmul.u32.u64.compose %v3943, 3817748708
      %v3945 = vextract.low.u32 %v3944
      %v3946 = vextract.high.u32 %v3944
      %v3947 = vshrl.u32 %v3946, 4
      %v3948 = vmul.u32 %v3947, 18
      %v3949 = vsub.s32 %v3943, %v3948
      %v3950 = vsub.s32 0, %v3949
      %v3951 = vsel %vm3941, %v3950, %v3949
      %vm3952 = vcmp.lt.s32.totalorder %v3566, 0
      %v3953 = vsub.s32 0, %v3566
      %v3954 = vsel %vm3952, %v3953, %v3566
      %v3955 = vmul.u32.u64.compose %v3954, 3817748708
      %v3956 = vextract.low.u32 %v3955
      %v3957 = vextract.high.u32 %v3955
      %v3958 = vshrl.u32 %v3957, 4
      %v3959 = vmul.u32 %v3958, 18
      %v3960 = vsub.s32 %v3954, %v3959
      %v3961 = vsub.s32 0, %v3960
      %v3962 = vsel %vm3952, %v3961, %v3960
      %vm3963 = vcmp.ne.s32.totalorder %v3577, 0
      %vm3964 = vcmp.ne.s32.totalorder %v3588, 0
      %vm3965 = vcmp.ne.s32.totalorder %v3599, 0
      %vm3966 = vcmp.ne.s32.totalorder %v3610, 0
      %vm3967 = vcmp.ne.s32.totalorder %v3621, 0
      %vm3968 = vcmp.ne.s32.totalorder %v3632, 0
      %vm3969 = vcmp.ne.s32.totalorder %v3643, 0
      %vm3970 = vcmp.ne.s32.totalorder %v3654, 0
      %vm3971 = vcmp.ne.s32.totalorder %v3665, 0
      %vm3972 = vcmp.ne.s32.totalorder %v3676, 0
      %vm3973 = vcmp.ne.s32.totalorder %v3687, 0
      %vm3974 = vcmp.ne.s32.totalorder %v3698, 0
      %vm3975 = vcmp.ne.s32.totalorder %v3709, 0
      %vm3976 = vcmp.ne.s32.totalorder %v3720, 0
      %vm3977 = vcmp.ne.s32.totalorder %v3731, 0
      %vm3978 = vcmp.ne.s32.totalorder %v3742, 0
      %vm3979 = vcmp.ne.s32.totalorder %v3753, 0
      %vm3980 = vcmp.ne.s32.totalorder %v3764, 0
      %vm3981 = vcmp.ne.s32.totalorder %v3775, 0
      %vm3982 = vcmp.ne.s32.totalorder %v3786, 0
      %vm3983 = vcmp.ne.s32.totalorder %v3797, 0
      %vm3984 = vcmp.ne.s32.totalorder %v3808, 0
      %vm3985 = vcmp.ne.s32.totalorder %v3819, 0
      %vm3986 = vcmp.ne.s32.totalorder %v3830, 0
      %vm3987 = vcmp.ne.s32.totalorder %v3841, 0
      %vm3988 = vcmp.ne.s32.totalorder %v3852, 0
      %vm3989 = vcmp.ne.s32.totalorder %v3863, 0
      %vm3990 = vcmp.ne.s32.totalorder %v3874, 0
      %vm3991 = vcmp.ne.s32.totalorder %v3885, 0
      %vm3992 = vcmp.ne.s32.totalorder %v3896, 0
      %vm3993 = vcmp.ne.s32.totalorder %v3907, 0
      %vm3994 = vcmp.ne.s32.totalorder %v3918, 0
      %vm3995 = vcmp.ne.s32.totalorder %v3929, 0
      %vm3996 = vcmp.ne.s32.totalorder %v3940, 0
      %vm3997 = vcmp.ne.s32.totalorder %v3951, 0
      %vm3998 = vcmp.ne.s32.totalorder %v3962, 0
      %vm3999 = vcmp.lt.s32.totalorder %v3577, 0
      %vm4000 = vcmp.lt.s32.totalorder %v3588, 0
      %vm4001 = vcmp.lt.s32.totalorder %v3599, 0
      %vm4002 = vcmp.lt.s32.totalorder %v3610, 0
      %vm4003 = vcmp.lt.s32.totalorder %v3621, 0
      %vm4004 = vcmp.lt.s32.totalorder %v3632, 0
      %vm4005 = vcmp.lt.s32.totalorder %v3643, 0
      %vm4006 = vcmp.lt.s32.totalorder %v3654, 0
      %vm4007 = vcmp.lt.s32.totalorder %v3665, 0
      %vm4008 = vcmp.lt.s32.totalorder %v3676, 0
      %vm4009 = vcmp.lt.s32.totalorder %v3687, 0
      %vm4010 = vcmp.lt.s32.totalorder %v3698, 0
      %vm4011 = vcmp.lt.s32.totalorder %v3709, 0
      %vm4012 = vcmp.lt.s32.totalorder %v3720, 0
      %vm4013 = vcmp.lt.s32.totalorder %v3731, 0
      %vm4014 = vcmp.lt.s32.totalorder %v3742, 0
      %vm4015 = vcmp.lt.s32.totalorder %v3753, 0
      %vm4016 = vcmp.lt.s32.totalorder %v3764, 0
      %vm4017 = vcmp.lt.s32.totalorder %v3775, 0
      %vm4018 = vcmp.lt.s32.totalorder %v3786, 0
      %vm4019 = vcmp.lt.s32.totalorder %v3797, 0
      %vm4020 = vcmp.lt.s32.totalorder %v3808, 0
      %vm4021 = vcmp.lt.s32.totalorder %v3819, 0
      %vm4022 = vcmp.lt.s32.totalorder %v3830, 0
      %vm4023 = vcmp.lt.s32.totalorder %v3841, 0
      %vm4024 = vcmp.lt.s32.totalorder %v3852, 0
      %vm4025 = vcmp.lt.s32.totalorder %v3863, 0
      %vm4026 = vcmp.lt.s32.totalorder %v3874, 0
      %vm4027 = vcmp.lt.s32.totalorder %v3885, 0
      %vm4028 = vcmp.lt.s32.totalorder %v3896, 0
      %vm4029 = vcmp.lt.s32.totalorder %v3907, 0
      %vm4030 = vcmp.lt.s32.totalorder %v3918, 0
      %vm4031 = vcmp.lt.s32.totalorder %v3929, 0
      %vm4032 = vcmp.lt.s32.totalorder %v3940, 0
      %vm4033 = vcmp.lt.s32.totalorder %v3951, 0
      %vm4034 = vcmp.lt.s32.totalorder %v3962, 0
      %vm4035 = vmand %vm3999, %vm3963
      %vm4036 = vmand %vm4000, %vm3964
      %vm4037 = vmand %vm4001, %vm3965
      %vm4038 = vmand %vm4002, %vm3966
      %vm4039 = vmand %vm4003, %vm3967
      %vm4040 = vmand %vm4004, %vm3968
      %vm4041 = vmand %vm4005, %vm3969
      %vm4042 = vmand %vm4006, %vm3970
      %vm4043 = vmand %vm4007, %vm3971
      %vm4044 = vmand %vm4008, %vm3972
      %vm4045 = vmand %vm4009, %vm3973
      %vm4046 = vmand %vm4010, %vm3974
      %vm4047 = vmand %vm4011, %vm3975
      %vm4048 = vmand %vm4012, %vm3976
      %vm4049 = vmand %vm4013, %vm3977
      %vm4050 = vmand %vm4014, %vm3978
      %vm4051 = vmand %vm4015, %vm3979
      %vm4052 = vmand %vm4016, %vm3980
      %vm4053 = vmand %vm4017, %vm3981
      %vm4054 = vmand %vm4018, %vm3982
      %vm4055 = vmand %vm4019, %vm3983
      %vm4056 = vmand %vm4020, %vm3984
      %vm4057 = vmand %vm4021, %vm3985
      %vm4058 = vmand %vm4022, %vm3986
      %vm4059 = vmand %vm4023, %vm3987
      %vm4060 = vmand %vm4024, %vm3988
      %vm4061 = vmand %vm4025, %vm3989
      %vm4062 = vmand %vm4026, %vm3990
      %vm4063 = vmand %vm4027, %vm3991
      %vm4064 = vmand %vm4028, %vm3992
      %vm4065 = vmand %vm4029, %vm3993
      %vm4066 = vmand %vm4030, %vm3994
      %vm4067 = vmand %vm4031, %vm3995
      %vm4068 = vmand %vm4032, %vm3996
      %vm4069 = vmand %vm4033, %vm3997
      %vm4070 = vmand %vm4034, %vm3998
      %v4071 = vadd.s32 %v3577, 18
      %v4072 = vadd.s32 %v3588, 18
      %v4073 = vadd.s32 %v3599, 18
      %v4074 = vadd.s32 %v3610, 18
      %v4075 = vadd.s32 %v3621, 18
      %v4076 = vadd.s32 %v3632, 18
      %v4077 = vadd.s32 %v3643, 18
      %v4078 = vadd.s32 %v3654, 18
      %v4079 = vadd.s32 %v3665, 18
      %v4080 = vadd.s32 %v3676, 18
      %v4081 = vadd.s32 %v3687, 18
      %v4082 = vadd.s32 %v3698, 18
      %v4083 = vadd.s32 %v3709, 18
      %v4084 = vadd.s32 %v3720, 18
      %v4085 = vadd.s32 %v3731, 18
      %v4086 = vadd.s32 %v3742, 18
      %v4087 = vadd.s32 %v3753, 18
      %v4088 = vadd.s32 %v3764, 18
      %v4089 = vadd.s32 %v3775, 18
      %v4090 = vadd.s32 %v3786, 18
      %v4091 = vadd.s32 %v3797, 18
      %v4092 = vadd.s32 %v3808, 18
      %v4093 = vadd.s32 %v3819, 18
      %v4094 = vadd.s32 %v3830, 18
      %v4095 = vadd.s32 %v3841, 18
      %v4096 = vadd.s32 %v3852, 18
      %v4097 = vadd.s32 %v3863, 18
      %v4098 = vadd.s32 %v3874, 18
      %v4099 = vadd.s32 %v3885, 18
      %v4100 = vadd.s32 %v3896, 18
      %v4101 = vadd.s32 %v3907, 18
      %v4102 = vadd.s32 %v3918, 18
      %v4103 = vadd.s32 %v3929, 18
      %v4104 = vadd.s32 %v3940, 18
      %v4105 = vadd.s32 %v3951, 18
      %v4106 = vadd.s32 %v3962, 18
      %v4107 = vsel %vm4035, %v4071, %v3577
      %v4108 = vsel %vm4036, %v4072, %v3588
      %v4109 = vsel %vm4037, %v4073, %v3599
      %v4110 = vsel %vm4038, %v4074, %v3610
      %v4111 = vsel %vm4039, %v4075, %v3621
      %v4112 = vsel %vm4040, %v4076, %v3632
      %v4113 = vsel %vm4041, %v4077, %v3643
      %v4114 = vsel %vm4042, %v4078, %v3654
      %v4115 = vsel %vm4043, %v4079, %v3665
      %v4116 = vsel %vm4044, %v4080, %v3676
      %v4117 = vsel %vm4045, %v4081, %v3687
      %v4118 = vsel %vm4046, %v4082, %v3698
      %v4119 = vsel %vm4047, %v4083, %v3709
      %v4120 = vsel %vm4048, %v4084, %v3720
      %v4121 = vsel %vm4049, %v4085, %v3731
      %v4122 = vsel %vm4050, %v4086, %v3742
      %v4123 = vsel %vm4051, %v4087, %v3753
      %v4124 = vsel %vm4052, %v4088, %v3764
      %v4125 = vsel %vm4053, %v4089, %v3775
      %v4126 = vsel %vm4054, %v4090, %v3786
      %v4127 = vsel %vm4055, %v4091, %v3797
      %v4128 = vsel %vm4056, %v4092, %v3808
      %v4129 = vsel %vm4057, %v4093, %v3819
      %v4130 = vsel %vm4058, %v4094, %v3830
      %v4131 = vsel %vm4059, %v4095, %v3841
      %v4132 = vsel %vm4060, %v4096, %v3852
      %v4133 = vsel %vm4061, %v4097, %v3863
      %v4134 = vsel %vm4062, %v4098, %v3874
      %v4135 = vsel %vm4063, %v4099, %v3885
      %v4136 = vsel %vm4064, %v4100, %v3896
      %v4137 = vsel %vm4065, %v4101, %v3907
      %v4138 = vsel %vm4066, %v4102, %v3918
      %v4139 = vsel %vm4067, %v4103, %v3929
      %v4140 = vsel %vm4068, %v4104, %v3940
      %v4141 = vsel %vm4069, %v4105, %v3951
      %v4142 = vsel %vm4070, %v4106, %v3962
      %vm4143 = vcmp.ge.s32.totalorder %v4107, 1
      %vm4144 = vcmp.ge.s32.totalorder %v4108, 1
      %vm4145 = vcmp.ge.s32.totalorder %v4109, 1
      %vm4146 = vcmp.ge.s32.totalorder %v4110, 1
      %vm4147 = vcmp.ge.s32.totalorder %v4111, 1
      %vm4148 = vcmp.ge.s32.totalorder %v4112, 1
      %vm4149 = vcmp.ge.s32.totalorder %v4113, 1
      %vm4150 = vcmp.ge.s32.totalorder %v4114, 1
      %vm4151 = vcmp.ge.s32.totalorder %v4115, 1
      %vm4152 = vcmp.ge.s32.totalorder %v4116, 1
      %vm4153 = vcmp.ge.s32.totalorder %v4117, 1
      %vm4154 = vcmp.ge.s32.totalorder %v4118, 1
      %vm4155 = vcmp.ge.s32.totalorder %v4119, 1
      %vm4156 = vcmp.ge.s32.totalorder %v4120, 1
      %vm4157 = vcmp.ge.s32.totalorder %v4121, 1
      %vm4158 = vcmp.ge.s32.totalorder %v4122, 1
      %vm4159 = vcmp.ge.s32.totalorder %v4123, 1
      %vm4160 = vcmp.ge.s32.totalorder %v4124, 1
      %vm4161 = vcmp.ge.s32.totalorder %v4125, 1
      %vm4162 = vcmp.ge.s32.totalorder %v4126, 1
      %vm4163 = vcmp.ge.s32.totalorder %v4127, 1
      %vm4164 = vcmp.ge.s32.totalorder %v4128, 1
      %vm4165 = vcmp.ge.s32.totalorder %v4129, 1
      %vm4166 = vcmp.ge.s32.totalorder %v4130, 1
      %vm4167 = vcmp.ge.s32.totalorder %v4131, 1
      %vm4168 = vcmp.ge.s32.totalorder %v4132, 1
      %vm4169 = vcmp.ge.s32.totalorder %v4133, 1
      %vm4170 = vcmp.ge.s32.totalorder %v4134, 1
      %vm4171 = vcmp.ge.s32.totalorder %v4135, 1
      %vm4172 = vcmp.ge.s32.totalorder %v4136, 1
      %vm4173 = vcmp.ge.s32.totalorder %v4137, 1
      %vm4174 = vcmp.ge.s32.totalorder %v4138, 1
      %vm4175 = vcmp.ge.s32.totalorder %v4139, 1
      %vm4176 = vcmp.ge.s32.totalorder %v4140, 1
      %vm4177 = vcmp.ge.s32.totalorder %v4141, 1
      %vm4178 = vcmp.ge.s32.totalorder %v4142, 1
      %vm4179 = vcmp.le.s32.totalorder %v4107, 16
      %vm4180 = vcmp.le.s32.totalorder %v4108, 16
      %vm4181 = vcmp.le.s32.totalorder %v4109, 16
      %vm4182 = vcmp.le.s32.totalorder %v4110, 16
      %vm4183 = vcmp.le.s32.totalorder %v4111, 16
      %vm4184 = vcmp.le.s32.totalorder %v4112, 16
      %vm4185 = vcmp.le.s32.totalorder %v4113, 16
      %vm4186 = vcmp.le.s32.totalorder %v4114, 16
      %vm4187 = vcmp.le.s32.totalorder %v4115, 16
      %vm4188 = vcmp.le.s32.totalorder %v4116, 16
      %vm4189 = vcmp.le.s32.totalorder %v4117, 16
      %vm4190 = vcmp.le.s32.totalorder %v4118, 16
      %vm4191 = vcmp.le.s32.totalorder %v4119, 16
      %vm4192 = vcmp.le.s32.totalorder %v4120, 16
      %vm4193 = vcmp.le.s32.totalorder %v4121, 16
      %vm4194 = vcmp.le.s32.totalorder %v4122, 16
      %vm4195 = vcmp.le.s32.totalorder %v4123, 16
      %vm4196 = vcmp.le.s32.totalorder %v4124, 16
      %vm4197 = vcmp.le.s32.totalorder %v4125, 16
      %vm4198 = vcmp.le.s32.totalorder %v4126, 16
      %vm4199 = vcmp.le.s32.totalorder %v4127, 16
      %vm4200 = vcmp.le.s32.totalorder %v4128, 16
      %vm4201 = vcmp.le.s32.totalorder %v4129, 16
      %vm4202 = vcmp.le.s32.totalorder %v4130, 16
      %vm4203 = vcmp.le.s32.totalorder %v4131, 16
      %vm4204 = vcmp.le.s32.totalorder %v4132, 16
      %vm4205 = vcmp.le.s32.totalorder %v4133, 16
      %vm4206 = vcmp.le.s32.totalorder %v4134, 16
      %vm4207 = vcmp.le.s32.totalorder %v4135, 16
      %vm4208 = vcmp.le.s32.totalorder %v4136, 16
      %vm4209 = vcmp.le.s32.totalorder %v4137, 16
      %vm4210 = vcmp.le.s32.totalorder %v4138, 16
      %vm4211 = vcmp.le.s32.totalorder %v4139, 16
      %vm4212 = vcmp.le.s32.totalorder %v4140, 16
      %vm4213 = vcmp.le.s32.totalorder %v4141, 16
      %vm4214 = vcmp.le.s32.totalorder %v4142, 16
      %vm4215 = vmand %vm4143, %vm4179
      %vm4216 = vmand %vm4144, %vm4180
      %vm4217 = vmand %vm4145, %vm4181
      %vm4218 = vmand %vm4146, %vm4182
      %vm4219 = vmand %vm4147, %vm4183
      %vm4220 = vmand %vm4148, %vm4184
      %vm4221 = vmand %vm4149, %vm4185
      %vm4222 = vmand %vm4150, %vm4186
      %vm4223 = vmand %vm4151, %vm4187
      %vm4224 = vmand %vm4152, %vm4188
      %vm4225 = vmand %vm4153, %vm4189
      %vm4226 = vmand %vm4154, %vm4190
      %vm4227 = vmand %vm4155, %vm4191
      %vm4228 = vmand %vm4156, %vm4192
      %vm4229 = vmand %vm4157, %vm4193
      %vm4230 = vmand %vm4158, %vm4194
      %vm4231 = vmand %vm4159, %vm4195
      %vm4232 = vmand %vm4160, %vm4196
      %vm4233 = vmand %vm4161, %vm4197
      %vm4234 = vmand %vm4162, %vm4198
      %vm4235 = vmand %vm4163, %vm4199
      %vm4236 = vmand %vm4164, %vm4200
      %vm4237 = vmand %vm4165, %vm4201
      %vm4238 = vmand %vm4166, %vm4202
      %vm4239 = vmand %vm4167, %vm4203
      %vm4240 = vmand %vm4168, %vm4204
      %vm4241 = vmand %vm4169, %vm4205
      %vm4242 = vmand %vm4170, %vm4206
      %vm4243 = vmand %vm4171, %vm4207
      %vm4244 = vmand %vm4172, %vm4208
      %vm4245 = vmand %vm4173, %vm4209
      %vm4246 = vmand %vm4174, %vm4210
      %vm4247 = vmand %vm4175, %vm4211
      %vm4248 = vmand %vm4176, %vm4212
      %vm4249 = vmand %vm4177, %vm4213
      %vm4250 = vmand %vm4178, %vm4214
      %v4251 = vsel %vm4215, 1, 0
      %v4252 = vsel %vm4216, 1, 0
      %v4253 = vsel %vm4217, 1, 0
      %v4254 = vsel %vm4218, 1, 0
      %v4255 = vsel %vm4219, 1, 0
      %v4256 = vsel %vm4220, 1, 0
      %v4257 = vsel %vm4221, 1, 0
      %v4258 = vsel %vm4222, 1, 0
      %v4259 = vsel %vm4223, 1, 0
      %v4260 = vsel %vm4224, 1, 0
      %v4261 = vsel %vm4225, 1, 0
      %v4262 = vsel %vm4226, 1, 0
      %v4263 = vsel %vm4227, 1, 0
      %v4264 = vsel %vm4228, 1, 0
      %v4265 = vsel %vm4229, 1, 0
      %v4266 = vsel %vm4230, 1, 0
      %v4267 = vsel %vm4231, 1, 0
      %v4268 = vsel %vm4232, 1, 0
      %v4269 = vsel %vm4233, 1, 0
      %v4270 = vsel %vm4234, 1, 0
      %v4271 = vsel %vm4235, 1, 0
      %v4272 = vsel %vm4236, 1, 0
      %v4273 = vsel %vm4237, 1, 0
      %v4274 = vsel %vm4238, 1, 0
      %v4275 = vsel %vm4239, 1, 0
      %v4276 = vsel %vm4240, 1, 0
      %v4277 = vsel %vm4241, 1, 0
      %v4278 = vsel %vm4242, 1, 0
      %v4279 = vsel %vm4243, 1, 0
      %v4280 = vsel %vm4244, 1, 0
      %v4281 = vsel %vm4245, 1, 0
      %v4282 = vsel %vm4246, 1, 0
      %v4283 = vsel %vm4247, 1, 0
      %v4284 = vsel %vm4248, 1, 0
      %v4285 = vsel %vm4249, 1, 0
      %v4286 = vsel %vm4250, 1, 0
      %v4287 = vcvt.s32.f32 %v4251
      %v4288 = vcvt.s32.f32 %v4252
      %v4289 = vcvt.s32.f32 %v4253
      %v4290 = vcvt.s32.f32 %v4254
      %v4291 = vcvt.s32.f32 %v4255
      %v4292 = vcvt.s32.f32 %v4256
      %v4293 = vcvt.s32.f32 %v4257
      %v4294 = vcvt.s32.f32 %v4258
      %v4295 = vcvt.s32.f32 %v4259
      %v4296 = vcvt.s32.f32 %v4260
      %v4297 = vcvt.s32.f32 %v4261
      %v4298 = vcvt.s32.f32 %v4262
      %v4299 = vcvt.s32.f32 %v4263
      %v4300 = vcvt.s32.f32 %v4264
      %v4301 = vcvt.s32.f32 %v4265
      %v4302 = vcvt.s32.f32 %v4266
      %v4303 = vcvt.s32.f32 %v4267
      %v4304 = vcvt.s32.f32 %v4268
      %v4305 = vcvt.s32.f32 %v4269
      %v4306 = vcvt.s32.f32 %v4270
      %v4307 = vcvt.s32.f32 %v4271
      %v4308 = vcvt.s32.f32 %v4272
      %v4309 = vcvt.s32.f32 %v4273
      %v4310 = vcvt.s32.f32 %v4274
      %v4311 = vcvt.s32.f32 %v4275
      %v4312 = vcvt.s32.f32 %v4276
      %v4313 = vcvt.s32.f32 %v4277
      %v4314 = vcvt.s32.f32 %v4278
      %v4315 = vcvt.s32.f32 %v4279
      %v4316 = vcvt.s32.f32 %v4280
      %v4317 = vcvt.s32.f32 %v4281
      %v4318 = vcvt.s32.f32 %v4282
      %v4319 = vcvt.s32.f32 %v4283
      %v4320 = vcvt.s32.f32 %v4284
      %v4321 = vcvt.s32.f32 %v4285
      %v4322 = vcvt.s32.f32 %v4286
      %v4323 = vmul.f32 %v3420, %v4287
      %v4324 = vmul.f32 %v3421, %v4288
      %v4325 = vmul.f32 %v3422, %v4289
      %v4326 = vmul.f32 %v3423, %v4290
      %v4327 = vmul.f32 %v3424, %v4291
      %v4328 = vmul.f32 %v3425, %v4292
      %v4329 = vmul.f32 %v3426, %v4293
      %v4330 = vmul.f32 %v3427, %v4294
      %v4331 = vmul.f32 %v3428, %v4295
      %v4332 = vmul.f32 %v3429, %v4296
      %v4333 = vmul.f32 %v3430, %v4297
      %v4334 = vmul.f32 %v3431, %v4298
      %v4335 = vmul.f32 %v3432, %v4299
      %v4336 = vmul.f32 %v3433, %v4300
      %v4337 = vmul.f32 %v3434, %v4301
      %v4338 = vmul.f32 %v3435, %v4302
      %v4339 = vmul.f32 %v3436, %v4303
      %v4340 = vmul.f32 %v3437, %v4304
      %v4341 = vmul.f32 %v3438, %v4305
      %v4342 = vmul.f32 %v3439, %v4306
      %v4343 = vmul.f32 %v3440, %v4307
      %v4344 = vmul.f32 %v3441, %v4308
      %v4345 = vmul.f32 %v3442, %v4309
      %v4346 = vmul.f32 %v3443, %v4310
      %v4347 = vmul.f32 %v3444, %v4311
      %v4348 = vmul.f32 %v3445, %v4312
      %v4349 = vmul.f32 %v3446, %v4313
      %v4350 = vmul.f32 %v3447, %v4314
      %v4351 = vmul.f32 %v3448, %v4315
      %v4352 = vmul.f32 %v3449, %v4316
      %v4353 = vmul.f32 %v3450, %v4317
      %v4354 = vmul.f32 %v3451, %v4318
      %v4355 = vmul.f32 %v3452, %v4319
      %v4356 = vmul.f32 %v3453, %v4320
      %v4357 = vmul.f32 %v3454, %v4321
      %v4358 = vmul.f32 %v3455, %v4322
      %p4359 = scmp.eq.s32.totalorder %s21, 0
      %p4360 = scmp.eq.s32.totalorder %s22, 0
      %p4361 = pnand %p4359, %p4360
      %p4362 = pneg %p4361
      // Predicated region
      $region37: #{unet_encoder_forward.10} parent=35 // pred_check
        _
      $region38: #{unet_encoder_forward.10} parent=35 // pred_check_branch
        %4364 = sbr.rel (%p4361) target = $region40
      $region39: #{unet_encoder_forward.10} parent=35 // pred_region
        %4365 = vst [vmem:[%s5] sm:$0x3] 0.0
      $region40: #{unet_encoder_forward.10} parent=35 // pred_fallthru
        _
      %v4366 = vld [vmem:[%s5] sm:$0x3]
      %v4367 = vadd.f32 %v4323, %v4324
      %v4368 = vadd.f32 %v4367, %v4325
      %v4369 = vadd.f32 %v4368, %v4326
      %v4370 = vadd.f32 %v4369, %v4327
      %v4371 = vadd.f32 %v4370, %v4328
      %v4372 = vadd.f32 %v4371, %v4329
      %v4373 = vadd.f32 %v4372, %v4330
      %v4374 = vadd.f32 %v4373, %v4331
      %v4375 = vadd.f32 %v4374, %v4332
      %v4376 = vadd.f32 %v4375, %v4333
      %v4377 = vadd.f32 %v4376, %v4334
      %v4378 = vadd.f32 %v4377, %v4335
      %v4379 = vadd.f32 %v4378, %v4336
      %v4380 = vadd.f32 %v4379, %v4337
      %v4381 = vadd.f32 %v4380, %v4338
      %v4382 = vadd.f32 %v4381, %v4339
      %v4383 = vadd.f32 %v4382, %v4340
      %v4384 = vadd.f32 %v4383, %v4341
      %v4385 = vadd.f32 %v4384, %v4342
      %v4386 = vadd.f32 %v4385, %v4343
      %v4387 = vadd.f32 %v4386, %v4344
      %v4388 = vadd.f32 %v4387, %v4345
      %v4389 = vadd.f32 %v4388, %v4346
      %v4390 = vadd.f32 %v4389, %v4347
      %v4391 = vadd.f32 %v4390, %v4348
      %v4392 = vadd.f32 %v4391, %v4349
      %v4393 = vadd.f32 %v4392, %v4350
      %v4394 = vadd.f32 %v4393, %v4351
      %v4395 = vadd.f32 %v4394, %v4352
      %v4396 = vadd.f32 %v4395, %v4353
      %v4397 = vadd.f32 %v4396, %v4354
      %v4398 = vadd.f32 %v4397, %v4355
      %v4399 = vadd.f32 %v4398, %v4356
      %v4400 = vadd.f32 %v4399, %v4357
      %v4401 = vadd.f32 %v4400, %v4358
      %v4402 = vrot.slane %v4401, 4
      %v4403 = vadd.f32 %v4401, %v4402
      %v4404 = vrot.slane %v4403, 2
      %v4405 = vadd.f32 %v4403, %v4404
      %v4406 = vrot.slane %v4405, 1
      %v4407 = vadd.f32 %v4405, %v4406
      %v4408 = vmul.f32 %v4323, %v4323
      %v4409 = vmul.f32 %v4324, %v4324
      %v4410 = vmul.f32 %v4325, %v4325
      %v4411 = vmul.f32 %v4326, %v4326
      %v4412 = vmul.f32 %v4327, %v4327
      %v4413 = vmul.f32 %v4328, %v4328
      %v4414 = vmul.f32 %v4329, %v4329
      %v4415 = vmul.f32 %v4330, %v4330
      %v4416 = vmul.f32 %v4331, %v4331
      %v4417 = vmul.f32 %v4332, %v4332
      %v4418 = vmul.f32 %v4333, %v4333
      %v4419 = vmul.f32 %v4334, %v4334
      %v4420 = vmul.f32 %v4335, %v4335
      %v4421 = vmul.f32 %v4336, %v4336
      %v4422 = vmul.f32 %v4337, %v4337
      %v4423 = vmul.f32 %v4338, %v4338
      %v4424 = vmul.f32 %v4339, %v4339
      %v4425 = vmul.f32 %v4340, %v4340
      %v4426 = vmul.f32 %v4341, %v4341
      %v4427 = vmul.f32 %v4342, %v4342
      %v4428 = vmul.f32 %v4343, %v4343
      %v4429 = vmul.f32 %v4344, %v4344
      %v4430 = vmul.f32 %v4345, %v4345
      %v4431 = vmul.f32 %v4346, %v4346
      %v4432 = vmul.f32 %v4347, %v4347
      %v4433 = vmul.f32 %v4348, %v4348
      %v4434 = vmul.f32 %v4349, %v4349
      %v4435 = vmul.f32 %v4350, %v4350
      %v4436 = vmul.f32 %v4351, %v4351
      %v4437 = vmul.f32 %v4352, %v4352
      %v4438 = vmul.f32 %v4353, %v4353
      %v4439 = vmul.f32 %v4354, %v4354
      %v4440 = vmul.f32 %v4355, %v4355
      %v4441 = vmul.f32 %v4356, %v4356
      %v4442 = vmul.f32 %v4357, %v4357
      %v4443 = vmul.f32 %v4358, %v4358
      %v4444 = vadd.f32 %v4408, %v4409
      %v4445 = vadd.f32 %v4444, %v4410
      %v4446 = vadd.f32 %v4445, %v4411
      %v4447 = vadd.f32 %v4446, %v4412
      %v4448 = vadd.f32 %v4447, %v4413
      %v4449 = vadd.f32 %v4448, %v4414
      %v4450 = vadd.f32 %v4449, %v4415
      %v4451 = vadd.f32 %v4450, %v4416
      %v4452 = vadd.f32 %v4451, %v4417
      %v4453 = vadd.f32 %v4452, %v4418
      %v4454 = vadd.f32 %v4453, %v4419
      %v4455 = vadd.f32 %v4454, %v4420
      %v4456 = vadd.f32 %v4455, %v4421
      %v4457 = vadd.f32 %v4456, %v4422
      %v4458 = vadd.f32 %v4457, %v4423
      %v4459 = vadd.f32 %v4458, %v4424
      %v4460 = vadd.f32 %v4459, %v4425
      %v4461 = vadd.f32 %v4460, %v4426
      %v4462 = vadd.f32 %v4461, %v4427
      %v4463 = vadd.f32 %v4462, %v4428
      %v4464 = vadd.f32 %v4463, %v4429
      %v4465 = vadd.f32 %v4464, %v4430
      %v4466 = vadd.f32 %v4465, %v4431
      %v4467 = vadd.f32 %v4466, %v4432
      %v4468 = vadd.f32 %v4467, %v4433
      %v4469 = vadd.f32 %v4468, %v4434
      %v4470 = vadd.f32 %v4469, %v4435
      %v4471 = vadd.f32 %v4470, %v4436
      %v4472 = vadd.f32 %v4471, %v4437
      %v4473 = vadd.f32 %v4472, %v4438
      %v4474 = vadd.f32 %v4473, %v4439
      %v4475 = vadd.f32 %v4474, %v4440
      %v4476 = vadd.f32 %v4475, %v4441
      %v4477 = vadd.f32 %v4476, %v4442
      %v4478 = vadd.f32 %v4477, %v4443
      %v4479 = vrot.slane %v4478, 4
      %v4480 = vadd.f32 %v4478, %v4479
      %v4481 = vrot.slane %v4480, 2
      %v4482 = vadd.f32 %v4480, %v4481
      %v4483 = vrot.slane %v4482, 1
      %v4484 = vadd.f32 %v4482, %v4483
      %vm4485 = vcmask 1040384
      %v4486 = vsel %vm4485, %v4407, %v4484
      %v4487 = vadd.f32 %v4366, %v4486
      %4488 = vst [vmem:[%s5] sm:$0x3] %v4487
      %s4489 = smul.u32 36, %s22
      %p4490 = scmp.lt.s32.totalorder %s21, 1
      %s4491 = scalar_select %p4490, %s21, 1
      %p4492 = scmp.lt.s32.totalorder %s4489, 35
      %s4493 = scalar_select %p4492, %s4489, 35
      %s4494 = smul.addr %s4491, 36
      %s4495 = sadd.s32 %s4493, %s4494
      %s4496 = smul.addr %s4495, 8
      %s4497 = scalar_lea.vmem %s4, %s4496
      // Predicated region
      $region41: #{unet_encoder_forward.10} parent=35 // pred_check
        %p4498 = pneg %p149
      $region42: #{unet_encoder_forward.10} parent=35 // pred_check_branch
        %4500 = sbr.rel (%p4498) target = $region44
      $region43: #{unet_encoder_forward.10} parent=35 // pred_region
        %s4501 = smul.u32 36, %s22
      $region44: #{unet_encoder_forward.10} parent=35 // pred_fallthru
        _
      // Predicated region
      $region45: #{unet_encoder_forward.10} parent=35 // pred_check
        %p4502 = pneg %p170
      $region46: #{unet_encoder_forward.10} parent=35 // pred_check_branch
        %4504 = sbr.rel (%p4502) target = $region48
      $region47: #{unet_encoder_forward.10} parent=35 // pred_region
        _
      $region48: #{unet_encoder_forward.10} parent=35 // pred_fallthru
        _
      // Predicated region
      $region49: #{unet_encoder_forward.10} parent=35 // pred_check
        %p4505 = pneg %p170
      $region50: #{unet_encoder_forward.10} parent=35 // pred_check_branch
        %4507 = sbr.rel (%p4505) target = $region52
      $region51: #{unet_encoder_forward.10} parent=35 // pred_region
        _
      $region52: #{unet_encoder_forward.10} parent=35 // pred_fallthru
        _
    $region36: #{unet_encoder_forward.10} parent=5 // pred_fallthru
      _
    %p4508 = scmp.le.s32.totalorder 2, %s12
    // Predicated region
    $region53: #{unet_encoder_forward.10} parent=5 // pred_check
      %p4509 = pneg %p4508
    $region54: #{unet_encoder_forward.10} parent=5 // pred_check_branch
      %4511 = sbr.rel (%p4509) target = $region56
    $region55: #{unet_encoder_forward.10} parent=5 // pred_region
      %s4512 = ssub.s32 %s12, 2
      // Predicated region
      $region57: #{unet_encoder_forward.10} parent=55 // pred_check
        %p4513 = pneg %p155
      $region58: #{unet_encoder_forward.10} parent=55 // pred_check_branch
        %4515 = sbr.rel (%p4513) target = $region60
      $region59: #{unet_encoder_forward.10} parent=55 // pred_region
        %s4516 = smul.u32 36, %s24
        %p4517 = scmp.lt.s32.totalorder %s23, 1
        %s4518 = scalar_select %p4517, %s23, 1
        %p4519 = scmp.lt.s32.totalorder %s4516, 35
        %s4520 = scalar_select %p4519, %s4516, 35
        %s4521 = smul.addr %s4518, 36
        %s4522 = sadd.s32 %s4520, %s4521
        %s4523 = smul.addr %s4522, 8
        %s4524 = scalar_lea.vmem %s4, %s4523
      $region60: #{unet_encoder_forward.10} parent=55 // pred_fallthru
        _
    $region56: #{unet_encoder_forward.10} parent=5 // pred_fallthru
      _
  $region6: #{unet_encoder_forward.10} parent=0 // loop_footer
    %s16 = sadd.s32 1, %s12
  $region7: #{unet_encoder_forward.10} parent=0 // loop_footer_branch
    %11 = sbr.rel target = $region3
  $region8: #{unet_encoder_forward.10} parent=0 // loop_exit
    _

// kernel: unet_encoder_forward.16
$region0: #{unet_encoder_forward.16}
  #allocation0 [shape = 'u32[]', space=smem, size = 0x4, offset = 0x4, fixed_abs, tag = 'smem constant byte address 0x4 - core index']
  #allocation1 [shape = 'u32[144,128]{1,0:T(1,128)}', space=vmem, size = 0x12000, scoped, tag = 'internal scratch']
  %s0 = inlined_call_operand.vmem [shape: f32[160,128], index: 0, kind: input, shape index: {}]
  %s1 = inlined_call_operand.vmem [shape: f32[1,128], index: 1, kind: input, shape index: {}]
  %s2 = inlined_call_operand.vmem [shape: f32[1,128], index: 2, kind: input, shape index: {}]
  %s3 = inlined_call_operand.vmem [shape: f32[160,128], index: 3, kind: output, shape index: {}]
  %s4 = sld [smem:[#allocation0]]
  $region22: #{unet_encoder_forward.16} parent=0
    _
  %s6 = ssub.s32 1, %s4
  %s7 = scalar_select 0, %s6, %s4
  // Predicated region
  $region2: #{unet_encoder_forward.16} parent=0 // pred_check
    _
  $region3: #{unet_encoder_forward.16} parent=0 // pred_check_branch
    %9 = sbr.rel (0) target = $region5
  $region4: #{unet_encoder_forward.16} parent=0 // pred_region
    _
  $region5: #{unet_encoder_forward.16} parent=0 // pred_fallthru
    _
  // Predicated region
  $region6: #{unet_encoder_forward.16} parent=0 // pred_check
    _
  $region7: #{unet_encoder_forward.16} parent=0 // pred_check_branch
    %11 = sbr.rel (0) target = $region9
  $region8: #{unet_encoder_forward.16} parent=0 // pred_region
    _
  $region9: #{unet_encoder_forward.16} parent=0 // pred_fallthru
    _
  // Predicated region
  $region10: #{unet_encoder_forward.16} parent=0 // pred_check
    _
  $region11: #{unet_encoder_forward.16} parent=0 // pred_check_branch
    %13 = sbr.rel (0) target = $region13
  $region12: #{unet_encoder_forward.16} parent=0 // pred_region
    _
  $region13: #{unet_encoder_forward.16} parent=0 // pred_fallthru
    _
  %s14 = smul.u32 0, 160
  %v15 = vlaneseq
  %v16 = vshrl.u32 %v15, 7
  %v17 = vadd.s32 %v16, 8
  %v18 = vadd.s32 %v16, 16
  %v19 = vadd.s32 %v16, 24
  %v20 = vadd.s32 %v16, 32
  %v21 = vadd.s32 %v16, 40
  %v22 = vadd.s32 %v16, 48
  %v23 = vadd.s32 %v16, 56
  %v24 = vadd.s32 %v16, 64
  %v25 = vadd.s32 %v16, 72
  %v26 = vadd.s32 %v16, 80
  %v27 = vadd.s32 %v16, 88
  %v28 = vadd.s32 %v16, 96
  %v29 = vadd.s32 %v16, 104
  %v30 = vadd.s32 %v16, 112
  %v31 = vadd.s32 %v16, 120
  %v32 = vadd.s32 %v16, 128
  %v33 = vadd.s32 %v16, 136
  %v34 = vadd.s32 %v16, 144
  %v35 = vadd.s32 %v16, 152
  %v36 = vstv %s14
  %v37 = vadd.s32 %v36, %v16
  %v38 = vadd.s32 %v36, %v17
  %v39 = vadd.s32 %v36, %v18
  %v40 = vadd.s32 %v36, %v19
  %v41 = vadd.s32 %v36, %v20
  %v42 = vadd.s32 %v36, %v21
  %v43 = vadd.s32 %v36, %v22
  %v44 = vadd.s32 %v36, %v23
  %v45 = vadd.s32 %v36, %v24
  %v46 = vadd.s32 %v36, %v25
  %v47 = vadd.s32 %v36, %v26
  %v48 = vadd.s32 %v36, %v27
  %v49 = vadd.s32 %v36, %v28
  %v50 = vadd.s32 %v36, %v29
  %v51 = vadd.s32 %v36, %v30
  %v52 = vadd.s32 %v36, %v31
  %v53 = vadd.s32 %v36, %v32
  %v54 = vadd.s32 %v36, %v33
  %v55 = vadd.s32 %v36, %v34
  %v56 = vadd.s32 %v36, %v35
  %vm57 = vcmp.lt.s32.totalorder %v37, 0
  %v58 = vsub.s32 0, %v37
  %v59 = vsel %vm57, %v58, %v37
  %v60 = vmul.u32.u64.compose %v59, 3435973837
  %v61 = vextract.low.u32 %v60
  %v62 = vextract.high.u32 %v60
  %v63 = vshrl.u32 %v62, 3
  %v64 = vmul.u32 %v63, 10
  %v65 = vsub.s32 %v59, %v64
  %v66 = vsub.s32 0, %v65
  %v67 = vsel %vm57, %v66, %v65
  %vm68 = vcmp.lt.s32.totalorder %v38, 0
  %v69 = vsub.s32 0, %v38
  %v70 = vsel %vm68, %v69, %v38
  %v71 = vmul.u32.u64.compose %v70, 3435973837
  %v72 = vextract.low.u32 %v71
  %v73 = vextract.high.u32 %v71
  %v74 = vshrl.u32 %v73, 3
  %v75 = vmul.u32 %v74, 10
  %v76 = vsub.s32 %v70, %v75
  %v77 = vsub.s32 0, %v76
  %v78 = vsel %vm68, %v77, %v76
  %vm79 = vcmp.lt.s32.totalorder %v39, 0
  %v80 = vsub.s32 0, %v39
  %v81 = vsel %vm79, %v80, %v39
  %v82 = vmul.u32.u64.compose %v81, 3435973837
  %v83 = vextract.low.u32 %v82
  %v84 = vextract.high.u32 %v82
  %v85 = vshrl.u32 %v84, 3
  %v86 = vmul.u32 %v85, 10
  %v87 = vsub.s32 %v81, %v86
  %v88 = vsub.s32 0, %v87
  %v89 = vsel %vm79, %v88, %v87
  %vm90 = vcmp.lt.s32.totalorder %v40, 0
  %v91 = vsub.s32 0, %v40
  %v92 = vsel %vm90, %v91, %v40
  %v93 = vmul.u32.u64.compose %v92, 3435973837
  %v94 = vextract.low.u32 %v93
  %v95 = vextract.high.u32 %v93
  %v96 = vshrl.u32 %v95, 3
  %v97 = vmul.u32 %v96, 10
  %v98 = vsub.s32 %v92, %v97
  %v99 = vsub.s32 0, %v98
  %v100 = vsel %vm90, %v99, %v98
  %vm101 = vcmp.lt.s32.totalorder %v41, 0
  %v102 = vsub.s32 0, %v41
  %v103 = vsel %vm101, %v102, %v41
  %v104 = vmul.u32.u64.compose %v103, 3435973837
  %v105 = vextract.low.u32 %v104
  %v106 = vextract.high.u32 %v104
  %v107 = vshrl.u32 %v106, 3
  %v108 = vmul.u32 %v107, 10
  %v109 = vsub.s32 %v103, %v108
  %v110 = vsub.s32 0, %v109
  %v111 = vsel %vm101, %v110, %v109
  %vm112 = vcmp.lt.s32.totalorder %v42, 0
  %v113 = vsub.s32 0, %v42
  %v114 = vsel %vm112, %v113, %v42
  %v115 = vmul.u32.u64.compose %v114, 3435973837
  %v116 = vextract.low.u32 %v115
  %v117 = vextract.high.u32 %v115
  %v118 = vshrl.u32 %v117, 3
  %v119 = vmul.u32 %v118, 10
  %v120 = vsub.s32 %v114, %v119
  %v121 = vsub.s32 0, %v120
  %v122 = vsel %vm112, %v121, %v120
  %vm123 = vcmp.lt.s32.totalorder %v43, 0
  %v124 = vsub.s32 0, %v43
  %v125 = vsel %vm123, %v124, %v43
  %v126 = vmul.u32.u64.compose %v125, 3435973837
  %v127 = vextract.low.u32 %v126
  %v128 = vextract.high.u32 %v126
  %v129 = vshrl.u32 %v128, 3
  %v130 = vmul.u32 %v129, 10
  %v131 = vsub.s32 %v125, %v130
  %v132 = vsub.s32 0, %v131
  %v133 = vsel %vm123, %v132, %v131
  %vm134 = vcmp.lt.s32.totalorder %v44, 0
  %v135 = vsub.s32 0, %v44
  %v136 = vsel %vm134, %v135, %v44
  %v137 = vmul.u32.u64.compose %v136, 3435973837
  %v138 = vextract.low.u32 %v137
  %v139 = vextract.high.u32 %v137
  %v140 = vshrl.u32 %v139, 3
  %v141 = vmul.u32 %v140, 10
  %v142 = vsub.s32 %v136, %v141
  %v143 = vsub.s32 0, %v142
  %v144 = vsel %vm134, %v143, %v142
  %vm145 = vcmp.lt.s32.totalorder %v45, 0
  %v146 = vsub.s32 0, %v45
  %v147 = vsel %vm145, %v146, %v45
  %v148 = vmul.u32.u64.compose %v147, 3435973837
  %v149 = vextract.low.u32 %v148
  %v150 = vextract.high.u32 %v148
  %v151 = vshrl.u32 %v150, 3
  %v152 = vmul.u32 %v151, 10
  %v153 = vsub.s32 %v147, %v152
  %v154 = vsub.s32 0, %v153
  %v155 = vsel %vm145, %v154, %v153
  %vm156 = vcmp.lt.s32.totalorder %v46, 0
  %v157 = vsub.s32 0, %v46
  %v158 = vsel %vm156, %v157, %v46
  %v159 = vmul.u32.u64.compose %v158, 3435973837
  %v160 = vextract.low.u32 %v159
  %v161 = vextract.high.u32 %v159
  %v162 = vshrl.u32 %v161, 3
  %v163 = vmul.u32 %v162, 10
  %v164 = vsub.s32 %v158, %v163
  %v165 = vsub.s32 0, %v164
  %v166 = vsel %vm156, %v165, %v164
  %vm167 = vcmp.lt.s32.totalorder %v47, 0
  %v168 = vsub.s32 0, %v47
  %v169 = vsel %vm167, %v168, %v47
  %v170 = vmul.u32.u64.compose %v169, 3435973837
  %v171 = vextract.low.u32 %v170
  %v172 = vextract.high.u32 %v170
  %v173 = vshrl.u32 %v172, 3
  %v174 = vmul.u32 %v173, 10
  %v175 = vsub.s32 %v169, %v174
  %v176 = vsub.s32 0, %v175
  %v177 = vsel %vm167, %v176, %v175
  %vm178 = vcmp.lt.s32.totalorder %v48, 0
  %v179 = vsub.s32 0, %v48
  %v180 = vsel %vm178, %v179, %v48
  %v181 = vmul.u32.u64.compose %v180, 3435973837
  %v182 = vextract.low.u32 %v181
  %v183 = vextract.high.u32 %v181
  %v184 = vshrl.u32 %v183, 3
  %v185 = vmul.u32 %v184, 10
  %v186 = vsub.s32 %v180, %v185
  %v187 = vsub.s32 0, %v186
  %v188 = vsel %vm178, %v187, %v186
  %vm189 = vcmp.lt.s32.totalorder %v49, 0
  %v190 = vsub.s32 0, %v49
  %v191 = vsel %vm189, %v190, %v49
  %v192 = vmul.u32.u64.compose %v191, 3435973837
  %v193 = vextract.low.u32 %v192
  %v194 = vextract.high.u32 %v192
  %v195 = vshrl.u32 %v194, 3
  %v196 = vmul.u32 %v195, 10
  %v197 = vsub.s32 %v191, %v196
  %v198 = vsub.s32 0, %v197
  %v199 = vsel %vm189, %v198, %v197
  %vm200 = vcmp.lt.s32.totalorder %v50, 0
  %v201 = vsub.s32 0, %v50
  %v202 = vsel %vm200, %v201, %v50
  %v203 = vmul.u32.u64.compose %v202, 3435973837
  %v204 = vextract.low.u32 %v203
  %v205 = vextract.high.u32 %v203
  %v206 = vshrl.u32 %v205, 3
  %v207 = vmul.u32 %v206, 10
  %v208 = vsub.s32 %v202, %v207
  %v209 = vsub.s32 0, %v208
  %v210 = vsel %vm200, %v209, %v208
  %vm211 = vcmp.lt.s32.totalorder %v51, 0
  %v212 = vsub.s32 0, %v51
  %v213 = vsel %vm211, %v212, %v51
  %v214 = vmul.u32.u64.compose %v213, 3435973837
  %v215 = vextract.low.u32 %v214
  %v216 = vextract.high.u32 %v214
  %v217 = vshrl.u32 %v216, 3
  %v218 = vmul.u32 %v217, 10
  %v219 = vsub.s32 %v213, %v218
  %v220 = vsub.s32 0, %v219
  %v221 = vsel %vm211, %v220, %v219
  %vm222 = vcmp.lt.s32.totalorder %v52, 0
  %v223 = vsub.s32 0, %v52
  %v224 = vsel %vm222, %v223, %v52
  %v225 = vmul.u32.u64.compose %v224, 3435973837
  %v226 = vextract.low.u32 %v225
  %v227 = vextract.high.u32 %v225
  %v228 = vshrl.u32 %v227, 3
  %v229 = vmul.u32 %v228, 10
  %v230 = vsub.s32 %v224, %v229
  %v231 = vsub.s32 0, %v230
  %v232 = vsel %vm222, %v231, %v230
  %vm233 = vcmp.lt.s32.totalorder %v53, 0
  %v234 = vsub.s32 0, %v53
  %v235 = vsel %vm233, %v234, %v53
  %v236 = vmul.u32.u64.compose %v235, 3435973837
  %v237 = vextract.low.u32 %v236
  %v238 = vextract.high.u32 %v236
  %v239 = vshrl.u32 %v238, 3
  %v240 = vmul.u32 %v239, 10
  %v241 = vsub.s32 %v235, %v240
  %v242 = vsub.s32 0, %v241
  %v243 = vsel %vm233, %v242, %v241
  %vm244 = vcmp.lt.s32.totalorder %v54, 0
  %v245 = vsub.s32 0, %v54
  %v246 = vsel %vm244, %v245, %v54
  %v247 = vmul.u32.u64.compose %v246, 3435973837
  %v248 = vextract.low.u32 %v247
  %v249 = vextract.high.u32 %v247
  %v250 = vshrl.u32 %v249, 3
  %v251 = vmul.u32 %v250, 10
  %v252 = vsub.s32 %v246, %v251
  %v253 = vsub.s32 0, %v252
  %v254 = vsel %vm244, %v253, %v252
  %vm255 = vcmp.lt.s32.totalorder %v55, 0
  %v256 = vsub.s32 0, %v55
  %v257 = vsel %vm255, %v256, %v55
  %v258 = vmul.u32.u64.compose %v257, 3435973837
  %v259 = vextract.low.u32 %v258
  %v260 = vextract.high.u32 %v258
  %v261 = vshrl.u32 %v260, 3
  %v262 = vmul.u32 %v261, 10
  %v263 = vsub.s32 %v257, %v262
  %v264 = vsub.s32 0, %v263
  %v265 = vsel %vm255, %v264, %v263
  %vm266 = vcmp.lt.s32.totalorder %v56, 0
  %v267 = vsub.s32 0, %v56
  %v268 = vsel %vm266, %v267, %v56
  %v269 = vmul.u32.u64.compose %v268, 3435973837
  %v270 = vextract.low.u32 %v269
  %v271 = vextract.high.u32 %v269
  %v272 = vshrl.u32 %v271, 3
  %v273 = vmul.u32 %v272, 10
  %v274 = vsub.s32 %v268, %v273
  %v275 = vsub.s32 0, %v274
  %v276 = vsel %vm266, %v275, %v274
  %vm277 = vcmp.ne.s32.totalorder %v67, 0
  %vm278 = vcmp.ne.s32.totalorder %v78, 0
  %vm279 = vcmp.ne.s32.totalorder %v89, 0
  %vm280 = vcmp.ne.s32.totalorder %v100, 0
  %vm281 = vcmp.ne.s32.totalorder %v111, 0
  %vm282 = vcmp.ne.s32.totalorder %v122, 0
  %vm283 = vcmp.ne.s32.totalorder %v133, 0
  %vm284 = vcmp.ne.s32.totalorder %v144, 0
  %vm285 = vcmp.ne.s32.totalorder %v155, 0
  %vm286 = vcmp.ne.s32.totalorder %v166, 0
  %vm287 = vcmp.ne.s32.totalorder %v177, 0
  %vm288 = vcmp.ne.s32.totalorder %v188, 0
  %vm289 = vcmp.ne.s32.totalorder %v199, 0
  %vm290 = vcmp.ne.s32.totalorder %v210, 0
  %vm291 = vcmp.ne.s32.totalorder %v221, 0
  %vm292 = vcmp.ne.s32.totalorder %v232, 0
  %vm293 = vcmp.ne.s32.totalorder %v243, 0
  %vm294 = vcmp.ne.s32.totalorder %v254, 0
  %vm295 = vcmp.ne.s32.totalorder %v265, 0
  %vm296 = vcmp.ne.s32.totalorder %v276, 0
  %vm297 = vcmp.lt.s32.totalorder %v67, 0
  %vm298 = vcmp.lt.s32.totalorder %v78, 0
  %vm299 = vcmp.lt.s32.totalorder %v89, 0
  %vm300 = vcmp.lt.s32.totalorder %v100, 0
  %vm301 = vcmp.lt.s32.totalorder %v111, 0
  %vm302 = vcmp.lt.s32.totalorder %v122, 0
  %vm303 = vcmp.lt.s32.totalorder %v133, 0
  %vm304 = vcmp.lt.s32.totalorder %v144, 0
  %vm305 = vcmp.lt.s32.totalorder %v155, 0
  %vm306 = vcmp.lt.s32.totalorder %v166, 0
  %vm307 = vcmp.lt.s32.totalorder %v177, 0
  %vm308 = vcmp.lt.s32.totalorder %v188, 0
  %vm309 = vcmp.lt.s32.totalorder %v199, 0
  %vm310 = vcmp.lt.s32.totalorder %v210, 0
  %vm311 = vcmp.lt.s32.totalorder %v221, 0
  %vm312 = vcmp.lt.s32.totalorder %v232, 0
  %vm313 = vcmp.lt.s32.totalorder %v243, 0
  %vm314 = vcmp.lt.s32.totalorder %v254, 0
  %vm315 = vcmp.lt.s32.totalorder %v265, 0
  %vm316 = vcmp.lt.s32.totalorder %v276, 0
  %vm317 = vmand %vm297, %vm277
  %vm318 = vmand %vm298, %vm278
  %vm319 = vmand %vm299, %vm279
  %vm320 = vmand %vm300, %vm280
  %vm321 = vmand %vm301, %vm281
  %vm322 = vmand %vm302, %vm282
  %vm323 = vmand %vm303, %vm283
  %vm324 = vmand %vm304, %vm284
  %vm325 = vmand %vm305, %vm285
  %vm326 = vmand %vm306, %vm286
  %vm327 = vmand %vm307, %vm287
  %vm328 = vmand %vm308, %vm288
  %vm329 = vmand %vm309, %vm289
  %vm330 = vmand %vm310, %vm290
  %vm331 = vmand %vm311, %vm291
  %vm332 = vmand %vm312, %vm292
  %vm333 = vmand %vm313, %vm293
  %vm334 = vmand %vm314, %vm294
  %vm335 = vmand %vm315, %vm295
  %vm336 = vmand %vm316, %vm296
  %v337 = vadd.s32 %v67, 10
  %v338 = vadd.s32 %v78, 10
  %v339 = vadd.s32 %v89, 10
  %v340 = vadd.s32 %v100, 10
  %v341 = vadd.s32 %v111, 10
  %v342 = vadd.s32 %v122, 10
  %v343 = vadd.s32 %v133, 10
  %v344 = vadd.s32 %v144, 10
  %v345 = vadd.s32 %v155, 10
  %v346 = vadd.s32 %v166, 10
  %v347 = vadd.s32 %v177, 10
  %v348 = vadd.s32 %v188, 10
  %v349 = vadd.s32 %v199, 10
  %v350 = vadd.s32 %v210, 10
  %v351 = vadd.s32 %v221, 10
  %v352 = vadd.s32 %v232, 10
  %v353 = vadd.s32 %v243, 10
  %v354 = vadd.s32 %v254, 10
  %v355 = vadd.s32 %v265, 10
  %v356 = vadd.s32 %v276, 10
  %v357 = vsel %vm317, %v337, %v67
  %v358 = vsel %vm318, %v338, %v78
  %v359 = vsel %vm319, %v339, %v89
  %v360 = vsel %vm320, %v340, %v100
  %v361 = vsel %vm321, %v341, %v111
  %v362 = vsel %vm322, %v342, %v122
  %v363 = vsel %vm323, %v343, %v133
  %v364 = vsel %vm324, %v344, %v144
  %v365 = vsel %vm325, %v345, %v155
  %v366 = vsel %vm326, %v346, %v166
  %v367 = vsel %vm327, %v347, %v177
  %v368 = vsel %vm328, %v348, %v188
  %v369 = vsel %vm329, %v349, %v199
  %v370 = vsel %vm330, %v350, %v210
  %v371 = vsel %vm331, %v351, %v221
  %v372 = vsel %vm332, %v352, %v232
  %v373 = vsel %vm333, %v353, %v243
  %v374 = vsel %vm334, %v354, %v254
  %v375 = vsel %vm335, %v355, %v265
  %v376 = vsel %vm336, %v356, %v276
  %vm377 = vcmp.ge.s32.totalorder %v357, 1
  %vm378 = vcmp.ge.s32.totalorder %v358, 1
  %vm379 = vcmp.ge.s32.totalorder %v359, 1
  %vm380 = vcmp.ge.s32.totalorder %v360, 1
  %vm381 = vcmp.ge.s32.totalorder %v361, 1
  %vm382 = vcmp.ge.s32.totalorder %v362, 1
  %vm383 = vcmp.ge.s32.totalorder %v363, 1
  %vm384 = vcmp.ge.s32.totalorder %v364, 1
  %vm385 = vcmp.ge.s32.totalorder %v365, 1
  %vm386 = vcmp.ge.s32.totalorder %v366, 1
  %vm387 = vcmp.ge.s32.totalorder %v367, 1
  %vm388 = vcmp.ge.s32.totalorder %v368, 1
  %vm389 = vcmp.ge.s32.totalorder %v369, 1
  %vm390 = vcmp.ge.s32.totalorder %v370, 1
  %vm391 = vcmp.ge.s32.totalorder %v371, 1
  %vm392 = vcmp.ge.s32.totalorder %v372, 1
  %vm393 = vcmp.ge.s32.totalorder %v373, 1
  %vm394 = vcmp.ge.s32.totalorder %v374, 1
  %vm395 = vcmp.ge.s32.totalorder %v375, 1
  %vm396 = vcmp.ge.s32.totalorder %v376, 1
  %vm397 = vcmp.le.s32.totalorder %v357, 8
  %vm398 = vcmp.le.s32.totalorder %v358, 8
  %vm399 = vcmp.le.s32.totalorder %v359, 8
  %vm400 = vcmp.le.s32.totalorder %v360, 8
  %vm401 = vcmp.le.s32.totalorder %v361, 8
  %vm402 = vcmp.le.s32.totalorder %v362, 8
  %vm403 = vcmp.le.s32.totalorder %v363, 8
  %vm404 = vcmp.le.s32.totalorder %v364, 8
  %vm405 = vcmp.le.s32.totalorder %v365, 8
  %vm406 = vcmp.le.s32.totalorder %v366, 8
  %vm407 = vcmp.le.s32.totalorder %v367, 8
  %vm408 = vcmp.le.s32.totalorder %v368, 8
  %vm409 = vcmp.le.s32.totalorder %v369, 8
  %vm410 = vcmp.le.s32.totalorder %v370, 8
  %vm411 = vcmp.le.s32.totalorder %v371, 8
  %vm412 = vcmp.le.s32.totalorder %v372, 8
  %vm413 = vcmp.le.s32.totalorder %v373, 8
  %vm414 = vcmp.le.s32.totalorder %v374, 8
  %vm415 = vcmp.le.s32.totalorder %v375, 8
  %vm416 = vcmp.le.s32.totalorder %v376, 8
  %vm417 = vmand %vm377, %vm397
  %vm418 = vmand %vm378, %vm398
  %vm419 = vmand %vm379, %vm399
  %vm420 = vmand %vm380, %vm400
  %vm421 = vmand %vm381, %vm401
  %vm422 = vmand %vm382, %vm402
  %vm423 = vmand %vm383, %vm403
  %vm424 = vmand %vm384, %vm404
  %vm425 = vmand %vm385, %vm405
  %vm426 = vmand %vm386, %vm406
  %vm427 = vmand %vm387, %vm407
  %vm428 = vmand %vm388, %vm408
  %vm429 = vmand %vm389, %vm409
  %vm430 = vmand %vm390, %vm410
  %vm431 = vmand %vm391, %vm411
  %vm432 = vmand %vm392, %vm412
  %vm433 = vmand %vm393, %vm413
  %vm434 = vmand %vm394, %vm414
  %vm435 = vmand %vm395, %vm415
  %vm436 = vmand %vm396, %vm416
  %v437 = vsel %vm417, 1, 0
  %v438 = vsel %vm418, 1, 0
  %v439 = vsel %vm419, 1, 0
  %v440 = vsel %vm420, 1, 0
  %v441 = vsel %vm421, 1, 0
  %v442 = vsel %vm422, 1, 0
  %v443 = vsel %vm423, 1, 0
  %v444 = vsel %vm424, 1, 0
  %v445 = vsel %vm425, 1, 0
  %v446 = vsel %vm426, 1, 0
  %v447 = vsel %vm427, 1, 0
  %v448 = vsel %vm428, 1, 0
  %v449 = vsel %vm429, 1, 0
  %v450 = vsel %vm430, 1, 0
  %v451 = vsel %vm431, 1, 0
  %v452 = vsel %vm432, 1, 0
  %v453 = vsel %vm433, 1, 0
  %v454 = vsel %vm434, 1, 0
  %v455 = vsel %vm435, 1, 0
  %v456 = vsel %vm436, 1, 0
  %v457 = vcvt.s32.f32 %v437
  %v458 = vcvt.s32.f32 %v438
  %v459 = vcvt.s32.f32 %v439
  %v460 = vcvt.s32.f32 %v440
  %v461 = vcvt.s32.f32 %v441
  %v462 = vcvt.s32.f32 %v442
  %v463 = vcvt.s32.f32 %v443
  %v464 = vcvt.s32.f32 %v444
  %v465 = vcvt.s32.f32 %v445
  %v466 = vcvt.s32.f32 %v446
  %v467 = vcvt.s32.f32 %v447
  %v468 = vcvt.s32.f32 %v448
  %v469 = vcvt.s32.f32 %v449
  %v470 = vcvt.s32.f32 %v450
  %v471 = vcvt.s32.f32 %v451
  %v472 = vcvt.s32.f32 %v452
  %v473 = vcvt.s32.f32 %v453
  %v474 = vcvt.s32.f32 %v454
  %v475 = vcvt.s32.f32 %v455
  %v476 = vcvt.s32.f32 %v456
  %v477 = vld [vmem:[%s0] sm:$0xff]
  %v478 = vld [vmem:[%s0 + $0x8] sm:$0xff]
  %v479 = vld [vmem:[%s0 + $0x10] sm:$0xff]
  %v480 = vld [vmem:[%s0 + $0x18] sm:$0xff]
  %v481 = vld [vmem:[%s0 + $0x20] sm:$0xff]
  %v482 = vld [vmem:[%s0 + $0x28] sm:$0xff]
  %v483 = vld [vmem:[%s0 + $0x30] sm:$0xff]
  %v484 = vld [vmem:[%s0 + $0x38] sm:$0xff]
  %v485 = vld [vmem:[%s0 + $0x40] sm:$0xff]
  %v486 = vld [vmem:[%s0 + $0x48] sm:$0xff]
  %v487 = vld [vmem:[%s0 + $0x50] sm:$0xff]
  %v488 = vld [vmem:[%s0 + $0x58] sm:$0xff]
  %v489 = vld [vmem:[%s0 + $0x60] sm:$0xff]
  %v490 = vld [vmem:[%s0 + $0x68] sm:$0xff]
  %v491 = vld [vmem:[%s0 + $0x70] sm:$0xff]
  %v492 = vld [vmem:[%s0 + $0x78] sm:$0xff]
  %v493 = vld [vmem:[%s0 + $0x80] sm:$0xff]
  %v494 = vld [vmem:[%s0 + $0x88] sm:$0xff]
  %v495 = vld [vmem:[%s0 + $0x90] sm:$0xff]
  %v496 = vld [vmem:[%s0 + $0x98] sm:$0xff]
  %v497 = vld [vmem:[%s1] sm:$0x1]
  %v499 = vlaneseq
  %v500 = vshrl.u32 %v499, 7
  %v501 = vsub.s32 0, %v500
  %v502 = vrot.slane %v497, %v501
  %v504 = vmul.f32 %v477, %v502
  %v505 = vmul.f32 %v478, %v502
  %v506 = vmul.f32 %v479, %v502
  %v507 = vmul.f32 %v480, %v502
  %v508 = vmul.f32 %v481, %v502
  %v509 = vmul.f32 %v482, %v502
  %v510 = vmul.f32 %v483, %v502
  %v511 = vmul.f32 %v484, %v502
  %v512 = vmul.f32 %v485, %v502
  %v513 = vmul.f32 %v486, %v502
  %v514 = vmul.f32 %v487, %v502
  %v515 = vmul.f32 %v488, %v502
  %v516 = vmul.f32 %v489, %v502
  %v517 = vmul.f32 %v490, %v502
  %v518 = vmul.f32 %v491, %v502
  %v519 = vmul.f32 %v492, %v502
  %v520 = vmul.f32 %v493, %v502
  %v521 = vmul.f32 %v494, %v502
  %v522 = vmul.f32 %v495, %v502
  %v523 = vmul.f32 %v496, %v502
  %v524 = vld [vmem:[%s2] sm:$0x1]
  %v526 = vlaneseq
  %v527 = vshrl.u32 %v526, 7
  %v528 = vsub.s32 0, %v527
  %v529 = vrot.slane %v524, %v528
  %v531 = vadd.f32 %v504, %v529
  %v532 = vadd.f32 %v505, %v529
  %v533 = vadd.f32 %v506, %v529
  %v534 = vadd.f32 %v507, %v529
  %v535 = vadd.f32 %v508, %v529
  %v536 = vadd.f32 %v509, %v529
  %v537 = vadd.f32 %v510, %v529
  %v538 = vadd.f32 %v511, %v529
  %v539 = vadd.f32 %v512, %v529
  %v540 = vadd.f32 %v513, %v529
  %v541 = vadd.f32 %v514, %v529
  %v542 = vadd.f32 %v515, %v529
  %v543 = vadd.f32 %v516, %v529
  %v544 = vadd.f32 %v517, %v529
  %v545 = vadd.f32 %v518, %v529
  %v546 = vadd.f32 %v519, %v529
  %v547 = vadd.f32 %v520, %v529
  %v548 = vadd.f32 %v521, %v529
  %v549 = vadd.f32 %v522, %v529
  %v550 = vadd.f32 %v523, %v529
  %v551 = vmul.f32 %v531, %v457
  %v552 = vmul.f32 %v532, %v458
  %v553 = vmul.f32 %v533, %v459
  %v554 = vmul.f32 %v534, %v460
  %v555 = vmul.f32 %v535, %v461
  %v556 = vmul.f32 %v536, %v462
  %v557 = vmul.f32 %v537, %v463
  %v558 = vmul.f32 %v538, %v464
  %v559 = vmul.f32 %v539, %v465
  %v560 = vmul.f32 %v540, %v466
  %v561 = vmul.f32 %v541, %v467
  %v562 = vmul.f32 %v542, %v468
  %v563 = vmul.f32 %v543, %v469
  %v564 = vmul.f32 %v544, %v470
  %v565 = vmul.f32 %v545, %v471
  %v566 = vmul.f32 %v546, %v472
  %v567 = vmul.f32 %v547, %v473
  %v568 = vmul.f32 %v548, %v474
  %v569 = vmul.f32 %v549, %v475
  %v570 = vmul.f32 %v550, %v476
  %571 = vst [vmem:[%s3] sm:$0xff] %v551
  %572 = vst [vmem:[%s3 + $0x8] sm:$0xff] %v552
  %573 = vst [vmem:[%s3 + $0x10] sm:$0xff] %v553
  %574 = vst [vmem:[%s3 + $0x18] sm:$0xff] %v554
  %575 = vst [vmem:[%s3 + $0x20] sm:$0xff] %v555
  %576 = vst [vmem:[%s3 + $0x28] sm:$0xff] %v556
  %577 = vst [vmem:[%s3 + $0x30] sm:$0xff] %v557
  %578 = vst [vmem:[%s3 + $0x38] sm:$0xff] %v558
  %579 = vst [vmem:[%s3 + $0x40] sm:$0xff] %v559
  %580 = vst [vmem:[%s3 + $0x48] sm:$0xff] %v560
  %581 = vst [vmem:[%s3 + $0x50] sm:$0xff] %v561
  %582 = vst [vmem:[%s3 + $0x58] sm:$0xff] %v562
  %583 = vst [vmem:[%s3 + $0x60] sm:$0xff] %v563
  %584 = vst [vmem:[%s3 + $0x68] sm:$0xff] %v564
  %585 = vst [vmem:[%s3 + $0x70] sm:$0xff] %v565
  %586 = vst [vmem:[%s3 + $0x78] sm:$0xff] %v566
  %587 = vst [vmem:[%s3 + $0x80] sm:$0xff] %v567
  %588 = vst [vmem:[%s3 + $0x88] sm:$0xff] %v568
  %589 = vst [vmem:[%s3 + $0x90] sm:$0xff] %v569
  %590 = vst [vmem:[%s3 + $0x98] sm:$0xff] %v570
  // Predicated region
  $region14: #{unet_encoder_forward.16} parent=0 // pred_check
    _
  $region15: #{unet_encoder_forward.16} parent=0 // pred_check_branch
    %592 = sbr.rel (0) target = $region17
  $region16: #{unet_encoder_forward.16} parent=0 // pred_region
    _
  $region17: #{unet_encoder_forward.16} parent=0 // pred_fallthru
    _
  // Predicated region
  $region18: #{unet_encoder_forward.16} parent=0 // pred_check
    _
  $region19: #{unet_encoder_forward.16} parent=0 // pred_check_branch
    %594 = sbr.rel (0) target = $region21
  $region20: #{unet_encoder_forward.16} parent=0 // pred_region
    _
  $region21: #{unet_encoder_forward.16} parent=0 // pred_fallthru
    _

// kernel: unet_encoder_forward.19
$region0: #{unet_encoder_forward.19}
  #allocation0 [shape = 'u32[]', space=smem, size = 0x4, offset = 0x4, fixed_abs, tag = 'smem constant byte address 0x4 - core index']
  #allocation1 [shape = 'u32[144,128]{1,0:T(1,128)}', space=vmem, size = 0x12000, scoped, tag = 'internal scratch']
  %s0 = inlined_call_operand.vmem [shape: f32[2,4,2,4,256], index: 0, kind: input, shape index: {}]
  %s1 = inlined_call_operand.vmem [shape: f32[2,4,4,128], index: 1, kind: output, shape index: {}]
  %s2 = sld [smem:[#allocation0]]
  $region37: #{unet_encoder_forward.19} parent=0
    _
  %s4 = ssub.s32 1, %s2
  %s5 = scalar_select 0, %s4, %s2
  loop: start=0, step=1, limit=4
  $region2: #{unet_encoder_forward.19} parent=0 // loop_pre_header
    _
  $region3: #{unet_encoder_forward.19} parent=0 // loop_header
    %s7 = sphi 0, %s11
    %p8 = scmp.ge.s32.totalorder %s7, 4
    %s14 = sphi 0, %s26
    %s15 = sphi 0, %s22
    %s16 = sphi 0, %s14
    %s17 = sphi 0, %s15
    %s18 = sphi 0, %s16
    %s19 = sphi 0, %s17
    %s31 = sphi 0, %s33
    %s34 = sphi 0, %s31
    %s35 = sphi 0, %s34
    %s51 = sphi 0, %s35
    %s59 = sphi 0, %s61
    %s62 = sphi 0, %s59
    %s63 = sphi 0, %s62
    %s79 = sphi 0, %s63
  $region4: #{unet_encoder_forward.19} parent=0 // loop_header_branch
    %10 = sbr.rel (%p8) target = $region8
  $region5: #{unet_encoder_forward.19} parent=0 // loop_body
    %s12 = ssub.s32 %s7, 1
    %s13 = ssub.s32 %s7, 2
    %s20 = sadd.s32 1, %s15
    %p21 = scmp.ge.s32.totalorder %s20, 1
    %s22 = scalar_select %p21, 0, %s20
    %s23 = sadd.s32 1, %s14
    %s24 = scalar_select %p21, %s23, %s14
    %p25 = scmp.ge.s32.totalorder %s24, 2
    %s26 = scalar_select %p25, 0, %s24
    %s27 = ssub.s32 %s14, %s26
    %s28 = ssub.s32 %s15, %s22
    %s29 = sor.u32 %s27, %s28
    %p30 = scmp.eq.s32.totalorder %s29, 0
    %s32 = sadd.s32 %s31, 1
    %s33 = scalar_select %p30, %s31, %s32
    %p36 = pneg %p30
    %p37 = scmp.eq.s32.totalorder %s7, 1
    %p38 = por %p36, %p37
    %p39 = scmp.ne.s32.totalorder %s31, %s34
    %p40 = scmp.eq.s32.totalorder %s7, 0
    %p41 = por %p39, %p40
    %p42 = scmp.ne.s32.totalorder %s31, %s34
    %p43 = scmp.eq.s32.totalorder %s12, 1
    %p44 = por %p42, %p43
    %p45 = scmp.ne.s32.totalorder %s34, %s35
    %p46 = scmp.eq.s32.totalorder %s12, 0
    %p47 = por %p45, %p46
    %p48 = scmp.ne.s32.totalorder %s34, %s35
    %p49 = scmp.eq.s32.totalorder %s13, 1
    %p50 = por %p48, %p49
    %p52 = scmp.ne.s32.totalorder %s35, %s51
    %p53 = scmp.eq.s32.totalorder %s13, 0
    %p54 = por %p52, %p53
    %s55 = ssub.s32 %s14, %s26
    %s56 = ssub.s32 %s15, %s22
    %s57 = sor.u32 %s55, %s56
    %p58 = scmp.eq.s32.totalorder %s57, 0
    %s60 = sadd.s32 %s59, 1
    %s61 = scalar_select %p58, %s59, %s60
    %p64 = pneg %p58
    %p65 = scmp.eq.s32.totalorder %s7, 1
    %p66 = por %p64, %p65
    %p67 = scmp.ne.s32.totalorder %s59, %s62
    %p68 = scmp.eq.s32.totalorder %s7, 0
    %p69 = por %p67, %p68
    %p70 = scmp.ne.s32.totalorder %s59, %s62
    %p71 = scmp.eq.s32.totalorder %s12, 1
    %p72 = por %p70, %p71
    %p73 = scmp.ne.s32.totalorder %s62, %s63
    %p74 = scmp.eq.s32.totalorder %s12, 0
    %p75 = por %p73, %p74
    %p76 = scmp.ne.s32.totalorder %s62, %s63
    %p77 = scmp.eq.s32.totalorder %s13, 1
    %p78 = por %p76, %p77
    %p80 = scmp.ne.s32.totalorder %s63, %s79
    %p81 = scmp.eq.s32.totalorder %s13, 0
    %p82 = por %p80, %p81
    %p83 = scmp.le.s32.totalorder 1, %s7
    %p84 = scmp.lt.s32.totalorder %s7, 3
    %p85 = pnand %p83, %p84
    %p86 = pneg %p85
    // Predicated region
    $region9: #{unet_encoder_forward.19} parent=5 // pred_check
      _
    $region10: #{unet_encoder_forward.19} parent=5 // pred_check_branch
      %88 = sbr.rel (%p85) target = $region12
    $region11: #{unet_encoder_forward.19} parent=5 // pred_region
      %s89 = ssub.s32 %s7, 1
    $region12: #{unet_encoder_forward.19} parent=5 // pred_fallthru
      _
    %p90 = scmp.lt.s32.totalorder %s7, 2
    // Predicated region
    $region13: #{unet_encoder_forward.19} parent=5 // pred_check
      %p91 = pneg %p90
    $region14: #{unet_encoder_forward.19} parent=5 // pred_check_branch
      %93 = sbr.rel (%p91) target = $region16
    $region15: #{unet_encoder_forward.19} parent=5 // pred_region
      // Predicated region
      $region17: #{unet_encoder_forward.19} parent=15 // pred_check
        %p94 = pneg %p41
      $region18: #{unet_encoder_forward.19} parent=15 // pred_check_branch
        %96 = sbr.rel (%p94) target = $region20
      $region19: #{unet_encoder_forward.19} parent=15 // pred_region
        %s97 = smul.u32 4, %s15
        %p98 = scmp.lt.s32.totalorder %s14, 1
        %s99 = scalar_select %p98, %s14, 1
        %p100 = scmp.lt.s32.totalorder %s97, 3
        %s101 = scalar_select %p100, %s97, 3
        %s102 = smul.addr %s101, 4
        %s103 = smul.addr %s99, 16
        %s104 = sadd.s32 %s102, %s103
        %s105 = smul.addr %s104, 4
        %s106 = scalar_lea.vmem %s0, %s105
        %s107 = smul.u32 4, %s15
      $region20: #{unet_encoder_forward.19} parent=15 // pred_fallthru
        _
    $region16: #{unet_encoder_forward.19} parent=5 // pred_fallthru
      _
    %p108 = scmp.le.s32.totalorder 1, %s7
    %p109 = scmp.lt.s32.totalorder %s7, 3
    %p110 = pnand %p108, %p109
    %p111 = pneg %p110
    // Predicated region
    $region21: #{unet_encoder_forward.19} parent=5 // pred_check
      _
    $region22: #{unet_encoder_forward.19} parent=5 // pred_check_branch
      %113 = sbr.rel (%p110) target = $region24
    $region23: #{unet_encoder_forward.19} parent=5 // pred_region
      %s114 = ssub.s32 %s7, 1
      %s115 = smul.u32 4, %s17
      %p116 = scmp.lt.s32.totalorder %s16, 1
      %s117 = scalar_select %p116, %s16, 1
      %p118 = scmp.lt.s32.totalorder %s115, 3
      %s119 = scalar_select %p118, %s115, 3
      %s120 = smul.addr %s119, 4
      %s121 = smul.addr %s117, 16
      %s122 = sadd.s32 %s120, %s121
      %s123 = smul.addr %s122, 4
      %s124 = scalar_lea.vmem %s0, %s123
      %p125 = pneg %p47
      %p126 = pneg %p44
      %p127 = pneg %p75
      %p128 = pneg %p72
      %s129 = smul.u32 4, %s17
      %p130 = scmp.lt.s32.totalorder %s16, 1
      %s131 = scalar_select %p130, %s16, 1
      %p132 = scmp.lt.s32.totalorder %s129, 3
      %s133 = scalar_select %p132, %s129, 3
      %s134 = smul.addr %s131, 4
      %s135 = sadd.s32 %s133, %s134
      %s136 = smul.addr %s135, 4
      %s137 = scalar_lea.vmem %s1, %s136
      %s138 = smul.u32 4, %s17
      %p139 = scmp.lt.s32.totalorder %s16, 1
      %s140 = scalar_select %p139, %s16, 1
      %p141 = scmp.lt.s32.totalorder %s138, 3
      %s142 = scalar_select %p141, %s138, 3
      %s143 = smul.addr %s142, 4
      %s144 = smul.addr %s140, 16
      %s145 = sadd.s32 %s143, %s144
      %s146 = smul.addr %s145, 4
      %s147 = scalar_lea.vmem %s0, %s146
      %s148 = smul.u32 4, %s17
      %s149 = smul.u32 4, %s17
      %p150 = scmp.lt.s32.totalorder %s16, 1
      %s151 = scalar_select %p150, %s16, 1
      %p152 = scmp.lt.s32.totalorder %s149, 3
      %s153 = scalar_select %p152, %s149, 3
      %s154 = smul.addr %s151, 4
      %s155 = sadd.s32 %s153, %s154
      %s156 = smul.addr %s155, 4
      %s157 = scalar_lea.vmem %s1, %s156
      %s158 = smul.u32 4, %s17
      %v159 = vld [vmem:[%s147] sm:$0xff]
      %v160 = vld [vmem:[%s147 + $0x8] sm:$0xff]
      %v161 = vld [vmem:[%s147 + $0x10] sm:$0xff]
      %v162 = vld [vmem:[%s147 + $0x18] sm:$0xff]
      %v163 = vld [vmem:[%s147 + $0x20] sm:$0xff]
      %v164 = vld [vmem:[%s147 + $0x28] sm:$0xff]
      %v165 = vld [vmem:[%s147 + $0x30] sm:$0xff]
      %v166 = vld [vmem:[%s147 + $0x38] sm:$0xff]
      %v167 = vmax.f32 %v159, %v160
      %v168 = vmax.f32 %v161, %v162
      %v169 = vmax.f32 %v163, %v164
      %v170 = vmax.f32 %v165, %v166
      %v175 = vrot.slane %v167, 4
      %v176 = vrot.slane %v168, 4
      %v177 = vrot.slane %v169, 4
      %v178 = vrot.slane %v170, 4
      %v183 = vmax.f32 %v167, %v175
      %v184 = vmax.f32 %v168, %v176
      %v185 = vmax.f32 %v169, %v177
      %v186 = vmax.f32 %v170, %v178
      %187 = vst [vmem:[%s157] sm:$0xf] %v183
      %188 = vst [vmem:[%s157 + $0x4] sm:$0xf] %v184
      %189 = vst [vmem:[%s157 + $0x8] sm:$0xf] %v185
      %190 = vst [vmem:[%s157 + $0xc] sm:$0xf] %v186
      %s191 = smul.u32 4, %s17
      %p192 = scmp.lt.s32.totalorder %s16, 1
      %s193 = scalar_select %p192, %s16, 1
      %p194 = scmp.lt.s32.totalorder %s191, 3
      %s195 = scalar_select %p194, %s191, 3
      %s196 = smul.addr %s193, 4
      %s197 = sadd.s32 %s195, %s196
      %s198 = smul.addr %s197, 4
      %s199 = scalar_lea.vmem %s1, %s198
      // Predicated region
      $region25: #{unet_encoder_forward.19} parent=23 // pred_check
        %p200 = pneg %p72
      $region26: #{unet_encoder_forward.19} parent=23 // pred_check_branch
        %202 = sbr.rel (%p200) target = $region28
      $region27: #{unet_encoder_forward.19} parent=23 // pred_region
        %s203 = smul.u32 4, %s17
      $region28: #{unet_encoder_forward.19} parent=23 // pred_fallthru
        _
    $region24: #{unet_encoder_forward.19} parent=5 // pred_fallthru
      _
    %p204 = scmp.le.s32.totalorder 2, %s7
    // Predicated region
    $region29: #{unet_encoder_forward.19} parent=5 // pred_check
      %p205 = pneg %p204
    $region30: #{unet_encoder_forward.19} parent=5 // pred_check_branch
      %207 = sbr.rel (%p205) target = $region32
    $region31: #{unet_encoder_forward.19} parent=5 // pred_region
      %s208 = ssub.s32 %s7, 2
      // Predicated region
      $region33: #{unet_encoder_forward.19} parent=31 // pred_check
        %p209 = pneg %p78
      $region34: #{unet_encoder_forward.19} parent=31 // pred_check_branch
        %211 = sbr.rel (%p209) target = $region36
      $region35: #{unet_encoder_forward.19} parent=31 // pred_region
        %s212 = smul.u32 4, %s19
        %p213 = scmp.lt.s32.totalorder %s18, 1
        %s214 = scalar_select %p213, %s18, 1
        %p215 = scmp.lt.s32.totalorder %s212, 3
        %s216 = scalar_select %p215, %s212, 3
        %s217 = smul.addr %s214, 4
        %s218 = sadd.s32 %s216, %s217
        %s219 = smul.addr %s218, 4
        %s220 = scalar_lea.vmem %s1, %s219
      $region36: #{unet_encoder_forward.19} parent=31 // pred_fallthru
        _
    $region32: #{unet_encoder_forward.19} parent=5 // pred_fallthru
      _
  $region6: #{unet_encoder_forward.19} parent=0 // loop_footer
    %s11 = sadd.s32 1, %s7
  $region7: #{unet_encoder_forward.19} parent=0 // loop_footer_branch
    %6 = sbr.rel target = $region3
  $region8: #{unet_encoder_forward.19} parent=0 // loop_exit
    _

// kernel: unet_encoder_forward.15
$region0: #{unet_encoder_forward.15}
  #allocation0 [shape = 'u32[]', space=smem, size = 0x4, offset = 0x4, fixed_abs, tag = 'smem constant byte address 0x4 - core index']
  #allocation1 [shape = 'u32[144,128]{1,0:T(1,128)}', space=vmem, size = 0x12000, scoped, tag = 'internal scratch']
  %s0 = inlined_call_operand.vmem [shape: f32[2,160,128], index: 0, kind: input, shape index: {}, may-alias: {0,1}]
  %s1 = inlined_call_operand.vmem [shape: f32[2,160,128], index: 1, kind: input, shape index: {}, may-alias: {0,1}]
  %s2 = inlined_call_operand.vmem [shape: bf16[9,128,128], index: 2, kind: input, shape index: {}]
  %s3 = inlined_call_operand.vmem [shape: f32[1,128], index: 3, kind: input, shape index: {}]
  %s4 = inlined_call_operand.vmem [shape: f32[2,80,128], index: 4, kind: output, shape index: {0}]
  %s5 = inlined_call_operand.vmem [shape: f32[2,128], index: 5, kind: output, shape index: {1}]
  %6 = xla_tuple %s4, %s5
  %s7 = sld [smem:[#allocation0]]
  $region61: #{unet_encoder_forward.15} parent=0
    _
  %s9 = ssub.s32 1, %s7
  %s10 = scalar_select 0, %s9, %s7
  loop: start=0, step=1, limit=4
  $region2: #{unet_encoder_forward.15} parent=0 // loop_pre_header
    _
  $region3: #{unet_encoder_forward.15} parent=0 // loop_header
    %s12 = sphi 0, %s16
    %p13 = scmp.ge.s32.totalorder %s12, 4
    %s19 = sphi 0, %s31
    %s20 = sphi 0, %s27
    %s21 = sphi 0, %s19
    %s22 = sphi 0, %s20
    %s23 = sphi 0, %s21
    %s24 = sphi 0, %s22
    %s36 = sphi 0, %s38
    %s39 = sphi 0, %s36
    %s40 = sphi 0, %s39
    %s56 = sphi 0, %s40
    %s66 = sphi 0, %s68
    %s69 = sphi 0, %s66
    %s70 = sphi 0, %s69
    %s86 = sphi 0, %s70
    %s90 = sphi 0, %s90
    %s92 = sphi 0, %s90
    %s93 = sphi 0, %s92
    %s107 = sphi 0, %s93
    %s111 = sphi 0, %s111
    %s113 = sphi 0, %s111
    %s114 = sphi 0, %s113
    %s128 = sphi 0, %s114
    %s136 = sphi 0, %s138
    %s139 = sphi 0, %s136
    %s140 = sphi 0, %s139
    %s156 = sphi 0, %s140
    %s160 = sphi 0, %s160
    %s162 = sphi 0, %s160
    %s163 = sphi 0, %s162
    %s177 = sphi 0, %s163
  $region4: #{unet_encoder_forward.15} parent=0 // loop_header_branch
    %15 = sbr.rel (%p13) target = $region8
  $region5: #{unet_encoder_forward.15} parent=0 // loop_body
    %s17 = ssub.s32 %s12, 1
    %s18 = ssub.s32 %s12, 2
    %s25 = sadd.s32 1, %s20
    %p26 = scmp.ge.s32.totalorder %s25, 1
    %s27 = scalar_select %p26, 0, %s25
    %s28 = sadd.s32 1, %s19
    %s29 = scalar_select %p26, %s28, %s19
    %p30 = scmp.ge.s32.totalorder %s29, 2
    %s31 = scalar_select %p30, 0, %s29
    %s32 = ssub.s32 %s19, %s31
    %s33 = ssub.s32 %s20, %s27
    %s34 = sor.u32 %s32, %s33
    %p35 = scmp.eq.s32.totalorder %s34, 0
    %s37 = sadd.s32 %s36, 1
    %s38 = scalar_select %p35, %s36, %s37
    %p41 = pneg %p35
    %p42 = scmp.eq.s32.totalorder %s12, 1
    %p43 = por %p41, %p42
    %p44 = scmp.ne.s32.totalorder %s36, %s39
    %p45 = scmp.eq.s32.totalorder %s12, 0
    %p46 = por %p44, %p45
    %p47 = scmp.ne.s32.totalorder %s36, %s39
    %p48 = scmp.eq.s32.totalorder %s17, 1
    %p49 = por %p47, %p48
    %p50 = scmp.ne.s32.totalorder %s39, %s40
    %p51 = scmp.eq.s32.totalorder %s17, 0
    %p52 = por %p50, %p51
    %p53 = scmp.ne.s32.totalorder %s39, %s40
    %p54 = scmp.eq.s32.totalorder %s18, 1
    %p55 = por %p53, %p54
    %p57 = scmp.ne.s32.totalorder %s40, %s56
    %p58 = scmp.eq.s32.totalorder %s18, 0
    %p59 = por %p57, %p58
    %s60 = sadd.s32 %s20, 1
    %s61 = sadd.s32 %s27, 1
    %s62 = ssub.s32 %s19, %s31
    %s63 = ssub.s32 %s60, %s61
    %s64 = sor.u32 %s62, %s63
    %p65 = scmp.eq.s32.totalorder %s64, 0
    %s67 = sadd.s32 %s66, 1
    %s68 = scalar_select %p65, %s66, %s67
    %p71 = pneg %p65
    %p72 = scmp.eq.s32.totalorder %s12, 1
    %p73 = por %p71, %p72
    %p74 = scmp.ne.s32.totalorder %s66, %s69
    %p75 = scmp.eq.s32.totalorder %s12, 0
    %p76 = por %p74, %p75
    %p77 = scmp.ne.s32.totalorder %s66, %s69
    %p78 = scmp.eq.s32.totalorder %s17, 1
    %p79 = por %p77, %p78
    %p80 = scmp.ne.s32.totalorder %s69, %s70
    %p81 = scmp.eq.s32.totalorder %s17, 0
    %p82 = por %p80, %p81
    %p83 = scmp.ne.s32.totalorder %s69, %s70
    %p84 = scmp.eq.s32.totalorder %s18, 1
    %p85 = por %p83, %p84
    %p87 = scmp.ne.s32.totalorder %s70, %s86
    %p88 = scmp.eq.s32.totalorder %s18, 0
    %p89 = por %p87, %p88
    %s91 = sadd.s32 %s90, 1
    %p94 = scmp.eq.s32.totalorder %s12, 1
    %p95 = scmp.ne.s32.totalorder %s90, %s92
    %p96 = scmp.eq.s32.totalorder %s12, 0
    %p97 = por %p95, %p96
    %p98 = scmp.ne.s32.totalorder %s90, %s92
    %p99 = scmp.eq.s32.totalorder %s17, 1
    %p100 = por %p98, %p99
    %p101 = scmp.ne.s32.totalorder %s92, %s93
    %p102 = scmp.eq.s32.totalorder %s17, 0
    %p103 = por %p101, %p102
    %p104 = scmp.ne.s32.totalorder %s92, %s93
    %p105 = scmp.eq.s32.totalorder %s18, 1
    %p106 = por %p104, %p105
    %p108 = scmp.ne.s32.totalorder %s93, %s107
    %p109 = scmp.eq.s32.totalorder %s18, 0
    %p110 = por %p108, %p109
    %s112 = sadd.s32 %s111, 1
    %p115 = scmp.eq.s32.totalorder %s12, 1
    %p116 = scmp.ne.s32.totalorder %s111, %s113
    %p117 = scmp.eq.s32.totalorder %s12, 0
    %p118 = por %p116, %p117
    %p119 = scmp.ne.s32.totalorder %s111, %s113
    %p120 = scmp.eq.s32.totalorder %s17, 1
    %p121 = por %p119, %p120
    %p122 = scmp.ne.s32.totalorder %s113, %s114
    %p123 = scmp.eq.s32.totalorder %s17, 0
    %p124 = por %p122, %p123
    %p125 = scmp.ne.s32.totalorder %s113, %s114
    %p126 = scmp.eq.s32.totalorder %s18, 1
    %p127 = por %p125, %p126
    %p129 = scmp.ne.s32.totalorder %s114, %s128
    %p130 = scmp.eq.s32.totalorder %s18, 0
    %p131 = por %p129, %p130
    %s132 = ssub.s32 %s19, %s31
    %s133 = ssub.s32 %s20, %s27
    %s134 = sor.u32 %s132, %s133
    %p135 = scmp.eq.s32.totalorder %s134, 0
    %s137 = sadd.s32 %s136, 1
    %s138 = scalar_select %p135, %s136, %s137
    %p141 = pneg %p135
    %p142 = scmp.eq.s32.totalorder %s12, 1
    %p143 = por %p141, %p142
    %p144 = scmp.ne.s32.totalorder %s136, %s139
    %p145 = scmp.eq.s32.totalorder %s12, 0
    %p146 = por %p144, %p145
    %p147 = scmp.ne.s32.totalorder %s136, %s139
    %p148 = scmp.eq.s32.totalorder %s17, 1
    %p149 = por %p147, %p148
    %p150 = scmp.ne.s32.totalorder %s139, %s140
    %p151 = scmp.eq.s32.totalorder %s17, 0
    %p152 = por %p150, %p151
    %p153 = scmp.ne.s32.totalorder %s139, %s140
    %p154 = scmp.eq.s32.totalorder %s18, 1
    %p155 = por %p153, %p154
    %p157 = scmp.ne.s32.totalorder %s140, %s156
    %p158 = scmp.eq.s32.totalorder %s18, 0
    %p159 = por %p157, %p158
    %s161 = sadd.s32 %s160, 1
    %p164 = scmp.eq.s32.totalorder %s12, 1
    %p165 = scmp.ne.s32.totalorder %s160, %s162
    %p166 = scmp.eq.s32.totalorder %s12, 0
    %p167 = por %p165, %p166
    %p168 = scmp.ne.s32.totalorder %s160, %s162
    %p169 = scmp.eq.s32.totalorder %s17, 1
    %p170 = por %p168, %p169
    %p171 = scmp.ne.s32.totalorder %s162, %s163
    %p172 = scmp.eq.s32.totalorder %s17, 0
    %p173 = por %p171, %p172
    %p174 = scmp.ne.s32.totalorder %s162, %s163
    %p175 = scmp.eq.s32.totalorder %s18, 1
    %p176 = por %p174, %p175
    %p178 = scmp.ne.s32.totalorder %s163, %s177
    %p179 = scmp.eq.s32.totalorder %s18, 0
    %p180 = por %p178, %p179
    %p181 = scmp.le.s32.totalorder 1, %s12
    %p182 = scmp.lt.s32.totalorder %s12, 3
    %p183 = pnand %p181, %p182
    %p184 = pneg %p183
    // Predicated region
    $region9: #{unet_encoder_forward.15} parent=5 // pred_check
      _
    $region10: #{unet_encoder_forward.15} parent=5 // pred_check_branch
      %186 = sbr.rel (%p183) target = $region12
    $region11: #{unet_encoder_forward.15} parent=5 // pred_region
      %s187 = ssub.s32 %s12, 1
      // Predicated region
      $region13: #{unet_encoder_forward.15} parent=11 // pred_check
        %p188 = pneg %p103
      $region14: #{unet_encoder_forward.15} parent=11 // pred_check_branch
        %190 = sbr.rel (%p188) target = $region16
      $region15: #{unet_encoder_forward.15} parent=11 // pred_region
        _
      $region16: #{unet_encoder_forward.15} parent=11 // pred_fallthru
        _
      // Predicated region
      $region17: #{unet_encoder_forward.15} parent=11 // pred_check
        %p191 = pneg %p124
      $region18: #{unet_encoder_forward.15} parent=11 // pred_check_branch
        %193 = sbr.rel (%p191) target = $region20
      $region19: #{unet_encoder_forward.15} parent=11 // pred_region
        _
      $region20: #{unet_encoder_forward.15} parent=11 // pred_fallthru
        _
    $region12: #{unet_encoder_forward.15} parent=5 // pred_fallthru
      _
    %p194 = scmp.lt.s32.totalorder %s12, 2
    // Predicated region
    $region21: #{unet_encoder_forward.15} parent=5 // pred_check
      %p195 = pneg %p194
    $region22: #{unet_encoder_forward.15} parent=5 // pred_check_branch
      %197 = sbr.rel (%p195) target = $region24
    $region23: #{unet_encoder_forward.15} parent=5 // pred_region
      // Predicated region
      $region25: #{unet_encoder_forward.15} parent=23 // pred_check
        %p198 = pneg %p46
      $region26: #{unet_encoder_forward.15} parent=23 // pred_check_branch
        %200 = sbr.rel (%p198) target = $region28
      $region27: #{unet_encoder_forward.15} parent=23 // pred_region
        %s201 = smul.u32 10, %s20
        %p202 = scmp.lt.s32.totalorder %s19, 1
        %s203 = scalar_select %p202, %s19, 1
        %p204 = scmp.lt.s32.totalorder %s201, 19
        %s205 = scalar_select %p204, %s201, 19
        %s206 = smul.addr %s203, 20
        %s207 = sadd.s32 %s205, %s206
        %s208 = smul.addr %s207, 8
        %s209 = scalar_lea.vmem %s0, %s208
        %s210 = smul.u32 10, %s20
      $region28: #{unet_encoder_forward.15} parent=23 // pred_fallthru
        _
      // Predicated region
      $region29: #{unet_encoder_forward.15} parent=23 // pred_check
        %p211 = pneg %p76
      $region30: #{unet_encoder_forward.15} parent=23 // pred_check_branch
        %213 = sbr.rel (%p211) target = $region32
      $region31: #{unet_encoder_forward.15} parent=23 // pred_region
        %s214 = sadd.s32 %s20, 1
        %s215 = smul.u32 10, %s214
        %p216 = scmp.lt.s32.totalorder %s19, 1
        %s217 = scalar_select %p216, %s19, 1
        %p218 = scmp.lt.s32.totalorder %s215, 19
        %s219 = scalar_select %p218, %s215, 19
        %s220 = smul.addr %s217, 20
        %s221 = sadd.s32 %s219, %s220
        %s222 = smul.addr %s221, 8
        %s223 = scalar_lea.vmem %s1, %s222
        %s224 = sadd.s32 %s20, 1
        %s225 = smul.u32 10, %s224
      $region32: #{unet_encoder_forward.15} parent=23 // pred_fallthru
        _
    $region24: #{unet_encoder_forward.15} parent=5 // pred_fallthru
      _
    %p226 = scmp.le.s32.totalorder 1, %s12
    %p227 = scmp.lt.s32.totalorder %s12, 3
    %p228 = pnand %p226, %p227
    %p229 = pneg %p228
    // Predicated region
    $region33: #{unet_encoder_forward.15} parent=5 // pred_check
      _
    $region34: #{unet_encoder_forward.15} parent=5 // pred_check_branch
      %231 = sbr.rel (%p228) target = $region36
    $region35: #{unet_encoder_forward.15} parent=5 // pred_region
      %s232 = ssub.s32 %s12, 1
      %s233 = smul.u32 10, %s22
      %p234 = scmp.lt.s32.totalorder %s21, 1
      %s235 = scalar_select %p234, %s21, 1
      %p236 = scmp.lt.s32.totalorder %s233, 19
      %s237 = scalar_select %p236, %s233, 19
      %s238 = smul.addr %s235, 20
      %s239 = sadd.s32 %s237, %s238
      %s240 = smul.addr %s239, 8
      %s241 = scalar_lea.vmem %s0, %s240
      %p242 = pneg %p52
      %p243 = pneg %p49
      %s244 = sadd.s32 %s22, 1
      %s245 = smul.u32 10, %s244
      %p246 = scmp.lt.s32.totalorder %s21, 1
      %s247 = scalar_select %p246, %s21, 1
      %p248 = scmp.lt.s32.totalorder %s245, 19
      %s249 = scalar_select %p248, %s245, 19
      %s250 = smul.addr %s247, 20
      %s251 = sadd.s32 %s249, %s250
      %s252 = smul.addr %s251, 8
      %s253 = scalar_lea.vmem %s1, %s252
      %p254 = pneg %p82
      %p255 = pneg %p79
      %p256 = pneg %p103
      %p257 = pneg %p100
      %p258 = pneg %p124
      %p259 = pneg %p121
      %p260 = pneg %p152
      %p261 = pneg %p149
      %s262 = smul.u32 10, %s22
      %p263 = scmp.lt.s32.totalorder %s21, 1
      %s264 = scalar_select %p263, %s21, 1
      %p265 = scmp.lt.s32.totalorder %s262, 9
      %s266 = scalar_select %p265, %s262, 9
      %s267 = smul.addr %s264, 10
      %s268 = sadd.s32 %s266, %s267
      %s269 = smul.addr %s268, 8
      %s270 = scalar_lea.vmem %s4, %s269
      %p271 = pneg %p173
      %p272 = pneg %p170
      %s273 = smul.u32 10, %s22
      %p274 = scmp.lt.s32.totalorder %s21, 1
      %s275 = scalar_select %p274, %s21, 1
      %p276 = scmp.lt.s32.totalorder %s273, 19
      %s277 = scalar_select %p276, %s273, 19
      %s278 = smul.addr %s275, 20
      %s279 = sadd.s32 %s277, %s278
      %s280 = smul.addr %s279, 8
      %s281 = scalar_lea.vmem %s0, %s280
      %s282 = smul.u32 10, %s22
      %s283 = sadd.s32 %s22, 1
      %s284 = smul.u32 10, %s283
      %p285 = scmp.lt.s32.totalorder %s21, 1
      %s286 = scalar_select %p285, %s21, 1
      %p287 = scmp.lt.s32.totalorder %s284, 19
      %s288 = scalar_select %p287, %s284, 19
      %s289 = smul.addr %s286, 20
      %s290 = sadd.s32 %s288, %s289
      %s291 = smul.addr %s290, 8
      %s292 = scalar_lea.vmem %s1, %s291
      %s293 = sadd.s32 %s22, 1
      %s294 = smul.u32 10, %s293
      %s295 = smul.u32 10, %s22
      %p296 = scmp.lt.s32.totalorder %s21, 1
      %s297 = scalar_select %p296, %s21, 1
      %p298 = scmp.lt.s32.totalorder %s295, 9
      %s299 = scalar_select %p298, %s295, 9
      %s300 = smul.addr %s297, 10
      %s301 = sadd.s32 %s299, %s300
      %s302 = smul.addr %s301, 8
      %s303 = scalar_lea.vmem %s4, %s302
      %s304 = smul.u32 10, %s22
      %v306 = vld [vmem:[%s281] sm:$0xff]
      %v307 = vld [vmem:[%s281 + $0x8] sm:$0xff]
      %v308 = vld [vmem:[%s281 + $0x10] sm:$0xff]
      %v309 = vld [vmem:[%s281 + $0x18] sm:$0xff]
      %v310 = vld [vmem:[%s281 + $0x20] sm:$0xff]
      %v311 = vld [vmem:[%s281 + $0x28] sm:$0xff]
      %v312 = vld [vmem:[%s281 + $0x30] sm:$0xff]
      %v313 = vld [vmem:[%s281 + $0x38] sm:$0xff]
      %v314 = vld [vmem:[%s281 + $0x40] sm:$0xff]
      %v315 = vld [vmem:[%s281 + $0x48] sm:$0xff]
      %v316 = vld [vmem:[%s292] sm:$0xff]
      %v317 = vld [vmem:[%s292 + $0x8] sm:$0xff]
      %v318 = vld [vmem:[%s292 + $0x10] sm:$0xff]
      %v319 = vpack.c.bf16 %v307, %v306
      %v320 = vpack.c.bf16 %v309, %v308
      %v321 = vpack.c.bf16 %v311, %v310
      %v322 = vpack.c.bf16 %v313, %v312
      %v323 = vpack.c.bf16 %v315, %v314
      %v324 = vld [vmem:[%s2] sm:$0xf]
      %v325 = vld [vmem:[%s2 + $0x4] sm:$0xf]
      %v326 = vld [vmem:[%s2 + $0x8] sm:$0xf]
      %v327 = vld [vmem:[%s2 + $0xc] sm:$0xf]
      %v328 = vld [vmem:[%s2 + $0x10] sm:$0xf]
      %v329 = vld [vmem:[%s2 + $0x14] sm:$0xf]
      %v330 = vld [vmem:[%s2 + $0x18] sm:$0xf]
      %v331 = vld [vmem:[%s2 + $0x1c] sm:$0xf]
      %v332 = vld [vmem:[%s2 + $0x20] sm:$0xf]
      %v333 = vld [vmem:[%s2 + $0x24] sm:$0xf]
      %v334 = vld [vmem:[%s2 + $0x28] sm:$0xf]
      %v335 = vld [vmem:[%s2 + $0x2c] sm:$0xf]
      %v336 = vld [vmem:[%s2 + $0x30] sm:$0xf]
      %v337 = vld [vmem:[%s2 + $0x34] sm:$0xf]
      %v338 = vld [vmem:[%s2 + $0x38] sm:$0xf]
      %v339 = vld [vmem:[%s2 + $0x3c] sm:$0xf]
      %v340 = vpack.c.bf16 %v316, %v316
      %s341 = scalar_lea.vmem %s2, 64
      %v342 = vld [vmem:[%s341] sm:$0xf]
      %v343 = vld [vmem:[%s341 + $0x4] sm:$0xf]
      %v344 = vld [vmem:[%s341 + $0x8] sm:$0xf]
      %v345 = vld [vmem:[%s341 + $0xc] sm:$0xf]
      %v346 = vld [vmem:[%s341 + $0x10] sm:$0xf]
      %v347 = vld [vmem:[%s341 + $0x14] sm:$0xf]
      %v348 = vld [vmem:[%s341 + $0x18] sm:$0xf]
      %v349 = vld [vmem:[%s341 + $0x1c] sm:$0xf]
      %v350 = vld [vmem:[%s341 + $0x20] sm:$0xf]
      %v351 = vld [vmem:[%s341 + $0x24] sm:$0xf]
      %v352 = vld [vmem:[%s341 + $0x28] sm:$0xf]
      %v353 = vld [vmem:[%s341 + $0x2c] sm:$0xf]
      %v354 = vld [vmem:[%s341 + $0x30] sm:$0xf]
      %v355 = vld [vmem:[%s341 + $0x34] sm:$0xf]
      %v356 = vld [vmem:[%s341 + $0x38] sm:$0xf]
      %v357 = vld [vmem:[%s341 + $0x3c] sm:$0xf]
      %vm358 = vsmask.f32 7424
      %v360 = vshrl.u32 %v319, 16
      %v362 = vshll.u32 %v319, 16
      %v364 = vrot.slane %v362, 1
      %v365 = vor.u32 %v360, %v364
      %v367 = vshll.u32 %v320, 16
      %v369 = vrot.slane %v367, 1
      %v370 = vsel %vm358, %v365, %v369
      %v371 = vshrl.u32 %v320, 16
      %v373 = vor.u32 %v371, %v369
      %v375 = vshll.u32 %v321, 16
      %v377 = vrot.slane %v375, 1
      %v378 = vsel %vm358, %v373, %v377
      %v379 = vshrl.u32 %v321, 16
      %v381 = vor.u32 %v379, %v377
      %v383 = vshll.u32 %v322, 16
      %v385 = vrot.slane %v383, 1
      %v386 = vsel %vm358, %v381, %v385
      %v387 = vshrl.u32 %v322, 16
      %v389 = vor.u32 %v387, %v385
      %v391 = vshll.u32 %v323, 16
      %v393 = vrot.slane %v391, 1
      %v394 = vsel %vm358, %v389, %v393
      %v395 = vshrl.u32 %v323, 16
      %v397 = vor.u32 %v395, %v393
      %v399 = vshll.u32 %v340, 16
      %v401 = vrot.slane %v399, 1
      %v402 = vsel %vm358, %v397, %v401
      %v424 = vunpack.c.l.b16 %v342
      %v425 = vunpack.c.l.b16 %v343
      %v426 = vunpack.c.l.b16 %v344
      %v427 = vunpack.c.l.b16 %v345
      %v428 = vunpack.c.l.b16 %v346
      %v429 = vunpack.c.l.b16 %v347
      %v430 = vunpack.c.l.b16 %v348
      %v431 = vunpack.c.l.b16 %v349
      %v432 = vunpack.c.l.b16 %v350
      %v433 = vunpack.c.l.b16 %v351
      %v434 = vunpack.c.l.b16 %v352
      %v435 = vunpack.c.l.b16 %v353
      %v436 = vunpack.c.l.b16 %v354
      %v437 = vunpack.c.l.b16 %v355
      %v438 = vunpack.c.l.b16 %v356
      %v439 = vunpack.c.l.b16 %v357
      %v440 = vpack.c.b16 %v425, %v424
      %v441 = vpack.c.b16 %v427, %v426
      %v442 = vpack.c.b16 %v429, %v428
      %v443 = vpack.c.b16 %v431, %v430
      %v444 = vpack.c.b16 %v433, %v432
      %v445 = vpack.c.b16 %v435, %v434
      %v446 = vpack.c.b16 %v437, %v436
      %v447 = vpack.c.b16 %v439, %v438
      %456 = vmatprep.subr.bf16.mxu0 0
      %457 = vmatpush1.bf16.msra.mxu0 %v447
      %458 = vmatprep.subr.bf16.mxu0 0
      %459 = vmatpush1.bf16.msra.mxu0 %v446
      %460 = vmatprep.subr.bf16.mxu0 0
      %461 = vmatpush1.bf16.msra.mxu0 %v445
      %462 = vmatprep.subr.bf16.mxu0 0
      %463 = vmatpush1.bf16.msra.mxu0 %v444
      %464 = vmatprep.subr.bf16.mxu0 0
      %465 = vmatpush1.bf16.msra.mxu0 %v443
      %466 = vmatprep.subr.bf16.mxu0 0
      %467 = vmatpush1.bf16.msra.mxu0 %v442
      %468 = vmatprep.subr.bf16.mxu0 0
      %469 = vmatpush1.bf16.msra.mxu0 %v441
      %470 = vmatprep.subr.bf16.mxu0 0
      %471 = vmatpush1.bf16.msra.mxu0 %v440
      %472 = vmatprep.subr.bf16.mxu0 0
      %473 = vmatpush2.bf16.msra.mxu0 0
      %474 = vmatprep.subr.bf16.mxu0 0
      %475 = vmatpush2.bf16.msra.mxu0 0
      %476 = vmatprep.subr.bf16.mxu0 0
      %477 = vmatpush2.bf16.msra.mxu0 0
      %478 = vmatprep.subr.bf16.mxu0 0
      %479 = vmatpush2.bf16.msra.mxu0 0
      %480 = vmatprep.subr.bf16.mxu0 0
      %481 = vmatpush2.bf16.msra.mxu0 0
      %482 = vmatprep.subr.bf16.mxu0 0
      %483 = vmatpush2.bf16.msra.mxu0 0
      %484 = vmatprep.subr.bf16.mxu0 0
      %485 = vmatpush2.bf16.msra.mxu0 0
      %486 = vmatprep.subr.bf16.mxu0 0
      %487 = vmatpush2.bf16.msra.mxu0 0
      %488 = vmatprep.mubr.bf16.mxu0 0
      %489 = vmatmul.mubr.bf16.gmra.mxu0 %v370
      %v490 = vpop.f32.mrf.mxu0
      %v491 = vadd.f32 0.0, %v490
      %v492 = vpop.f32.mrf.mxu0
      %v493 = vpop.f32.mrf.mxu0
      %v494 = vadd.f32 0.0, %v493
      %v495 = vpop.f32.mrf.mxu0
      %496 = vmatprep.mubr.bf16.mxu0 0
      %497 = vmatmul.mubr.bf16.gmra.mxu0 %v378
      %v498 = vpop.f32.mrf.mxu0
      %v499 = vadd.f32 0.0, %v498
      %v500 = vpop.f32.mrf.mxu0
      %v501 = vpop.f32.mrf.mxu0
      %v502 = vadd.f32 0.0, %v501
      %v503 = vpop.f32.mrf.mxu0
      %504 = vmatprep.mubr.bf16.mxu0 0
      %505 = vmatmul.mubr.bf16.gmra.mxu0 %v386
      %v506 = vpop.f32.mrf.mxu0
      %v507 = vadd.f32 0.0, %v506
      %v508 = vpop.f32.mrf.mxu0
      %v509 = vpop.f32.mrf.mxu0
      %v510 = vadd.f32 0.0, %v509
      %v511 = vpop.f32.mrf.mxu0
      %512 = vmatprep.mubr.bf16.mxu0 0
      %513 = vmatmul.mubr.bf16.gmra.mxu0 %v394
      %v514 = vpop.f32.mrf.mxu0
      %v515 = vadd.f32 0.0, %v514
      %v516 = vpop.f32.mrf.mxu0
      %v517 = vpop.f32.mrf.mxu0
      %v518 = vadd.f32 0.0, %v517
      %v519 = vpop.f32.mrf.mxu0
      %520 = vmatprep.mubr.bf16.mxu0 0
      %521 = vmatmul.mubr.bf16.gmra.mxu0 %v402
      %v522 = vpop.f32.mrf.mxu0
      %v523 = vadd.f32 0.0, %v522
      %v524 = vpop.f32.mrf.mxu0
      %v525 = vpop.f32.mrf.mxu0
      %v526 = vadd.f32 0.0, %v525
      %v527 = vpop.f32.mrf.mxu0
      %528 = vdwg.mxu0
      %v545 = vunpack.c.l.b16 %v324
      %v546 = vunpack.c.l.b16 %v325
      %v547 = vunpack.c.l.b16 %v326
      %v548 = vunpack.c.l.b16 %v327
      %v549 = vunpack.c.l.b16 %v328
      %v550 = vunpack.c.l.b16 %v329
      %v551 = vunpack.c.l.b16 %v330
      %v552 = vunpack.c.l.b16 %v331
      %v553 = vunpack.c.l.b16 %v332
      %v554 = vunpack.c.l.b16 %v333
      %v555 = vunpack.c.l.b16 %v334
      %v556 = vunpack.c.l.b16 %v335
      %v557 = vunpack.c.l.b16 %v336
      %v558 = vunpack.c.l.b16 %v337
      %v559 = vunpack.c.l.b16 %v338
      %v560 = vunpack.c.l.b16 %v339
      %v561 = vpack.c.b16 %v546, %v545
      %v562 = vpack.c.b16 %v548, %v547
      %v563 = vpack.c.b16 %v550, %v549
      %v564 = vpack.c.b16 %v552, %v551
      %v565 = vpack.c.b16 %v554, %v553
      %v566 = vpack.c.b16 %v556, %v555
      %v567 = vpack.c.b16 %v558, %v557
      %v568 = vpack.c.b16 %v560, %v559
      %577 = vmatprep.subr.bf16.mxu0 0
      %578 = vmatpush1.bf16.msra.mxu0 %v568
      %579 = vmatprep.subr.bf16.mxu0 0
      %580 = vmatpush1.bf16.msra.mxu0 %v567
      %581 = vmatprep.subr.bf16.mxu0 0
      %582 = vmatpush1.bf16.msra.mxu0 %v566
      %583 = vmatprep.subr.bf16.mxu0 0
      %584 = vmatpush1.bf16.msra.mxu0 %v565
      %585 = vmatprep.subr.bf16.mxu0 0
      %586 = vmatpush1.bf16.msra.mxu0 %v564
      %587 = vmatprep.subr.bf16.mxu0 0
      %588 = vmatpush1.bf16.msra.mxu0 %v563
      %589 = vmatprep.subr.bf16.mxu0 0
      %590 = vmatpush1.bf16.msra.mxu0 %v562
      %591 = vmatprep.subr.bf16.mxu0 0
      %592 = vmatpush1.bf16.msra.mxu0 %v561
      %593 = vmatprep.subr.bf16.mxu0 0
      %594 = vmatpush2.bf16.msra.mxu0 0
      %595 = vmatprep.subr.bf16.mxu0 0
      %596 = vmatpush2.bf16.msra.mxu0 0
      %597 = vmatprep.subr.bf16.mxu0 0
      %598 = vmatpush2.bf16.msra.mxu0 0
      %599 = vmatprep.subr.bf16.mxu0 0
      %600 = vmatpush2.bf16.msra.mxu0 0
      %601 = vmatprep.subr.bf16.mxu0 0
      %602 = vmatpush2.bf16.msra.mxu0 0
      %603 = vmatprep.subr.bf16.mxu0 0
      %604 = vmatpush2.bf16.msra.mxu0 0
      %605 = vmatprep.subr.bf16.mxu0 0
      %606 = vmatpush2.bf16.msra.mxu0 0
      %607 = vmatprep.subr.bf16.mxu0 0
      %608 = vmatpush2.bf16.msra.mxu0 0
      %609 = vmatprep.mubr.bf16.mxu0 0
      %610 = vmatmul.mubr.bf16.gmra.mxu0 %v319
      %v611 = vpop.f32.mrf.mxu0
      %v612 = vadd.f32 %v491, %v611
      %v613 = vpop.f32.mrf.mxu0
      %v614 = vpop.f32.mrf.mxu0
      %v615 = vadd.f32 %v494, %v614
      %v616 = vpop.f32.mrf.mxu0
      %617 = vmatprep.mubr.bf16.mxu0 0
      %618 = vmatmul.mubr.bf16.gmra.mxu0 %v320
      %v619 = vpop.f32.mrf.mxu0
      %v620 = vadd.f32 %v499, %v619
      %v621 = vpop.f32.mrf.mxu0
      %v622 = vpop.f32.mrf.mxu0
      %v623 = vadd.f32 %v502, %v622
      %v624 = vpop.f32.mrf.mxu0
      %625 = vmatprep.mubr.bf16.mxu0 0
      %626 = vmatmul.mubr.bf16.gmra.mxu0 %v321
      %v627 = vpop.f32.mrf.mxu0
      %v628 = vadd.f32 %v507, %v627
      %v629 = vpop.f32.mrf.mxu0
      %v630 = vpop.f32.mrf.mxu0
      %v631 = vadd.f32 %v510, %v630
      %v632 = vpop.f32.mrf.mxu0
      %633 = vmatprep.mubr.bf16.mxu0 0
      %634 = vmatmul.mubr.bf16.gmra.mxu0 %v322
      %v635 = vpop.f32.mrf.mxu0
      %v636 = vadd.f32 %v515, %v635
      %v637 = vpop.f32.mrf.mxu0
      %v638 = vpop.f32.mrf.mxu0
      %v639 = vadd.f32 %v518, %v638
      %v640 = vpop.f32.mrf.mxu0
      %641 = vmatprep.mubr.bf16.mxu0 0
      %642 = vmatmul.mubr.bf16.gmra.mxu0 %v323
      %v643 = vpop.f32.mrf.mxu0
      %v644 = vadd.f32 %v523, %v643
      %v645 = vpop.f32.mrf.mxu0
      %v646 = vpop.f32.mrf.mxu0
      %v647 = vadd.f32 %v526, %v646
      %v648 = vpop.f32.mrf.mxu0
      %649 = vdwg.mxu0
      %s650 = scalar_lea.vmem %s2, 128
      %v651 = vld [vmem:[%s650] sm:$0xf]
      %v652 = vld [vmem:[%s650 + $0x4] sm:$0xf]
      %v653 = vld [vmem:[%s650 + $0x8] sm:$0xf]
      %v654 = vld [vmem:[%s650 + $0xc] sm:$0xf]
      %v655 = vld [vmem:[%s650 + $0x10] sm:$0xf]
      %v656 = vld [vmem:[%s650 + $0x14] sm:$0xf]
      %v657 = vld [vmem:[%s650 + $0x18] sm:$0xf]
      %v658 = vld [vmem:[%s650 + $0x1c] sm:$0xf]
      %v659 = vld [vmem:[%s650 + $0x20] sm:$0xf]
      %v660 = vld [vmem:[%s650 + $0x24] sm:$0xf]
      %v661 = vld [vmem:[%s650 + $0x28] sm:$0xf]
      %v662 = vld [vmem:[%s650 + $0x2c] sm:$0xf]
      %v663 = vld [vmem:[%s650 + $0x30] sm:$0xf]
      %v664 = vld [vmem:[%s650 + $0x34] sm:$0xf]
      %v665 = vld [vmem:[%s650 + $0x38] sm:$0xf]
      %v666 = vld [vmem:[%s650 + $0x3c] sm:$0xf]
      %vm673 = vcmask 1046528
      %v674 = vrot.slane %v319, 1
      %v675 = vrot.slane %v320, 1
      %v676 = vsel %vm673, %v674, %v675
      %v677 = vrot.slane %v321, 1
      %v678 = vsel %vm673, %v675, %v677
      %v679 = vrot.slane %v322, 1
      %v680 = vsel %vm673, %v677, %v679
      %v681 = vrot.slane %v323, 1
      %v682 = vsel %vm673, %v679, %v681
      %v683 = vrot.slane %v340, 1
      %v684 = vsel %vm673, %v681, %v683
      %v706 = vunpack.c.l.b16 %v651
      %v707 = vunpack.c.l.b16 %v652
      %v708 = vunpack.c.l.b16 %v653
      %v709 = vunpack.c.l.b16 %v654
      %v710 = vunpack.c.l.b16 %v655
      %v711 = vunpack.c.l.b16 %v656
      %v712 = vunpack.c.l.b16 %v657
      %v713 = vunpack.c.l.b16 %v658
      %v714 = vunpack.c.l.b16 %v659
      %v715 = vunpack.c.l.b16 %v660
      %v716 = vunpack.c.l.b16 %v661
      %v717 = vunpack.c.l.b16 %v662
      %v718 = vunpack.c.l.b16 %v663
      %v719 = vunpack.c.l.b16 %v664
      %v720 = vunpack.c.l.b16 %v665
      %v721 = vunpack.c.l.b16 %v666
      %v722 = vpack.c.b16 %v707, %v706
      %v723 = vpack.c.b16 %v709, %v708
      %v724 = vpack.c.b16 %v711, %v710
      %v725 = vpack.c.b16 %v713, %v712
      %v726 = vpack.c.b16 %v715, %v714
      %v727 = vpack.c.b16 %v717, %v716
      %v728 = vpack.c.b16 %v719, %v718
      %v729 = vpack.c.b16 %v721, %v720
      %738 = vmatprep.subr.bf16.mxu0 0
      %739 = vmatpush1.bf16.msra.mxu0 %v729
      %740 = vmatprep.subr.bf16.mxu0 0
      %741 = vmatpush1.bf16.msra.mxu0 %v728
      %742 = vmatprep.subr.bf16.mxu0 0
      %743 = vmatpush1.bf16.msra.mxu0 %v727
      %744 = vmatprep.subr.bf16.mxu0 0
      %745 = vmatpush1.bf16.msra.mxu0 %v726
      %746 = vmatprep.subr.bf16.mxu0 0
      %747 = vmatpush1.bf16.msra.mxu0 %v725
      %748 = vmatprep.subr.bf16.mxu0 0
      %749 = vmatpush1.bf16.msra.mxu0 %v724
      %750 = vmatprep.subr.bf16.mxu0 0
      %751 = vmatpush1.bf16.msra.mxu0 %v723
      %752 = vmatprep.subr.bf16.mxu0 0
      %753 = vmatpush1.bf16.msra.mxu0 %v722
      %754 = vmatprep.subr.bf16.mxu0 0
      %755 = vmatpush2.bf16.msra.mxu0 0
      %756 = vmatprep.subr.bf16.mxu0 0
      %757 = vmatpush2.bf16.msra.mxu0 0
      %758 = vmatprep.subr.bf16.mxu0 0
      %759 = vmatpush2.bf16.msra.mxu0 0
      %760 = vmatprep.subr.bf16.mxu0 0
      %761 = vmatpush2.bf16.msra.mxu0 0
      %762 = vmatprep.subr.bf16.mxu0 0
      %763 = vmatpush2.bf16.msra.mxu0 0
      %764 = vmatprep.subr.bf16.mxu0 0
      %765 = vmatpush2.bf16.msra.mxu0 0
      %766 = vmatprep.subr.bf16.mxu0 0
      %767 = vmatpush2.bf16.msra.mxu0 0
      %768 = vmatprep.subr.bf16.mxu0 0
      %769 = vmatpush2.bf16.msra.mxu0 0
      %770 = vmatprep.mubr.bf16.mxu0 0
      %771 = vmatmul.mubr.bf16.gmra.mxu0 %v676
      %v772 = vpop.f32.mrf.mxu0
      %v773 = vadd.f32 0.0, %v772
      %v774 = vpop.f32.mrf.mxu0
      %v775 = vpop.f32.mrf.mxu0
      %v776 = vadd.f32 0.0, %v775
      %v777 = vpop.f32.mrf.mxu0
      %778 = vmatprep.mubr.bf16.mxu0 0
      %779 = vmatmul.mubr.bf16.gmra.mxu0 %v678
      %v780 = vpop.f32.mrf.mxu0
      %v781 = vadd.f32 0.0, %v780
      %v782 = vpop.f32.mrf.mxu0
      %v783 = vpop.f32.mrf.mxu0
      %v784 = vadd.f32 0.0, %v783
      %v785 = vpop.f32.mrf.mxu0
      %786 = vmatprep.mubr.bf16.mxu0 0
      %787 = vmatmul.mubr.bf16.gmra.mxu0 %v680
      %v788 = vpop.f32.mrf.mxu0
      %v789 = vadd.f32 0.0, %v788
      %v790 = vpop.f32.mrf.mxu0
      %v791 = vpop.f32.mrf.mxu0
      %v792 = vadd.f32 0.0, %v791
      %v793 = vpop.f32.mrf.mxu0
      %794 = vmatprep.mubr.bf16.mxu0 0
      %795 = vmatmul.mubr.bf16.gmra.mxu0 %v682
      %v796 = vpop.f32.mrf.mxu0
      %v797 = vadd.f32 0.0, %v796
      %v798 = vpop.f32.mrf.mxu0
      %v799 = vpop.f32.mrf.mxu0
      %v800 = vadd.f32 0.0, %v799
      %v801 = vpop.f32.mrf.mxu0
      %802 = vmatprep.mubr.bf16.mxu0 0
      %803 = vmatmul.mubr.bf16.gmra.mxu0 %v684
      %v804 = vpop.f32.mrf.mxu0
      %v805 = vadd.f32 0.0, %v804
      %v806 = vpop.f32.mrf.mxu0
      %v807 = vpop.f32.mrf.mxu0
      %v808 = vadd.f32 0.0, %v807
      %v809 = vpop.f32.mrf.mxu0
      %810 = vdwg.mxu0
      %v811 = vadd.f32 %v612, %v773
      %v812 = vadd.f32 %v615, %v776
      %v813 = vadd.f32 %v620, %v781
      %v814 = vadd.f32 %v623, %v784
      %v815 = vadd.f32 %v628, %v789
      %v816 = vadd.f32 %v631, %v792
      %v817 = vadd.f32 %v636, %v797
      %v818 = vadd.f32 %v639, %v800
      %v819 = vadd.f32 %v644, %v805
      %v820 = vadd.f32 %v647, %v808
      %v821 = vpack.c.bf16 %v308, %v307
      %v822 = vpack.c.bf16 %v310, %v309
      %v823 = vpack.c.bf16 %v312, %v311
      %v824 = vpack.c.bf16 %v314, %v313
      %v825 = vpack.c.bf16 %v316, %v315
      %v826 = vpack.c.bf16 %v317, %v317
      %s827 = scalar_lea.vmem %s2, 192
      %v828 = vld [vmem:[%s827] sm:$0xf]
      %v829 = vld [vmem:[%s827 + $0x4] sm:$0xf]
      %v830 = vld [vmem:[%s827 + $0x8] sm:$0xf]
      %v831 = vld [vmem:[%s827 + $0xc] sm:$0xf]
      %v832 = vld [vmem:[%s827 + $0x10] sm:$0xf]
      %v833 = vld [vmem:[%s827 + $0x14] sm:$0xf]
      %v834 = vld [vmem:[%s827 + $0x18] sm:$0xf]
      %v835 = vld [vmem:[%s827 + $0x1c] sm:$0xf]
      %v836 = vld [vmem:[%s827 + $0x20] sm:$0xf]
      %v837 = vld [vmem:[%s827 + $0x24] sm:$0xf]
      %v838 = vld [vmem:[%s827 + $0x28] sm:$0xf]
      %v839 = vld [vmem:[%s827 + $0x2c] sm:$0xf]
      %v840 = vld [vmem:[%s827 + $0x30] sm:$0xf]
      %v841 = vld [vmem:[%s827 + $0x34] sm:$0xf]
      %v842 = vld [vmem:[%s827 + $0x38] sm:$0xf]
      %v843 = vld [vmem:[%s827 + $0x3c] sm:$0xf]
      %v850 = vrot.slane %v821, 1
      %v851 = vrot.slane %v822, 1
      %v852 = vsel %vm673, %v850, %v851
      %v853 = vrot.slane %v823, 1
      %v854 = vsel %vm673, %v851, %v853
      %v855 = vrot.slane %v824, 1
      %v856 = vsel %vm673, %v853, %v855
      %v857 = vrot.slane %v825, 1
      %v858 = vsel %vm673, %v855, %v857
      %v859 = vrot.slane %v826, 1
      %v860 = vsel %vm673, %v857, %v859
      %v882 = vunpack.c.l.b16 %v828
      %v883 = vunpack.c.l.b16 %v829
      %v884 = vunpack.c.l.b16 %v830
      %v885 = vunpack.c.l.b16 %v831
      %v886 = vunpack.c.l.b16 %v832
      %v887 = vunpack.c.l.b16 %v833
      %v888 = vunpack.c.l.b16 %v834
      %v889 = vunpack.c.l.b16 %v835
      %v890 = vunpack.c.l.b16 %v836
      %v891 = vunpack.c.l.b16 %v837
      %v892 = vunpack.c.l.b16 %v838
      %v893 = vunpack.c.l.b16 %v839
      %v894 = vunpack.c.l.b16 %v840
      %v895 = vunpack.c.l.b16 %v841
      %v896 = vunpack.c.l.b16 %v842
      %v897 = vunpack.c.l.b16 %v843
      %v898 = vpack.c.b16 %v883, %v882
      %v899 = vpack.c.b16 %v885, %v884
      %v900 = vpack.c.b16 %v887, %v886
      %v901 = vpack.c.b16 %v889, %v888
      %v902 = vpack.c.b16 %v891, %v890
      %v903 = vpack.c.b16 %v893, %v892
      %v904 = vpack.c.b16 %v895, %v894
      %v905 = vpack.c.b16 %v897, %v896
      %914 = vmatprep.subr.bf16.mxu0 0
      %915 = vmatpush1.bf16.msra.mxu0 %v905
      %916 = vmatprep.subr.bf16.mxu0 0
      %917 = vmatpush1.bf16.msra.mxu0 %v904
      %918 = vmatprep.subr.bf16.mxu0 0
      %919 = vmatpush1.bf16.msra.mxu0 %v903
      %920 = vmatprep.subr.bf16.mxu0 0
      %921 = vmatpush1.bf16.msra.mxu0 %v902
      %922 = vmatprep.subr.bf16.mxu0 0
      %923 = vmatpush1.bf16.msra.mxu0 %v901
      %924 = vmatprep.subr.bf16.mxu0 0
      %925 = vmatpush1.bf16.msra.mxu0 %v900
      %926 = vmatprep.subr.bf16.mxu0 0
      %927 = vmatpush1.bf16.msra.mxu0 %v899
      %928 = vmatprep.subr.bf16.mxu0 0
      %929 = vmatpush1.bf16.msra.mxu0 %v898
      %930 = vmatprep.subr.bf16.mxu0 0
      %931 = vmatpush2.bf16.msra.mxu0 0
      %932 = vmatprep.subr.bf16.mxu0 0
      %933 = vmatpush2.bf16.msra.mxu0 0
      %934 = vmatprep.subr.bf16.mxu0 0
      %935 = vmatpush2.bf16.msra.mxu0 0
      %936 = vmatprep.subr.bf16.mxu0 0
      %937 = vmatpush2.bf16.msra.mxu0 0
      %938 = vmatprep.subr.bf16.mxu0 0
      %939 = vmatpush2.bf16.msra.mxu0 0
      %940 = vmatprep.subr.bf16.mxu0 0
      %941 = vmatpush2.bf16.msra.mxu0 0
      %942 = vmatprep.subr.bf16.mxu0 0
      %943 = vmatpush2.bf16.msra.mxu0 0
      %944 = vmatprep.subr.bf16.mxu0 0
      %945 = vmatpush2.bf16.msra.mxu0 0
      %946 = vmatprep.mubr.bf16.mxu0 0
      %947 = vmatmul.mubr.bf16.gmra.mxu0 %v852
      %v948 = vpop.f32.mrf.mxu0
      %v949 = vadd.f32 0.0, %v948
      %v950 = vpop.f32.mrf.mxu0
      %v951 = vpop.f32.mrf.mxu0
      %v952 = vadd.f32 0.0, %v951
      %v953 = vpop.f32.mrf.mxu0
      %954 = vmatprep.mubr.bf16.mxu0 0
      %955 = vmatmul.mubr.bf16.gmra.mxu0 %v854
      %v956 = vpop.f32.mrf.mxu0
      %v957 = vadd.f32 0.0, %v956
      %v958 = vpop.f32.mrf.mxu0
      %v959 = vpop.f32.mrf.mxu0
      %v960 = vadd.f32 0.0, %v959
      %v961 = vpop.f32.mrf.mxu0
      %962 = vmatprep.mubr.bf16.mxu0 0
      %963 = vmatmul.mubr.bf16.gmra.mxu0 %v856
      %v964 = vpop.f32.mrf.mxu0
      %v965 = vadd.f32 0.0, %v964
      %v966 = vpop.f32.mrf.mxu0
      %v967 = vpop.f32.mrf.mxu0
      %v968 = vadd.f32 0.0, %v967
      %v969 = vpop.f32.mrf.mxu0
      %970 = vmatprep.mubr.bf16.mxu0 0
      %971 = vmatmul.mubr.bf16.gmra.mxu0 %v858
      %v972 = vpop.f32.mrf.mxu0
      %v973 = vadd.f32 0.0, %v972
      %v974 = vpop.f32.mrf.mxu0
      %v975 = vpop.f32.mrf.mxu0
      %v976 = vadd.f32 0.0, %v975
      %v977 = vpop.f32.mrf.mxu0
      %978 = vmatprep.mubr.bf16.mxu0 0
      %979 = vmatmul.mubr.bf16.gmra.mxu0 %v860
      %v980 = vpop.f32.mrf.mxu0
      %v981 = vadd.f32 0.0, %v980
      %v982 = vpop.f32.mrf.mxu0
      %v983 = vpop.f32.mrf.mxu0
      %v984 = vadd.f32 0.0, %v983
      %v985 = vpop.f32.mrf.mxu0
      %986 = vdwg.mxu0
      %v987 = vadd.f32 %v811, %v949
      %v988 = vadd.f32 %v812, %v952
      %v989 = vadd.f32 %v813, %v957
      %v990 = vadd.f32 %v814, %v960
      %v991 = vadd.f32 %v815, %v965
      %v992 = vadd.f32 %v816, %v968
      %v993 = vadd.f32 %v817, %v973
      %v994 = vadd.f32 %v818, %v976
      %v995 = vadd.f32 %v819, %v981
      %v996 = vadd.f32 %v820, %v984
      %s997 = scalar_lea.vmem %s2, 256
      %v998 = vld [vmem:[%s997] sm:$0xf]
      %v999 = vld [vmem:[%s997 + $0x4] sm:$0xf]
      %v1000 = vld [vmem:[%s997 + $0x8] sm:$0xf]
      %v1001 = vld [vmem:[%s997 + $0xc] sm:$0xf]
      %v1002 = vld [vmem:[%s997 + $0x10] sm:$0xf]
      %v1003 = vld [vmem:[%s997 + $0x14] sm:$0xf]
      %v1004 = vld [vmem:[%s997 + $0x18] sm:$0xf]
      %v1005 = vld [vmem:[%s997 + $0x1c] sm:$0xf]
      %v1006 = vld [vmem:[%s997 + $0x20] sm:$0xf]
      %v1007 = vld [vmem:[%s997 + $0x24] sm:$0xf]
      %v1008 = vld [vmem:[%s997 + $0x28] sm:$0xf]
      %v1009 = vld [vmem:[%s997 + $0x2c] sm:$0xf]
      %v1010 = vld [vmem:[%s997 + $0x30] sm:$0xf]
      %v1011 = vld [vmem:[%s997 + $0x34] sm:$0xf]
      %v1012 = vld [vmem:[%s997 + $0x38] sm:$0xf]
      %v1013 = vld [vmem:[%s997 + $0x3c] sm:$0xf]
      %vm1014 = vsmask.f32 6400
      %v1016 = vshrl.u32 %v821, 16
      %v1018 = vrot.slane %v1016, 1
      %v1019 = vshll.u32 %v821, 16
      %v1021 = vrot.slane %v1019, 2
      %v1022 = vor.u32 %v1018, %v1021
      %v1024 = vshrl.u32 %v822, 16
      %v1026 = vrot.slane %v1024, 1
      %v1027 = vshll.u32 %v822, 16
      %v1029 = vrot.slane %v1027, 2
      %v1030 = vor.u32 %v1026, %v1029
      %v1031 = vsel %vm1014, %v1022, %v1030
      %v1033 = vshrl.u32 %v823, 16
      %v1035 = vrot.slane %v1033, 1
      %v1036 = vshll.u32 %v823, 16
      %v1038 = vrot.slane %v1036, 2
      %v1039 = vor.u32 %v1035, %v1038
      %v1040 = vsel %vm1014, %v1030, %v1039
      %v1042 = vshrl.u32 %v824, 16
      %v1044 = vrot.slane %v1042, 1
      %v1045 = vshll.u32 %v824, 16
      %v1047 = vrot.slane %v1045, 2
      %v1048 = vor.u32 %v1044, %v1047
      %v1049 = vsel %vm1014, %v1039, %v1048
      %v1051 = vshrl.u32 %v825, 16
      %v1053 = vrot.slane %v1051, 1
      %v1054 = vshll.u32 %v825, 16
      %v1056 = vrot.slane %v1054, 2
      %v1057 = vor.u32 %v1053, %v1056
      %v1058 = vsel %vm1014, %v1048, %v1057
      %v1060 = vshrl.u32 %v826, 16
      %v1062 = vrot.slane %v1060, 1
      %v1063 = vshll.u32 %v826, 16
      %v1065 = vrot.slane %v1063, 2
      %v1066 = vor.u32 %v1062, %v1065
      %v1067 = vsel %vm1014, %v1057, %v1066
      %v1089 = vunpack.c.l.b16 %v998
      %v1090 = vunpack.c.l.b16 %v999
      %v1091 = vunpack.c.l.b16 %v1000
      %v1092 = vunpack.c.l.b16 %v1001
      %v1093 = vunpack.c.l.b16 %v1002
      %v1094 = vunpack.c.l.b16 %v1003
      %v1095 = vunpack.c.l.b16 %v1004
      %v1096 = vunpack.c.l.b16 %v1005
      %v1097 = vunpack.c.l.b16 %v1006
      %v1098 = vunpack.c.l.b16 %v1007
      %v1099 = vunpack.c.l.b16 %v1008
      %v1100 = vunpack.c.l.b16 %v1009
      %v1101 = vunpack.c.l.b16 %v1010
      %v1102 = vunpack.c.l.b16 %v1011
      %v1103 = vunpack.c.l.b16 %v1012
      %v1104 = vunpack.c.l.b16 %v1013
      %v1105 = vpack.c.b16 %v1090, %v1089
      %v1106 = vpack.c.b16 %v1092, %v1091
      %v1107 = vpack.c.b16 %v1094, %v1093
      %v1108 = vpack.c.b16 %v1096, %v1095
      %v1109 = vpack.c.b16 %v1098, %v1097
      %v1110 = vpack.c.b16 %v1100, %v1099
      %v1111 = vpack.c.b16 %v1102, %v1101
      %v1112 = vpack.c.b16 %v1104, %v1103
      %1121 = vmatprep.subr.bf16.mxu0 0
      %1122 = vmatpush1.bf16.msra.mxu0 %v1112
      %1123 = vmatprep.subr.bf16.mxu0 0
      %1124 = vmatpush1.bf16.msra.mxu0 %v1111
      %1125 = vmatprep.subr.bf16.mxu0 0
      %1126 = vmatpush1.bf16.msra.mxu0 %v1110
      %1127 = vmatprep.subr.bf16.mxu0 0
      %1128 = vmatpush1.bf16.msra.mxu0 %v1109
      %1129 = vmatprep.subr.bf16.mxu0 0
      %1130 = vmatpush1.bf16.msra.mxu0 %v1108
      %1131 = vmatprep.subr.bf16.mxu0 0
      %1132 = vmatpush1.bf16.msra.mxu0 %v1107
      %1133 = vmatprep.subr.bf16.mxu0 0
      %1134 = vmatpush1.bf16.msra.mxu0 %v1106
      %1135 = vmatprep.subr.bf16.mxu0 0
      %1136 = vmatpush1.bf16.msra.mxu0 %v1105
      %1137 = vmatprep.subr.bf16.mxu0 0
      %1138 = vmatpush2.bf16.msra.mxu0 0
      %1139 = vmatprep.subr.bf16.mxu0 0
      %1140 = vmatpush2.bf16.msra.mxu0 0
      %1141 = vmatprep.subr.bf16.mxu0 0
      %1142 = vmatpush2.bf16.msra.mxu0 0
      %1143 = vmatprep.subr.bf16.mxu0 0
      %1144 = vmatpush2.bf16.msra.mxu0 0
      %1145 = vmatprep.subr.bf16.mxu0 0
      %1146 = vmatpush2.bf16.msra.mxu0 0
      %1147 = vmatprep.subr.bf16.mxu0 0
      %1148 = vmatpush2.bf16.msra.mxu0 0
      %1149 = vmatprep.subr.bf16.mxu0 0
      %1150 = vmatpush2.bf16.msra.mxu0 0
      %1151 = vmatprep.subr.bf16.mxu0 0
      %1152 = vmatpush2.bf16.msra.mxu0 0
      %1153 = vmatprep.mubr.bf16.mxu0 0
      %1154 = vmatmul.mubr.bf16.gmra.mxu0 %v1031
      %v1155 = vpop.f32.mrf.mxu0
      %v1156 = vadd.f32 0.0, %v1155
      %v1157 = vpop.f32.mrf.mxu0
      %v1158 = vpop.f32.mrf.mxu0
      %v1159 = vadd.f32 0.0, %v1158
      %v1160 = vpop.f32.mrf.mxu0
      %1161 = vmatprep.mubr.bf16.mxu0 0
      %1162 = vmatmul.mubr.bf16.gmra.mxu0 %v1040
      %v1163 = vpop.f32.mrf.mxu0
      %v1164 = vadd.f32 0.0, %v1163
      %v1165 = vpop.f32.mrf.mxu0
      %v1166 = vpop.f32.mrf.mxu0
      %v1167 = vadd.f32 0.0, %v1166
      %v1168 = vpop.f32.mrf.mxu0
      %1169 = vmatprep.mubr.bf16.mxu0 0
      %1170 = vmatmul.mubr.bf16.gmra.mxu0 %v1049
      %v1171 = vpop.f32.mrf.mxu0
      %v1172 = vadd.f32 0.0, %v1171
      %v1173 = vpop.f32.mrf.mxu0
      %v1174 = vpop.f32.mrf.mxu0
      %v1175 = vadd.f32 0.0, %v1174
      %v1176 = vpop.f32.mrf.mxu0
      %1177 = vmatprep.mubr.bf16.mxu0 0
      %1178 = vmatmul.mubr.bf16.gmra.mxu0 %v1058
      %v1179 = vpop.f32.mrf.mxu0
      %v1180 = vadd.f32 0.0, %v1179
      %v1181 = vpop.f32.mrf.mxu0
      %v1182 = vpop.f32.mrf.mxu0
      %v1183 = vadd.f32 0.0, %v1182
      %v1184 = vpop.f32.mrf.mxu0
      %1185 = vmatprep.mubr.bf16.mxu0 0
      %1186 = vmatmul.mubr.bf16.gmra.mxu0 %v1067
      %v1187 = vpop.f32.mrf.mxu0
      %v1188 = vadd.f32 0.0, %v1187
      %v1189 = vpop.f32.mrf.mxu0
      %v1190 = vpop.f32.mrf.mxu0
      %v1191 = vadd.f32 0.0, %v1190
      %v1192 = vpop.f32.mrf.mxu0
      %1193 = vdwg.mxu0
      %v1194 = vadd.f32 %v987, %v1156
      %v1195 = vadd.f32 %v988, %v1159
      %v1196 = vadd.f32 %v989, %v1164
      %v1197 = vadd.f32 %v990, %v1167
      %v1198 = vadd.f32 %v991, %v1172
      %v1199 = vadd.f32 %v992, %v1175
      %v1200 = vadd.f32 %v993, %v1180
      %v1201 = vadd.f32 %v994, %v1183
      %v1202 = vadd.f32 %v995, %v1188
      %v1203 = vadd.f32 %v996, %v1191
      %s1204 = scalar_lea.vmem %s2, 320
      %v1205 = vld [vmem:[%s1204] sm:$0xf]
      %v1206 = vld [vmem:[%s1204 + $0x4] sm:$0xf]
      %v1207 = vld [vmem:[%s1204 + $0x8] sm:$0xf]
      %v1208 = vld [vmem:[%s1204 + $0xc] sm:$0xf]
      %v1209 = vld [vmem:[%s1204 + $0x10] sm:$0xf]
      %v1210 = vld [vmem:[%s1204 + $0x14] sm:$0xf]
      %v1211 = vld [vmem:[%s1204 + $0x18] sm:$0xf]
      %v1212 = vld [vmem:[%s1204 + $0x1c] sm:$0xf]
      %v1213 = vld [vmem:[%s1204 + $0x20] sm:$0xf]
      %v1214 = vld [vmem:[%s1204 + $0x24] sm:$0xf]
      %v1215 = vld [vmem:[%s1204 + $0x28] sm:$0xf]
      %v1216 = vld [vmem:[%s1204 + $0x2c] sm:$0xf]
      %v1217 = vld [vmem:[%s1204 + $0x30] sm:$0xf]
      %v1218 = vld [vmem:[%s1204 + $0x34] sm:$0xf]
      %v1219 = vld [vmem:[%s1204 + $0x38] sm:$0xf]
      %v1220 = vld [vmem:[%s1204 + $0x3c] sm:$0xf]
      %vm1221 = vcmask 1045504
      %v1222 = vrot.slane %v821, 2
      %v1223 = vrot.slane %v822, 2
      %v1224 = vsel %vm1221, %v1222, %v1223
      %v1225 = vrot.slane %v823, 2
      %v1226 = vsel %vm1221, %v1223, %v1225
      %v1227 = vrot.slane %v824, 2
      %v1228 = vsel %vm1221, %v1225, %v1227
      %v1229 = vrot.slane %v825, 2
      %v1230 = vsel %vm1221, %v1227, %v1229
      %v1231 = vrot.slane %v826, 2
      %v1232 = vsel %vm1221, %v1229, %v1231
      %v1254 = vunpack.c.l.b16 %v1205
      %v1255 = vunpack.c.l.b16 %v1206
      %v1256 = vunpack.c.l.b16 %v1207
      %v1257 = vunpack.c.l.b16 %v1208
      %v1258 = vunpack.c.l.b16 %v1209
      %v1259 = vunpack.c.l.b16 %v1210
      %v1260 = vunpack.c.l.b16 %v1211
      %v1261 = vunpack.c.l.b16 %v1212
      %v1262 = vunpack.c.l.b16 %v1213
      %v1263 = vunpack.c.l.b16 %v1214
      %v1264 = vunpack.c.l.b16 %v1215
      %v1265 = vunpack.c.l.b16 %v1216
      %v1266 = vunpack.c.l.b16 %v1217
      %v1267 = vunpack.c.l.b16 %v1218
      %v1268 = vunpack.c.l.b16 %v1219
      %v1269 = vunpack.c.l.b16 %v1220
      %v1270 = vpack.c.b16 %v1255, %v1254
      %v1271 = vpack.c.b16 %v1257, %v1256
      %v1272 = vpack.c.b16 %v1259, %v1258
      %v1273 = vpack.c.b16 %v1261, %v1260
      %v1274 = vpack.c.b16 %v1263, %v1262
      %v1275 = vpack.c.b16 %v1265, %v1264
      %v1276 = vpack.c.b16 %v1267, %v1266
      %v1277 = vpack.c.b16 %v1269, %v1268
      %1286 = vmatprep.subr.bf16.mxu0 0
      %1287 = vmatpush1.bf16.msra.mxu0 %v1277
      %1288 = vmatprep.subr.bf16.mxu0 0
      %1289 = vmatpush1.bf16.msra.mxu0 %v1276
      %1290 = vmatprep.subr.bf16.mxu0 0
      %1291 = vmatpush1.bf16.msra.mxu0 %v1275
      %1292 = vmatprep.subr.bf16.mxu0 0
      %1293 = vmatpush1.bf16.msra.mxu0 %v1274
      %1294 = vmatprep.subr.bf16.mxu0 0
      %1295 = vmatpush1.bf16.msra.mxu0 %v1273
      %1296 = vmatprep.subr.bf16.mxu0 0
      %1297 = vmatpush1.bf16.msra.mxu0 %v1272
      %1298 = vmatprep.subr.bf16.mxu0 0
      %1299 = vmatpush1.bf16.msra.mxu0 %v1271
      %1300 = vmatprep.subr.bf16.mxu0 0
      %1301 = vmatpush1.bf16.msra.mxu0 %v1270
      %1302 = vmatprep.subr.bf16.mxu0 0
      %1303 = vmatpush2.bf16.msra.mxu0 0
      %1304 = vmatprep.subr.bf16.mxu0 0
      %1305 = vmatpush2.bf16.msra.mxu0 0
      %1306 = vmatprep.subr.bf16.mxu0 0
      %1307 = vmatpush2.bf16.msra.mxu0 0
      %1308 = vmatprep.subr.bf16.mxu0 0
      %1309 = vmatpush2.bf16.msra.mxu0 0
      %1310 = vmatprep.subr.bf16.mxu0 0
      %1311 = vmatpush2.bf16.msra.mxu0 0
      %1312 = vmatprep.subr.bf16.mxu0 0
      %1313 = vmatpush2.bf16.msra.mxu0 0
      %1314 = vmatprep.subr.bf16.mxu0 0
      %1315 = vmatpush2.bf16.msra.mxu0 0
      %1316 = vmatprep.subr.bf16.mxu0 0
      %1317 = vmatpush2.bf16.msra.mxu0 0
      %1318 = vmatprep.mubr.bf16.mxu0 0
      %1319 = vmatmul.mubr.bf16.gmra.mxu0 %v1224
      %v1320 = vpop.f32.mrf.mxu0
      %v1321 = vadd.f32 0.0, %v1320
      %v1322 = vpop.f32.mrf.mxu0
      %v1323 = vpop.f32.mrf.mxu0
      %v1324 = vadd.f32 0.0, %v1323
      %v1325 = vpop.f32.mrf.mxu0
      %1326 = vmatprep.mubr.bf16.mxu0 0
      %1327 = vmatmul.mubr.bf16.gmra.mxu0 %v1226
      %v1328 = vpop.f32.mrf.mxu0
      %v1329 = vadd.f32 0.0, %v1328
      %v1330 = vpop.f32.mrf.mxu0
      %v1331 = vpop.f32.mrf.mxu0
      %v1332 = vadd.f32 0.0, %v1331
      %v1333 = vpop.f32.mrf.mxu0
      %1334 = vmatprep.mubr.bf16.mxu0 0
      %1335 = vmatmul.mubr.bf16.gmra.mxu0 %v1228
      %v1336 = vpop.f32.mrf.mxu0
      %v1337 = vadd.f32 0.0, %v1336
      %v1338 = vpop.f32.mrf.mxu0
      %v1339 = vpop.f32.mrf.mxu0
      %v1340 = vadd.f32 0.0, %v1339
      %v1341 = vpop.f32.mrf.mxu0
      %1342 = vmatprep.mubr.bf16.mxu0 0
      %1343 = vmatmul.mubr.bf16.gmra.mxu0 %v1230
      %v1344 = vpop.f32.mrf.mxu0
      %v1345 = vadd.f32 0.0, %v1344
      %v1346 = vpop.f32.mrf.mxu0
      %v1347 = vpop.f32.mrf.mxu0
      %v1348 = vadd.f32 0.0, %v1347
      %v1349 = vpop.f32.mrf.mxu0
      %1350 = vmatprep.mubr.bf16.mxu0 0
      %1351 = vmatmul.mubr.bf16.gmra.mxu0 %v1232
      %v1352 = vpop.f32.mrf.mxu0
      %v1353 = vadd.f32 0.0, %v1352
      %v1354 = vpop.f32.mrf.mxu0
      %v1355 = vpop.f32.mrf.mxu0
      %v1356 = vadd.f32 0.0, %v1355
      %v1357 = vpop.f32.mrf.mxu0
      %1358 = vdwg.mxu0
      %v1359 = vadd.f32 %v1194, %v1321
      %v1360 = vadd.f32 %v1195, %v1324
      %v1361 = vadd.f32 %v1196, %v1329
      %v1362 = vadd.f32 %v1197, %v1332
      %v1363 = vadd.f32 %v1198, %v1337
      %v1364 = vadd.f32 %v1199, %v1340
      %v1365 = vadd.f32 %v1200, %v1345
      %v1366 = vadd.f32 %v1201, %v1348
      %v1367 = vadd.f32 %v1202, %v1353
      %v1368 = vadd.f32 %v1203, %v1356
      %v1369 = vpack.c.bf16 %v317, %v316
      %v1370 = vpack.c.bf16 %v318, %v318
      %s1371 = scalar_lea.vmem %s2, 384
      %v1372 = vld [vmem:[%s1371] sm:$0xf]
      %v1373 = vld [vmem:[%s1371 + $0x4] sm:$0xf]
      %v1374 = vld [vmem:[%s1371 + $0x8] sm:$0xf]
      %v1375 = vld [vmem:[%s1371 + $0xc] sm:$0xf]
      %v1376 = vld [vmem:[%s1371 + $0x10] sm:$0xf]
      %v1377 = vld [vmem:[%s1371 + $0x14] sm:$0xf]
      %v1378 = vld [vmem:[%s1371 + $0x18] sm:$0xf]
      %v1379 = vld [vmem:[%s1371 + $0x1c] sm:$0xf]
      %v1380 = vld [vmem:[%s1371 + $0x20] sm:$0xf]
      %v1381 = vld [vmem:[%s1371 + $0x24] sm:$0xf]
      %v1382 = vld [vmem:[%s1371 + $0x28] sm:$0xf]
      %v1383 = vld [vmem:[%s1371 + $0x2c] sm:$0xf]
      %v1384 = vld [vmem:[%s1371 + $0x30] sm:$0xf]
      %v1385 = vld [vmem:[%s1371 + $0x34] sm:$0xf]
      %v1386 = vld [vmem:[%s1371 + $0x38] sm:$0xf]
      %v1387 = vld [vmem:[%s1371 + $0x3c] sm:$0xf]
      %v1390 = vrot.slane %v320, 2
      %v1391 = vrot.slane %v321, 2
      %v1392 = vsel %vm1221, %v1390, %v1391
      %v1393 = vrot.slane %v322, 2
      %v1394 = vsel %vm1221, %v1391, %v1393
      %v1395 = vrot.slane %v323, 2
      %v1396 = vsel %vm1221, %v1393, %v1395
      %v1397 = vrot.slane %v1369, 2
      %v1398 = vsel %vm1221, %v1395, %v1397
      %v1399 = vrot.slane %v1370, 2
      %v1400 = vsel %vm1221, %v1397, %v1399
      %v1422 = vunpack.c.l.b16 %v1372
      %v1423 = vunpack.c.l.b16 %v1373
      %v1424 = vunpack.c.l.b16 %v1374
      %v1425 = vunpack.c.l.b16 %v1375
      %v1426 = vunpack.c.l.b16 %v1376
      %v1427 = vunpack.c.l.b16 %v1377
      %v1428 = vunpack.c.l.b16 %v1378
      %v1429 = vunpack.c.l.b16 %v1379
      %v1430 = vunpack.c.l.b16 %v1380
      %v1431 = vunpack.c.l.b16 %v1381
      %v1432 = vunpack.c.l.b16 %v1382
      %v1433 = vunpack.c.l.b16 %v1383
      %v1434 = vunpack.c.l.b16 %v1384
      %v1435 = vunpack.c.l.b16 %v1385
      %v1436 = vunpack.c.l.b16 %v1386
      %v1437 = vunpack.c.l.b16 %v1387
      %v1438 = vpack.c.b16 %v1423, %v1422
      %v1439 = vpack.c.b16 %v1425, %v1424
      %v1440 = vpack.c.b16 %v1427, %v1426
      %v1441 = vpack.c.b16 %v1429, %v1428
      %v1442 = vpack.c.b16 %v1431, %v1430
      %v1443 = vpack.c.b16 %v1433, %v1432
      %v1444 = vpack.c.b16 %v1435, %v1434
      %v1445 = vpack.c.b16 %v1437, %v1436
      %1454 = vmatprep.subr.bf16.mxu0 0
      %1455 = vmatpush1.bf16.msra.mxu0 %v1445
      %1456 = vmatprep.subr.bf16.mxu0 0
      %1457 = vmatpush1.bf16.msra.mxu0 %v1444
      %1458 = vmatprep.subr.bf16.mxu0 0
      %1459 = vmatpush1.bf16.msra.mxu0 %v1443
      %1460 = vmatprep.subr.bf16.mxu0 0
      %1461 = vmatpush1.bf16.msra.mxu0 %v1442
      %1462 = vmatprep.subr.bf16.mxu0 0
      %1463 = vmatpush1.bf16.msra.mxu0 %v1441
      %1464 = vmatprep.subr.bf16.mxu0 0
      %1465 = vmatpush1.bf16.msra.mxu0 %v1440
      %1466 = vmatprep.subr.bf16.mxu0 0
      %1467 = vmatpush1.bf16.msra.mxu0 %v1439
      %1468 = vmatprep.subr.bf16.mxu0 0
      %1469 = vmatpush1.bf16.msra.mxu0 %v1438
      %1470 = vmatprep.subr.bf16.mxu0 0
      %1471 = vmatpush2.bf16.msra.mxu0 0
      %1472 = vmatprep.subr.bf16.mxu0 0
      %1473 = vmatpush2.bf16.msra.mxu0 0
      %1474 = vmatprep.subr.bf16.mxu0 0
      %1475 = vmatpush2.bf16.msra.mxu0 0
      %1476 = vmatprep.subr.bf16.mxu0 0
      %1477 = vmatpush2.bf16.msra.mxu0 0
      %1478 = vmatprep.subr.bf16.mxu0 0
      %1479 = vmatpush2.bf16.msra.mxu0 0
      %1480 = vmatprep.subr.bf16.mxu0 0
      %1481 = vmatpush2.bf16.msra.mxu0 0
      %1482 = vmatprep.subr.bf16.mxu0 0
      %1483 = vmatpush2.bf16.msra.mxu0 0
      %1484 = vmatprep.subr.bf16.mxu0 0
      %1485 = vmatpush2.bf16.msra.mxu0 0
      %1486 = vmatprep.mubr.bf16.mxu0 0
      %1487 = vmatmul.mubr.bf16.gmra.mxu0 %v1392
      %v1488 = vpop.f32.mrf.mxu0
      %v1489 = vadd.f32 0.0, %v1488
      %v1490 = vpop.f32.mrf.mxu0
      %v1491 = vpop.f32.mrf.mxu0
      %v1492 = vadd.f32 0.0, %v1491
      %v1493 = vpop.f32.mrf.mxu0
      %1494 = vmatprep.mubr.bf16.mxu0 0
      %1495 = vmatmul.mubr.bf16.gmra.mxu0 %v1394
      %v1496 = vpop.f32.mrf.mxu0
      %v1497 = vadd.f32 0.0, %v1496
      %v1498 = vpop.f32.mrf.mxu0
      %v1499 = vpop.f32.mrf.mxu0
      %v1500 = vadd.f32 0.0, %v1499
      %v1501 = vpop.f32.mrf.mxu0
      %1502 = vmatprep.mubr.bf16.mxu0 0
      %1503 = vmatmul.mubr.bf16.gmra.mxu0 %v1396
      %v1504 = vpop.f32.mrf.mxu0
      %v1505 = vadd.f32 0.0, %v1504
      %v1506 = vpop.f32.mrf.mxu0
      %v1507 = vpop.f32.mrf.mxu0
      %v1508 = vadd.f32 0.0, %v1507
      %v1509 = vpop.f32.mrf.mxu0
      %1510 = vmatprep.mubr.bf16.mxu0 0
      %1511 = vmatmul.mubr.bf16.gmra.mxu0 %v1398
      %v1512 = vpop.f32.mrf.mxu0
      %v1513 = vadd.f32 0.0, %v1512
      %v1514 = vpop.f32.mrf.mxu0
      %v1515 = vpop.f32.mrf.mxu0
      %v1516 = vadd.f32 0.0, %v1515
      %v1517 = vpop.f32.mrf.mxu0
      %1518 = vmatprep.mubr.bf16.mxu0 0
      %1519 = vmatmul.mubr.bf16.gmra.mxu0 %v1400
      %v1520 = vpop.f32.mrf.mxu0
      %v1521 = vadd.f32 0.0, %v1520
      %v1522 = vpop.f32.mrf.mxu0
      %v1523 = vpop.f32.mrf.mxu0
      %v1524 = vadd.f32 0.0, %v1523
      %v1525 = vpop.f32.mrf.mxu0
      %1526 = vdwg.mxu0
      %v1527 = vadd.f32 %v1359, %v1489
      %v1528 = vadd.f32 %v1360, %v1492
      %v1529 = vadd.f32 %v1361, %v1497
      %v1530 = vadd.f32 %v1362, %v1500
      %v1531 = vadd.f32 %v1363, %v1505
      %v1532 = vadd.f32 %v1364, %v1508
      %v1533 = vadd.f32 %v1365, %v1513
      %v1534 = vadd.f32 %v1366, %v1516
      %v1535 = vadd.f32 %v1367, %v1521
      %v1536 = vadd.f32 %v1368, %v1524
      %s1537 = scalar_lea.vmem %s2, 448
      %v1538 = vld [vmem:[%s1537] sm:$0xf]
      %v1539 = vld [vmem:[%s1537 + $0x4] sm:$0xf]
      %v1540 = vld [vmem:[%s1537 + $0x8] sm:$0xf]
      %v1541 = vld [vmem:[%s1537 + $0xc] sm:$0xf]
      %v1542 = vld [vmem:[%s1537 + $0x10] sm:$0xf]
      %v1543 = vld [vmem:[%s1537 + $0x14] sm:$0xf]
      %v1544 = vld [vmem:[%s1537 + $0x18] sm:$0xf]
      %v1545 = vld [vmem:[%s1537 + $0x1c] sm:$0xf]
      %v1546 = vld [vmem:[%s1537 + $0x20] sm:$0xf]
      %v1547 = vld [vmem:[%s1537 + $0x24] sm:$0xf]
      %v1548 = vld [vmem:[%s1537 + $0x28] sm:$0xf]
      %v1549 = vld [vmem:[%s1537 + $0x2c] sm:$0xf]
      %v1550 = vld [vmem:[%s1537 + $0x30] sm:$0xf]
      %v1551 = vld [vmem:[%s1537 + $0x34] sm:$0xf]
      %v1552 = vld [vmem:[%s1537 + $0x38] sm:$0xf]
      %v1553 = vld [vmem:[%s1537 + $0x3c] sm:$0xf]
      %vm1554 = vsmask.f32 5376
      %v1555 = vrot.slane %v371, 2
      %v1556 = vrot.slane %v367, 3
      %v1557 = vor.u32 %v1555, %v1556
      %v1558 = vrot.slane %v379, 2
      %v1559 = vrot.slane %v375, 3
      %v1560 = vor.u32 %v1558, %v1559
      %v1561 = vsel %vm1554, %v1557, %v1560
      %v1562 = vrot.slane %v387, 2
      %v1563 = vrot.slane %v383, 3
      %v1564 = vor.u32 %v1562, %v1563
      %v1565 = vsel %vm1554, %v1560, %v1564
      %v1566 = vrot.slane %v395, 2
      %v1567 = vrot.slane %v391, 3
      %v1568 = vor.u32 %v1566, %v1567
      %v1569 = vsel %vm1554, %v1564, %v1568
      %v1571 = vshrl.u32 %v1369, 16
      %v1573 = vrot.slane %v1571, 2
      %v1574 = vshll.u32 %v1369, 16
      %v1576 = vrot.slane %v1574, 3
      %v1577 = vor.u32 %v1573, %v1576
      %v1578 = vsel %vm1554, %v1568, %v1577
      %v1580 = vshrl.u32 %v1370, 16
      %v1582 = vrot.slane %v1580, 2
      %v1583 = vshll.u32 %v1370, 16
      %v1585 = vrot.slane %v1583, 3
      %v1586 = vor.u32 %v1582, %v1585
      %v1587 = vsel %vm1554, %v1577, %v1586
      %v1609 = vunpack.c.l.b16 %v1538
      %v1610 = vunpack.c.l.b16 %v1539
      %v1611 = vunpack.c.l.b16 %v1540
      %v1612 = vunpack.c.l.b16 %v1541
      %v1613 = vunpack.c.l.b16 %v1542
      %v1614 = vunpack.c.l.b16 %v1543
      %v1615 = vunpack.c.l.b16 %v1544
      %v1616 = vunpack.c.l.b16 %v1545
      %v1617 = vunpack.c.l.b16 %v1546
      %v1618 = vunpack.c.l.b16 %v1547
      %v1619 = vunpack.c.l.b16 %v1548
      %v1620 = vunpack.c.l.b16 %v1549
      %v1621 = vunpack.c.l.b16 %v1550
      %v1622 = vunpack.c.l.b16 %v1551
      %v1623 = vunpack.c.l.b16 %v1552
      %v1624 = vunpack.c.l.b16 %v1553
      %v1625 = vpack.c.b16 %v1610, %v1609
      %v1626 = vpack.c.b16 %v1612, %v1611
      %v1627 = vpack.c.b16 %v1614, %v1613
      %v1628 = vpack.c.b16 %v1616, %v1615
      %v1629 = vpack.c.b16 %v1618, %v1617
      %v1630 = vpack.c.b16 %v1620, %v1619
      %v1631 = vpack.c.b16 %v1622, %v1621
      %v1632 = vpack.c.b16 %v1624, %v1623
      %1641 = vmatprep.subr.bf16.mxu0 0
      %1642 = vmatpush1.bf16.msra.mxu0 %v1632
      %1643 = vmatprep.subr.bf16.mxu0 0
      %1644 = vmatpush1.bf16.msra.mxu0 %v1631
      %1645 = vmatprep.subr.bf16.mxu0 0
      %1646 = vmatpush1.bf16.msra.mxu0 %v1630
      %1647 = vmatprep.subr.bf16.mxu0 0
      %1648 = vmatpush1.bf16.msra.mxu0 %v1629
      %1649 = vmatprep.subr.bf16.mxu0 0
      %1650 = vmatpush1.bf16.msra.mxu0 %v1628
      %1651 = vmatprep.subr.bf16.mxu0 0
      %1652 = vmatpush1.bf16.msra.mxu0 %v1627
      %1653 = vmatprep.subr.bf16.mxu0 0
      %1654 = vmatpush1.bf16.msra.mxu0 %v1626
      %1655 = vmatprep.subr.bf16.mxu0 0
      %1656 = vmatpush1.bf16.msra.mxu0 %v1625
      %1657 = vmatprep.subr.bf16.mxu0 0
      %1658 = vmatpush2.bf16.msra.mxu0 0
      %1659 = vmatprep.subr.bf16.mxu0 0
      %1660 = vmatpush2.bf16.msra.mxu0 0
      %1661 = vmatprep.subr.bf16.mxu0 0
      %1662 = vmatpush2.bf16.msra.mxu0 0
      %1663 = vmatprep.subr.bf16.mxu0 0
      %1664 = vmatpush2.bf16.msra.mxu0 0
      %1665 = vmatprep.subr.bf16.mxu0 0
      %1666 = vmatpush2.bf16.msra.mxu0 0
      %1667 = vmatprep.subr.bf16.mxu0 0
      %1668 = vmatpush2.bf16.msra.mxu0 0
      %1669 = vmatprep.subr.bf16.mxu0 0
      %1670 = vmatpush2.bf16.msra.mxu0 0
      %1671 = vmatprep.subr.bf16.mxu0 0
      %1672 = vmatpush2.bf16.msra.mxu0 0
      %1673 = vmatprep.mubr.bf16.mxu0 0
      %1674 = vmatmul.mubr.bf16.gmra.mxu0 %v1561
      %v1675 = vpop.f32.mrf.mxu0
      %v1676 = vadd.f32 0.0, %v1675
      %v1677 = vpop.f32.mrf.mxu0
      %v1678 = vpop.f32.mrf.mxu0
      %v1679 = vadd.f32 0.0, %v1678
      %v1680 = vpop.f32.mrf.mxu0
      %1681 = vmatprep.mubr.bf16.mxu0 0
      %1682 = vmatmul.mubr.bf16.gmra.mxu0 %v1565
      %v1683 = vpop.f32.mrf.mxu0
      %v1684 = vadd.f32 0.0, %v1683
      %v1685 = vpop.f32.mrf.mxu0
      %v1686 = vpop.f32.mrf.mxu0
      %v1687 = vadd.f32 0.0, %v1686
      %v1688 = vpop.f32.mrf.mxu0
      %1689 = vmatprep.mubr.bf16.mxu0 0
      %1690 = vmatmul.mubr.bf16.gmra.mxu0 %v1569
      %v1691 = vpop.f32.mrf.mxu0
      %v1692 = vadd.f32 0.0, %v1691
      %v1693 = vpop.f32.mrf.mxu0
      %v1694 = vpop.f32.mrf.mxu0
      %v1695 = vadd.f32 0.0, %v1694
      %v1696 = vpop.f32.mrf.mxu0
      %1697 = vmatprep.mubr.bf16.mxu0 0
      %1698 = vmatmul.mubr.bf16.gmra.mxu0 %v1578
      %v1699 = vpop.f32.mrf.mxu0
      %v1700 = vadd.f32 0.0, %v1699
      %v1701 = vpop.f32.mrf.mxu0
      %v1702 = vpop.f32.mrf.mxu0
      %v1703 = vadd.f32 0.0, %v1702
      %v1704 = vpop.f32.mrf.mxu0
      %1705 = vmatprep.mubr.bf16.mxu0 0
      %1706 = vmatmul.mubr.bf16.gmra.mxu0 %v1587
      %v1707 = vpop.f32.mrf.mxu0
      %v1708 = vadd.f32 0.0, %v1707
      %v1709 = vpop.f32.mrf.mxu0
      %v1710 = vpop.f32.mrf.mxu0
      %v1711 = vadd.f32 0.0, %v1710
      %v1712 = vpop.f32.mrf.mxu0
      %1713 = vdwg.mxu0
      %v1714 = vadd.f32 %v1527, %v1676
      %v1715 = vadd.f32 %v1528, %v1679
      %v1716 = vadd.f32 %v1529, %v1684
      %v1717 = vadd.f32 %v1530, %v1687
      %v1718 = vadd.f32 %v1531, %v1692
      %v1719 = vadd.f32 %v1532, %v1695
      %v1720 = vadd.f32 %v1533, %v1700
      %v1721 = vadd.f32 %v1534, %v1703
      %v1722 = vadd.f32 %v1535, %v1708
      %v1723 = vadd.f32 %v1536, %v1711
      %s1724 = scalar_lea.vmem %s2, 512
      %v1725 = vld [vmem:[%s1724] sm:$0xf]
      %v1726 = vld [vmem:[%s1724 + $0x4] sm:$0xf]
      %v1727 = vld [vmem:[%s1724 + $0x8] sm:$0xf]
      %v1728 = vld [vmem:[%s1724 + $0xc] sm:$0xf]
      %v1729 = vld [vmem:[%s1724 + $0x10] sm:$0xf]
      %v1730 = vld [vmem:[%s1724 + $0x14] sm:$0xf]
      %v1731 = vld [vmem:[%s1724 + $0x18] sm:$0xf]
      %v1732 = vld [vmem:[%s1724 + $0x1c] sm:$0xf]
      %v1733 = vld [vmem:[%s1724 + $0x20] sm:$0xf]
      %v1734 = vld [vmem:[%s1724 + $0x24] sm:$0xf]
      %v1735 = vld [vmem:[%s1724 + $0x28] sm:$0xf]
      %v1736 = vld [vmem:[%s1724 + $0x2c] sm:$0xf]
      %v1737 = vld [vmem:[%s1724 + $0x30] sm:$0xf]
      %v1738 = vld [vmem:[%s1724 + $0x34] sm:$0xf]
      %v1739 = vld [vmem:[%s1724 + $0x38] sm:$0xf]
      %v1740 = vld [vmem:[%s1724 + $0x3c] sm:$0xf]
      %vm1741 = vcmask 1044480
      %v1742 = vrot.slane %v320, 3
      %v1743 = vrot.slane %v321, 3
      %v1744 = vsel %vm1741, %v1742, %v1743
      %v1745 = vrot.slane %v322, 3
      %v1746 = vsel %vm1741, %v1743, %v1745
      %v1747 = vrot.slane %v323, 3
      %v1748 = vsel %vm1741, %v1745, %v1747
      %v1749 = vrot.slane %v1369, 3
      %v1750 = vsel %vm1741, %v1747, %v1749
      %v1751 = vrot.slane %v1370, 3
      %v1752 = vsel %vm1741, %v1749, %v1751
      %v1774 = vunpack.c.l.b16 %v1725
      %v1775 = vunpack.c.l.b16 %v1726
      %v1776 = vunpack.c.l.b16 %v1727
      %v1777 = vunpack.c.l.b16 %v1728
      %v1778 = vunpack.c.l.b16 %v1729
      %v1779 = vunpack.c.l.b16 %v1730
      %v1780 = vunpack.c.l.b16 %v1731
      %v1781 = vunpack.c.l.b16 %v1732
      %v1782 = vunpack.c.l.b16 %v1733
      %v1783 = vunpack.c.l.b16 %v1734
      %v1784 = vunpack.c.l.b16 %v1735
      %v1785 = vunpack.c.l.b16 %v1736
      %v1786 = vunpack.c.l.b16 %v1737
      %v1787 = vunpack.c.l.b16 %v1738
      %v1788 = vunpack.c.l.b16 %v1739
      %v1789 = vunpack.c.l.b16 %v1740
      %v1790 = vpack.c.b16 %v1775, %v1774
      %v1791 = vpack.c.b16 %v1777, %v1776
      %v1792 = vpack.c.b16 %v1779, %v1778
      %v1793 = vpack.c.b16 %v1781, %v1780
      %v1794 = vpack.c.b16 %v1783, %v1782
      %v1795 = vpack.c.b16 %v1785, %v1784
      %v1796 = vpack.c.b16 %v1787, %v1786
      %v1797 = vpack.c.b16 %v1789, %v1788
      %1806 = vmatprep.subr.bf16.mxu0 0
      %1807 = vmatpush1.bf16.msra.mxu0 %v1797
      %1808 = vmatprep.subr.bf16.mxu0 0
      %1809 = vmatpush1.bf16.msra.mxu0 %v1796
      %1810 = vmatprep.subr.bf16.mxu0 0
      %1811 = vmatpush1.bf16.msra.mxu0 %v1795
      %1812 = vmatprep.subr.bf16.mxu0 0
      %1813 = vmatpush1.bf16.msra.mxu0 %v1794
      %1814 = vmatprep.subr.bf16.mxu0 0
      %1815 = vmatpush1.bf16.msra.mxu0 %v1793
      %1816 = vmatprep.subr.bf16.mxu0 0
      %1817 = vmatpush1.bf16.msra.mxu0 %v1792
      %1818 = vmatprep.subr.bf16.mxu0 0
      %1819 = vmatpush1.bf16.msra.mxu0 %v1791
      %1820 = vmatprep.subr.bf16.mxu0 0
      %1821 = vmatpush1.bf16.msra.mxu0 %v1790
      %1822 = vmatprep.subr.bf16.mxu0 0
      %1823 = vmatpush2.bf16.msra.mxu0 0
      %1824 = vmatprep.subr.bf16.mxu0 0
      %1825 = vmatpush2.bf16.msra.mxu0 0
      %1826 = vmatprep.subr.bf16.mxu0 0
      %1827 = vmatpush2.bf16.msra.mxu0 0
      %1828 = vmatprep.subr.bf16.mxu0 0
      %1829 = vmatpush2.bf16.msra.mxu0 0
      %1830 = vmatprep.subr.bf16.mxu0 0
      %1831 = vmatpush2.bf16.msra.mxu0 0
      %1832 = vmatprep.subr.bf16.mxu0 0
      %1833 = vmatpush2.bf16.msra.mxu0 0
      %1834 = vmatprep.subr.bf16.mxu0 0
      %1835 = vmatpush2.bf16.msra.mxu0 0
      %1836 = vmatprep.subr.bf16.mxu0 0
      %1837 = vmatpush2.bf16.msra.mxu0 0
      %1838 = vmatprep.mubr.bf16.mxu0 0
      %1839 = vmatmul.mubr.bf16.gmra.mxu0 %v1744
      %v1840 = vpop.f32.mrf.mxu0
      %v1841 = vadd.f32 0.0, %v1840
      %v1842 = vpop.f32.mrf.mxu0
      %v1843 = vpop.f32.mrf.mxu0
      %v1844 = vadd.f32 0.0, %v1843
      %v1845 = vpop.f32.mrf.mxu0
      %1846 = vmatprep.mubr.bf16.mxu0 0
      %1847 = vmatmul.mubr.bf16.gmra.mxu0 %v1746
      %v1848 = vpop.f32.mrf.mxu0
      %v1849 = vadd.f32 0.0, %v1848
      %v1850 = vpop.f32.mrf.mxu0
      %v1851 = vpop.f32.mrf.mxu0
      %v1852 = vadd.f32 0.0, %v1851
      %v1853 = vpop.f32.mrf.mxu0
      %1854 = vmatprep.mubr.bf16.mxu0 0
      %1855 = vmatmul.mubr.bf16.gmra.mxu0 %v1748
      %v1856 = vpop.f32.mrf.mxu0
      %v1857 = vadd.f32 0.0, %v1856
      %v1858 = vpop.f32.mrf.mxu0
      %v1859 = vpop.f32.mrf.mxu0
      %v1860 = vadd.f32 0.0, %v1859
      %v1861 = vpop.f32.mrf.mxu0
      %1862 = vmatprep.mubr.bf16.mxu0 0
      %1863 = vmatmul.mubr.bf16.gmra.mxu0 %v1750
      %v1864 = vpop.f32.mrf.mxu0
      %v1865 = vadd.f32 0.0, %v1864
      %v1866 = vpop.f32.mrf.mxu0
      %v1867 = vpop.f32.mrf.mxu0
      %v1868 = vadd.f32 0.0, %v1867
      %v1869 = vpop.f32.mrf.mxu0
      %1870 = vmatprep.mubr.bf16.mxu0 0
      %1871 = vmatmul.mubr.bf16.gmra.mxu0 %v1752
      %v1872 = vpop.f32.mrf.mxu0
      %v1873 = vadd.f32 0.0, %v1872
      %v1874 = vpop.f32.mrf.mxu0
      %v1875 = vpop.f32.mrf.mxu0
      %v1876 = vadd.f32 0.0, %v1875
      %v1877 = vpop.f32.mrf.mxu0
      %1878 = vdwg.mxu0
      %v1879 = vadd.f32 %v1714, %v1841
      %v1880 = vadd.f32 %v1715, %v1844
      %v1881 = vadd.f32 %v1716, %v1849
      %v1882 = vadd.f32 %v1717, %v1852
      %v1883 = vadd.f32 %v1718, %v1857
      %v1884 = vadd.f32 %v1719, %v1860
      %v1885 = vadd.f32 %v1720, %v1865
      %v1886 = vadd.f32 %v1721, %v1868
      %v1887 = vadd.f32 %v1722, %v1873
      %v1888 = vadd.f32 %v1723, %v1876
      %v1889 = vld [vmem:[%s3] sm:$0x1]
      %v1891 = vlaneseq
      %v1892 = vshrl.u32 %v1891, 7
      %v1893 = vsub.s32 0, %v1892
      %v1894 = vrot.slane %v1889, %v1893
      %v1896 = vadd.f32 %v1879, %v1894
      %v1897 = vadd.f32 %v1880, %v1894
      %v1898 = vadd.f32 %v1881, %v1894
      %v1899 = vadd.f32 %v1882, %v1894
      %v1900 = vadd.f32 %v1883, %v1894
      %v1901 = vadd.f32 %v1884, %v1894
      %v1902 = vadd.f32 %v1885, %v1894
      %v1903 = vadd.f32 %v1886, %v1894
      %v1904 = vadd.f32 %v1887, %v1894
      %v1905 = vadd.f32 %v1888, %v1894
      %v1906 = vmax.f32 %v1896, 0.0
      %v1907 = vmax.f32 %v1897, 0.0
      %v1908 = vmax.f32 %v1898, 0.0
      %v1909 = vmax.f32 %v1899, 0.0
      %v1910 = vmax.f32 %v1900, 0.0
      %v1911 = vmax.f32 %v1901, 0.0
      %v1912 = vmax.f32 %v1902, 0.0
      %v1913 = vmax.f32 %v1903, 0.0
      %v1914 = vmax.f32 %v1904, 0.0
      %v1915 = vmax.f32 %v1905, 0.0
      %1916 = vst [vmem:[%s303] sm:$0xff] %v1906
      %1917 = vst [vmem:[%s303 + $0x8] sm:$0xff] %v1907
      %1918 = vst [vmem:[%s303 + $0x10] sm:$0xff] %v1908
      %1919 = vst [vmem:[%s303 + $0x18] sm:$0xff] %v1909
      %1920 = vst [vmem:[%s303 + $0x20] sm:$0xff] %v1910
      %1921 = vst [vmem:[%s303 + $0x28] sm:$0xff] %v1911
      %1922 = vst [vmem:[%s303 + $0x30] sm:$0xff] %v1912
      %1923 = vst [vmem:[%s303 + $0x38] sm:$0xff] %v1913
      %1924 = vst [vmem:[%s303 + $0x40] sm:$0xff] %v1914
      %1925 = vst [vmem:[%s303 + $0x48] sm:$0xff] %v1915
      %s1926 = smul.u32 %s22, 80
      %v1927 = vlaneseq
      %v1928 = vshrl.u32 %v1927, 7
      %v1929 = vadd.s32 %v1928, 8
      %v1930 = vadd.s32 %v1928, 16
      %v1931 = vadd.s32 %v1928, 24
      %v1932 = vadd.s32 %v1928, 32
      %v1933 = vadd.s32 %v1928, 40
      %v1934 = vadd.s32 %v1928, 48
      %v1935 = vadd.s32 %v1928, 56
      %v1936 = vadd.s32 %v1928, 64
      %v1937 = vadd.s32 %v1928, 72
      %v1938 = vstv %s1926
      %v1939 = vadd.s32 %v1938, %v1928
      %v1940 = vadd.s32 %v1938, %v1929
      %v1941 = vadd.s32 %v1938, %v1930
      %v1942 = vadd.s32 %v1938, %v1931
      %v1943 = vadd.s32 %v1938, %v1932
      %v1944 = vadd.s32 %v1938, %v1933
      %v1945 = vadd.s32 %v1938, %v1934
      %v1946 = vadd.s32 %v1938, %v1935
      %v1947 = vadd.s32 %v1938, %v1936
      %v1948 = vadd.s32 %v1938, %v1937
      %vm1949 = vcmp.lt.s32.totalorder %v1939, 0
      %v1950 = vsub.s32 0, %v1939
      %v1951 = vsel %vm1949, %v1950, %v1939
      %v1952 = vmul.u32.u64.compose %v1951, 3435973837
      %v1953 = vextract.low.u32 %v1952
      %v1954 = vextract.high.u32 %v1952
      %v1955 = vshrl.u32 %v1954, 3
      %v1956 = vmul.u32 %v1955, 10
      %v1957 = vsub.s32 %v1951, %v1956
      %v1958 = vsub.s32 0, %v1957
      %v1959 = vsel %vm1949, %v1958, %v1957
      %vm1960 = vcmp.lt.s32.totalorder %v1940, 0
      %v1961 = vsub.s32 0, %v1940
      %v1962 = vsel %vm1960, %v1961, %v1940
      %v1963 = vmul.u32.u64.compose %v1962, 3435973837
      %v1964 = vextract.low.u32 %v1963
      %v1965 = vextract.high.u32 %v1963
      %v1966 = vshrl.u32 %v1965, 3
      %v1967 = vmul.u32 %v1966, 10
      %v1968 = vsub.s32 %v1962, %v1967
      %v1969 = vsub.s32 0, %v1968
      %v1970 = vsel %vm1960, %v1969, %v1968
      %vm1971 = vcmp.lt.s32.totalorder %v1941, 0
      %v1972 = vsub.s32 0, %v1941
      %v1973 = vsel %vm1971, %v1972, %v1941
      %v1974 = vmul.u32.u64.compose %v1973, 3435973837
      %v1975 = vextract.low.u32 %v1974
      %v1976 = vextract.high.u32 %v1974
      %v1977 = vshrl.u32 %v1976, 3
      %v1978 = vmul.u32 %v1977, 10
      %v1979 = vsub.s32 %v1973, %v1978
      %v1980 = vsub.s32 0, %v1979
      %v1981 = vsel %vm1971, %v1980, %v1979
      %vm1982 = vcmp.lt.s32.totalorder %v1942, 0
      %v1983 = vsub.s32 0, %v1942
      %v1984 = vsel %vm1982, %v1983, %v1942
      %v1985 = vmul.u32.u64.compose %v1984, 3435973837
      %v1986 = vextract.low.u32 %v1985
      %v1987 = vextract.high.u32 %v1985
      %v1988 = vshrl.u32 %v1987, 3
      %v1989 = vmul.u32 %v1988, 10
      %v1990 = vsub.s32 %v1984, %v1989
      %v1991 = vsub.s32 0, %v1990
      %v1992 = vsel %vm1982, %v1991, %v1990
      %vm1993 = vcmp.lt.s32.totalorder %v1943, 0
      %v1994 = vsub.s32 0, %v1943
      %v1995 = vsel %vm1993, %v1994, %v1943
      %v1996 = vmul.u32.u64.compose %v1995, 3435973837
      %v1997 = vextract.low.u32 %v1996
      %v1998 = vextract.high.u32 %v1996
      %v1999 = vshrl.u32 %v1998, 3
      %v2000 = vmul.u32 %v1999, 10
      %v2001 = vsub.s32 %v1995, %v2000
      %v2002 = vsub.s32 0, %v2001
      %v2003 = vsel %vm1993, %v2002, %v2001
      %vm2004 = vcmp.lt.s32.totalorder %v1944, 0
      %v2005 = vsub.s32 0, %v1944
      %v2006 = vsel %vm2004, %v2005, %v1944
      %v2007 = vmul.u32.u64.compose %v2006, 3435973837
      %v2008 = vextract.low.u32 %v2007
      %v2009 = vextract.high.u32 %v2007
      %v2010 = vshrl.u32 %v2009, 3
      %v2011 = vmul.u32 %v2010, 10
      %v2012 = vsub.s32 %v2006, %v2011
      %v2013 = vsub.s32 0, %v2012
      %v2014 = vsel %vm2004, %v2013, %v2012
      %vm2015 = vcmp.lt.s32.totalorder %v1945, 0
      %v2016 = vsub.s32 0, %v1945
      %v2017 = vsel %vm2015, %v2016, %v1945
      %v2018 = vmul.u32.u64.compose %v2017, 3435973837
      %v2019 = vextract.low.u32 %v2018
      %v2020 = vextract.high.u32 %v2018
      %v2021 = vshrl.u32 %v2020, 3
      %v2022 = vmul.u32 %v2021, 10
      %v2023 = vsub.s32 %v2017, %v2022
      %v2024 = vsub.s32 0, %v2023
      %v2025 = vsel %vm2015, %v2024, %v2023
      %vm2026 = vcmp.lt.s32.totalorder %v1946, 0
      %v2027 = vsub.s32 0, %v1946
      %v2028 = vsel %vm2026, %v2027, %v1946
      %v2029 = vmul.u32.u64.compose %v2028, 3435973837
      %v2030 = vextract.low.u32 %v2029
      %v2031 = vextract.high.u32 %v2029
      %v2032 = vshrl.u32 %v2031, 3
      %v2033 = vmul.u32 %v2032, 10
      %v2034 = vsub.s32 %v2028, %v2033
      %v2035 = vsub.s32 0, %v2034
      %v2036 = vsel %vm2026, %v2035, %v2034
      %vm2037 = vcmp.lt.s32.totalorder %v1947, 0
      %v2038 = vsub.s32 0, %v1947
      %v2039 = vsel %vm2037, %v2038, %v1947
      %v2040 = vmul.u32.u64.compose %v2039, 3435973837
      %v2041 = vextract.low.u32 %v2040
      %v2042 = vextract.high.u32 %v2040
      %v2043 = vshrl.u32 %v2042, 3
      %v2044 = vmul.u32 %v2043, 10
      %v2045 = vsub.s32 %v2039, %v2044
      %v2046 = vsub.s32 0, %v2045
      %v2047 = vsel %vm2037, %v2046, %v2045
      %vm2048 = vcmp.lt.s32.totalorder %v1948, 0
      %v2049 = vsub.s32 0, %v1948
      %v2050 = vsel %vm2048, %v2049, %v1948
      %v2051 = vmul.u32.u64.compose %v2050, 3435973837
      %v2052 = vextract.low.u32 %v2051
      %v2053 = vextract.high.u32 %v2051
      %v2054 = vshrl.u32 %v2053, 3
      %v2055 = vmul.u32 %v2054, 10
      %v2056 = vsub.s32 %v2050, %v2055
      %v2057 = vsub.s32 0, %v2056
      %v2058 = vsel %vm2048, %v2057, %v2056
      %vm2059 = vcmp.ne.s32.totalorder %v1959, 0
      %vm2060 = vcmp.ne.s32.totalorder %v1970, 0
      %vm2061 = vcmp.ne.s32.totalorder %v1981, 0
      %vm2062 = vcmp.ne.s32.totalorder %v1992, 0
      %vm2063 = vcmp.ne.s32.totalorder %v2003, 0
      %vm2064 = vcmp.ne.s32.totalorder %v2014, 0
      %vm2065 = vcmp.ne.s32.totalorder %v2025, 0
      %vm2066 = vcmp.ne.s32.totalorder %v2036, 0
      %vm2067 = vcmp.ne.s32.totalorder %v2047, 0
      %vm2068 = vcmp.ne.s32.totalorder %v2058, 0
      %vm2069 = vcmp.lt.s32.totalorder %v1959, 0
      %vm2070 = vcmp.lt.s32.totalorder %v1970, 0
      %vm2071 = vcmp.lt.s32.totalorder %v1981, 0
      %vm2072 = vcmp.lt.s32.totalorder %v1992, 0
      %vm2073 = vcmp.lt.s32.totalorder %v2003, 0
      %vm2074 = vcmp.lt.s32.totalorder %v2014, 0
      %vm2075 = vcmp.lt.s32.totalorder %v2025, 0
      %vm2076 = vcmp.lt.s32.totalorder %v2036, 0
      %vm2077 = vcmp.lt.s32.totalorder %v2047, 0
      %vm2078 = vcmp.lt.s32.totalorder %v2058, 0
      %vm2079 = vmand %vm2069, %vm2059
      %vm2080 = vmand %vm2070, %vm2060
      %vm2081 = vmand %vm2071, %vm2061
      %vm2082 = vmand %vm2072, %vm2062
      %vm2083 = vmand %vm2073, %vm2063
      %vm2084 = vmand %vm2074, %vm2064
      %vm2085 = vmand %vm2075, %vm2065
      %vm2086 = vmand %vm2076, %vm2066
      %vm2087 = vmand %vm2077, %vm2067
      %vm2088 = vmand %vm2078, %vm2068
      %v2089 = vadd.s32 %v1959, 10
      %v2090 = vadd.s32 %v1970, 10
      %v2091 = vadd.s32 %v1981, 10
      %v2092 = vadd.s32 %v1992, 10
      %v2093 = vadd.s32 %v2003, 10
      %v2094 = vadd.s32 %v2014, 10
      %v2095 = vadd.s32 %v2025, 10
      %v2096 = vadd.s32 %v2036, 10
      %v2097 = vadd.s32 %v2047, 10
      %v2098 = vadd.s32 %v2058, 10
      %v2099 = vsel %vm2079, %v2089, %v1959
      %v2100 = vsel %vm2080, %v2090, %v1970
      %v2101 = vsel %vm2081, %v2091, %v1981
      %v2102 = vsel %vm2082, %v2092, %v1992
      %v2103 = vsel %vm2083, %v2093, %v2003
      %v2104 = vsel %vm2084, %v2094, %v2014
      %v2105 = vsel %vm2085, %v2095, %v2025
      %v2106 = vsel %vm2086, %v2096, %v2036
      %v2107 = vsel %vm2087, %v2097, %v2047
      %v2108 = vsel %vm2088, %v2098, %v2058
      %vm2109 = vcmp.ge.s32.totalorder %v2099, 1
      %vm2110 = vcmp.ge.s32.totalorder %v2100, 1
      %vm2111 = vcmp.ge.s32.totalorder %v2101, 1
      %vm2112 = vcmp.ge.s32.totalorder %v2102, 1
      %vm2113 = vcmp.ge.s32.totalorder %v2103, 1
      %vm2114 = vcmp.ge.s32.totalorder %v2104, 1
      %vm2115 = vcmp.ge.s32.totalorder %v2105, 1
      %vm2116 = vcmp.ge.s32.totalorder %v2106, 1
      %vm2117 = vcmp.ge.s32.totalorder %v2107, 1
      %vm2118 = vcmp.ge.s32.totalorder %v2108, 1
      %vm2119 = vcmp.le.s32.totalorder %v2099, 8
      %vm2120 = vcmp.le.s32.totalorder %v2100, 8
      %vm2121 = vcmp.le.s32.totalorder %v2101, 8
      %vm2122 = vcmp.le.s32.totalorder %v2102, 8
      %vm2123 = vcmp.le.s32.totalorder %v2103, 8
      %vm2124 = vcmp.le.s32.totalorder %v2104, 8
      %vm2125 = vcmp.le.s32.totalorder %v2105, 8
      %vm2126 = vcmp.le.s32.totalorder %v2106, 8
      %vm2127 = vcmp.le.s32.totalorder %v2107, 8
      %vm2128 = vcmp.le.s32.totalorder %v2108, 8
      %vm2129 = vmand %vm2109, %vm2119
      %vm2130 = vmand %vm2110, %vm2120
      %vm2131 = vmand %vm2111, %vm2121
      %vm2132 = vmand %vm2112, %vm2122
      %vm2133 = vmand %vm2113, %vm2123
      %vm2134 = vmand %vm2114, %vm2124
      %vm2135 = vmand %vm2115, %vm2125
      %vm2136 = vmand %vm2116, %vm2126
      %vm2137 = vmand %vm2117, %vm2127
      %vm2138 = vmand %vm2118, %vm2128
      %v2139 = vsel %vm2129, 1, 0
      %v2140 = vsel %vm2130, 1, 0
      %v2141 = vsel %vm2131, 1, 0
      %v2142 = vsel %vm2132, 1, 0
      %v2143 = vsel %vm2133, 1, 0
      %v2144 = vsel %vm2134, 1, 0
      %v2145 = vsel %vm2135, 1, 0
      %v2146 = vsel %vm2136, 1, 0
      %v2147 = vsel %vm2137, 1, 0
      %v2148 = vsel %vm2138, 1, 0
      %v2149 = vcvt.s32.f32 %v2139
      %v2150 = vcvt.s32.f32 %v2140
      %v2151 = vcvt.s32.f32 %v2141
      %v2152 = vcvt.s32.f32 %v2142
      %v2153 = vcvt.s32.f32 %v2143
      %v2154 = vcvt.s32.f32 %v2144
      %v2155 = vcvt.s32.f32 %v2145
      %v2156 = vcvt.s32.f32 %v2146
      %v2157 = vcvt.s32.f32 %v2147
      %v2158 = vcvt.s32.f32 %v2148
      %v2159 = vmul.f32 %v1906, %v2149
      %v2160 = vmul.f32 %v1907, %v2150
      %v2161 = vmul.f32 %v1908, %v2151
      %v2162 = vmul.f32 %v1909, %v2152
      %v2163 = vmul.f32 %v1910, %v2153
      %v2164 = vmul.f32 %v1911, %v2154
      %v2165 = vmul.f32 %v1912, %v2155
      %v2166 = vmul.f32 %v1913, %v2156
      %v2167 = vmul.f32 %v1914, %v2157
      %v2168 = vmul.f32 %v1915, %v2158
      %p2169 = scmp.eq.s32.totalorder %s21, 0
      %p2170 = scmp.eq.s32.totalorder %s22, 0
      %p2171 = pnand %p2169, %p2170
      %p2172 = pneg %p2171
      // Predicated region
      $region37: #{unet_encoder_forward.15} parent=35 // pred_check
        _
      $region38: #{unet_encoder_forward.15} parent=35 // pred_check_branch
        %2174 = sbr.rel (%p2171) target = $region40
      $region39: #{unet_encoder_forward.15} parent=35 // pred_region
        %2175 = vst [vmem:[%s5] sm:$0x3] 0.0
      $region40: #{unet_encoder_forward.15} parent=35 // pred_fallthru
        _
      %v2176 = vld [vmem:[%s5] sm:$0x3]
      %v2177 = vadd.f32 %v2159, %v2160
      %v2178 = vadd.f32 %v2177, %v2161
      %v2179 = vadd.f32 %v2178, %v2162
      %v2180 = vadd.f32 %v2179, %v2163
      %v2181 = vadd.f32 %v2180, %v2164
      %v2182 = vadd.f32 %v2181, %v2165
      %v2183 = vadd.f32 %v2182, %v2166
      %v2184 = vadd.f32 %v2183, %v2167
      %v2185 = vadd.f32 %v2184, %v2168
      %v2186 = vrot.slane %v2185, 4
      %v2187 = vadd.f32 %v2185, %v2186
      %v2188 = vrot.slane %v2187, 2
      %v2189 = vadd.f32 %v2187, %v2188
      %v2190 = vrot.slane %v2189, 1
      %v2191 = vadd.f32 %v2189, %v2190
      %v2192 = vmul.f32 %v2159, %v2159
      %v2193 = vmul.f32 %v2160, %v2160
      %v2194 = vmul.f32 %v2161, %v2161
      %v2195 = vmul.f32 %v2162, %v2162
      %v2196 = vmul.f32 %v2163, %v2163
      %v2197 = vmul.f32 %v2164, %v2164
      %v2198 = vmul.f32 %v2165, %v2165
      %v2199 = vmul.f32 %v2166, %v2166
      %v2200 = vmul.f32 %v2167, %v2167
      %v2201 = vmul.f32 %v2168, %v2168
      %v2202 = vadd.f32 %v2192, %v2193
      %v2203 = vadd.f32 %v2202, %v2194
      %v2204 = vadd.f32 %v2203, %v2195
      %v2205 = vadd.f32 %v2204, %v2196
      %v2206 = vadd.f32 %v2205, %v2197
      %v2207 = vadd.f32 %v2206, %v2198
      %v2208 = vadd.f32 %v2207, %v2199
      %v2209 = vadd.f32 %v2208, %v2200
      %v2210 = vadd.f32 %v2209, %v2201
      %v2211 = vrot.slane %v2210, 4
      %v2212 = vadd.f32 %v2210, %v2211
      %v2213 = vrot.slane %v2212, 2
      %v2214 = vadd.f32 %v2212, %v2213
      %v2215 = vrot.slane %v2214, 1
      %v2216 = vadd.f32 %v2214, %v2215
      %vm2217 = vcmask 1040384
      %v2218 = vsel %vm2217, %v2191, %v2216
      %v2219 = vadd.f32 %v2176, %v2218
      %2220 = vst [vmem:[%s5] sm:$0x3] %v2219
      %s2221 = smul.u32 10, %s22
      %p2222 = scmp.lt.s32.totalorder %s21, 1
      %s2223 = scalar_select %p2222, %s21, 1
      %p2224 = scmp.lt.s32.totalorder %s2221, 9
      %s2225 = scalar_select %p2224, %s2221, 9
      %s2226 = smul.addr %s2223, 10
      %s2227 = sadd.s32 %s2225, %s2226
      %s2228 = smul.addr %s2227, 8
      %s2229 = scalar_lea.vmem %s4, %s2228
      // Predicated region
      $region41: #{unet_encoder_forward.15} parent=35 // pred_check
        %p2230 = pneg %p149
      $region42: #{unet_encoder_forward.15} parent=35 // pred_check_branch
        %2232 = sbr.rel (%p2230) target = $region44
      $region43: #{unet_encoder_forward.15} parent=35 // pred_region
        %s2233 = smul.u32 10, %s22
      $region44: #{unet_encoder_forward.15} parent=35 // pred_fallthru
        _
      // Predicated region
      $region45: #{unet_encoder_forward.15} parent=35 // pred_check
        %p2234 = pneg %p170
      $region46: #{unet_encoder_forward.15} parent=35 // pred_check_branch
        %2236 = sbr.rel (%p2234) target = $region48
      $region47: #{unet_encoder_forward.15} parent=35 // pred_region
        _
      $region48: #{unet_encoder_forward.15} parent=35 // pred_fallthru
        _
      // Predicated region
      $region49: #{unet_encoder_forward.15} parent=35 // pred_check
        %p2237 = pneg %p170
      $region50: #{unet_encoder_forward.15} parent=35 // pred_check_branch
        %2239 = sbr.rel (%p2237) target = $region52
      $region51: #{unet_encoder_forward.15} parent=35 // pred_region
        _
      $region52: #{unet_encoder_forward.15} parent=35 // pred_fallthru
        _
    $region36: #{unet_encoder_forward.15} parent=5 // pred_fallthru
      _
    %p2240 = scmp.le.s32.totalorder 2, %s12
    // Predicated region
    $region53: #{unet_encoder_forward.15} parent=5 // pred_check
      %p2241 = pneg %p2240
    $region54: #{unet_encoder_forward.15} parent=5 // pred_check_branch
      %2243 = sbr.rel (%p2241) target = $region56
    $region55: #{unet_encoder_forward.15} parent=5 // pred_region
      %s2244 = ssub.s32 %s12, 2
      // Predicated region
      $region57: #{unet_encoder_forward.15} parent=55 // pred_check
        %p2245 = pneg %p155
      $region58: #{unet_encoder_forward.15} parent=55 // pred_check_branch
        %2247 = sbr.rel (%p2245) target = $region60
      $region59: #{unet_encoder_forward.15} parent=55 // pred_region
        %s2248 = smul.u32 10, %s24
        %p2249 = scmp.lt.s32.totalorder %s23, 1
        %s2250 = scalar_select %p2249, %s23, 1
        %p2251 = scmp.lt.s32.totalorder %s2248, 9
        %s2252 = scalar_select %p2251, %s2248, 9
        %s2253 = smul.addr %s2250, 10
        %s2254 = sadd.s32 %s2252, %s2253
        %s2255 = smul.addr %s2254, 8
        %s2256 = scalar_lea.vmem %s4, %s2255
      $region60: #{unet_encoder_forward.15} parent=55 // pred_fallthru
        _
    $region56: #{unet_encoder_forward.15} parent=5 // pred_fallthru
      _
  $region6: #{unet_encoder_forward.15} parent=0 // loop_footer
    %s16 = sadd.s32 1, %s12
  $region7: #{unet_encoder_forward.15} parent=0 // loop_footer_branch
    %11 = sbr.rel target = $region3
  $region8: #{unet_encoder_forward.15} parent=0 // loop_exit
    _

</llo_original>
